<compile_context>
chip_gen: v5e
topology: v5e:2x2
jax: 0.10.0
libtpu: 0.0.40
codegen_flags: <defaults>
</compile_context>

<pallas_src>
import functools
from typing import Any, NamedTuple

import jax
import jax.numpy as jnp
from jax.experimental import pallas as pl
from jax.experimental.pallas import tpu as pltpu


def _round_up(x: int, m: int) -> int:
    return (x + m - 1) // m * m


class LSTMConfig(NamedTuple):
    input_size: int
    hidden_size: int
    output_size: int
    num_layers: int
    i_pad: int
    h_pad: int
    o_pad: int
    mxu_dtype: Any


def _sigmoid(x):
    # One EUP pass (tanh) instead of exp + reciprocal; identical math.
    return 0.5 * (jnp.tanh(0.5 * x) + 1.0)


# -----------------------------------------------------------------------------
# Fused kernel: all LSTM layers + ReLU + FC, one time-chunk per grid step.
# Grid = (batch_blocks, time_chunks); h/c state persists in VMEM scratch across
# the (sequential) time axis and is reset when the time index is 0.
# Gate order matches PyTorch: [i, f, g, o], each padded to h_pad lanes.
# -----------------------------------------------------------------------------
def _fused_lstm_kernel(*refs, num_layers, compute_dtype, unroll):
    x_ref = refs[0]
    layer_refs = refs[1:1 + 3 * num_layers]
    (w_fc_ref, b_fc_ref, out_ref,
     xg_scr, act_scr, h_scr, c_scr) = refs[1 + 3 * num_layers:]

    t_step = pl.program_id(1)

    @pl.when(t_step == 0)
    def _():
        h_scr[...] = jnp.zeros_like(h_scr)
        c_scr[...] = jnp.zeros_like(c_scr)

    chunk, b_blk, _ = x_ref.shape
    hp = h_scr.shape[-1]
    op = out_ref.shape[-1]

    for layer in range(num_layers):
        w_ih_ref = layer_refs[3 * layer + 0]
        w_hh_ref = layer_refs[3 * layer + 1]
        b_ref = layer_refs[3 * layer + 2]

        # Hoisted input projection for the whole chunk: one big MXU matmul
        # (chunk*b_blk, fin) x (fin, 4*hp), bias added once (not per step).
        inp = x_ref[...] if layer == 0 else act_scr[...]
        fin = inp.shape[-1]
        xg = jnp.dot(
            inp.reshape(chunk * b_blk, fin).astype(compute_dtype),
            w_ih_ref[...],
            preferred_element_type=jnp.float32,
        ) + b_ref[...]
        xg_scr[...] = xg.reshape(chunk, b_blk, 4 * hp)

        w_hh = w_hh_ref[...]

        # Recurrence: (h, c) carried in registers; only act_scr[t] is stored
        # per step (needed as the next layer's / FC's input).
        def step(t, carry, w_hh=w_hh):
            h, c = carry
            gates = xg_scr[t] + jnp.dot(
                h.astype(compute_dtype), w_hh,
                preferred_element_type=jnp.float32)
            # 128-lane-aligned gate slices (hp is a multiple of 128).
            i_g = _sigmoid(gates[:, 0 * hp:1 * hp])
            f_g = _sigmoid(gates[:, 1 * hp:2 * hp])
            g_g = jnp.tanh(gates[:, 2 * hp:3 * hp])
            o_g = _sigmoid(gates[:, 3 * hp:4 * hp])
            c_new = f_g * c + i_g * g_g
            h_new = o_g * jnp.tanh(c_new)
            act_scr[t] = h_new.astype(act_scr.dtype)
            return (h_new, c_new)

        h_last, c_last = jax.lax.fori_loop(
            0, chunk, step, (h_scr[layer], c_scr[layer]), unroll=unroll)
        # Write state back once per (layer, chunk): only needed across grid steps.
        h_scr[layer] = h_last
        c_scr[layer] = c_last

    # Fused ReLU + per-timestep Linear on the whole chunk, lane-dense output.
    h_all = jnp.maximum(act_scr[...], 0.0).astype(compute_dtype)
    y = jnp.dot(
        h_all.reshape(chunk * b_blk, hp),
        w_fc_ref[...],
        preferred_element_type=jnp.float32,
    ) + b_fc_ref[...]
    out_ref[...] = y.reshape(chunk, b_blk, op).astype(out_ref.dtype)


# -----------------------------------------------------------------------------
# Parameter initialization (PyTorch layout) and kernel-layout preparation.
# -----------------------------------------------------------------------------
def init_params(key, input_size, hidden_size, output_size, num_layers):
    """PyTorch-layout params with nn.LSTM/nn.Linear-style U(-1/sqrt(H)) init."""
    h = hidden_size
    bound = 1.0 / float(h) ** 0.5
    layers = []
    for layer in range(num_layers):
        in_sz = input_size if layer == 0 else h
        key, k1, k2, k3, k4 = jax.random.split(key, 5)
        layers.append(dict(
            w_ih=jax.random.uniform(k1, (4 * h, in_sz), jnp.float32, -bound, bound),
            w_hh=jax.random.uniform(k2, (4 * h, h), jnp.float32, -bound, bound),
            b_ih=jax.random.uniform(k3, (4 * h,), jnp.float32, -bound, bound),
            b_hh=jax.random.uniform(k4, (4 * h,), jnp.float32, -bound, bound),
        ))
    key, k5, k6 = jax.random.split(key, 3)
    w_fc = jax.random.uniform(k5, (output_size, h), jnp.float32, -bound, bound)
    b_fc = jax.random.uniform(k6, (output_size,), jnp.float32, -bound, bound)
    return dict(layers=layers, w_fc=w_fc, b_fc=b_fc,
                input_size=input_size, hidden_size=h, output_size=output_size)


def prepare_params(params, *, mxu_dtype=jnp.bfloat16):
    """Pad/transpose PyTorch-layout params into lane-aligned kernel layout."""
    i_sz, h, o = params["input_size"], params["hidden_size"], params["output_size"]
    num_layers = len(params["layers"])
    i_pad = _round_up(i_sz, 128)      # lane-dense x loads for layer 0
    h_pad = _round_up(h, 128)         # 128-lane-aligned gate blocks
    o_pad = _round_up(o, 128)         # lane-dense output store

    def pad_gate_matrix(w, in_size, in_pad):
        # w: (4H, in) PyTorch layout -> (in_pad, 4*h_pad), zero-padded (exact).
        out = jnp.zeros((in_pad, 4 * h_pad), jnp.float32)
        for g in range(4):
            out = out.at[:in_size, g * h_pad:g * h_pad + h].set(
                w[g * h:(g + 1) * h, :].T)
        return out

    def pad_gate_bias(b):
        out = jnp.zeros((1, 4 * h_pad), jnp.float32)
        for g in range(4):
            out = out.at[0, g * h_pad:g * h_pad + h].set(b[g * h:(g + 1) * h])
        return out

    klayers = []
    for l, lp in enumerate(params["layers"]):
        in_size = i_sz if l == 0 else h
        in_pad = i_pad if l == 0 else h_pad
        w_ih = pad_gate_matrix(lp["w_ih"], in_size, in_pad).astype(mxu_dtype)
        w_hh = pad_gate_matrix(lp["w_hh"], h, h_pad).astype(mxu_dtype)
        bias = pad_gate_bias(lp["b_ih"] + lp["b_hh"])   # fused, kept f32
        klayers.append((w_ih, w_hh, bias))

    w_fc = (jnp.zeros((h_pad, o_pad), jnp.float32)
            .at[:h, :o].set(params["w_fc"].T).astype(mxu_dtype))
    b_fc = jnp.zeros((1, o_pad), jnp.float32).at[0, :o].set(params["b_fc"])

    arrays = dict(layers=klayers, w_fc=w_fc, b_fc=b_fc)
    config = LSTMConfig(i_sz, h, o, num_layers, i_pad, h_pad, o_pad, mxu_dtype)
    return arrays, config


# -----------------------------------------------------------------------------
# Generation-aware sizing helpers
# -----------------------------------------------------------------------------
def _num_tensorcores() -> int:
    # Among v5e/v6e/v7x, only v7x exposes 2 TensorCores per chip.
    try:
        kind = jax.devices()[0].device_kind.lower()
    except Exception:
        return 1
    return 2 if "v7" in kind else 1


def _vmem_limit_bytes() -> int:
    try:
        cap = int(pltpu.get_tpu_info().vmem_capacity_bytes)
    except Exception:
        cap = 64 * 1024 * 1024        # v7x-safe fallback
    # ~80% of physical, capped; leaves headroom for compiler-internal scratch.
    return int(min(cap * 0.8, 100 * 1024 * 1024))


def _choose_chunk(seq: int, requested: int, cap: int) -> int:
    chunk = max(1, min(requested, seq, cap))
    # Prefer a chunk that divides seq (no recurrence wasted on padded trailing
    # timesteps), as long as it is not much smaller than requested.
    best_div = 1
    for d in range(chunk, 0, -1):
        if seq % d == 0:
            best_div = d
            break
    if 2 * best_div >= chunk:
        chunk = best_div
    return chunk


# -----------------------------------------------------------------------------
# Forward wrapper
# -----------------------------------------------------------------------------
def simple_lstm_forward(x, arrays, *, config: LSTMConfig, time_block: int = 128,
                        single_buffer_weights: bool = True):
    """x: (batch, seq, input_size) -> (batch, seq, output_size)."""
    i_sz, o = config.input_size, config.output_size
    i_pad, h_pad, o_pad = config.i_pad, config.h_pad, config.o_pad
    num_layers = config.num_layers
    mxu_dtype = config.mxu_dtype
    mxu_bytes = jnp.dtype(mxu_dtype).itemsize

    batch, seq, _ = x.shape
    b_pad = _round_up(batch, 8)
    # Split the batch across TensorCores only on multi-TC chips (v7x);
    # on 1-TC chips the split halves MXU fill and doubles sequential steps.
    if _num_tensorcores() >= 2 and b_pad % 16 == 0:
        b_blk = b_pad // 2
    else:
        b_blk = b_pad
    nb = b_pad // b_blk

    # Generation-aware VMEM budget -> time-chunk sizing.
    vmem_limit = _vmem_limit_bytes()
    wmul = 1 if single_buffer_weights else 2
    weight_bytes = 0
    for l in range(num_layers):
        fin = i_pad if l == 0 else h_pad
        weight_bytes += (fin + h_pad) * 4 * h_pad * mxu_bytes + 4 * h_pad * 4
    weight_bytes += h_pad * o_pad * mxu_bytes + o_pad * 4
    weight_bytes *= wmul
    state_bytes = 2 * num_layers * b_blk * h_pad * 4
    per_t_bytes = b_blk * (4 * h_pad * 4            # xg scratch (f32)
                           + h_pad * mxu_bytes      # act scratch (compute dtype)
                           + 2 * i_pad * mxu_bytes  # x block (double-buffered)
                           + 2 * o_pad * 4)         # out block (double-buffered)
    budget = vmem_limit - weight_bytes - state_bytes - (2 << 20)
    chunk_cap = max(1, budget // max(per_t_bytes, 1))
    chunk = _choose_chunk(seq, time_block, chunk_cap)
    t_pad = _round_up(seq, chunk)
    nt = t_pad // chunk
    unroll = max(1, min(8, chunk))    # partial unroll: LLO visibility, no spills

    # Time-major + tile padding (zero padding is exact: padded gate lanes give
    # c = 0, h = 0 forever; padded batch rows / trailing padded timesteps are
    # sliced away before return).
    x_tm = jnp.transpose(x, (1, 0, 2))
    x_tm = jnp.pad(
        x_tm, ((0, t_pad - seq), (0, b_pad - batch), (0, i_pad - i_sz))
    ).astype(mxu_dtype)

    def wspec(shape):
        # Constant-index weight blocks: single-buffer to halve their VMEM.
        if single_buffer_weights:
            return pl.BlockSpec(shape, lambda b, t: (0,) * len(shape),
                                pipeline_mode=pl.Buffered(1))
        return pl.BlockSpec(shape, lambda b, t: (0,) * len(shape))

    in_specs = [pl.BlockSpec((chunk, b_blk, i_pad), lambda b, t: (t, b, 0))]
    args = [x_tm]
    for l, (w_ih, w_hh, bias) in enumerate(arrays["layers"]):
        fin = i_pad if l == 0 else h_pad
        in_specs += [wspec((fin, 4 * h_pad)),
                     wspec((h_pad, 4 * h_pad)),
                     wspec((1, 4 * h_pad))]
        args += [w_ih, w_hh, bias]
    in_specs += [wspec((h_pad, o_pad)), wspec((1, o_pad))]
    args += [arrays["w_fc"], arrays["b_fc"]]

    kernel = functools.partial(
        _fused_lstm_kernel, num_layers=num_layers,
        compute_dtype=mxu_dtype, unroll=unroll)

    y_tm = pl.pallas_call(
        kernel,
        out_shape=jax.ShapeDtypeStruct((t_pad, b_pad, o_pad), jnp.float32),
        grid_spec=pltpu.PrefetchScalarGridSpec(
            num_scalar_prefetch=0,
            grid=(nb, nt),
            in_specs=in_specs,
            out_specs=pl.BlockSpec((chunk, b_blk, o_pad), lambda b, t: (t, b, 0)),
            scratch_shapes=[
                pltpu.VMEM((chunk, b_blk, 4 * h_pad), jnp.float32),   # hoisted x-gates
                pltpu.VMEM((chunk, b_blk, h_pad), mxu_dtype),         # layer activations
                pltpu.VMEM((num_layers, b_blk, h_pad), jnp.float32),  # h state
                pltpu.VMEM((num_layers, b_blk, h_pad), jnp.float32),  # c state
            ],
        ),
        compiler_params=pltpu.CompilerParams(
            # Batch parallel (2nd TC on v7x), time strictly sequential.
            # Do NOT reorder the grid: h/c scratch is reset only at t == 0.
            dimension_semantics=("parallel", "arbitrary"),
            vmem_limit_bytes=vmem_limit,
        ),
    )(*args)

    return jnp.transpose(y_tm[:seq, :batch, :o], (1, 0, 2))


def run_forward(x, arrays, config, *, time_block: int = 128):
    """JIT + run; falls back to double-buffered weights if pl.Buffered(1)
    is rejected by the installed Pallas/Mosaic version."""
    last_err = None
    for single_buf in (True, False):
        fn = jax.jit(simple_lstm_forward,
                     static_argnames=("config", "time_block",
                                      "single_buffer_weights"))
        try:
            return jax.block_until_ready(
                fn(x, arrays, config=config, time_block=time_block,
                   single_buffer_weights=single_buf))
        except Exception as err:
            last_err = err
    raise last_err


# -----------------------------------------------------------------------------
# Pure-JAX reference (uses the unpadded PyTorch-layout params)
# -----------------------------------------------------------------------------
def reference_forward(x, params):
    h_sz = params["hidden_size"]
    batch, _, _ = x.shape
    h_seq = jnp.transpose(x, (1, 0, 2)).astype(jnp.float32)
    for lp in params["layers"]:
        w_ih_t, w_hh_t = lp["w_ih"].T, lp["w_hh"].T
        bias = (lp["b_ih"] + lp["b_hh"])[None, :]

        def step(carry, x_t, w_ih_t=w_ih_t, w_hh_t=w_hh_t, bias=bias):
            h, c = carry
            gates = x_t @ w_ih_t + h @ w_hh_t + bias
            i = jax.nn.sigmoid(gates[:, 0 * h_sz:1 * h_sz])
            f = jax.nn.sigmoid(gates[:, 1 * h_sz:2 * h_sz])
            g = jnp.tanh(gates[:, 2 * h_sz:3 * h_sz])
            o = jax.nn.sigmoid(gates[:, 3 * h_sz:4 * h_sz])
            c = f * c + i * g
            h = o * jnp.tanh(c)
            return (h, c), h

        init = (jnp.zeros((batch, h_sz), jnp.float32),
                jnp.zeros((batch, h_sz), jnp.float32))
        _, h_seq = jax.lax.scan(step, init, h_seq)
    y = jnp.maximum(h_seq, 0.0) @ params["w_fc"].T + params["b_fc"][None, :]
    return jnp.transpose(y, (1, 0, 2))


if __name__ == "__main__":
    batch, seq_len = 2, 8
    input_size, hidden_size, output_size, num_layers = 16, 32, 8, 2

    key = jax.random.PRNGKey(0)
    key, xkey = jax.random.split(key)
    x = jax.random.normal(xkey, (batch, seq_len, input_size), jnp.float32)

    torch_params = init_params(key, input_size, hidden_size, output_size, num_layers)
    ref = reference_forward(x, torch_params)

    # f32 MXU-operand path (exact vs reference).
    arrays_f32, cfg_f32 = prepare_params(torch_params, mxu_dtype=jnp.float32)
    out = run_forward(x, arrays_f32, cfg_f32)
    assert out.shape == (batch, seq_len, output_size), out.shape
    assert jnp.allclose(out, ref, atol=1e-4, rtol=1e-4), (
        float(jnp.max(jnp.abs(out - ref))))

    # bf16 MXU-operand path (default on all generations); f32 gate accumulation,
    # bias and state -> loose tolerance.
    arrays_bf16, cfg_bf16 = prepare_params(torch_params)  # bf16 default
    out_bf16 = run_forward(x, arrays_bf16, cfg_bf16)
    assert out_bf16.shape == (batch, seq_len, output_size), out_bf16.shape
    assert jnp.allclose(out_bf16, ref, atol=1e-1, rtol=1e-1), (
        float(jnp.max(jnp.abs(out_bf16 - ref))))

    print("KERNEL_OK")
</pallas_src>

<mosaic_0001>
module attributes {stable_mosaic.version = 11 : i64} {
  func.func @_fused_lstm_kernel(%arg0: i32, %arg1: i32, %arg2: memref<8x8x128xf32, #tpu.memory_space<vmem>>, %arg3: memref<128x512xf32, #tpu.memory_space<vmem>>, %arg4: memref<128x512xf32, #tpu.memory_space<vmem>>, %arg5: memref<1x512xf32, #tpu.memory_space<vmem>>, %arg6: memref<128x512xf32, #tpu.memory_space<vmem>>, %arg7: memref<128x512xf32, #tpu.memory_space<vmem>>, %arg8: memref<1x512xf32, #tpu.memory_space<vmem>>, %arg9: memref<128x128xf32, #tpu.memory_space<vmem>>, %arg10: memref<1x128xf32, #tpu.memory_space<vmem>>, %arg11: memref<8x8x128xf32, #tpu.memory_space<vmem>>, %arg12: memref<8x8x512xf32, #tpu.memory_space<vmem>>, %arg13: memref<8x8x128xf32, #tpu.memory_space<vmem>>, %arg14: memref<2x8x128xf32, #tpu.memory_space<vmem>>, %arg15: memref<2x8x128xf32, #tpu.memory_space<vmem>>) attributes {dimension_semantics = [#tpu.dimension_semantics<parallel>, #tpu.dimension_semantics<arbitrary>], iteration_bounds = array<i64: 1, 1>, scalar_prefetch = 0 : i64, scratch_operands = 4 : i64, tpu.core_type = #tpu.core_type<tc>, window_params = [{transform_indices = @transform_0, window_bounds = array<i64: 8, 8, 128>}, {pipeline_mode = #tpu.pipeline_mode<synchronous>, transform_indices = @transform_1, window_bounds = array<i64: 128, 512>}, {pipeline_mode = #tpu.pipeline_mode<synchronous>, transform_indices = @transform_2, window_bounds = array<i64: 128, 512>}, {pipeline_mode = #tpu.pipeline_mode<synchronous>, transform_indices = @transform_3, window_bounds = array<i64: 1, 512>}, {pipeline_mode = #tpu.pipeline_mode<synchronous>, transform_indices = @transform_4, window_bounds = array<i64: 128, 512>}, {pipeline_mode = #tpu.pipeline_mode<synchronous>, transform_indices = @transform_5, window_bounds = array<i64: 128, 512>}, {pipeline_mode = #tpu.pipeline_mode<synchronous>, transform_indices = @transform_6, window_bounds = array<i64: 1, 512>}, {pipeline_mode = #tpu.pipeline_mode<synchronous>, transform_indices = @transform_7, window_bounds = array<i64: 128, 128>}, {pipeline_mode = #tpu.pipeline_mode<synchronous>, transform_indices = @transform_8, window_bounds = array<i64: 1, 128>}, {transform_indices = @transform_9, window_bounds = array<i64: 8, 8, 128>}]} {
    %c0_i32 = arith.constant 0 : i32
    %0 = arith.cmpi eq, %arg1, %c0_i32 : i32
    %1 = arith.extui %0 : i1 to i32
    %c0_i32_0 = arith.constant 0 : i32
    %2 = arith.cmpi ne, %1, %c0_i32_0 : i32
    scf.if %2 {
      %cst_294 = arith.constant 0.000000e+00 : f32
      %694 = vector.broadcast %cst_294 : f32 to vector<2x8x128xf32>
      %c0_295 = arith.constant 0 : index
      %c0_296 = arith.constant 0 : index
      %c0_297 = arith.constant 0 : index
      %695 = vector.load %arg14[%c0_295, %c0_296, %c0_297] : memref<2x8x128xf32, #tpu.memory_space<vmem>>, vector<2x8x128xf32>
      tpu.vector_store %arg14[%c0_295, %c0_296, %c0_297], %694 {strides = array<i32>} : memref<2x8x128xf32, #tpu.memory_space<vmem>>, vector<2x8x128xf32>,
      %cst_298 = arith.constant 0.000000e+00 : f32
      %696 = vector.broadcast %cst_298 : f32 to vector<2x8x128xf32>
      %c0_299 = arith.constant 0 : index
      %c0_300 = arith.constant 0 : index
      %c0_301 = arith.constant 0 : index
      %697 = vector.load %arg15[%c0_299, %c0_300, %c0_301] : memref<2x8x128xf32, #tpu.memory_space<vmem>>, vector<2x8x128xf32>
      tpu.vector_store %arg15[%c0_299, %c0_300, %c0_301], %696 {strides = array<i32>} : memref<2x8x128xf32, #tpu.memory_space<vmem>>, vector<2x8x128xf32>,
    } else {
    }
    %c0 = arith.constant 0 : index
    %c0_1 = arith.constant 0 : index
    %c0_2 = arith.constant 0 : index
    %3 = vector.load %arg2[%c0, %c0_1, %c0_2] : memref<8x8x128xf32, #tpu.memory_space<vmem>>, vector<8x8x128xf32>
    %4 = vector.shape_cast %3 : vector<8x8x128xf32> to vector<64x128xf32>
    %c0_3 = arith.constant 0 : index
    %c0_4 = arith.constant 0 : index
    %5 = vector.load %arg3[%c0_3, %c0_4] : memref<128x512xf32, #tpu.memory_space<vmem>>, vector<128x512xf32>
    %cst = arith.constant dense<0.000000e+00> : vector<64x512xf32>
    %6 = tpu.matmul %4, %5, %cst {dimension_numbers = #tpu.dot_dimension_numbers<[1], [0], [0], [1], [0, 0, 1, 1], [], []>} : vector<64x128xf32>, vector<128x512xf32>, vector<64x512xf32> -> vector<64x512xf32>
    %c0_5 = arith.constant 0 : index
    %c0_6 = arith.constant 0 : index
    %7 = vector.load %arg5[%c0_5, %c0_6] : memref<1x512xf32, #tpu.memory_space<vmem>>, vector<1x512xf32>
    %8 = vector.broadcast %7 : vector<1x512xf32> to vector<64x512xf32>
    %9 = arith.addf %6, %8 : vector<64x512xf32>
    %10 = vector.shape_cast %9 : vector<64x512xf32> to vector<8x8x512xf32>
    %c0_7 = arith.constant 0 : index
    %c0_8 = arith.constant 0 : index
    %c0_9 = arith.constant 0 : index
    %11 = vector.load %arg12[%c0_7, %c0_8, %c0_9] : memref<8x8x512xf32, #tpu.memory_space<vmem>>, vector<8x8x512xf32>
    tpu.vector_store %arg12[%c0_7, %c0_8, %c0_9], %10 {strides = array<i32>} : memref<8x8x512xf32, #tpu.memory_space<vmem>>, vector<8x8x512xf32>,
    %c0_10 = arith.constant 0 : index
    %c0_11 = arith.constant 0 : index
    %12 = vector.load %arg4[%c0_10, %c0_11] : memref<128x512xf32, #tpu.memory_space<vmem>>, vector<128x512xf32>
    %c0_12 = arith.constant 0 : index
    %c0_13 = arith.constant 0 : index
    %c0_14 = arith.constant 0 : index
    %13 = vector.load %arg14[%c0_12, %c0_13, %c0_14] : memref<2x8x128xf32, #tpu.memory_space<vmem>>, vector<1x8x128xf32>
    %14 = vector.shape_cast %13 : vector<1x8x128xf32> to vector<8x128xf32>
    %c0_15 = arith.constant 0 : index
    %c0_16 = arith.constant 0 : index
    %c0_17 = arith.constant 0 : index
    %15 = vector.load %arg15[%c0_15, %c0_16, %c0_17] : memref<2x8x128xf32, #tpu.memory_space<vmem>>, vector<1x8x128xf32>
    %16 = vector.shape_cast %15 : vector<1x8x128xf32> to vector<8x128xf32>
    %c0_i32_18 = arith.constant 0 : i32
    %17 = arith.index_cast %c0_i32_18 : i32 to index
    %c0_19 = arith.constant 0 : index
    %c0_20 = arith.constant 0 : index
    %18 = vector.load %arg12[%17, %c0_19, %c0_20] : memref<8x8x512xf32, #tpu.memory_space<vmem>>, vector<1x8x512xf32>
    %19 = vector.shape_cast %18 : vector<1x8x512xf32> to vector<8x512xf32>
    %cst_21 = arith.constant dense<0.000000e+00> : vector<8x512xf32>
    %20 = tpu.matmul %14, %12, %cst_21 {dimension_numbers = #tpu.dot_dimension_numbers<[1], [0], [0], [1], [0, 0, 1, 1], [], []>} : vector<8x128xf32>, vector<128x512xf32>, vector<8x512xf32> -> vector<8x512xf32>
    %21 = arith.addf %19, %20 : vector<8x512xf32>
    %22 = vector.extract_strided_slice %21 {offsets = [0, 0], sizes = [8, 128], strides = [1, 1]} : vector<8x512xf32> to vector<8x128xf32>
    %cst_22 = arith.constant 5.000000e-01 : f32
    %23 = vector.broadcast %cst_22 : f32 to vector<8x128xf32>
    %24 = arith.mulf %23, %22 : vector<8x128xf32>
    %25 = math.tanh %24 : vector<8x128xf32>
    %cst_23 = arith.constant 1.000000e+00 : f32
    %26 = vector.broadcast %cst_23 : f32 to vector<8x128xf32>
    %27 = arith.addf %25, %26 : vector<8x128xf32>
    %cst_24 = arith.constant 5.000000e-01 : f32
    %28 = vector.broadcast %cst_24 : f32 to vector<8x128xf32>
    %29 = arith.mulf %28, %27 : vector<8x128xf32>
    %30 = vector.extract_strided_slice %21 {offsets = [0, 128], sizes = [8, 128], strides = [1, 1]} : vector<8x512xf32> to vector<8x128xf32>
    %cst_25 = arith.constant 5.000000e-01 : f32
    %31 = vector.broadcast %cst_25 : f32 to vector<8x128xf32>
    %32 = arith.mulf %31, %30 : vector<8x128xf32>
    %33 = math.tanh %32 : vector<8x128xf32>
    %cst_26 = arith.constant 1.000000e+00 : f32
    %34 = vector.broadcast %cst_26 : f32 to vector<8x128xf32>
    %35 = arith.addf %33, %34 : vector<8x128xf32>
    %cst_27 = arith.constant 5.000000e-01 : f32
    %36 = vector.broadcast %cst_27 : f32 to vector<8x128xf32>
    %37 = arith.mulf %36, %35 : vector<8x128xf32>
    %38 = vector.extract_strided_slice %21 {offsets = [0, 256], sizes = [8, 128], strides = [1, 1]} : vector<8x512xf32> to vector<8x128xf32>
    %39 = math.tanh %38 : vector<8x128xf32>
    %40 = vector.extract_strided_slice %21 {offsets = [0, 384], sizes = [8, 128], strides = [1, 1]} : vector<8x512xf32> to vector<8x128xf32>
    %cst_28 = arith.constant 5.000000e-01 : f32
    %41 = vector.broadcast %cst_28 : f32 to vector<8x128xf32>
    %42 = arith.mulf %41, %40 : vector<8x128xf32>
    %43 = math.tanh %42 : vector<8x128xf32>
    %cst_29 = arith.constant 1.000000e+00 : f32
    %44 = vector.broadcast %cst_29 : f32 to vector<8x128xf32>
    %45 = arith.addf %43, %44 : vector<8x128xf32>
    %cst_30 = arith.constant 5.000000e-01 : f32
    %46 = vector.broadcast %cst_30 : f32 to vector<8x128xf32>
    %47 = arith.mulf %46, %45 : vector<8x128xf32>
    %48 = arith.mulf %37, %16 : vector<8x128xf32>
    %49 = arith.mulf %29, %39 : vector<8x128xf32>
    %50 = arith.addf %48, %49 : vector<8x128xf32>
    %51 = math.tanh %50 : vector<8x128xf32>
    %52 = arith.mulf %47, %51 : vector<8x128xf32>
    %53 = arith.index_cast %c0_i32_18 : i32 to index
    %c0_31 = arith.constant 0 : index
    %c0_32 = arith.constant 0 : index
    %54 = vector.load %arg13[%53, %c0_31, %c0_32] : memref<8x8x128xf32, #tpu.memory_space<vmem>>, vector<1x8x128xf32>
    %55 = vector.shape_cast %54 : vector<1x8x128xf32> to vector<8x128xf32>
    %56 = vector.shape_cast %52 : vector<8x128xf32> to vector<1x8x128xf32>
    tpu.vector_store %arg13[%53, %c0_31, %c0_32], %56 {strides = array<i32>} : memref<8x8x128xf32, #tpu.memory_space<vmem>>, vector<1x8x128xf32>,
    %c1_i32 = arith.constant 1 : i32
    %57 = arith.index_cast %c1_i32 : i32 to index
    %c0_33 = arith.constant 0 : index
    %c0_34 = arith.constant 0 : index
    %58 = vector.load %arg12[%57, %c0_33, %c0_34] : memref<8x8x512xf32, #tpu.memory_space<vmem>>, vector<1x8x512xf32>
    %59 = vector.shape_cast %58 : vector<1x8x512xf32> to vector<8x512xf32>
    %cst_35 = arith.constant dense<0.000000e+00> : vector<8x512xf32>
    %60 = tpu.matmul %52, %12, %cst_35 {dimension_numbers = #tpu.dot_dimension_numbers<[1], [0], [0], [1], [0, 0, 1, 1], [], []>} : vector<8x128xf32>, vector<128x512xf32>, vector<8x512xf32> -> vector<8x512xf32>
    %61 = arith.addf %59, %60 : vector<8x512xf32>
    %62 = vector.extract_strided_slice %61 {offsets = [0, 0], sizes = [8, 128], strides = [1, 1]} : vector<8x512xf32> to vector<8x128xf32>
    %cst_36 = arith.constant 5.000000e-01 : f32
    %63 = vector.broadcast %cst_36 : f32 to vector<8x128xf32>
    %64 = arith.mulf %63, %62 : vector<8x128xf32>
    %65 = math.tanh %64 : vector<8x128xf32>
    %cst_37 = arith.constant 1.000000e+00 : f32
    %66 = vector.broadcast %cst_37 : f32 to vector<8x128xf32>
    %67 = arith.addf %65, %66 : vector<8x128xf32>
    %cst_38 = arith.constant 5.000000e-01 : f32
    %68 = vector.broadcast %cst_38 : f32 to vector<8x128xf32>
    %69 = arith.mulf %68, %67 : vector<8x128xf32>
    %70 = vector.extract_strided_slice %61 {offsets = [0, 128], sizes = [8, 128], strides = [1, 1]} : vector<8x512xf32> to vector<8x128xf32>
    %cst_39 = arith.constant 5.000000e-01 : f32
    %71 = vector.broadcast %cst_39 : f32 to vector<8x128xf32>
    %72 = arith.mulf %71, %70 : vector<8x128xf32>
    %73 = math.tanh %72 : vector<8x128xf32>
    %cst_40 = arith.constant 1.000000e+00 : f32
    %74 = vector.broadcast %cst_40 : f32 to vector<8x128xf32>
    %75 = arith.addf %73, %74 : vector<8x128xf32>
    %cst_41 = arith.constant 5.000000e-01 : f32
    %76 = vector.broadcast %cst_41 : f32 to vector<8x128xf32>
    %77 = arith.mulf %76, %75 : vector<8x128xf32>
    %78 = vector.extract_strided_slice %61 {offsets = [0, 256], sizes = [8, 128], strides = [1, 1]} : vector<8x512xf32> to vector<8x128xf32>
    %79 = math.tanh %78 : vector<8x128xf32>
    %80 = vector.extract_strided_slice %61 {offsets = [0, 384], sizes = [8, 128], strides = [1, 1]} : vector<8x512xf32> to vector<8x128xf32>
    %cst_42 = arith.constant 5.000000e-01 : f32
    %81 = vector.broadcast %cst_42 : f32 to vector<8x128xf32>
    %82 = arith.mulf %81, %80 : vector<8x128xf32>
    %83 = math.tanh %82 : vector<8x128xf32>
    %cst_43 = arith.constant 1.000000e+00 : f32
    %84 = vector.broadcast %cst_43 : f32 to vector<8x128xf32>
    %85 = arith.addf %83, %84 : vector<8x128xf32>
    %cst_44 = arith.constant 5.000000e-01 : f32
    %86 = vector.broadcast %cst_44 : f32 to vector<8x128xf32>
    %87 = arith.mulf %86, %85 : vector<8x128xf32>
    %88 = arith.mulf %77, %50 : vector<8x128xf32>
    %89 = arith.mulf %69, %79 : vector<8x128xf32>
    %90 = arith.addf %88, %89 : vector<8x128xf32>
    %91 = math.tanh %90 : vector<8x128xf32>
    %92 = arith.mulf %87, %91 : vector<8x128xf32>
    %93 = arith.index_cast %c1_i32 : i32 to index
    %c0_45 = arith.constant 0 : index
    %c0_46 = arith.constant 0 : index
    %94 = vector.load %arg13[%93, %c0_45, %c0_46] : memref<8x8x128xf32, #tpu.memory_space<vmem>>, vector<1x8x128xf32>
    %95 = vector.shape_cast %94 : vector<1x8x128xf32> to vector<8x128xf32>
    %96 = vector.shape_cast %92 : vector<8x128xf32> to vector<1x8x128xf32>
    tpu.vector_store %arg13[%93, %c0_45, %c0_46], %96 {strides = array<i32>} : memref<8x8x128xf32, #tpu.memory_space<vmem>>, vector<1x8x128xf32>,
    %c2_i32 = arith.constant 2 : i32
    %97 = arith.index_cast %c2_i32 : i32 to index
    %c0_47 = arith.constant 0 : index
    %c0_48 = arith.constant 0 : index
    %98 = vector.load %arg12[%97, %c0_47, %c0_48] : memref<8x8x512xf32, #tpu.memory_space<vmem>>, vector<1x8x512xf32>
    %99 = vector.shape_cast %98 : vector<1x8x512xf32> to vector<8x512xf32>
    %cst_49 = arith.constant dense<0.000000e+00> : vector<8x512xf32>
    %100 = tpu.matmul %92, %12, %cst_49 {dimension_numbers = #tpu.dot_dimension_numbers<[1], [0], [0], [1], [0, 0, 1, 1], [], []>} : vector<8x128xf32>, vector<128x512xf32>, vector<8x512xf32> -> vector<8x512xf32>
    %101 = arith.addf %99, %100 : vector<8x512xf32>
    %102 = vector.extract_strided_slice %101 {offsets = [0, 0], sizes = [8, 128], strides = [1, 1]} : vector<8x512xf32> to vector<8x128xf32>
    %cst_50 = arith.constant 5.000000e-01 : f32
    %103 = vector.broadcast %cst_50 : f32 to vector<8x128xf32>
    %104 = arith.mulf %103, %102 : vector<8x128xf32>
    %105 = math.tanh %104 : vector<8x128xf32>
    %cst_51 = arith.constant 1.000000e+00 : f32
    %106 = vector.broadcast %cst_51 : f32 to vector<8x128xf32>
    %107 = arith.addf %105, %106 : vector<8x128xf32>
    %cst_52 = arith.constant 5.000000e-01 : f32
    %108 = vector.broadcast %cst_52 : f32 to vector<8x128xf32>
    %109 = arith.mulf %108, %107 : vector<8x128xf32>
    %110 = vector.extract_strided_slice %101 {offsets = [0, 128], sizes = [8, 128], strides = [1, 1]} : vector<8x512xf32> to vector<8x128xf32>
    %cst_53 = arith.constant 5.000000e-01 : f32
    %111 = vector.broadcast %cst_53 : f32 to vector<8x128xf32>
    %112 = arith.mulf %111, %110 : vector<8x128xf32>
    %113 = math.tanh %112 : vector<8x128xf32>
    %cst_54 = arith.constant 1.000000e+00 : f32
    %114 = vector.broadcast %cst_54 : f32 to vector<8x128xf32>
    %115 = arith.addf %113, %114 : vector<8x128xf32>
    %cst_55 = arith.constant 5.000000e-01 : f32
    %116 = vector.broadcast %cst_55 : f32 to vector<8x128xf32>
    %117 = arith.mulf %116, %115 : vector<8x128xf32>
    %118 = vector.extract_strided_slice %101 {offsets = [0, 256], sizes = [8, 128], strides = [1, 1]} : vector<8x512xf32> to vector<8x128xf32>
    %119 = math.tanh %118 : vector<8x128xf32>
    %120 = vector.extract_strided_slice %101 {offsets = [0, 384], sizes = [8, 128], strides = [1, 1]} : vector<8x512xf32> to vector<8x128xf32>
    %cst_56 = arith.constant 5.000000e-01 : f32
    %121 = vector.broadcast %cst_56 : f32 to vector<8x128xf32>
    %122 = arith.mulf %121, %120 : vector<8x128xf32>
    %123 = math.tanh %122 : vector<8x128xf32>
    %cst_57 = arith.constant 1.000000e+00 : f32
    %124 = vector.broadcast %cst_57 : f32 to vector<8x128xf32>
    %125 = arith.addf %123, %124 : vector<8x128xf32>
    %cst_58 = arith.constant 5.000000e-01 : f32
    %126 = vector.broadcast %cst_58 : f32 to vector<8x128xf32>
    %127 = arith.mulf %126, %125 : vector<8x128xf32>
    %128 = arith.mulf %117, %90 : vector<8x128xf32>
    %129 = arith.mulf %109, %119 : vector<8x128xf32>
    %130 = arith.addf %128, %129 : vector<8x128xf32>
    %131 = math.tanh %130 : vector<8x128xf32>
    %132 = arith.mulf %127, %131 : vector<8x128xf32>
    %133 = arith.index_cast %c2_i32 : i32 to index
    %c0_59 = arith.constant 0 : index
    %c0_60 = arith.constant 0 : index
    %134 = vector.load %arg13[%133, %c0_59, %c0_60] : memref<8x8x128xf32, #tpu.memory_space<vmem>>, vector<1x8x128xf32>
    %135 = vector.shape_cast %134 : vector<1x8x128xf32> to vector<8x128xf32>
    %136 = vector.shape_cast %132 : vector<8x128xf32> to vector<1x8x128xf32>
    tpu.vector_store %arg13[%133, %c0_59, %c0_60], %136 {strides = array<i32>} : memref<8x8x128xf32, #tpu.memory_space<vmem>>, vector<1x8x128xf32>,
    %c3_i32 = arith.constant 3 : i32
    %137 = arith.index_cast %c3_i32 : i32 to index
    %c0_61 = arith.constant 0 : index
    %c0_62 = arith.constant 0 : index
    %138 = vector.load %arg12[%137, %c0_61, %c0_62] : memref<8x8x512xf32, #tpu.memory_space<vmem>>, vector<1x8x512xf32>
    %139 = vector.shape_cast %138 : vector<1x8x512xf32> to vector<8x512xf32>
    %cst_63 = arith.constant dense<0.000000e+00> : vector<8x512xf32>
    %140 = tpu.matmul %132, %12, %cst_63 {dimension_numbers = #tpu.dot_dimension_numbers<[1], [0], [0], [1], [0, 0, 1, 1], [], []>} : vector<8x128xf32>, vector<128x512xf32>, vector<8x512xf32> -> vector<8x512xf32>
    %141 = arith.addf %139, %140 : vector<8x512xf32>
    %142 = vector.extract_strided_slice %141 {offsets = [0, 0], sizes = [8, 128], strides = [1, 1]} : vector<8x512xf32> to vector<8x128xf32>
    %cst_64 = arith.constant 5.000000e-01 : f32
    %143 = vector.broadcast %cst_64 : f32 to vector<8x128xf32>
    %144 = arith.mulf %143, %142 : vector<8x128xf32>
    %145 = math.tanh %144 : vector<8x128xf32>
    %cst_65 = arith.constant 1.000000e+00 : f32
    %146 = vector.broadcast %cst_65 : f32 to vector<8x128xf32>
    %147 = arith.addf %145, %146 : vector<8x128xf32>
    %cst_66 = arith.constant 5.000000e-01 : f32
    %148 = vector.broadcast %cst_66 : f32 to vector<8x128xf32>
    %149 = arith.mulf %148, %147 : vector<8x128xf32>
    %150 = vector.extract_strided_slice %141 {offsets = [0, 128], sizes = [8, 128], strides = [1, 1]} : vector<8x512xf32> to vector<8x128xf32>
    %cst_67 = arith.constant 5.000000e-01 : f32
    %151 = vector.broadcast %cst_67 : f32 to vector<8x128xf32>
    %152 = arith.mulf %151, %150 : vector<8x128xf32>
    %153 = math.tanh %152 : vector<8x128xf32>
    %cst_68 = arith.constant 1.000000e+00 : f32
    %154 = vector.broadcast %cst_68 : f32 to vector<8x128xf32>
    %155 = arith.addf %153, %154 : vector<8x128xf32>
    %cst_69 = arith.constant 5.000000e-01 : f32
    %156 = vector.broadcast %cst_69 : f32 to vector<8x128xf32>
    %157 = arith.mulf %156, %155 : vector<8x128xf32>
    %158 = vector.extract_strided_slice %141 {offsets = [0, 256], sizes = [8, 128], strides = [1, 1]} : vector<8x512xf32> to vector<8x128xf32>
    %159 = math.tanh %158 : vector<8x128xf32>
    %160 = vector.extract_strided_slice %141 {offsets = [0, 384], sizes = [8, 128], strides = [1, 1]} : vector<8x512xf32> to vector<8x128xf32>
    %cst_70 = arith.constant 5.000000e-01 : f32
    %161 = vector.broadcast %cst_70 : f32 to vector<8x128xf32>
    %162 = arith.mulf %161, %160 : vector<8x128xf32>
    %163 = math.tanh %162 : vector<8x128xf32>
    %cst_71 = arith.constant 1.000000e+00 : f32
    %164 = vector.broadcast %cst_71 : f32 to vector<8x128xf32>
    %165 = arith.addf %163, %164 : vector<8x128xf32>
    %cst_72 = arith.constant 5.000000e-01 : f32
    %166 = vector.broadcast %cst_72 : f32 to vector<8x128xf32>
    %167 = arith.mulf %166, %165 : vector<8x128xf32>
    %168 = arith.mulf %157, %130 : vector<8x128xf32>
    %169 = arith.mulf %149, %159 : vector<8x128xf32>
    %170 = arith.addf %168, %169 : vector<8x128xf32>
    %171 = math.tanh %170 : vector<8x128xf32>
    %172 = arith.mulf %167, %171 : vector<8x128xf32>
    %173 = arith.index_cast %c3_i32 : i32 to index
    %c0_73 = arith.constant 0 : index
    %c0_74 = arith.constant 0 : index
    %174 = vector.load %arg13[%173, %c0_73, %c0_74] : memref<8x8x128xf32, #tpu.memory_space<vmem>>, vector<1x8x128xf32>
    %175 = vector.shape_cast %174 : vector<1x8x128xf32> to vector<8x128xf32>
    %176 = vector.shape_cast %172 : vector<8x128xf32> to vector<1x8x128xf32>
    tpu.vector_store %arg13[%173, %c0_73, %c0_74], %176 {strides = array<i32>} : memref<8x8x128xf32, #tpu.memory_space<vmem>>, vector<1x8x128xf32>,
    %c4_i32 = arith.constant 4 : i32
    %177 = arith.index_cast %c4_i32 : i32 to index
    %c0_75 = arith.constant 0 : index
    %c0_76 = arith.constant 0 : index
    %178 = vector.load %arg12[%177, %c0_75, %c0_76] : memref<8x8x512xf32, #tpu.memory_space<vmem>>, vector<1x8x512xf32>
    %179 = vector.shape_cast %178 : vector<1x8x512xf32> to vector<8x512xf32>
    %cst_77 = arith.constant dense<0.000000e+00> : vector<8x512xf32>
    %180 = tpu.matmul %172, %12, %cst_77 {dimension_numbers = #tpu.dot_dimension_numbers<[1], [0], [0], [1], [0, 0, 1, 1], [], []>} : vector<8x128xf32>, vector<128x512xf32>, vector<8x512xf32> -> vector<8x512xf32>
    %181 = arith.addf %179, %180 : vector<8x512xf32>
    %182 = vector.extract_strided_slice %181 {offsets = [0, 0], sizes = [8, 128], strides = [1, 1]} : vector<8x512xf32> to vector<8x128xf32>
    %cst_78 = arith.constant 5.000000e-01 : f32
    %183 = vector.broadcast %cst_78 : f32 to vector<8x128xf32>
    %184 = arith.mulf %183, %182 : vector<8x128xf32>
    %185 = math.tanh %184 : vector<8x128xf32>
    %cst_79 = arith.constant 1.000000e+00 : f32
    %186 = vector.broadcast %cst_79 : f32 to vector<8x128xf32>
    %187 = arith.addf %185, %186 : vector<8x128xf32>
    %cst_80 = arith.constant 5.000000e-01 : f32
    %188 = vector.broadcast %cst_80 : f32 to vector<8x128xf32>
    %189 = arith.mulf %188, %187 : vector<8x128xf32>
    %190 = vector.extract_strided_slice %181 {offsets = [0, 128], sizes = [8, 128], strides = [1, 1]} : vector<8x512xf32> to vector<8x128xf32>
    %cst_81 = arith.constant 5.000000e-01 : f32
    %191 = vector.broadcast %cst_81 : f32 to vector<8x128xf32>
    %192 = arith.mulf %191, %190 : vector<8x128xf32>
    %193 = math.tanh %192 : vector<8x128xf32>
    %cst_82 = arith.constant 1.000000e+00 : f32
    %194 = vector.broadcast %cst_82 : f32 to vector<8x128xf32>
    %195 = arith.addf %193, %194 : vector<8x128xf32>
    %cst_83 = arith.constant 5.000000e-01 : f32
    %196 = vector.broadcast %cst_83 : f32 to vector<8x128xf32>
    %197 = arith.mulf %196, %195 : vector<8x128xf32>
    %198 = vector.extract_strided_slice %181 {offsets = [0, 256], sizes = [8, 128], strides = [1, 1]} : vector<8x512xf32> to vector<8x128xf32>
    %199 = math.tanh %198 : vector<8x128xf32>
    %200 = vector.extract_strided_slice %181 {offsets = [0, 384], sizes = [8, 128], strides = [1, 1]} : vector<8x512xf32> to vector<8x128xf32>
    %cst_84 = arith.constant 5.000000e-01 : f32
    %201 = vector.broadcast %cst_84 : f32 to vector<8x128xf32>
    %202 = arith.mulf %201, %200 : vector<8x128xf32>
    %203 = math.tanh %202 : vector<8x128xf32>
    %cst_85 = arith.constant 1.000000e+00 : f32
    %204 = vector.broadcast %cst_85 : f32 to vector<8x128xf32>
    %205 = arith.addf %203, %204 : vector<8x128xf32>
    %cst_86 = arith.constant 5.000000e-01 : f32
    %206 = vector.broadcast %cst_86 : f32 to vector<8x128xf32>
    %207 = arith.mulf %206, %205 : vector<8x128xf32>
    %208 = arith.mulf %197, %170 : vector<8x128xf32>
    %209 = arith.mulf %189, %199 : vector<8x128xf32>
    %210 = arith.addf %208, %209 : vector<8x128xf32>
    %211 = math.tanh %210 : vector<8x128xf32>
    %212 = arith.mulf %207, %211 : vector<8x128xf32>
    %213 = arith.index_cast %c4_i32 : i32 to index
    %c0_87 = arith.constant 0 : index
    %c0_88 = arith.constant 0 : index
    %214 = vector.load %arg13[%213, %c0_87, %c0_88] : memref<8x8x128xf32, #tpu.memory_space<vmem>>, vector<1x8x128xf32>
    %215 = vector.shape_cast %214 : vector<1x8x128xf32> to vector<8x128xf32>
    %216 = vector.shape_cast %212 : vector<8x128xf32> to vector<1x8x128xf32>
    tpu.vector_store %arg13[%213, %c0_87, %c0_88], %216 {strides = array<i32>} : memref<8x8x128xf32, #tpu.memory_space<vmem>>, vector<1x8x128xf32>,
    %c5_i32 = arith.constant 5 : i32
    %217 = arith.index_cast %c5_i32 : i32 to index
    %c0_89 = arith.constant 0 : index
    %c0_90 = arith.constant 0 : index
    %218 = vector.load %arg12[%217, %c0_89, %c0_90] : memref<8x8x512xf32, #tpu.memory_space<vmem>>, vector<1x8x512xf32>
    %219 = vector.shape_cast %218 : vector<1x8x512xf32> to vector<8x512xf32>
    %cst_91 = arith.constant dense<0.000000e+00> : vector<8x512xf32>
    %220 = tpu.matmul %212, %12, %cst_91 {dimension_numbers = #tpu.dot_dimension_numbers<[1], [0], [0], [1], [0, 0, 1, 1], [], []>} : vector<8x128xf32>, vector<128x512xf32>, vector<8x512xf32> -> vector<8x512xf32>
    %221 = arith.addf %219, %220 : vector<8x512xf32>
    %222 = vector.extract_strided_slice %221 {offsets = [0, 0], sizes = [8, 128], strides = [1, 1]} : vector<8x512xf32> to vector<8x128xf32>
    %cst_92 = arith.constant 5.000000e-01 : f32
    %223 = vector.broadcast %cst_92 : f32 to vector<8x128xf32>
    %224 = arith.mulf %223, %222 : vector<8x128xf32>
    %225 = math.tanh %224 : vector<8x128xf32>
    %cst_93 = arith.constant 1.000000e+00 : f32
    %226 = vector.broadcast %cst_93 : f32 to vector<8x128xf32>
    %227 = arith.addf %225, %226 : vector<8x128xf32>
    %cst_94 = arith.constant 5.000000e-01 : f32
    %228 = vector.broadcast %cst_94 : f32 to vector<8x128xf32>
    %229 = arith.mulf %228, %227 : vector<8x128xf32>
    %230 = vector.extract_strided_slice %221 {offsets = [0, 128], sizes = [8, 128], strides = [1, 1]} : vector<8x512xf32> to vector<8x128xf32>
    %cst_95 = arith.constant 5.000000e-01 : f32
    %231 = vector.broadcast %cst_95 : f32 to vector<8x128xf32>
    %232 = arith.mulf %231, %230 : vector<8x128xf32>
    %233 = math.tanh %232 : vector<8x128xf32>
    %cst_96 = arith.constant 1.000000e+00 : f32
    %234 = vector.broadcast %cst_96 : f32 to vector<8x128xf32>
    %235 = arith.addf %233, %234 : vector<8x128xf32>
    %cst_97 = arith.constant 5.000000e-01 : f32
    %236 = vector.broadcast %cst_97 : f32 to vector<8x128xf32>
    %237 = arith.mulf %236, %235 : vector<8x128xf32>
    %238 = vector.extract_strided_slice %221 {offsets = [0, 256], sizes = [8, 128], strides = [1, 1]} : vector<8x512xf32> to vector<8x128xf32>
    %239 = math.tanh %238 : vector<8x128xf32>
    %240 = vector.extract_strided_slice %221 {offsets = [0, 384], sizes = [8, 128], strides = [1, 1]} : vector<8x512xf32> to vector<8x128xf32>
    %cst_98 = arith.constant 5.000000e-01 : f32
    %241 = vector.broadcast %cst_98 : f32 to vector<8x128xf32>
    %242 = arith.mulf %241, %240 : vector<8x128xf32>
    %243 = math.tanh %242 : vector<8x128xf32>
    %cst_99 = arith.constant 1.000000e+00 : f32
    %244 = vector.broadcast %cst_99 : f32 to vector<8x128xf32>
    %245 = arith.addf %243, %244 : vector<8x128xf32>
    %cst_100 = arith.constant 5.000000e-01 : f32
    %246 = vector.broadcast %cst_100 : f32 to vector<8x128xf32>
    %247 = arith.mulf %246, %245 : vector<8x128xf32>
    %248 = arith.mulf %237, %210 : vector<8x128xf32>
    %249 = arith.mulf %229, %239 : vector<8x128xf32>
    %250 = arith.addf %248, %249 : vector<8x128xf32>
    %251 = math.tanh %250 : vector<8x128xf32>
    %252 = arith.mulf %247, %251 : vector<8x128xf32>
    %253 = arith.index_cast %c5_i32 : i32 to index
    %c0_101 = arith.constant 0 : index
    %c0_102 = arith.constant 0 : index
    %254 = vector.load %arg13[%253, %c0_101, %c0_102] : memref<8x8x128xf32, #tpu.memory_space<vmem>>, vector<1x8x128xf32>
    %255 = vector.shape_cast %254 : vector<1x8x128xf32> to vector<8x128xf32>
    %256 = vector.shape_cast %252 : vector<8x128xf32> to vector<1x8x128xf32>
    tpu.vector_store %arg13[%253, %c0_101, %c0_102], %256 {strides = array<i32>} : memref<8x8x128xf32, #tpu.memory_space<vmem>>, vector<1x8x128xf32>,
    %c6_i32 = arith.constant 6 : i32
    %257 = arith.index_cast %c6_i32 : i32 to index
    %c0_103 = arith.constant 0 : index
    %c0_104 = arith.constant 0 : index
    %258 = vector.load %arg12[%257, %c0_103, %c0_104] : memref<8x8x512xf32, #tpu.memory_space<vmem>>, vector<1x8x512xf32>
    %259 = vector.shape_cast %258 : vector<1x8x512xf32> to vector<8x512xf32>
    %cst_105 = arith.constant dense<0.000000e+00> : vector<8x512xf32>
    %260 = tpu.matmul %252, %12, %cst_105 {dimension_numbers = #tpu.dot_dimension_numbers<[1], [0], [0], [1], [0, 0, 1, 1], [], []>} : vector<8x128xf32>, vector<128x512xf32>, vector<8x512xf32> -> vector<8x512xf32>
    %261 = arith.addf %259, %260 : vector<8x512xf32>
    %262 = vector.extract_strided_slice %261 {offsets = [0, 0], sizes = [8, 128], strides = [1, 1]} : vector<8x512xf32> to vector<8x128xf32>
    %cst_106 = arith.constant 5.000000e-01 : f32
    %263 = vector.broadcast %cst_106 : f32 to vector<8x128xf32>
    %264 = arith.mulf %263, %262 : vector<8x128xf32>
    %265 = math.tanh %264 : vector<8x128xf32>
    %cst_107 = arith.constant 1.000000e+00 : f32
    %266 = vector.broadcast %cst_107 : f32 to vector<8x128xf32>
    %267 = arith.addf %265, %266 : vector<8x128xf32>
    %cst_108 = arith.constant 5.000000e-01 : f32
    %268 = vector.broadcast %cst_108 : f32 to vector<8x128xf32>
    %269 = arith.mulf %268, %267 : vector<8x128xf32>
    %270 = vector.extract_strided_slice %261 {offsets = [0, 128], sizes = [8, 128], strides = [1, 1]} : vector<8x512xf32> to vector<8x128xf32>
    %cst_109 = arith.constant 5.000000e-01 : f32
    %271 = vector.broadcast %cst_109 : f32 to vector<8x128xf32>
    %272 = arith.mulf %271, %270 : vector<8x128xf32>
    %273 = math.tanh %272 : vector<8x128xf32>
    %cst_110 = arith.constant 1.000000e+00 : f32
    %274 = vector.broadcast %cst_110 : f32 to vector<8x128xf32>
    %275 = arith.addf %273, %274 : vector<8x128xf32>
    %cst_111 = arith.constant 5.000000e-01 : f32
    %276 = vector.broadcast %cst_111 : f32 to vector<8x128xf32>
    %277 = arith.mulf %276, %275 : vector<8x128xf32>
    %278 = vector.extract_strided_slice %261 {offsets = [0, 256], sizes = [8, 128], strides = [1, 1]} : vector<8x512xf32> to vector<8x128xf32>
    %279 = math.tanh %278 : vector<8x128xf32>
    %280 = vector.extract_strided_slice %261 {offsets = [0, 384], sizes = [8, 128], strides = [1, 1]} : vector<8x512xf32> to vector<8x128xf32>
    %cst_112 = arith.constant 5.000000e-01 : f32
    %281 = vector.broadcast %cst_112 : f32 to vector<8x128xf32>
    %282 = arith.mulf %281, %280 : vector<8x128xf32>
    %283 = math.tanh %282 : vector<8x128xf32>
    %cst_113 = arith.constant 1.000000e+00 : f32
    %284 = vector.broadcast %cst_113 : f32 to vector<8x128xf32>
    %285 = arith.addf %283, %284 : vector<8x128xf32>
    %cst_114 = arith.constant 5.000000e-01 : f32
    %286 = vector.broadcast %cst_114 : f32 to vector<8x128xf32>
    %287 = arith.mulf %286, %285 : vector<8x128xf32>
    %288 = arith.mulf %277, %250 : vector<8x128xf32>
    %289 = arith.mulf %269, %279 : vector<8x128xf32>
    %290 = arith.addf %288, %289 : vector<8x128xf32>
    %291 = math.tanh %290 : vector<8x128xf32>
    %292 = arith.mulf %287, %291 : vector<8x128xf32>
    %293 = arith.index_cast %c6_i32 : i32 to index
    %c0_115 = arith.constant 0 : index
    %c0_116 = arith.constant 0 : index
    %294 = vector.load %arg13[%293, %c0_115, %c0_116] : memref<8x8x128xf32, #tpu.memory_space<vmem>>, vector<1x8x128xf32>
    %295 = vector.shape_cast %294 : vector<1x8x128xf32> to vector<8x128xf32>
    %296 = vector.shape_cast %292 : vector<8x128xf32> to vector<1x8x128xf32>
    tpu.vector_store %arg13[%293, %c0_115, %c0_116], %296 {strides = array<i32>} : memref<8x8x128xf32, #tpu.memory_space<vmem>>, vector<1x8x128xf32>,
    %c7_i32 = arith.constant 7 : i32
    %297 = arith.index_cast %c7_i32 : i32 to index
    %c0_117 = arith.constant 0 : index
    %c0_118 = arith.constant 0 : index
    %298 = vector.load %arg12[%297, %c0_117, %c0_118] : memref<8x8x512xf32, #tpu.memory_space<vmem>>, vector<1x8x512xf32>
    %299 = vector.shape_cast %298 : vector<1x8x512xf32> to vector<8x512xf32>
    %cst_119 = arith.constant dense<0.000000e+00> : vector<8x512xf32>
    %300 = tpu.matmul %292, %12, %cst_119 {dimension_numbers = #tpu.dot_dimension_numbers<[1], [0], [0], [1], [0, 0, 1, 1], [], []>} : vector<8x128xf32>, vector<128x512xf32>, vector<8x512xf32> -> vector<8x512xf32>
    %301 = arith.addf %299, %300 : vector<8x512xf32>
    %302 = vector.extract_strided_slice %301 {offsets = [0, 0], sizes = [8, 128], strides = [1, 1]} : vector<8x512xf32> to vector<8x128xf32>
    %cst_120 = arith.constant 5.000000e-01 : f32
    %303 = vector.broadcast %cst_120 : f32 to vector<8x128xf32>
    %304 = arith.mulf %303, %302 : vector<8x128xf32>
    %305 = math.tanh %304 : vector<8x128xf32>
    %cst_121 = arith.constant 1.000000e+00 : f32
    %306 = vector.broadcast %cst_121 : f32 to vector<8x128xf32>
    %307 = arith.addf %305, %306 : vector<8x128xf32>
    %cst_122 = arith.constant 5.000000e-01 : f32
    %308 = vector.broadcast %cst_122 : f32 to vector<8x128xf32>
    %309 = arith.mulf %308, %307 : vector<8x128xf32>
    %310 = vector.extract_strided_slice %301 {offsets = [0, 128], sizes = [8, 128], strides = [1, 1]} : vector<8x512xf32> to vector<8x128xf32>
    %cst_123 = arith.constant 5.000000e-01 : f32
    %311 = vector.broadcast %cst_123 : f32 to vector<8x128xf32>
    %312 = arith.mulf %311, %310 : vector<8x128xf32>
    %313 = math.tanh %312 : vector<8x128xf32>
    %cst_124 = arith.constant 1.000000e+00 : f32
    %314 = vector.broadcast %cst_124 : f32 to vector<8x128xf32>
    %315 = arith.addf %313, %314 : vector<8x128xf32>
    %cst_125 = arith.constant 5.000000e-01 : f32
    %316 = vector.broadcast %cst_125 : f32 to vector<8x128xf32>
    %317 = arith.mulf %316, %315 : vector<8x128xf32>
    %318 = vector.extract_strided_slice %301 {offsets = [0, 256], sizes = [8, 128], strides = [1, 1]} : vector<8x512xf32> to vector<8x128xf32>
    %319 = math.tanh %318 : vector<8x128xf32>
    %320 = vector.extract_strided_slice %301 {offsets = [0, 384], sizes = [8, 128], strides = [1, 1]} : vector<8x512xf32> to vector<8x128xf32>
    %cst_126 = arith.constant 5.000000e-01 : f32
    %321 = vector.broadcast %cst_126 : f32 to vector<8x128xf32>
    %322 = arith.mulf %321, %320 : vector<8x128xf32>
    %323 = math.tanh %322 : vector<8x128xf32>
    %cst_127 = arith.constant 1.000000e+00 : f32
    %324 = vector.broadcast %cst_127 : f32 to vector<8x128xf32>
    %325 = arith.addf %323, %324 : vector<8x128xf32>
    %cst_128 = arith.constant 5.000000e-01 : f32
    %326 = vector.broadcast %cst_128 : f32 to vector<8x128xf32>
    %327 = arith.mulf %326, %325 : vector<8x128xf32>
    %328 = arith.mulf %317, %290 : vector<8x128xf32>
    %329 = arith.mulf %309, %319 : vector<8x128xf32>
    %330 = arith.addf %328, %329 : vector<8x128xf32>
    %331 = math.tanh %330 : vector<8x128xf32>
    %332 = arith.mulf %327, %331 : vector<8x128xf32>
    %333 = arith.index_cast %c7_i32 : i32 to index
    %c0_129 = arith.constant 0 : index
    %c0_130 = arith.constant 0 : index
    %334 = vector.load %arg13[%333, %c0_129, %c0_130] : memref<8x8x128xf32, #tpu.memory_space<vmem>>, vector<1x8x128xf32>
    %335 = vector.shape_cast %334 : vector<1x8x128xf32> to vector<8x128xf32>
    %336 = vector.shape_cast %332 : vector<8x128xf32> to vector<1x8x128xf32>
    tpu.vector_store %arg13[%333, %c0_129, %c0_130], %336 {strides = array<i32>} : memref<8x8x128xf32, #tpu.memory_space<vmem>>, vector<1x8x128xf32>,
    %c8_i32 = arith.constant 8 : i32
    %c0_131 = arith.constant 0 : index
    %c0_132 = arith.constant 0 : index
    %c0_133 = arith.constant 0 : index
    %337 = vector.load %arg14[%c0_131, %c0_132, %c0_133] : memref<2x8x128xf32, #tpu.memory_space<vmem>>, vector<1x8x128xf32>
    %338 = vector.shape_cast %337 : vector<1x8x128xf32> to vector<8x128xf32>
    %339 = vector.shape_cast %332 : vector<8x128xf32> to vector<1x8x128xf32>
    tpu.vector_store %arg14[%c0_131, %c0_132, %c0_133], %339 {strides = array<i32>} : memref<2x8x128xf32, #tpu.memory_space<vmem>>, vector<1x8x128xf32>,
    %c0_134 = arith.constant 0 : index
    %c0_135 = arith.constant 0 : index
    %c0_136 = arith.constant 0 : index
    %340 = vector.load %arg15[%c0_134, %c0_135, %c0_136] : memref<2x8x128xf32, #tpu.memory_space<vmem>>, vector<1x8x128xf32>
    %341 = vector.shape_cast %340 : vector<1x8x128xf32> to vector<8x128xf32>
    %342 = vector.shape_cast %330 : vector<8x128xf32> to vector<1x8x128xf32>
    tpu.vector_store %arg15[%c0_134, %c0_135, %c0_136], %342 {strides = array<i32>} : memref<2x8x128xf32, #tpu.memory_space<vmem>>, vector<1x8x128xf32>,
    %c0_137 = arith.constant 0 : index
    %c0_138 = arith.constant 0 : index
    %c0_139 = arith.constant 0 : index
    %343 = vector.load %arg13[%c0_137, %c0_138, %c0_139] : memref<8x8x128xf32, #tpu.memory_space<vmem>>, vector<8x8x128xf32>
    %344 = vector.shape_cast %343 : vector<8x8x128xf32> to vector<64x128xf32>
    %c0_140 = arith.constant 0 : index
    %c0_141 = arith.constant 0 : index
    %345 = vector.load %arg6[%c0_140, %c0_141] : memref<128x512xf32, #tpu.memory_space<vmem>>, vector<128x512xf32>
    %cst_142 = arith.constant dense<0.000000e+00> : vector<64x512xf32>
    %346 = tpu.matmul %344, %345, %cst_142 {dimension_numbers = #tpu.dot_dimension_numbers<[1], [0], [0], [1], [0, 0, 1, 1], [], []>} : vector<64x128xf32>, vector<128x512xf32>, vector<64x512xf32> -> vector<64x512xf32>
    %c0_143 = arith.constant 0 : index
    %c0_144 = arith.constant 0 : index
    %347 = vector.load %arg8[%c0_143, %c0_144] : memref<1x512xf32, #tpu.memory_space<vmem>>, vector<1x512xf32>
    %348 = vector.broadcast %347 : vector<1x512xf32> to vector<64x512xf32>
    %349 = arith.addf %346, %348 : vector<64x512xf32>
    %350 = vector.shape_cast %349 : vector<64x512xf32> to vector<8x8x512xf32>
    %c0_145 = arith.constant 0 : index
    %c0_146 = arith.constant 0 : index
    %c0_147 = arith.constant 0 : index
    %351 = vector.load %arg12[%c0_145, %c0_146, %c0_147] : memref<8x8x512xf32, #tpu.memory_space<vmem>>, vector<8x8x512xf32>
    tpu.vector_store %arg12[%c0_145, %c0_146, %c0_147], %350 {strides = array<i32>} : memref<8x8x512xf32, #tpu.memory_space<vmem>>, vector<8x8x512xf32>,
    %c0_148 = arith.constant 0 : index
    %c0_149 = arith.constant 0 : index
    %352 = vector.load %arg7[%c0_148, %c0_149] : memref<128x512xf32, #tpu.memory_space<vmem>>, vector<128x512xf32>
    %c1 = arith.constant 1 : index
    %c0_150 = arith.constant 0 : index
    %c0_151 = arith.constant 0 : index
    %353 = vector.load %arg14[%c1, %c0_150, %c0_151] : memref<2x8x128xf32, #tpu.memory_space<vmem>>, vector<1x8x128xf32>
    %354 = vector.shape_cast %353 : vector<1x8x128xf32> to vector<8x128xf32>
    %c1_152 = arith.constant 1 : index
    %c0_153 = arith.constant 0 : index
    %c0_154 = arith.constant 0 : index
    %355 = vector.load %arg15[%c1_152, %c0_153, %c0_154] : memref<2x8x128xf32, #tpu.memory_space<vmem>>, vector<1x8x128xf32>
    %356 = vector.shape_cast %355 : vector<1x8x128xf32> to vector<8x128xf32>
    %c0_i32_155 = arith.constant 0 : i32
    %357 = arith.index_cast %c0_i32_155 : i32 to index
    %c0_156 = arith.constant 0 : index
    %c0_157 = arith.constant 0 : index
    %358 = vector.load %arg12[%357, %c0_156, %c0_157] : memref<8x8x512xf32, #tpu.memory_space<vmem>>, vector<1x8x512xf32>
    %359 = vector.shape_cast %358 : vector<1x8x512xf32> to vector<8x512xf32>
    %cst_158 = arith.constant dense<0.000000e+00> : vector<8x512xf32>
    %360 = tpu.matmul %354, %352, %cst_158 {dimension_numbers = #tpu.dot_dimension_numbers<[1], [0], [0], [1], [0, 0, 1, 1], [], []>} : vector<8x128xf32>, vector<128x512xf32>, vector<8x512xf32> -> vector<8x512xf32>
    %361 = arith.addf %359, %360 : vector<8x512xf32>
    %362 = vector.extract_strided_slice %361 {offsets = [0, 0], sizes = [8, 128], strides = [1, 1]} : vector<8x512xf32> to vector<8x128xf32>
    %cst_159 = arith.constant 5.000000e-01 : f32
    %363 = vector.broadcast %cst_159 : f32 to vector<8x128xf32>
    %364 = arith.mulf %363, %362 : vector<8x128xf32>
    %365 = math.tanh %364 : vector<8x128xf32>
    %cst_160 = arith.constant 1.000000e+00 : f32
    %366 = vector.broadcast %cst_160 : f32 to vector<8x128xf32>
    %367 = arith.addf %365, %366 : vector<8x128xf32>
    %cst_161 = arith.constant 5.000000e-01 : f32
    %368 = vector.broadcast %cst_161 : f32 to vector<8x128xf32>
    %369 = arith.mulf %368, %367 : vector<8x128xf32>
    %370 = vector.extract_strided_slice %361 {offsets = [0, 128], sizes = [8, 128], strides = [1, 1]} : vector<8x512xf32> to vector<8x128xf32>
    %cst_162 = arith.constant 5.000000e-01 : f32
    %371 = vector.broadcast %cst_162 : f32 to vector<8x128xf32>
    %372 = arith.mulf %371, %370 : vector<8x128xf32>
    %373 = math.tanh %372 : vector<8x128xf32>
    %cst_163 = arith.constant 1.000000e+00 : f32
    %374 = vector.broadcast %cst_163 : f32 to vector<8x128xf32>
    %375 = arith.addf %373, %374 : vector<8x128xf32>
    %cst_164 = arith.constant 5.000000e-01 : f32
    %376 = vector.broadcast %cst_164 : f32 to vector<8x128xf32>
    %377 = arith.mulf %376, %375 : vector<8x128xf32>
    %378 = vector.extract_strided_slice %361 {offsets = [0, 256], sizes = [8, 128], strides = [1, 1]} : vector<8x512xf32> to vector<8x128xf32>
    %379 = math.tanh %378 : vector<8x128xf32>
    %380 = vector.extract_strided_slice %361 {offsets = [0, 384], sizes = [8, 128], strides = [1, 1]} : vector<8x512xf32> to vector<8x128xf32>
    %cst_165 = arith.constant 5.000000e-01 : f32
    %381 = vector.broadcast %cst_165 : f32 to vector<8x128xf32>
    %382 = arith.mulf %381, %380 : vector<8x128xf32>
    %383 = math.tanh %382 : vector<8x128xf32>
    %cst_166 = arith.constant 1.000000e+00 : f32
    %384 = vector.broadcast %cst_166 : f32 to vector<8x128xf32>
    %385 = arith.addf %383, %384 : vector<8x128xf32>
    %cst_167 = arith.constant 5.000000e-01 : f32
    %386 = vector.broadcast %cst_167 : f32 to vector<8x128xf32>
    %387 = arith.mulf %386, %385 : vector<8x128xf32>
    %388 = arith.mulf %377, %356 : vector<8x128xf32>
    %389 = arith.mulf %369, %379 : vector<8x128xf32>
    %390 = arith.addf %388, %389 : vector<8x128xf32>
    %391 = math.tanh %390 : vector<8x128xf32>
    %392 = arith.mulf %387, %391 : vector<8x128xf32>
    %393 = arith.index_cast %c0_i32_155 : i32 to index
    %c0_168 = arith.constant 0 : index
    %c0_169 = arith.constant 0 : index
    %394 = vector.load %arg13[%393, %c0_168, %c0_169] : memref<8x8x128xf32, #tpu.memory_space<vmem>>, vector<1x8x128xf32>
    %395 = vector.shape_cast %394 : vector<1x8x128xf32> to vector<8x128xf32>
    %396 = vector.shape_cast %392 : vector<8x128xf32> to vector<1x8x128xf32>
    tpu.vector_store %arg13[%393, %c0_168, %c0_169], %396 {strides = array<i32>} : memref<8x8x128xf32, #tpu.memory_space<vmem>>, vector<1x8x128xf32>,
    %c1_i32_170 = arith.constant 1 : i32
    %397 = arith.index_cast %c1_i32_170 : i32 to index
    %c0_171 = arith.constant 0 : index
    %c0_172 = arith.constant 0 : index
    %398 = vector.load %arg12[%397, %c0_171, %c0_172] : memref<8x8x512xf32, #tpu.memory_space<vmem>>, vector<1x8x512xf32>
    %399 = vector.shape_cast %398 : vector<1x8x512xf32> to vector<8x512xf32>
    %cst_173 = arith.constant dense<0.000000e+00> : vector<8x512xf32>
    %400 = tpu.matmul %392, %352, %cst_173 {dimension_numbers = #tpu.dot_dimension_numbers<[1], [0], [0], [1], [0, 0, 1, 1], [], []>} : vector<8x128xf32>, vector<128x512xf32>, vector<8x512xf32> -> vector<8x512xf32>
    %401 = arith.addf %399, %400 : vector<8x512xf32>
    %402 = vector.extract_strided_slice %401 {offsets = [0, 0], sizes = [8, 128], strides = [1, 1]} : vector<8x512xf32> to vector<8x128xf32>
    %cst_174 = arith.constant 5.000000e-01 : f32
    %403 = vector.broadcast %cst_174 : f32 to vector<8x128xf32>
    %404 = arith.mulf %403, %402 : vector<8x128xf32>
    %405 = math.tanh %404 : vector<8x128xf32>
    %cst_175 = arith.constant 1.000000e+00 : f32
    %406 = vector.broadcast %cst_175 : f32 to vector<8x128xf32>
    %407 = arith.addf %405, %406 : vector<8x128xf32>
    %cst_176 = arith.constant 5.000000e-01 : f32
    %408 = vector.broadcast %cst_176 : f32 to vector<8x128xf32>
    %409 = arith.mulf %408, %407 : vector<8x128xf32>
    %410 = vector.extract_strided_slice %401 {offsets = [0, 128], sizes = [8, 128], strides = [1, 1]} : vector<8x512xf32> to vector<8x128xf32>
    %cst_177 = arith.constant 5.000000e-01 : f32
    %411 = vector.broadcast %cst_177 : f32 to vector<8x128xf32>
    %412 = arith.mulf %411, %410 : vector<8x128xf32>
    %413 = math.tanh %412 : vector<8x128xf32>
    %cst_178 = arith.constant 1.000000e+00 : f32
    %414 = vector.broadcast %cst_178 : f32 to vector<8x128xf32>
    %415 = arith.addf %413, %414 : vector<8x128xf32>
    %cst_179 = arith.constant 5.000000e-01 : f32
    %416 = vector.broadcast %cst_179 : f32 to vector<8x128xf32>
    %417 = arith.mulf %416, %415 : vector<8x128xf32>
    %418 = vector.extract_strided_slice %401 {offsets = [0, 256], sizes = [8, 128], strides = [1, 1]} : vector<8x512xf32> to vector<8x128xf32>
    %419 = math.tanh %418 : vector<8x128xf32>
    %420 = vector.extract_strided_slice %401 {offsets = [0, 384], sizes = [8, 128], strides = [1, 1]} : vector<8x512xf32> to vector<8x128xf32>
    %cst_180 = arith.constant 5.000000e-01 : f32
    %421 = vector.broadcast %cst_180 : f32 to vector<8x128xf32>
    %422 = arith.mulf %421, %420 : vector<8x128xf32>
    %423 = math.tanh %422 : vector<8x128xf32>
    %cst_181 = arith.constant 1.000000e+00 : f32
    %424 = vector.broadcast %cst_181 : f32 to vector<8x128xf32>
    %425 = arith.addf %423, %424 : vector<8x128xf32>
    %cst_182 = arith.constant 5.000000e-01 : f32
    %426 = vector.broadcast %cst_182 : f32 to vector<8x128xf32>
    %427 = arith.mulf %426, %425 : vector<8x128xf32>
    %428 = arith.mulf %417, %390 : vector<8x128xf32>
    %429 = arith.mulf %409, %419 : vector<8x128xf32>
    %430 = arith.addf %428, %429 : vector<8x128xf32>
    %431 = math.tanh %430 : vector<8x128xf32>
    %432 = arith.mulf %427, %431 : vector<8x128xf32>
    %433 = arith.index_cast %c1_i32_170 : i32 to index
    %c0_183 = arith.constant 0 : index
    %c0_184 = arith.constant 0 : index
    %434 = vector.load %arg13[%433, %c0_183, %c0_184] : memref<8x8x128xf32, #tpu.memory_space<vmem>>, vector<1x8x128xf32>
    %435 = vector.shape_cast %434 : vector<1x8x128xf32> to vector<8x128xf32>
    %436 = vector.shape_cast %432 : vector<8x128xf32> to vector<1x8x128xf32>
    tpu.vector_store %arg13[%433, %c0_183, %c0_184], %436 {strides = array<i32>} : memref<8x8x128xf32, #tpu.memory_space<vmem>>, vector<1x8x128xf32>,
    %c2_i32_185 = arith.constant 2 : i32
    %437 = arith.index_cast %c2_i32_185 : i32 to index
    %c0_186 = arith.constant 0 : index
    %c0_187 = arith.constant 0 : index
    %438 = vector.load %arg12[%437, %c0_186, %c0_187] : memref<8x8x512xf32, #tpu.memory_space<vmem>>, vector<1x8x512xf32>
    %439 = vector.shape_cast %438 : vector<1x8x512xf32> to vector<8x512xf32>
    %cst_188 = arith.constant dense<0.000000e+00> : vector<8x512xf32>
    %440 = tpu.matmul %432, %352, %cst_188 {dimension_numbers = #tpu.dot_dimension_numbers<[1], [0], [0], [1], [0, 0, 1, 1], [], []>} : vector<8x128xf32>, vector<128x512xf32>, vector<8x512xf32> -> vector<8x512xf32>
    %441 = arith.addf %439, %440 : vector<8x512xf32>
    %442 = vector.extract_strided_slice %441 {offsets = [0, 0], sizes = [8, 128], strides = [1, 1]} : vector<8x512xf32> to vector<8x128xf32>
    %cst_189 = arith.constant 5.000000e-01 : f32
    %443 = vector.broadcast %cst_189 : f32 to vector<8x128xf32>
    %444 = arith.mulf %443, %442 : vector<8x128xf32>
    %445 = math.tanh %444 : vector<8x128xf32>
    %cst_190 = arith.constant 1.000000e+00 : f32
    %446 = vector.broadcast %cst_190 : f32 to vector<8x128xf32>
    %447 = arith.addf %445, %446 : vector<8x128xf32>
    %cst_191 = arith.constant 5.000000e-01 : f32
    %448 = vector.broadcast %cst_191 : f32 to vector<8x128xf32>
    %449 = arith.mulf %448, %447 : vector<8x128xf32>
    %450 = vector.extract_strided_slice %441 {offsets = [0, 128], sizes = [8, 128], strides = [1, 1]} : vector<8x512xf32> to vector<8x128xf32>
    %cst_192 = arith.constant 5.000000e-01 : f32
    %451 = vector.broadcast %cst_192 : f32 to vector<8x128xf32>
    %452 = arith.mulf %451, %450 : vector<8x128xf32>
    %453 = math.tanh %452 : vector<8x128xf32>
    %cst_193 = arith.constant 1.000000e+00 : f32
    %454 = vector.broadcast %cst_193 : f32 to vector<8x128xf32>
    %455 = arith.addf %453, %454 : vector<8x128xf32>
    %cst_194 = arith.constant 5.000000e-01 : f32
    %456 = vector.broadcast %cst_194 : f32 to vector<8x128xf32>
    %457 = arith.mulf %456, %455 : vector<8x128xf32>
    %458 = vector.extract_strided_slice %441 {offsets = [0, 256], sizes = [8, 128], strides = [1, 1]} : vector<8x512xf32> to vector<8x128xf32>
    %459 = math.tanh %458 : vector<8x128xf32>
    %460 = vector.extract_strided_slice %441 {offsets = [0, 384], sizes = [8, 128], strides = [1, 1]} : vector<8x512xf32> to vector<8x128xf32>
    %cst_195 = arith.constant 5.000000e-01 : f32
    %461 = vector.broadcast %cst_195 : f32 to vector<8x128xf32>
    %462 = arith.mulf %461, %460 : vector<8x128xf32>
    %463 = math.tanh %462 : vector<8x128xf32>
    %cst_196 = arith.constant 1.000000e+00 : f32
    %464 = vector.broadcast %cst_196 : f32 to vector<8x128xf32>
    %465 = arith.addf %463, %464 : vector<8x128xf32>
    %cst_197 = arith.constant 5.000000e-01 : f32
    %466 = vector.broadcast %cst_197 : f32 to vector<8x128xf32>
    %467 = arith.mulf %466, %465 : vector<8x128xf32>
    %468 = arith.mulf %457, %430 : vector<8x128xf32>
    %469 = arith.mulf %449, %459 : vector<8x128xf32>
    %470 = arith.addf %468, %469 : vector<8x128xf32>
    %471 = math.tanh %470 : vector<8x128xf32>
    %472 = arith.mulf %467, %471 : vector<8x128xf32>
    %473 = arith.index_cast %c2_i32_185 : i32 to index
    %c0_198 = arith.constant 0 : index
    %c0_199 = arith.constant 0 : index
    %474 = vector.load %arg13[%473, %c0_198, %c0_199] : memref<8x8x128xf32, #tpu.memory_space<vmem>>, vector<1x8x128xf32>
    %475 = vector.shape_cast %474 : vector<1x8x128xf32> to vector<8x128xf32>
    %476 = vector.shape_cast %472 : vector<8x128xf32> to vector<1x8x128xf32>
    tpu.vector_store %arg13[%473, %c0_198, %c0_199], %476 {strides = array<i32>} : memref<8x8x128xf32, #tpu.memory_space<vmem>>, vector<1x8x128xf32>,
    %c3_i32_200 = arith.constant 3 : i32
    %477 = arith.index_cast %c3_i32_200 : i32 to index
    %c0_201 = arith.constant 0 : index
    %c0_202 = arith.constant 0 : index
    %478 = vector.load %arg12[%477, %c0_201, %c0_202] : memref<8x8x512xf32, #tpu.memory_space<vmem>>, vector<1x8x512xf32>
    %479 = vector.shape_cast %478 : vector<1x8x512xf32> to vector<8x512xf32>
    %cst_203 = arith.constant dense<0.000000e+00> : vector<8x512xf32>
    %480 = tpu.matmul %472, %352, %cst_203 {dimension_numbers = #tpu.dot_dimension_numbers<[1], [0], [0], [1], [0, 0, 1, 1], [], []>} : vector<8x128xf32>, vector<128x512xf32>, vector<8x512xf32> -> vector<8x512xf32>
    %481 = arith.addf %479, %480 : vector<8x512xf32>
    %482 = vector.extract_strided_slice %481 {offsets = [0, 0], sizes = [8, 128], strides = [1, 1]} : vector<8x512xf32> to vector<8x128xf32>
    %cst_204 = arith.constant 5.000000e-01 : f32
    %483 = vector.broadcast %cst_204 : f32 to vector<8x128xf32>
    %484 = arith.mulf %483, %482 : vector<8x128xf32>
    %485 = math.tanh %484 : vector<8x128xf32>
    %cst_205 = arith.constant 1.000000e+00 : f32
    %486 = vector.broadcast %cst_205 : f32 to vector<8x128xf32>
    %487 = arith.addf %485, %486 : vector<8x128xf32>
    %cst_206 = arith.constant 5.000000e-01 : f32
    %488 = vector.broadcast %cst_206 : f32 to vector<8x128xf32>
    %489 = arith.mulf %488, %487 : vector<8x128xf32>
    %490 = vector.extract_strided_slice %481 {offsets = [0, 128], sizes = [8, 128], strides = [1, 1]} : vector<8x512xf32> to vector<8x128xf32>
    %cst_207 = arith.constant 5.000000e-01 : f32
    %491 = vector.broadcast %cst_207 : f32 to vector<8x128xf32>
    %492 = arith.mulf %491, %490 : vector<8x128xf32>
    %493 = math.tanh %492 : vector<8x128xf32>
    %cst_208 = arith.constant 1.000000e+00 : f32
    %494 = vector.broadcast %cst_208 : f32 to vector<8x128xf32>
    %495 = arith.addf %493, %494 : vector<8x128xf32>
    %cst_209 = arith.constant 5.000000e-01 : f32
    %496 = vector.broadcast %cst_209 : f32 to vector<8x128xf32>
    %497 = arith.mulf %496, %495 : vector<8x128xf32>
    %498 = vector.extract_strided_slice %481 {offsets = [0, 256], sizes = [8, 128], strides = [1, 1]} : vector<8x512xf32> to vector<8x128xf32>
    %499 = math.tanh %498 : vector<8x128xf32>
    %500 = vector.extract_strided_slice %481 {offsets = [0, 384], sizes = [8, 128], strides = [1, 1]} : vector<8x512xf32> to vector<8x128xf32>
    %cst_210 = arith.constant 5.000000e-01 : f32
    %501 = vector.broadcast %cst_210 : f32 to vector<8x128xf32>
    %502 = arith.mulf %501, %500 : vector<8x128xf32>
    %503 = math.tanh %502 : vector<8x128xf32>
    %cst_211 = arith.constant 1.000000e+00 : f32
    %504 = vector.broadcast %cst_211 : f32 to vector<8x128xf32>
    %505 = arith.addf %503, %504 : vector<8x128xf32>
    %cst_212 = arith.constant 5.000000e-01 : f32
    %506 = vector.broadcast %cst_212 : f32 to vector<8x128xf32>
    %507 = arith.mulf %506, %505 : vector<8x128xf32>
    %508 = arith.mulf %497, %470 : vector<8x128xf32>
    %509 = arith.mulf %489, %499 : vector<8x128xf32>
    %510 = arith.addf %508, %509 : vector<8x128xf32>
    %511 = math.tanh %510 : vector<8x128xf32>
    %512 = arith.mulf %507, %511 : vector<8x128xf32>
    %513 = arith.index_cast %c3_i32_200 : i32 to index
    %c0_213 = arith.constant 0 : index
    %c0_214 = arith.constant 0 : index
    %514 = vector.load %arg13[%513, %c0_213, %c0_214] : memref<8x8x128xf32, #tpu.memory_space<vmem>>, vector<1x8x128xf32>
    %515 = vector.shape_cast %514 : vector<1x8x128xf32> to vector<8x128xf32>
    %516 = vector.shape_cast %512 : vector<8x128xf32> to vector<1x8x128xf32>
    tpu.vector_store %arg13[%513, %c0_213, %c0_214], %516 {strides = array<i32>} : memref<8x8x128xf32, #tpu.memory_space<vmem>>, vector<1x8x128xf32>,
    %c4_i32_215 = arith.constant 4 : i32
    %517 = arith.index_cast %c4_i32_215 : i32 to index
    %c0_216 = arith.constant 0 : index
    %c0_217 = arith.constant 0 : index
    %518 = vector.load %arg12[%517, %c0_216, %c0_217] : memref<8x8x512xf32, #tpu.memory_space<vmem>>, vector<1x8x512xf32>
    %519 = vector.shape_cast %518 : vector<1x8x512xf32> to vector<8x512xf32>
    %cst_218 = arith.constant dense<0.000000e+00> : vector<8x512xf32>
    %520 = tpu.matmul %512, %352, %cst_218 {dimension_numbers = #tpu.dot_dimension_numbers<[1], [0], [0], [1], [0, 0, 1, 1], [], []>} : vector<8x128xf32>, vector<128x512xf32>, vector<8x512xf32> -> vector<8x512xf32>
    %521 = arith.addf %519, %520 : vector<8x512xf32>
    %522 = vector.extract_strided_slice %521 {offsets = [0, 0], sizes = [8, 128], strides = [1, 1]} : vector<8x512xf32> to vector<8x128xf32>
    %cst_219 = arith.constant 5.000000e-01 : f32
    %523 = vector.broadcast %cst_219 : f32 to vector<8x128xf32>
    %524 = arith.mulf %523, %522 : vector<8x128xf32>
    %525 = math.tanh %524 : vector<8x128xf32>
    %cst_220 = arith.constant 1.000000e+00 : f32
    %526 = vector.broadcast %cst_220 : f32 to vector<8x128xf32>
    %527 = arith.addf %525, %526 : vector<8x128xf32>
    %cst_221 = arith.constant 5.000000e-01 : f32
    %528 = vector.broadcast %cst_221 : f32 to vector<8x128xf32>
    %529 = arith.mulf %528, %527 : vector<8x128xf32>
    %530 = vector.extract_strided_slice %521 {offsets = [0, 128], sizes = [8, 128], strides = [1, 1]} : vector<8x512xf32> to vector<8x128xf32>
    %cst_222 = arith.constant 5.000000e-01 : f32
    %531 = vector.broadcast %cst_222 : f32 to vector<8x128xf32>
    %532 = arith.mulf %531, %530 : vector<8x128xf32>
    %533 = math.tanh %532 : vector<8x128xf32>
    %cst_223 = arith.constant 1.000000e+00 : f32
    %534 = vector.broadcast %cst_223 : f32 to vector<8x128xf32>
    %535 = arith.addf %533, %534 : vector<8x128xf32>
    %cst_224 = arith.constant 5.000000e-01 : f32
    %536 = vector.broadcast %cst_224 : f32 to vector<8x128xf32>
    %537 = arith.mulf %536, %535 : vector<8x128xf32>
    %538 = vector.extract_strided_slice %521 {offsets = [0, 256], sizes = [8, 128], strides = [1, 1]} : vector<8x512xf32> to vector<8x128xf32>
    %539 = math.tanh %538 : vector<8x128xf32>
    %540 = vector.extract_strided_slice %521 {offsets = [0, 384], sizes = [8, 128], strides = [1, 1]} : vector<8x512xf32> to vector<8x128xf32>
    %cst_225 = arith.constant 5.000000e-01 : f32
    %541 = vector.broadcast %cst_225 : f32 to vector<8x128xf32>
    %542 = arith.mulf %541, %540 : vector<8x128xf32>
    %543 = math.tanh %542 : vector<8x128xf32>
    %cst_226 = arith.constant 1.000000e+00 : f32
    %544 = vector.broadcast %cst_226 : f32 to vector<8x128xf32>
    %545 = arith.addf %543, %544 : vector<8x128xf32>
    %cst_227 = arith.constant 5.000000e-01 : f32
    %546 = vector.broadcast %cst_227 : f32 to vector<8x128xf32>
    %547 = arith.mulf %546, %545 : vector<8x128xf32>
    %548 = arith.mulf %537, %510 : vector<8x128xf32>
    %549 = arith.mulf %529, %539 : vector<8x128xf32>
    %550 = arith.addf %548, %549 : vector<8x128xf32>
    %551 = math.tanh %550 : vector<8x128xf32>
    %552 = arith.mulf %547, %551 : vector<8x128xf32>
    %553 = arith.index_cast %c4_i32_215 : i32 to index
    %c0_228 = arith.constant 0 : index
    %c0_229 = arith.constant 0 : index
    %554 = vector.load %arg13[%553, %c0_228, %c0_229] : memref<8x8x128xf32, #tpu.memory_space<vmem>>, vector<1x8x128xf32>
    %555 = vector.shape_cast %554 : vector<1x8x128xf32> to vector<8x128xf32>
    %556 = vector.shape_cast %552 : vector<8x128xf32> to vector<1x8x128xf32>
    tpu.vector_store %arg13[%553, %c0_228, %c0_229], %556 {strides = array<i32>} : memref<8x8x128xf32, #tpu.memory_space<vmem>>, vector<1x8x128xf32>,
    %c5_i32_230 = arith.constant 5 : i32
    %557 = arith.index_cast %c5_i32_230 : i32 to index
    %c0_231 = arith.constant 0 : index
    %c0_232 = arith.constant 0 : index
    %558 = vector.load %arg12[%557, %c0_231, %c0_232] : memref<8x8x512xf32, #tpu.memory_space<vmem>>, vector<1x8x512xf32>
    %559 = vector.shape_cast %558 : vector<1x8x512xf32> to vector<8x512xf32>
    %cst_233 = arith.constant dense<0.000000e+00> : vector<8x512xf32>
    %560 = tpu.matmul %552, %352, %cst_233 {dimension_numbers = #tpu.dot_dimension_numbers<[1], [0], [0], [1], [0, 0, 1, 1], [], []>} : vector<8x128xf32>, vector<128x512xf32>, vector<8x512xf32> -> vector<8x512xf32>
    %561 = arith.addf %559, %560 : vector<8x512xf32>
    %562 = vector.extract_strided_slice %561 {offsets = [0, 0], sizes = [8, 128], strides = [1, 1]} : vector<8x512xf32> to vector<8x128xf32>
    %cst_234 = arith.constant 5.000000e-01 : f32
    %563 = vector.broadcast %cst_234 : f32 to vector<8x128xf32>
    %564 = arith.mulf %563, %562 : vector<8x128xf32>
    %565 = math.tanh %564 : vector<8x128xf32>
    %cst_235 = arith.constant 1.000000e+00 : f32
    %566 = vector.broadcast %cst_235 : f32 to vector<8x128xf32>
    %567 = arith.addf %565, %566 : vector<8x128xf32>
    %cst_236 = arith.constant 5.000000e-01 : f32
    %568 = vector.broadcast %cst_236 : f32 to vector<8x128xf32>
    %569 = arith.mulf %568, %567 : vector<8x128xf32>
    %570 = vector.extract_strided_slice %561 {offsets = [0, 128], sizes = [8, 128], strides = [1, 1]} : vector<8x512xf32> to vector<8x128xf32>
    %cst_237 = arith.constant 5.000000e-01 : f32
    %571 = vector.broadcast %cst_237 : f32 to vector<8x128xf32>
    %572 = arith.mulf %571, %570 : vector<8x128xf32>
    %573 = math.tanh %572 : vector<8x128xf32>
    %cst_238 = arith.constant 1.000000e+00 : f32
    %574 = vector.broadcast %cst_238 : f32 to vector<8x128xf32>
    %575 = arith.addf %573, %574 : vector<8x128xf32>
    %cst_239 = arith.constant 5.000000e-01 : f32
    %576 = vector.broadcast %cst_239 : f32 to vector<8x128xf32>
    %577 = arith.mulf %576, %575 : vector<8x128xf32>
    %578 = vector.extract_strided_slice %561 {offsets = [0, 256], sizes = [8, 128], strides = [1, 1]} : vector<8x512xf32> to vector<8x128xf32>
    %579 = math.tanh %578 : vector<8x128xf32>
    %580 = vector.extract_strided_slice %561 {offsets = [0, 384], sizes = [8, 128], strides = [1, 1]} : vector<8x512xf32> to vector<8x128xf32>
    %cst_240 = arith.constant 5.000000e-01 : f32
    %581 = vector.broadcast %cst_240 : f32 to vector<8x128xf32>
    %582 = arith.mulf %581, %580 : vector<8x128xf32>
    %583 = math.tanh %582 : vector<8x128xf32>
    %cst_241 = arith.constant 1.000000e+00 : f32
    %584 = vector.broadcast %cst_241 : f32 to vector<8x128xf32>
    %585 = arith.addf %583, %584 : vector<8x128xf32>
    %cst_242 = arith.constant 5.000000e-01 : f32
    %586 = vector.broadcast %cst_242 : f32 to vector<8x128xf32>
    %587 = arith.mulf %586, %585 : vector<8x128xf32>
    %588 = arith.mulf %577, %550 : vector<8x128xf32>
    %589 = arith.mulf %569, %579 : vector<8x128xf32>
    %590 = arith.addf %588, %589 : vector<8x128xf32>
    %591 = math.tanh %590 : vector<8x128xf32>
    %592 = arith.mulf %587, %591 : vector<8x128xf32>
    %593 = arith.index_cast %c5_i32_230 : i32 to index
    %c0_243 = arith.constant 0 : index
    %c0_244 = arith.constant 0 : index
    %594 = vector.load %arg13[%593, %c0_243, %c0_244] : memref<8x8x128xf32, #tpu.memory_space<vmem>>, vector<1x8x128xf32>
    %595 = vector.shape_cast %594 : vector<1x8x128xf32> to vector<8x128xf32>
    %596 = vector.shape_cast %592 : vector<8x128xf32> to vector<1x8x128xf32>
    tpu.vector_store %arg13[%593, %c0_243, %c0_244], %596 {strides = array<i32>} : memref<8x8x128xf32, #tpu.memory_space<vmem>>, vector<1x8x128xf32>,
    %c6_i32_245 = arith.constant 6 : i32
    %597 = arith.index_cast %c6_i32_245 : i32 to index
    %c0_246 = arith.constant 0 : index
    %c0_247 = arith.constant 0 : index
    %598 = vector.load %arg12[%597, %c0_246, %c0_247] : memref<8x8x512xf32, #tpu.memory_space<vmem>>, vector<1x8x512xf32>
    %599 = vector.shape_cast %598 : vector<1x8x512xf32> to vector<8x512xf32>
    %cst_248 = arith.constant dense<0.000000e+00> : vector<8x512xf32>
    %600 = tpu.matmul %592, %352, %cst_248 {dimension_numbers = #tpu.dot_dimension_numbers<[1], [0], [0], [1], [0, 0, 1, 1], [], []>} : vector<8x128xf32>, vector<128x512xf32>, vector<8x512xf32> -> vector<8x512xf32>
    %601 = arith.addf %599, %600 : vector<8x512xf32>
    %602 = vector.extract_strided_slice %601 {offsets = [0, 0], sizes = [8, 128], strides = [1, 1]} : vector<8x512xf32> to vector<8x128xf32>
    %cst_249 = arith.constant 5.000000e-01 : f32
    %603 = vector.broadcast %cst_249 : f32 to vector<8x128xf32>
    %604 = arith.mulf %603, %602 : vector<8x128xf32>
    %605 = math.tanh %604 : vector<8x128xf32>
    %cst_250 = arith.constant 1.000000e+00 : f32
    %606 = vector.broadcast %cst_250 : f32 to vector<8x128xf32>
    %607 = arith.addf %605, %606 : vector<8x128xf32>
    %cst_251 = arith.constant 5.000000e-01 : f32
    %608 = vector.broadcast %cst_251 : f32 to vector<8x128xf32>
    %609 = arith.mulf %608, %607 : vector<8x128xf32>
    %610 = vector.extract_strided_slice %601 {offsets = [0, 128], sizes = [8, 128], strides = [1, 1]} : vector<8x512xf32> to vector<8x128xf32>
    %cst_252 = arith.constant 5.000000e-01 : f32
    %611 = vector.broadcast %cst_252 : f32 to vector<8x128xf32>
    %612 = arith.mulf %611, %610 : vector<8x128xf32>
    %613 = math.tanh %612 : vector<8x128xf32>
    %cst_253 = arith.constant 1.000000e+00 : f32
    %614 = vector.broadcast %cst_253 : f32 to vector<8x128xf32>
    %615 = arith.addf %613, %614 : vector<8x128xf32>
    %cst_254 = arith.constant 5.000000e-01 : f32
    %616 = vector.broadcast %cst_254 : f32 to vector<8x128xf32>
    %617 = arith.mulf %616, %615 : vector<8x128xf32>
    %618 = vector.extract_strided_slice %601 {offsets = [0, 256], sizes = [8, 128], strides = [1, 1]} : vector<8x512xf32> to vector<8x128xf32>
    %619 = math.tanh %618 : vector<8x128xf32>
    %620 = vector.extract_strided_slice %601 {offsets = [0, 384], sizes = [8, 128], strides = [1, 1]} : vector<8x512xf32> to vector<8x128xf32>
    %cst_255 = arith.constant 5.000000e-01 : f32
    %621 = vector.broadcast %cst_255 : f32 to vector<8x128xf32>
    %622 = arith.mulf %621, %620 : vector<8x128xf32>
    %623 = math.tanh %622 : vector<8x128xf32>
    %cst_256 = arith.constant 1.000000e+00 : f32
    %624 = vector.broadcast %cst_256 : f32 to vector<8x128xf32>
    %625 = arith.addf %623, %624 : vector<8x128xf32>
    %cst_257 = arith.constant 5.000000e-01 : f32
    %626 = vector.broadcast %cst_257 : f32 to vector<8x128xf32>
    %627 = arith.mulf %626, %625 : vector<8x128xf32>
    %628 = arith.mulf %617, %590 : vector<8x128xf32>
    %629 = arith.mulf %609, %619 : vector<8x128xf32>
    %630 = arith.addf %628, %629 : vector<8x128xf32>
    %631 = math.tanh %630 : vector<8x128xf32>
    %632 = arith.mulf %627, %631 : vector<8x128xf32>
    %633 = arith.index_cast %c6_i32_245 : i32 to index
    %c0_258 = arith.constant 0 : index
    %c0_259 = arith.constant 0 : index
    %634 = vector.load %arg13[%633, %c0_258, %c0_259] : memref<8x8x128xf32, #tpu.memory_space<vmem>>, vector<1x8x128xf32>
    %635 = vector.shape_cast %634 : vector<1x8x128xf32> to vector<8x128xf32>
    %636 = vector.shape_cast %632 : vector<8x128xf32> to vector<1x8x128xf32>
    tpu.vector_store %arg13[%633, %c0_258, %c0_259], %636 {strides = array<i32>} : memref<8x8x128xf32, #tpu.memory_space<vmem>>, vector<1x8x128xf32>,
    %c7_i32_260 = arith.constant 7 : i32
    %637 = arith.index_cast %c7_i32_260 : i32 to index
    %c0_261 = arith.constant 0 : index
    %c0_262 = arith.constant 0 : index
    %638 = vector.load %arg12[%637, %c0_261, %c0_262] : memref<8x8x512xf32, #tpu.memory_space<vmem>>, vector<1x8x512xf32>
    %639 = vector.shape_cast %638 : vector<1x8x512xf32> to vector<8x512xf32>
    %cst_263 = arith.constant dense<0.000000e+00> : vector<8x512xf32>
    %640 = tpu.matmul %632, %352, %cst_263 {dimension_numbers = #tpu.dot_dimension_numbers<[1], [0], [0], [1], [0, 0, 1, 1], [], []>} : vector<8x128xf32>, vector<128x512xf32>, vector<8x512xf32> -> vector<8x512xf32>
    %641 = arith.addf %639, %640 : vector<8x512xf32>
    %642 = vector.extract_strided_slice %641 {offsets = [0, 0], sizes = [8, 128], strides = [1, 1]} : vector<8x512xf32> to vector<8x128xf32>
    %cst_264 = arith.constant 5.000000e-01 : f32
    %643 = vector.broadcast %cst_264 : f32 to vector<8x128xf32>
    %644 = arith.mulf %643, %642 : vector<8x128xf32>
    %645 = math.tanh %644 : vector<8x128xf32>
    %cst_265 = arith.constant 1.000000e+00 : f32
    %646 = vector.broadcast %cst_265 : f32 to vector<8x128xf32>
    %647 = arith.addf %645, %646 : vector<8x128xf32>
    %cst_266 = arith.constant 5.000000e-01 : f32
    %648 = vector.broadcast %cst_266 : f32 to vector<8x128xf32>
    %649 = arith.mulf %648, %647 : vector<8x128xf32>
    %650 = vector.extract_strided_slice %641 {offsets = [0, 128], sizes = [8, 128], strides = [1, 1]} : vector<8x512xf32> to vector<8x128xf32>
    %cst_267 = arith.constant 5.000000e-01 : f32
    %651 = vector.broadcast %cst_267 : f32 to vector<8x128xf32>
    %652 = arith.mulf %651, %650 : vector<8x128xf32>
    %653 = math.tanh %652 : vector<8x128xf32>
    %cst_268 = arith.constant 1.000000e+00 : f32
    %654 = vector.broadcast %cst_268 : f32 to vector<8x128xf32>
    %655 = arith.addf %653, %654 : vector<8x128xf32>
    %cst_269 = arith.constant 5.000000e-01 : f32
    %656 = vector.broadcast %cst_269 : f32 to vector<8x128xf32>
    %657 = arith.mulf %656, %655 : vector<8x128xf32>
    %658 = vector.extract_strided_slice %641 {offsets = [0, 256], sizes = [8, 128], strides = [1, 1]} : vector<8x512xf32> to vector<8x128xf32>
    %659 = math.tanh %658 : vector<8x128xf32>
    %660 = vector.extract_strided_slice %641 {offsets = [0, 384], sizes = [8, 128], strides = [1, 1]} : vector<8x512xf32> to vector<8x128xf32>
    %cst_270 = arith.constant 5.000000e-01 : f32
    %661 = vector.broadcast %cst_270 : f32 to vector<8x128xf32>
    %662 = arith.mulf %661, %660 : vector<8x128xf32>
    %663 = math.tanh %662 : vector<8x128xf32>
    %cst_271 = arith.constant 1.000000e+00 : f32
    %664 = vector.broadcast %cst_271 : f32 to vector<8x128xf32>
    %665 = arith.addf %663, %664 : vector<8x128xf32>
    %cst_272 = arith.constant 5.000000e-01 : f32
    %666 = vector.broadcast %cst_272 : f32 to vector<8x128xf32>
    %667 = arith.mulf %666, %665 : vector<8x128xf32>
    %668 = arith.mulf %657, %630 : vector<8x128xf32>
    %669 = arith.mulf %649, %659 : vector<8x128xf32>
    %670 = arith.addf %668, %669 : vector<8x128xf32>
    %671 = math.tanh %670 : vector<8x128xf32>
    %672 = arith.mulf %667, %671 : vector<8x128xf32>
    %673 = arith.index_cast %c7_i32_260 : i32 to index
    %c0_273 = arith.constant 0 : index
    %c0_274 = arith.constant 0 : index
    %674 = vector.load %arg13[%673, %c0_273, %c0_274] : memref<8x8x128xf32, #tpu.memory_space<vmem>>, vector<1x8x128xf32>
    %675 = vector.shape_cast %674 : vector<1x8x128xf32> to vector<8x128xf32>
    %676 = vector.shape_cast %672 : vector<8x128xf32> to vector<1x8x128xf32>
    tpu.vector_store %arg13[%673, %c0_273, %c0_274], %676 {strides = array<i32>} : memref<8x8x128xf32, #tpu.memory_space<vmem>>, vector<1x8x128xf32>,
    %c8_i32_275 = arith.constant 8 : i32
    %c1_276 = arith.constant 1 : index
    %c0_277 = arith.constant 0 : index
    %c0_278 = arith.constant 0 : index
    %677 = vector.load %arg14[%c1_276, %c0_277, %c0_278] : memref<2x8x128xf32, #tpu.memory_space<vmem>>, vector<1x8x128xf32>
    %678 = vector.shape_cast %677 : vector<1x8x128xf32> to vector<8x128xf32>
    %679 = vector.shape_cast %672 : vector<8x128xf32> to vector<1x8x128xf32>
    tpu.vector_store %arg14[%c1_276, %c0_277, %c0_278], %679 {strides = array<i32>} : memref<2x8x128xf32, #tpu.memory_space<vmem>>, vector<1x8x128xf32>,
    %c1_279 = arith.constant 1 : index
    %c0_280 = arith.constant 0 : index
    %c0_281 = arith.constant 0 : index
    %680 = vector.load %arg15[%c1_279, %c0_280, %c0_281] : memref<2x8x128xf32, #tpu.memory_space<vmem>>, vector<1x8x128xf32>
    %681 = vector.shape_cast %680 : vector<1x8x128xf32> to vector<8x128xf32>
    %682 = vector.shape_cast %670 : vector<8x128xf32> to vector<1x8x128xf32>
    tpu.vector_store %arg15[%c1_279, %c0_280, %c0_281], %682 {strides = array<i32>} : memref<2x8x128xf32, #tpu.memory_space<vmem>>, vector<1x8x128xf32>,
    %c0_282 = arith.constant 0 : index
    %c0_283 = arith.constant 0 : index
    %c0_284 = arith.constant 0 : index
    %683 = vector.load %arg13[%c0_282, %c0_283, %c0_284] : memref<8x8x128xf32, #tpu.memory_space<vmem>>, vector<8x8x128xf32>
    %cst_285 = arith.constant 0.000000e+00 : f32
    %684 = vector.broadcast %cst_285 : f32 to vector<8x8x128xf32>
    %685 = arith.maximumf %683, %684 : vector<8x8x128xf32>
    %686 = vector.shape_cast %685 : vector<8x8x128xf32> to vector<64x128xf32>
    %c0_286 = arith.constant 0 : index
    %c0_287 = arith.constant 0 : index
    %687 = vector.load %arg9[%c0_286, %c0_287] : memref<128x128xf32, #tpu.memory_space<vmem>>, vector<128x128xf32>
    %cst_288 = arith.constant dense<0.000000e+00> : vector<64x128xf32>
    %688 = tpu.matmul %686, %687, %cst_288 {dimension_numbers = #tpu.dot_dimension_numbers<[1], [0], [0], [1], [0, 0, 1, 1], [], []>} : vector<64x128xf32>, vector<128x128xf32>, vector<64x128xf32> -> vector<64x128xf32>
    %c0_289 = arith.constant 0 : index
    %c0_290 = arith.constant 0 : index
    %689 = vector.load %arg10[%c0_289, %c0_290] : memref<1x128xf32, #tpu.memory_space<vmem>>, vector<1x128xf32>
    %690 = vector.broadcast %689 : vector<1x128xf32> to vector<64x128xf32>
    %691 = arith.addf %688, %690 : vector<64x128xf32>
    %692 = vector.shape_cast %691 : vector<64x128xf32> to vector<8x8x128xf32>
    %c0_291 = arith.constant 0 : index
    %c0_292 = arith.constant 0 : index
    %c0_293 = arith.constant 0 : index
    %693 = vector.load %arg11[%c0_291, %c0_292, %c0_293] : memref<8x8x128xf32, #tpu.memory_space<vmem>>, vector<8x8x128xf32>
    tpu.vector_store %arg11[%c0_291, %c0_292, %c0_293], %692 {strides = array<i32>} : memref<8x8x128xf32, #tpu.memory_space<vmem>>, vector<8x8x128xf32>,
    return
  }
  func.func @transform_0(%arg0: i32, %arg1: i32) -> (i32, i32, i32) {
    %c0_i32 = arith.constant 0 : i32
    %c0_i32_0 = arith.constant 0 : i32
    return %arg1, %arg0, %c0_i32 : i32, i32, i32
  }
  func.func @transform_1(%arg0: i32, %arg1: i32) -> (i32, i32) {
    %c0_i32 = arith.constant 0 : i32
    %c0_i32_0 = arith.constant 0 : i32
    %c0_i32_1 = arith.constant 0 : i32
    return %c0_i32, %c0_i32_0 : i32, i32
  }
  func.func @transform_2(%arg0: i32, %arg1: i32) -> (i32, i32) {
    %c0_i32 = arith.constant 0 : i32
    %c0_i32_0 = arith.constant 0 : i32
    %c0_i32_1 = arith.constant 0 : i32
    return %c0_i32, %c0_i32_0 : i32, i32
  }
  func.func @transform_3(%arg0: i32, %arg1: i32) -> (i32, i32) {
    %c0_i32 = arith.constant 0 : i32
    %c0_i32_0 = arith.constant 0 : i32
    %c0_i32_1 = arith.constant 0 : i32
    return %c0_i32, %c0_i32_0 : i32, i32
  }
  func.func @transform_4(%arg0: i32, %arg1: i32) -> (i32, i32) {
    %c0_i32 = arith.constant 0 : i32
    %c0_i32_0 = arith.constant 0 : i32
    %c0_i32_1 = arith.constant 0 : i32
    return %c0_i32, %c0_i32_0 : i32, i32
  }
  func.func @transform_5(%arg0: i32, %arg1: i32) -> (i32, i32) {
    %c0_i32 = arith.constant 0 : i32
    %c0_i32_0 = arith.constant 0 : i32
    %c0_i32_1 = arith.constant 0 : i32
    return %c0_i32, %c0_i32_0 : i32, i32
  }
  func.func @transform_6(%arg0: i32, %arg1: i32) -> (i32, i32) {
    %c0_i32 = arith.constant 0 : i32
    %c0_i32_0 = arith.constant 0 : i32
    %c0_i32_1 = arith.constant 0 : i32
    return %c0_i32, %c0_i32_0 : i32, i32
  }
  func.func @transform_7(%arg0: i32, %arg1: i32) -> (i32, i32) {
    %c0_i32 = arith.constant 0 : i32
    %c0_i32_0 = arith.constant 0 : i32
    %c0_i32_1 = arith.constant 0 : i32
    return %c0_i32, %c0_i32_0 : i32, i32
  }
  func.func @transform_8(%arg0: i32, %arg1: i32) -> (i32, i32) {
    %c0_i32 = arith.constant 0 : i32
    %c0_i32_0 = arith.constant 0 : i32
    %c0_i32_1 = arith.constant 0 : i32
    return %c0_i32, %c0_i32_0 : i32, i32
  }
  func.func @transform_9(%arg0: i32, %arg1: i32) -> (i32, i32, i32) {
    %c0_i32 = arith.constant 0 : i32
    %c0_i32_0 = arith.constant 0 : i32
    return %arg1, %arg0, %c0_i32 : i32, i32, i32
  }
}

module attributes {stable_mosaic.version = 11 : i64} {
  func.func @_fused_lstm_kernel(%arg0: i32, %arg1: i32, %arg2: memref<8x8x128xf32, #tpu.memory_space<vmem>>, %arg3: memref<128x512xf32, #tpu.memory_space<vmem>>, %arg4: memref<128x512xf32, #tpu.memory_space<vmem>>, %arg5: memref<1x512xf32, #tpu.memory_space<vmem>>, %arg6: memref<128x512xf32, #tpu.memory_space<vmem>>, %arg7: memref<128x512xf32, #tpu.memory_space<vmem>>, %arg8: memref<1x512xf32, #tpu.memory_space<vmem>>, %arg9: memref<128x128xf32, #tpu.memory_space<vmem>>, %arg10: memref<1x128xf32, #tpu.memory_space<vmem>>, %arg11: memref<8x8x128xf32, #tpu.memory_space<vmem>>, %arg12: memref<8x8x512xf32, #tpu.memory_space<vmem>>, %arg13: memref<8x8x128xf32, #tpu.memory_space<vmem>>, %arg14: memref<2x8x128xf32, #tpu.memory_space<vmem>>, %arg15: memref<2x8x128xf32, #tpu.memory_space<vmem>>) attributes {dimension_semantics = [#tpu.dimension_semantics<parallel>, #tpu.dimension_semantics<arbitrary>], iteration_bounds = array<i64: 1, 1>, scalar_prefetch = 0 : i64, scratch_operands = 4 : i64, tpu.core_type = #tpu.core_type<tc>, window_params = [{transform_indices = @transform_0, window_bounds = array<i64: 8, 8, 128>}, {pipeline_mode = #tpu.pipeline_mode<synchronous>, transform_indices = @transform_1, window_bounds = array<i64: 128, 512>}, {pipeline_mode = #tpu.pipeline_mode<synchronous>, transform_indices = @transform_2, window_bounds = array<i64: 128, 512>}, {pipeline_mode = #tpu.pipeline_mode<synchronous>, transform_indices = @transform_3, window_bounds = array<i64: 1, 512>}, {pipeline_mode = #tpu.pipeline_mode<synchronous>, transform_indices = @transform_4, window_bounds = array<i64: 128, 512>}, {pipeline_mode = #tpu.pipeline_mode<synchronous>, transform_indices = @transform_5, window_bounds = array<i64: 128, 512>}, {pipeline_mode = #tpu.pipeline_mode<synchronous>, transform_indices = @transform_6, window_bounds = array<i64: 1, 512>}, {pipeline_mode = #tpu.pipeline_mode<synchronous>, transform_indices = @transform_7, window_bounds = array<i64: 128, 128>}, {pipeline_mode = #tpu.pipeline_mode<synchronous>, transform_indices = @transform_8, window_bounds = array<i64: 1, 128>}, {transform_indices = @transform_9, window_bounds = array<i64: 8, 8, 128>}]} {
    %c0_i32 = arith.constant 0 : i32
    %0 = arith.cmpi eq, %arg1, %c0_i32 : i32
    %1 = arith.extui %0 : i1 to i32
    %c0_i32_0 = arith.constant 0 : i32
    %2 = arith.cmpi ne, %1, %c0_i32_0 : i32
    scf.if %2 {
      %cst_294 = arith.constant 0.000000e+00 : f32
      %694 = vector.broadcast %cst_294 : f32 to vector<2x8x128xf32>
      %c0_295 = arith.constant 0 : index
      %c0_296 = arith.constant 0 : index
      %c0_297 = arith.constant 0 : index
      %695 = vector.load %arg14[%c0_295, %c0_296, %c0_297] : memref<2x8x128xf32, #tpu.memory_space<vmem>>, vector<2x8x128xf32>
      tpu.vector_store %arg14[%c0_295, %c0_296, %c0_297], %694 {strides = array<i32>} : memref<2x8x128xf32, #tpu.memory_space<vmem>>, vector<2x8x128xf32>,
      %cst_298 = arith.constant 0.000000e+00 : f32
      %696 = vector.broadcast %cst_298 : f32 to vector<2x8x128xf32>
      %c0_299 = arith.constant 0 : index
      %c0_300 = arith.constant 0 : index
      %c0_301 = arith.constant 0 : index
      %697 = vector.load %arg15[%c0_299, %c0_300, %c0_301] : memref<2x8x128xf32, #tpu.memory_space<vmem>>, vector<2x8x128xf32>
      tpu.vector_store %arg15[%c0_299, %c0_300, %c0_301], %696 {strides = array<i32>} : memref<2x8x128xf32, #tpu.memory_space<vmem>>, vector<2x8x128xf32>,
    } else {
    }
    %c0 = arith.constant 0 : index
    %c0_1 = arith.constant 0 : index
    %c0_2 = arith.constant 0 : index
    %3 = vector.load %arg2[%c0, %c0_1, %c0_2] : memref<8x8x128xf32, #tpu.memory_space<vmem>>, vector<8x8x128xf32>
    %4 = vector.shape_cast %3 : vector<8x8x128xf32> to vector<64x128xf32>
    %c0_3 = arith.constant 0 : index
    %c0_4 = arith.constant 0 : index
    %5 = vector.load %arg3[%c0_3, %c0_4] : memref<128x512xf32, #tpu.memory_space<vmem>>, vector<128x512xf32>
    %cst = arith.constant dense<0.000000e+00> : vector<64x512xf32>
    %6 = tpu.matmul %4, %5, %cst {dimension_numbers = #tpu.dot_dimension_numbers<[1], [0], [0], [1], [0, 0, 1, 1], [], []>} : vector<64x128xf32>, vector<128x512xf32>, vector<64x512xf32> -> vector<64x512xf32>
    %c0_5 = arith.constant 0 : index
    %c0_6 = arith.constant 0 : index
    %7 = vector.load %arg5[%c0_5, %c0_6] : memref<1x512xf32, #tpu.memory_space<vmem>>, vector<1x512xf32>
    %8 = vector.broadcast %7 : vector<1x512xf32> to vector<64x512xf32>
    %9 = arith.addf %6, %8 : vector<64x512xf32>
    %10 = vector.shape_cast %9 : vector<64x512xf32> to vector<8x8x512xf32>
    %c0_7 = arith.constant 0 : index
    %c0_8 = arith.constant 0 : index
    %c0_9 = arith.constant 0 : index
    %11 = vector.load %arg12[%c0_7, %c0_8, %c0_9] : memref<8x8x512xf32, #tpu.memory_space<vmem>>, vector<8x8x512xf32>
    tpu.vector_store %arg12[%c0_7, %c0_8, %c0_9], %10 {strides = array<i32>} : memref<8x8x512xf32, #tpu.memory_space<vmem>>, vector<8x8x512xf32>,
    %c0_10 = arith.constant 0 : index
    %c0_11 = arith.constant 0 : index
    %12 = vector.load %arg4[%c0_10, %c0_11] : memref<128x512xf32, #tpu.memory_space<vmem>>, vector<128x512xf32>
    %c0_12 = arith.constant 0 : index
    %c0_13 = arith.constant 0 : index
    %c0_14 = arith.constant 0 : index
    %13 = vector.load %arg14[%c0_12, %c0_13, %c0_14] : memref<2x8x128xf32, #tpu.memory_space<vmem>>, vector<1x8x128xf32>
    %14 = vector.shape_cast %13 : vector<1x8x128xf32> to vector<8x128xf32>
    %c0_15 = arith.constant 0 : index
    %c0_16 = arith.constant 0 : index
    %c0_17 = arith.constant 0 : index
    %15 = vector.load %arg15[%c0_15, %c0_16, %c0_17] : memref<2x8x128xf32, #tpu.memory_space<vmem>>, vector<1x8x128xf32>
    %16 = vector.shape_cast %15 : vector<1x8x128xf32> to vector<8x128xf32>
    %c0_i32_18 = arith.constant 0 : i32
    %17 = arith.index_cast %c0_i32_18 : i32 to index
    %c0_19 = arith.constant 0 : index
    %c0_20 = arith.constant 0 : index
    %18 = vector.load %arg12[%17, %c0_19, %c0_20] : memref<8x8x512xf32, #tpu.memory_space<vmem>>, vector<1x8x512xf32>
    %19 = vector.shape_cast %18 : vector<1x8x512xf32> to vector<8x512xf32>
    %cst_21 = arith.constant dense<0.000000e+00> : vector<8x512xf32>
    %20 = tpu.matmul %14, %12, %cst_21 {dimension_numbers = #tpu.dot_dimension_numbers<[1], [0], [0], [1], [0, 0, 1, 1], [], []>} : vector<8x128xf32>, vector<128x512xf32>, vector<8x512xf32> -> vector<8x512xf32>
    %21 = arith.addf %19, %20 : vector<8x512xf32>
    %22 = vector.extract_strided_slice %21 {offsets = [0, 0], sizes = [8, 128], strides = [1, 1]} : vector<8x512xf32> to vector<8x128xf32>
    %cst_22 = arith.constant 5.000000e-01 : f32
    %23 = vector.broadcast %cst_22 : f32 to vector<8x128xf32>
    %24 = arith.mulf %23, %22 : vector<8x128xf32>
    %25 = math.tanh %24 : vector<8x128xf32>
    %cst_23 = arith.constant 1.000000e+00 : f32
    %26 = vector.broadcast %cst_23 : f32 to vector<8x128xf32>
    %27 = arith.addf %25, %26 : vector<8x128xf32>
    %cst_24 = arith.constant 5.000000e-01 : f32
    %28 = vector.broadcast %cst_24 : f32 to vector<8x128xf32>
    %29 = arith.mulf %28, %27 : vector<8x128xf32>
    %30 = vector.extract_strided_slice %21 {offsets = [0, 128], sizes = [8, 128], strides = [1, 1]} : vector<8x512xf32> to vector<8x128xf32>
    %cst_25 = arith.constant 5.000000e-01 : f32
    %31 = vector.broadcast %cst_25 : f32 to vector<8x128xf32>
    %32 = arith.mulf %31, %30 : vector<8x128xf32>
    %33 = math.tanh %32 : vector<8x128xf32>
    %cst_26 = arith.constant 1.000000e+00 : f32
    %34 = vector.broadcast %cst_26 : f32 to vector<8x128xf32>
    %35 = arith.addf %33, %34 : vector<8x128xf32>
    %cst_27 = arith.constant 5.000000e-01 : f32
    %36 = vector.broadcast %cst_27 : f32 to vector<8x128xf32>
    %37 = arith.mulf %36, %35 : vector<8x128xf32>
    %38 = vector.extract_strided_slice %21 {offsets = [0, 256], sizes = [8, 128], strides = [1, 1]} : vector<8x512xf32> to vector<8x128xf32>
    %39 = math.tanh %38 : vector<8x128xf32>
    %40 = vector.extract_strided_slice %21 {offsets = [0, 384], sizes = [8, 128], strides = [1, 1]} : vector<8x512xf32> to vector<8x128xf32>
    %cst_28 = arith.constant 5.000000e-01 : f32
    %41 = vector.broadcast %cst_28 : f32 to vector<8x128xf32>
    %42 = arith.mulf %41, %40 : vector<8x128xf32>
    %43 = math.tanh %42 : vector<8x128xf32>
    %cst_29 = arith.constant 1.000000e+00 : f32
    %44 = vector.broadcast %cst_29 : f32 to vector<8x128xf32>
    %45 = arith.addf %43, %44 : vector<8x128xf32>
    %cst_30 = arith.constant 5.000000e-01 : f32
    %46 = vector.broadcast %cst_30 : f32 to vector<8x128xf32>
    %47 = arith.mulf %46, %45 : vector<8x128xf32>
    %48 = arith.mulf %37, %16 : vector<8x128xf32>
    %49 = arith.mulf %29, %39 : vector<8x128xf32>
    %50 = arith.addf %48, %49 : vector<8x128xf32>
    %51 = math.tanh %50 : vector<8x128xf32>
    %52 = arith.mulf %47, %51 : vector<8x128xf32>
    %53 = arith.index_cast %c0_i32_18 : i32 to index
    %c0_31 = arith.constant 0 : index
    %c0_32 = arith.constant 0 : index
    %54 = vector.load %arg13[%53, %c0_31, %c0_32] : memref<8x8x128xf32, #tpu.memory_space<vmem>>, vector<1x8x128xf32>
    %55 = vector.shape_cast %54 : vector<1x8x128xf32> to vector<8x128xf32>
    %56 = vector.shape_cast %52 : vector<8x128xf32> to vector<1x8x128xf32>
    tpu.vector_store %arg13[%53, %c0_31, %c0_32], %56 {strides = array<i32>} : memref<8x8x128xf32, #tpu.memory_space<vmem>>, vector<1x8x128xf32>,
    %c1_i32 = arith.constant 1 : i32
    %57 = arith.index_cast %c1_i32 : i32 to index
    %c0_33 = arith.constant 0 : index
    %c0_34 = arith.constant 0 : index
    %58 = vector.load %arg12[%57, %c0_33, %c0_34] : memref<8x8x512xf32, #tpu.memory_space<vmem>>, vector<1x8x512xf32>
    %59 = vector.shape_cast %58 : vector<1x8x512xf32> to vector<8x512xf32>
    %cst_35 = arith.constant dense<0.000000e+00> : vector<8x512xf32>
    %60 = tpu.matmul %52, %12, %cst_35 {dimension_numbers = #tpu.dot_dimension_numbers<[1], [0], [0], [1], [0, 0, 1, 1], [], []>} : vector<8x128xf32>, vector<128x512xf32>, vector<8x512xf32> -> vector<8x512xf32>
    %61 = arith.addf %59, %60 : vector<8x512xf32>
    %62 = vector.extract_strided_slice %61 {offsets = [0, 0], sizes = [8, 128], strides = [1, 1]} : vector<8x512xf32> to vector<8x128xf32>
    %cst_36 = arith.constant 5.000000e-01 : f32
    %63 = vector.broadcast %cst_36 : f32 to vector<8x128xf32>
    %64 = arith.mulf %63, %62 : vector<8x128xf32>
    %65 = math.tanh %64 : vector<8x128xf32>
    %cst_37 = arith.constant 1.000000e+00 : f32
    %66 = vector.broadcast %cst_37 : f32 to vector<8x128xf32>
    %67 = arith.addf %65, %66 : vector<8x128xf32>
    %cst_38 = arith.constant 5.000000e-01 : f32
    %68 = vector.broadcast %cst_38 : f32 to vector<8x128xf32>
    %69 = arith.mulf %68, %67 : vector<8x128xf32>
    %70 = vector.extract_strided_slice %61 {offsets = [0, 128], sizes = [8, 128], strides = [1, 1]} : vector<8x512xf32> to vector<8x128xf32>
    %cst_39 = arith.constant 5.000000e-01 : f32
    %71 = vector.broadcast %cst_39 : f32 to vector<8x128xf32>
    %72 = arith.mulf %71, %70 : vector<8x128xf32>
    %73 = math.tanh %72 : vector<8x128xf32>
    %cst_40 = arith.constant 1.000000e+00 : f32
    %74 = vector.broadcast %cst_40 : f32 to vector<8x128xf32>
    %75 = arith.addf %73, %74 : vector<8x128xf32>
    %cst_41 = arith.constant 5.000000e-01 : f32
    %76 = vector.broadcast %cst_41 : f32 to vector<8x128xf32>
    %77 = arith.mulf %76, %75 : vector<8x128xf32>
    %78 = vector.extract_strided_slice %61 {offsets = [0, 256], sizes = [8, 128], strides = [1, 1]} : vector<8x512xf32> to vector<8x128xf32>
    %79 = math.tanh %78 : vector<8x128xf32>
    %80 = vector.extract_strided_slice %61 {offsets = [0, 384], sizes = [8, 128], strides = [1, 1]} : vector<8x512xf32> to vector<8x128xf32>
    %cst_42 = arith.constant 5.000000e-01 : f32
    %81 = vector.broadcast %cst_42 : f32 to vector<8x128xf32>
    %82 = arith.mulf %81, %80 : vector<8x128xf32>
    %83 = math.tanh %82 : vector<8x128xf32>
    %cst_43 = arith.constant 1.000000e+00 : f32
    %84 = vector.broadcast %cst_43 : f32 to vector<8x128xf32>
    %85 = arith.addf %83, %84 : vector<8x128xf32>
    %cst_44 = arith.constant 5.000000e-01 : f32
    %86 = vector.broadcast %cst_44 : f32 to vector<8x128xf32>
    %87 = arith.mulf %86, %85 : vector<8x128xf32>
    %88 = arith.mulf %77, %50 : vector<8x128xf32>
    %89 = arith.mulf %69, %79 : vector<8x128xf32>
    %90 = arith.addf %88, %89 : vector<8x128xf32>
    %91 = math.tanh %90 : vector<8x128xf32>
    %92 = arith.mulf %87, %91 : vector<8x128xf32>
    %93 = arith.index_cast %c1_i32 : i32 to index
    %c0_45 = arith.constant 0 : index
    %c0_46 = arith.constant 0 : index
    %94 = vector.load %arg13[%93, %c0_45, %c0_46] : memref<8x8x128xf32, #tpu.memory_space<vmem>>, vector<1x8x128xf32>
    %95 = vector.shape_cast %94 : vector<1x8x128xf32> to vector<8x128xf32>
    %96 = vector.shape_cast %92 : vector<8x128xf32> to vector<1x8x128xf32>
    tpu.vector_store %arg13[%93, %c0_45, %c0_46], %96 {strides = array<i32>} : memref<8x8x128xf32, #tpu.memory_space<vmem>>, vector<1x8x128xf32>,
    %c2_i32 = arith.constant 2 : i32
    %97 = arith.index_cast %c2_i32 : i32 to index
    %c0_47 = arith.constant 0 : index
    %c0_48 = arith.constant 0 : index
    %98 = vector.load %arg12[%97, %c0_47, %c0_48] : memref<8x8x512xf32, #tpu.memory_space<vmem>>, vector<1x8x512xf32>
    %99 = vector.shape_cast %98 : vector<1x8x512xf32> to vector<8x512xf32>
    %cst_49 = arith.constant dense<0.000000e+00> : vector<8x512xf32>
    %100 = tpu.matmul %92, %12, %cst_49 {dimension_numbers = #tpu.dot_dimension_numbers<[1], [0], [0], [1], [0, 0, 1, 1], [], []>} : vector<8x128xf32>, vector<128x512xf32>, vector<8x512xf32> -> vector<8x512xf32>
    %101 = arith.addf %99, %100 : vector<8x512xf32>
    %102 = vector.extract_strided_slice %101 {offsets = [0, 0], sizes = [8, 128], strides = [1, 1]} : vector<8x512xf32> to vector<8x128xf32>
    %cst_50 = arith.constant 5.000000e-01 : f32
    %103 = vector.broadcast %cst_50 : f32 to vector<8x128xf32>
    %104 = arith.mulf %103, %102 : vector<8x128xf32>
    %105 = math.tanh %104 : vector<8x128xf32>
    %cst_51 = arith.constant 1.000000e+00 : f32
    %106 = vector.broadcast %cst_51 : f32 to vector<8x128xf32>
    %107 = arith.addf %105, %106 : vector<8x128xf32>
    %cst_52 = arith.constant 5.000000e-01 : f32
    %108 = vector.broadcast %cst_52 : f32 to vector<8x128xf32>
    %109 = arith.mulf %108, %107 : vector<8x128xf32>
    %110 = vector.extract_strided_slice %101 {offsets = [0, 128], sizes = [8, 128], strides = [1, 1]} : vector<8x512xf32> to vector<8x128xf32>
    %cst_53 = arith.constant 5.000000e-01 : f32
    %111 = vector.broadcast %cst_53 : f32 to vector<8x128xf32>
    %112 = arith.mulf %111, %110 : vector<8x128xf32>
    %113 = math.tanh %112 : vector<8x128xf32>
    %cst_54 = arith.constant 1.000000e+00 : f32
    %114 = vector.broadcast %cst_54 : f32 to vector<8x128xf32>
    %115 = arith.addf %113, %114 : vector<8x128xf32>
    %cst_55 = arith.constant 5.000000e-01 : f32
    %116 = vector.broadcast %cst_55 : f32 to vector<8x128xf32>
    %117 = arith.mulf %116, %115 : vector<8x128xf32>
    %118 = vector.extract_strided_slice %101 {offsets = [0, 256], sizes = [8, 128], strides = [1, 1]} : vector<8x512xf32> to vector<8x128xf32>
    %119 = math.tanh %118 : vector<8x128xf32>
    %120 = vector.extract_strided_slice %101 {offsets = [0, 384], sizes = [8, 128], strides = [1, 1]} : vector<8x512xf32> to vector<8x128xf32>
    %cst_56 = arith.constant 5.000000e-01 : f32
    %121 = vector.broadcast %cst_56 : f32 to vector<8x128xf32>
    %122 = arith.mulf %121, %120 : vector<8x128xf32>
    %123 = math.tanh %122 : vector<8x128xf32>
    %cst_57 = arith.constant 1.000000e+00 : f32
    %124 = vector.broadcast %cst_57 : f32 to vector<8x128xf32>
    %125 = arith.addf %123, %124 : vector<8x128xf32>
    %cst_58 = arith.constant 5.000000e-01 : f32
    %126 = vector.broadcast %cst_58 : f32 to vector<8x128xf32>
    %127 = arith.mulf %126, %125 : vector<8x128xf32>
    %128 = arith.mulf %117, %90 : vector<8x128xf32>
    %129 = arith.mulf %109, %119 : vector<8x128xf32>
    %130 = arith.addf %128, %129 : vector<8x128xf32>
    %131 = math.tanh %130 : vector<8x128xf32>
    %132 = arith.mulf %127, %131 : vector<8x128xf32>
    %133 = arith.index_cast %c2_i32 : i32 to index
    %c0_59 = arith.constant 0 : index
    %c0_60 = arith.constant 0 : index
    %134 = vector.load %arg13[%133, %c0_59, %c0_60] : memref<8x8x128xf32, #tpu.memory_space<vmem>>, vector<1x8x128xf32>
    %135 = vector.shape_cast %134 : vector<1x8x128xf32> to vector<8x128xf32>
    %136 = vector.shape_cast %132 : vector<8x128xf32> to vector<1x8x128xf32>
    tpu.vector_store %arg13[%133, %c0_59, %c0_60], %136 {strides = array<i32>} : memref<8x8x128xf32, #tpu.memory_space<vmem>>, vector<1x8x128xf32>,
    %c3_i32 = arith.constant 3 : i32
    %137 = arith.index_cast %c3_i32 : i32 to index
    %c0_61 = arith.constant 0 : index
    %c0_62 = arith.constant 0 : index
    %138 = vector.load %arg12[%137, %c0_61, %c0_62] : memref<8x8x512xf32, #tpu.memory_space<vmem>>, vector<1x8x512xf32>
    %139 = vector.shape_cast %138 : vector<1x8x512xf32> to vector<8x512xf32>
    %cst_63 = arith.constant dense<0.000000e+00> : vector<8x512xf32>
    %140 = tpu.matmul %132, %12, %cst_63 {dimension_numbers = #tpu.dot_dimension_numbers<[1], [0], [0], [1], [0, 0, 1, 1], [], []>} : vector<8x128xf32>, vector<128x512xf32>, vector<8x512xf32> -> vector<8x512xf32>
    %141 = arith.addf %139, %140 : vector<8x512xf32>
    %142 = vector.extract_strided_slice %141 {offsets = [0, 0], sizes = [8, 128], strides = [1, 1]} : vector<8x512xf32> to vector<8x128xf32>
    %cst_64 = arith.constant 5.000000e-01 : f32
    %143 = vector.broadcast %cst_64 : f32 to vector<8x128xf32>
    %144 = arith.mulf %143, %142 : vector<8x128xf32>
    %145 = math.tanh %144 : vector<8x128xf32>
    %cst_65 = arith.constant 1.000000e+00 : f32
    %146 = vector.broadcast %cst_65 : f32 to vector<8x128xf32>
    %147 = arith.addf %145, %146 : vector<8x128xf32>
    %cst_66 = arith.constant 5.000000e-01 : f32
    %148 = vector.broadcast %cst_66 : f32 to vector<8x128xf32>
    %149 = arith.mulf %148, %147 : vector<8x128xf32>
    %150 = vector.extract_strided_slice %141 {offsets = [0, 128], sizes = [8, 128], strides = [1, 1]} : vector<8x512xf32> to vector<8x128xf32>
    %cst_67 = arith.constant 5.000000e-01 : f32
    %151 = vector.broadcast %cst_67 : f32 to vector<8x128xf32>
    %152 = arith.mulf %151, %150 : vector<8x128xf32>
    %153 = math.tanh %152 : vector<8x128xf32>
    %cst_68 = arith.constant 1.000000e+00 : f32
    %154 = vector.broadcast %cst_68 : f32 to vector<8x128xf32>
    %155 = arith.addf %153, %154 : vector<8x128xf32>
    %cst_69 = arith.constant 5.000000e-01 : f32
    %156 = vector.broadcast %cst_69 : f32 to vector<8x128xf32>
    %157 = arith.mulf %156, %155 : vector<8x128xf32>
    %158 = vector.extract_strided_slice %141 {offsets = [0, 256], sizes = [8, 128], strides = [1, 1]} : vector<8x512xf32> to vector<8x128xf32>
    %159 = math.tanh %158 : vector<8x128xf32>
    %160 = vector.extract_strided_slice %141 {offsets = [0, 384], sizes = [8, 128], strides = [1, 1]} : vector<8x512xf32> to vector<8x128xf32>
    %cst_70 = arith.constant 5.000000e-01 : f32
    %161 = vector.broadcast %cst_70 : f32 to vector<8x128xf32>
    %162 = arith.mulf %161, %160 : vector<8x128xf32>
    %163 = math.tanh %162 : vector<8x128xf32>
    %cst_71 = arith.constant 1.000000e+00 : f32
    %164 = vector.broadcast %cst_71 : f32 to vector<8x128xf32>
    %165 = arith.addf %163, %164 : vector<8x128xf32>
    %cst_72 = arith.constant 5.000000e-01 : f32
    %166 = vector.broadcast %cst_72 : f32 to vector<8x128xf32>
    %167 = arith.mulf %166, %165 : vector<8x128xf32>
    %168 = arith.mulf %157, %130 : vector<8x128xf32>
    %169 = arith.mulf %149, %159 : vector<8x128xf32>
    %170 = arith.addf %168, %169 : vector<8x128xf32>
    %171 = math.tanh %170 : vector<8x128xf32>
    %172 = arith.mulf %167, %171 : vector<8x128xf32>
    %173 = arith.index_cast %c3_i32 : i32 to index
    %c0_73 = arith.constant 0 : index
    %c0_74 = arith.constant 0 : index
    %174 = vector.load %arg13[%173, %c0_73, %c0_74] : memref<8x8x128xf32, #tpu.memory_space<vmem>>, vector<1x8x128xf32>
    %175 = vector.shape_cast %174 : vector<1x8x128xf32> to vector<8x128xf32>
    %176 = vector.shape_cast %172 : vector<8x128xf32> to vector<1x8x128xf32>
    tpu.vector_store %arg13[%173, %c0_73, %c0_74], %176 {strides = array<i32>} : memref<8x8x128xf32, #tpu.memory_space<vmem>>, vector<1x8x128xf32>,
    %c4_i32 = arith.constant 4 : i32
    %177 = arith.index_cast %c4_i32 : i32 to index
    %c0_75 = arith.constant 0 : index
    %c0_76 = arith.constant 0 : index
    %178 = vector.load %arg12[%177, %c0_75, %c0_76] : memref<8x8x512xf32, #tpu.memory_space<vmem>>, vector<1x8x512xf32>
    %179 = vector.shape_cast %178 : vector<1x8x512xf32> to vector<8x512xf32>
    %cst_77 = arith.constant dense<0.000000e+00> : vector<8x512xf32>
    %180 = tpu.matmul %172, %12, %cst_77 {dimension_numbers = #tpu.dot_dimension_numbers<[1], [0], [0], [1], [0, 0, 1, 1], [], []>} : vector<8x128xf32>, vector<128x512xf32>, vector<8x512xf32> -> vector<8x512xf32>
    %181 = arith.addf %179, %180 : vector<8x512xf32>
    %182 = vector.extract_strided_slice %181 {offsets = [0, 0], sizes = [8, 128], strides = [1, 1]} : vector<8x512xf32> to vector<8x128xf32>
    %cst_78 = arith.constant 5.000000e-01 : f32
    %183 = vector.broadcast %cst_78 : f32 to vector<8x128xf32>
    %184 = arith.mulf %183, %182 : vector<8x128xf32>
    %185 = math.tanh %184 : vector<8x128xf32>
    %cst_79 = arith.constant 1.000000e+00 : f32
    %186 = vector.broadcast %cst_79 : f32 to vector<8x128xf32>
    %187 = arith.addf %185, %186 : vector<8x128xf32>
    %cst_80 = arith.constant 5.000000e-01 : f32
    %188 = vector.broadcast %cst_80 : f32 to vector<8x128xf32>
    %189 = arith.mulf %188, %187 : vector<8x128xf32>
    %190 = vector.extract_strided_slice %181 {offsets = [0, 128], sizes = [8, 128], strides = [1, 1]} : vector<8x512xf32> to vector<8x128xf32>
    %cst_81 = arith.constant 5.000000e-01 : f32
    %191 = vector.broadcast %cst_81 : f32 to vector<8x128xf32>
    %192 = arith.mulf %191, %190 : vector<8x128xf32>
    %193 = math.tanh %192 : vector<8x128xf32>
    %cst_82 = arith.constant 1.000000e+00 : f32
    %194 = vector.broadcast %cst_82 : f32 to vector<8x128xf32>
    %195 = arith.addf %193, %194 : vector<8x128xf32>
    %cst_83 = arith.constant 5.000000e-01 : f32
    %196 = vector.broadcast %cst_83 : f32 to vector<8x128xf32>
    %197 = arith.mulf %196, %195 : vector<8x128xf32>
    %198 = vector.extract_strided_slice %181 {offsets = [0, 256], sizes = [8, 128], strides = [1, 1]} : vector<8x512xf32> to vector<8x128xf32>
    %199 = math.tanh %198 : vector<8x128xf32>
    %200 = vector.extract_strided_slice %181 {offsets = [0, 384], sizes = [8, 128], strides = [1, 1]} : vector<8x512xf32> to vector<8x128xf32>
    %cst_84 = arith.constant 5.000000e-01 : f32
    %201 = vector.broadcast %cst_84 : f32 to vector<8x128xf32>
    %202 = arith.mulf %201, %200 : vector<8x128xf32>
    %203 = math.tanh %202 : vector<8x128xf32>
    %cst_85 = arith.constant 1.000000e+00 : f32
    %204 = vector.broadcast %cst_85 : f32 to vector<8x128xf32>
    %205 = arith.addf %203, %204 : vector<8x128xf32>
    %cst_86 = arith.constant 5.000000e-01 : f32
    %206 = vector.broadcast %cst_86 : f32 to vector<8x128xf32>
    %207 = arith.mulf %206, %205 : vector<8x128xf32>
    %208 = arith.mulf %197, %170 : vector<8x128xf32>
    %209 = arith.mulf %189, %199 : vector<8x128xf32>
    %210 = arith.addf %208, %209 : vector<8x128xf32>
    %211 = math.tanh %210 : vector<8x128xf32>
    %212 = arith.mulf %207, %211 : vector<8x128xf32>
    %213 = arith.index_cast %c4_i32 : i32 to index
    %c0_87 = arith.constant 0 : index
    %c0_88 = arith.constant 0 : index
    %214 = vector.load %arg13[%213, %c0_87, %c0_88] : memref<8x8x128xf32, #tpu.memory_space<vmem>>, vector<1x8x128xf32>
    %215 = vector.shape_cast %214 : vector<1x8x128xf32> to vector<8x128xf32>
    %216 = vector.shape_cast %212 : vector<8x128xf32> to vector<1x8x128xf32>
    tpu.vector_store %arg13[%213, %c0_87, %c0_88], %216 {strides = array<i32>} : memref<8x8x128xf32, #tpu.memory_space<vmem>>, vector<1x8x128xf32>,
    %c5_i32 = arith.constant 5 : i32
    %217 = arith.index_cast %c5_i32 : i32 to index
    %c0_89 = arith.constant 0 : index
    %c0_90 = arith.constant 0 : index
    %218 = vector.load %arg12[%217, %c0_89, %c0_90] : memref<8x8x512xf32, #tpu.memory_space<vmem>>, vector<1x8x512xf32>
    %219 = vector.shape_cast %218 : vector<1x8x512xf32> to vector<8x512xf32>
    %cst_91 = arith.constant dense<0.000000e+00> : vector<8x512xf32>
    %220 = tpu.matmul %212, %12, %cst_91 {dimension_numbers = #tpu.dot_dimension_numbers<[1], [0], [0], [1], [0, 0, 1, 1], [], []>} : vector<8x128xf32>, vector<128x512xf32>, vector<8x512xf32> -> vector<8x512xf32>
    %221 = arith.addf %219, %220 : vector<8x512xf32>
    %222 = vector.extract_strided_slice %221 {offsets = [0, 0], sizes = [8, 128], strides = [1, 1]} : vector<8x512xf32> to vector<8x128xf32>
    %cst_92 = arith.constant 5.000000e-01 : f32
    %223 = vector.broadcast %cst_92 : f32 to vector<8x128xf32>
    %224 = arith.mulf %223, %222 : vector<8x128xf32>
    %225 = math.tanh %224 : vector<8x128xf32>
    %cst_93 = arith.constant 1.000000e+00 : f32
    %226 = vector.broadcast %cst_93 : f32 to vector<8x128xf32>
    %227 = arith.addf %225, %226 : vector<8x128xf32>
    %cst_94 = arith.constant 5.000000e-01 : f32
    %228 = vector.broadcast %cst_94 : f32 to vector<8x128xf32>
    %229 = arith.mulf %228, %227 : vector<8x128xf32>
    %230 = vector.extract_strided_slice %221 {offsets = [0, 128], sizes = [8, 128], strides = [1, 1]} : vector<8x512xf32> to vector<8x128xf32>
    %cst_95 = arith.constant 5.000000e-01 : f32
    %231 = vector.broadcast %cst_95 : f32 to vector<8x128xf32>
    %232 = arith.mulf %231, %230 : vector<8x128xf32>
    %233 = math.tanh %232 : vector<8x128xf32>
    %cst_96 = arith.constant 1.000000e+00 : f32
    %234 = vector.broadcast %cst_96 : f32 to vector<8x128xf32>
    %235 = arith.addf %233, %234 : vector<8x128xf32>
    %cst_97 = arith.constant 5.000000e-01 : f32
    %236 = vector.broadcast %cst_97 : f32 to vector<8x128xf32>
    %237 = arith.mulf %236, %235 : vector<8x128xf32>
    %238 = vector.extract_strided_slice %221 {offsets = [0, 256], sizes = [8, 128], strides = [1, 1]} : vector<8x512xf32> to vector<8x128xf32>
    %239 = math.tanh %238 : vector<8x128xf32>
    %240 = vector.extract_strided_slice %221 {offsets = [0, 384], sizes = [8, 128], strides = [1, 1]} : vector<8x512xf32> to vector<8x128xf32>
    %cst_98 = arith.constant 5.000000e-01 : f32
    %241 = vector.broadcast %cst_98 : f32 to vector<8x128xf32>
    %242 = arith.mulf %241, %240 : vector<8x128xf32>
    %243 = math.tanh %242 : vector<8x128xf32>
    %cst_99 = arith.constant 1.000000e+00 : f32
    %244 = vector.broadcast %cst_99 : f32 to vector<8x128xf32>
    %245 = arith.addf %243, %244 : vector<8x128xf32>
    %cst_100 = arith.constant 5.000000e-01 : f32
    %246 = vector.broadcast %cst_100 : f32 to vector<8x128xf32>
    %247 = arith.mulf %246, %245 : vector<8x128xf32>
    %248 = arith.mulf %237, %210 : vector<8x128xf32>
    %249 = arith.mulf %229, %239 : vector<8x128xf32>
    %250 = arith.addf %248, %249 : vector<8x128xf32>
    %251 = math.tanh %250 : vector<8x128xf32>
    %252 = arith.mulf %247, %251 : vector<8x128xf32>
    %253 = arith.index_cast %c5_i32 : i32 to index
    %c0_101 = arith.constant 0 : index
    %c0_102 = arith.constant 0 : index
    %254 = vector.load %arg13[%253, %c0_101, %c0_102] : memref<8x8x128xf32, #tpu.memory_space<vmem>>, vector<1x8x128xf32>
    %255 = vector.shape_cast %254 : vector<1x8x128xf32> to vector<8x128xf32>
    %256 = vector.shape_cast %252 : vector<8x128xf32> to vector<1x8x128xf32>
    tpu.vector_store %arg13[%253, %c0_101, %c0_102], %256 {strides = array<i32>} : memref<8x8x128xf32, #tpu.memory_space<vmem>>, vector<1x8x128xf32>,
    %c6_i32 = arith.constant 6 : i32
    %257 = arith.index_cast %c6_i32 : i32 to index
    %c0_103 = arith.constant 0 : index
    %c0_104 = arith.constant 0 : index
    %258 = vector.load %arg12[%257, %c0_103, %c0_104] : memref<8x8x512xf32, #tpu.memory_space<vmem>>, vector<1x8x512xf32>
    %259 = vector.shape_cast %258 : vector<1x8x512xf32> to vector<8x512xf32>
    %cst_105 = arith.constant dense<0.000000e+00> : vector<8x512xf32>
    %260 = tpu.matmul %252, %12, %cst_105 {dimension_numbers = #tpu.dot_dimension_numbers<[1], [0], [0], [1], [0, 0, 1, 1], [], []>} : vector<8x128xf32>, vector<128x512xf32>, vector<8x512xf32> -> vector<8x512xf32>
    %261 = arith.addf %259, %260 : vector<8x512xf32>
    %262 = vector.extract_strided_slice %261 {offsets = [0, 0], sizes = [8, 128], strides = [1, 1]} : vector<8x512xf32> to vector<8x128xf32>
    %cst_106 = arith.constant 5.000000e-01 : f32
    %263 = vector.broadcast %cst_106 : f32 to vector<8x128xf32>
    %264 = arith.mulf %263, %262 : vector<8x128xf32>
    %265 = math.tanh %264 : vector<8x128xf32>
    %cst_107 = arith.constant 1.000000e+00 : f32
    %266 = vector.broadcast %cst_107 : f32 to vector<8x128xf32>
    %267 = arith.addf %265, %266 : vector<8x128xf32>
    %cst_108 = arith.constant 5.000000e-01 : f32
    %268 = vector.broadcast %cst_108 : f32 to vector<8x128xf32>
    %269 = arith.mulf %268, %267 : vector<8x128xf32>
    %270 = vector.extract_strided_slice %261 {offsets = [0, 128], sizes = [8, 128], strides = [1, 1]} : vector<8x512xf32> to vector<8x128xf32>
    %cst_109 = arith.constant 5.000000e-01 : f32
    %271 = vector.broadcast %cst_109 : f32 to vector<8x128xf32>
    %272 = arith.mulf %271, %270 : vector<8x128xf32>
    %273 = math.tanh %272 : vector<8x128xf32>
    %cst_110 = arith.constant 1.000000e+00 : f32
    %274 = vector.broadcast %cst_110 : f32 to vector<8x128xf32>
    %275 = arith.addf %273, %274 : vector<8x128xf32>
    %cst_111 = arith.constant 5.000000e-01 : f32
    %276 = vector.broadcast %cst_111 : f32 to vector<8x128xf32>
    %277 = arith.mulf %276, %275 : vector<8x128xf32>
    %278 = vector.extract_strided_slice %261 {offsets = [0, 256], sizes = [8, 128], strides = [1, 1]} : vector<8x512xf32> to vector<8x128xf32>
    %279 = math.tanh %278 : vector<8x128xf32>
    %280 = vector.extract_strided_slice %261 {offsets = [0, 384], sizes = [8, 128], strides = [1, 1]} : vector<8x512xf32> to vector<8x128xf32>
    %cst_112 = arith.constant 5.000000e-01 : f32
    %281 = vector.broadcast %cst_112 : f32 to vector<8x128xf32>
    %282 = arith.mulf %281, %280 : vector<8x128xf32>
    %283 = math.tanh %282 : vector<8x128xf32>
    %cst_113 = arith.constant 1.000000e+00 : f32
    %284 = vector.broadcast %cst_113 : f32 to vector<8x128xf32>
    %285 = arith.addf %283, %284 : vector<8x128xf32>
    %cst_114 = arith.constant 5.000000e-01 : f32
    %286 = vector.broadcast %cst_114 : f32 to vector<8x128xf32>
    %287 = arith.mulf %286, %285 : vector<8x128xf32>
    %288 = arith.mulf %277, %250 : vector<8x128xf32>
    %289 = arith.mulf %269, %279 : vector<8x128xf32>
    %290 = arith.addf %288, %289 : vector<8x128xf32>
    %291 = math.tanh %290 : vector<8x128xf32>
    %292 = arith.mulf %287, %291 : vector<8x128xf32>
    %293 = arith.index_cast %c6_i32 : i32 to index
    %c0_115 = arith.constant 0 : index
    %c0_116 = arith.constant 0 : index
    %294 = vector.load %arg13[%293, %c0_115, %c0_116] : memref<8x8x128xf32, #tpu.memory_space<vmem>>, vector<1x8x128xf32>
    %295 = vector.shape_cast %294 : vector<1x8x128xf32> to vector<8x128xf32>
    %296 = vector.shape_cast %292 : vector<8x128xf32> to vector<1x8x128xf32>
    tpu.vector_store %arg13[%293, %c0_115, %c0_116], %296 {strides = array<i32>} : memref<8x8x128xf32, #tpu.memory_space<vmem>>, vector<1x8x128xf32>,
    %c7_i32 = arith.constant 7 : i32
    %297 = arith.index_cast %c7_i32 : i32 to index
    %c0_117 = arith.constant 0 : index
    %c0_118 = arith.constant 0 : index
    %298 = vector.load %arg12[%297, %c0_117, %c0_118] : memref<8x8x512xf32, #tpu.memory_space<vmem>>, vector<1x8x512xf32>
    %299 = vector.shape_cast %298 : vector<1x8x512xf32> to vector<8x512xf32>
    %cst_119 = arith.constant dense<0.000000e+00> : vector<8x512xf32>
    %300 = tpu.matmul %292, %12, %cst_119 {dimension_numbers = #tpu.dot_dimension_numbers<[1], [0], [0], [1], [0, 0, 1, 1], [], []>} : vector<8x128xf32>, vector<128x512xf32>, vector<8x512xf32> -> vector<8x512xf32>
    %301 = arith.addf %299, %300 : vector<8x512xf32>
    %302 = vector.extract_strided_slice %301 {offsets = [0, 0], sizes = [8, 128], strides = [1, 1]} : vector<8x512xf32> to vector<8x128xf32>
    %cst_120 = arith.constant 5.000000e-01 : f32
    %303 = vector.broadcast %cst_120 : f32 to vector<8x128xf32>
    %304 = arith.mulf %303, %302 : vector<8x128xf32>
    %305 = math.tanh %304 : vector<8x128xf32>
    %cst_121 = arith.constant 1.000000e+00 : f32
    %306 = vector.broadcast %cst_121 : f32 to vector<8x128xf32>
    %307 = arith.addf %305, %306 : vector<8x128xf32>
    %cst_122 = arith.constant 5.000000e-01 : f32
    %308 = vector.broadcast %cst_122 : f32 to vector<8x128xf32>
    %309 = arith.mulf %308, %307 : vector<8x128xf32>
    %310 = vector.extract_strided_slice %301 {offsets = [0, 128], sizes = [8, 128], strides = [1, 1]} : vector<8x512xf32> to vector<8x128xf32>
    %cst_123 = arith.constant 5.000000e-01 : f32
    %311 = vector.broadcast %cst_123 : f32 to vector<8x128xf32>
    %312 = arith.mulf %311, %310 : vector<8x128xf32>
    %313 = math.tanh %312 : vector<8x128xf32>
    %cst_124 = arith.constant 1.000000e+00 : f32
    %314 = vector.broadcast %cst_124 : f32 to vector<8x128xf32>
    %315 = arith.addf %313, %314 : vector<8x128xf32>
    %cst_125 = arith.constant 5.000000e-01 : f32
    %316 = vector.broadcast %cst_125 : f32 to vector<8x128xf32>
    %317 = arith.mulf %316, %315 : vector<8x128xf32>
    %318 = vector.extract_strided_slice %301 {offsets = [0, 256], sizes = [8, 128], strides = [1, 1]} : vector<8x512xf32> to vector<8x128xf32>
    %319 = math.tanh %318 : vector<8x128xf32>
    %320 = vector.extract_strided_slice %301 {offsets = [0, 384], sizes = [8, 128], strides = [1, 1]} : vector<8x512xf32> to vector<8x128xf32>
    %cst_126 = arith.constant 5.000000e-01 : f32
    %321 = vector.broadcast %cst_126 : f32 to vector<8x128xf32>
    %322 = arith.mulf %321, %320 : vector<8x128xf32>
    %323 = math.tanh %322 : vector<8x128xf32>
    %cst_127 = arith.constant 1.000000e+00 : f32
    %324 = vector.broadcast %cst_127 : f32 to vector<8x128xf32>
    %325 = arith.addf %323, %324 : vector<8x128xf32>
    %cst_128 = arith.constant 5.000000e-01 : f32
    %326 = vector.broadcast %cst_128 : f32 to vector<8x128xf32>
    %327 = arith.mulf %326, %325 : vector<8x128xf32>
    %328 = arith.mulf %317, %290 : vector<8x128xf32>
    %329 = arith.mulf %309, %319 : vector<8x128xf32>
    %330 = arith.addf %328, %329 : vector<8x128xf32>
    %331 = math.tanh %330 : vector<8x128xf32>
    %332 = arith.mulf %327, %331 : vector<8x128xf32>
    %333 = arith.index_cast %c7_i32 : i32 to index
    %c0_129 = arith.constant 0 : index
    %c0_130 = arith.constant 0 : index
    %334 = vector.load %arg13[%333, %c0_129, %c0_130] : memref<8x8x128xf32, #tpu.memory_space<vmem>>, vector<1x8x128xf32>
    %335 = vector.shape_cast %334 : vector<1x8x128xf32> to vector<8x128xf32>
    %336 = vector.shape_cast %332 : vector<8x128xf32> to vector<1x8x128xf32>
    tpu.vector_store %arg13[%333, %c0_129, %c0_130], %336 {strides = array<i32>} : memref<8x8x128xf32, #tpu.memory_space<vmem>>, vector<1x8x128xf32>,
    %c8_i32 = arith.constant 8 : i32
    %c0_131 = arith.constant 0 : index
    %c0_132 = arith.constant 0 : index
    %c0_133 = arith.constant 0 : index
    %337 = vector.load %arg14[%c0_131, %c0_132, %c0_133] : memref<2x8x128xf32, #tpu.memory_space<vmem>>, vector<1x8x128xf32>
    %338 = vector.shape_cast %337 : vector<1x8x128xf32> to vector<8x128xf32>
    %339 = vector.shape_cast %332 : vector<8x128xf32> to vector<1x8x128xf32>
    tpu.vector_store %arg14[%c0_131, %c0_132, %c0_133], %339 {strides = array<i32>} : memref<2x8x128xf32, #tpu.memory_space<vmem>>, vector<1x8x128xf32>,
    %c0_134 = arith.constant 0 : index
    %c0_135 = arith.constant 0 : index
    %c0_136 = arith.constant 0 : index
    %340 = vector.load %arg15[%c0_134, %c0_135, %c0_136] : memref<2x8x128xf32, #tpu.memory_space<vmem>>, vector<1x8x128xf32>
    %341 = vector.shape_cast %340 : vector<1x8x128xf32> to vector<8x128xf32>
    %342 = vector.shape_cast %330 : vector<8x128xf32> to vector<1x8x128xf32>
    tpu.vector_store %arg15[%c0_134, %c0_135, %c0_136], %342 {strides = array<i32>} : memref<2x8x128xf32, #tpu.memory_space<vmem>>, vector<1x8x128xf32>,
    %c0_137 = arith.constant 0 : index
    %c0_138 = arith.constant 0 : index
    %c0_139 = arith.constant 0 : index
    %343 = vector.load %arg13[%c0_137, %c0_138, %c0_139] : memref<8x8x128xf32, #tpu.memory_space<vmem>>, vector<8x8x128xf32>
    %344 = vector.shape_cast %343 : vector<8x8x128xf32> to vector<64x128xf32>
    %c0_140 = arith.constant 0 : index
    %c0_141 = arith.constant 0 : index
    %345 = vector.load %arg6[%c0_140, %c0_141] : memref<128x512xf32, #tpu.memory_space<vmem>>, vector<128x512xf32>
    %cst_142 = arith.constant dense<0.000000e+00> : vector<64x512xf32>
    %346 = tpu.matmul %344, %345, %cst_142 {dimension_numbers = #tpu.dot_dimension_numbers<[1], [0], [0], [1], [0, 0, 1, 1], [], []>} : vector<64x128xf32>, vector<128x512xf32>, vector<64x512xf32> -> vector<64x512xf32>
    %c0_143 = arith.constant 0 : index
    %c0_144 = arith.constant 0 : index
    %347 = vector.load %arg8[%c0_143, %c0_144] : memref<1x512xf32, #tpu.memory_space<vmem>>, vector<1x512xf32>
    %348 = vector.broadcast %347 : vector<1x512xf32> to vector<64x512xf32>
    %349 = arith.addf %346, %348 : vector<64x512xf32>
    %350 = vector.shape_cast %349 : vector<64x512xf32> to vector<8x8x512xf32>
    %c0_145 = arith.constant 0 : index
    %c0_146 = arith.constant 0 : index
    %c0_147 = arith.constant 0 : index
    %351 = vector.load %arg12[%c0_145, %c0_146, %c0_147] : memref<8x8x512xf32, #tpu.memory_space<vmem>>, vector<8x8x512xf32>
    tpu.vector_store %arg12[%c0_145, %c0_146, %c0_147], %350 {strides = array<i32>} : memref<8x8x512xf32, #tpu.memory_space<vmem>>, vector<8x8x512xf32>,
    %c0_148 = arith.constant 0 : index
    %c0_149 = arith.constant 0 : index
    %352 = vector.load %arg7[%c0_148, %c0_149] : memref<128x512xf32, #tpu.memory_space<vmem>>, vector<128x512xf32>
    %c1 = arith.constant 1 : index
    %c0_150 = arith.constant 0 : index
    %c0_151 = arith.constant 0 : index
    %353 = vector.load %arg14[%c1, %c0_150, %c0_151] : memref<2x8x128xf32, #tpu.memory_space<vmem>>, vector<1x8x128xf32>
    %354 = vector.shape_cast %353 : vector<1x8x128xf32> to vector<8x128xf32>
    %c1_152 = arith.constant 1 : index
    %c0_153 = arith.constant 0 : index
    %c0_154 = arith.constant 0 : index
    %355 = vector.load %arg15[%c1_152, %c0_153, %c0_154] : memref<2x8x128xf32, #tpu.memory_space<vmem>>, vector<1x8x128xf32>
    %356 = vector.shape_cast %355 : vector<1x8x128xf32> to vector<8x128xf32>
    %c0_i32_155 = arith.constant 0 : i32
    %357 = arith.index_cast %c0_i32_155 : i32 to index
    %c0_156 = arith.constant 0 : index
    %c0_157 = arith.constant 0 : index
    %358 = vector.load %arg12[%357, %c0_156, %c0_157] : memref<8x8x512xf32, #tpu.memory_space<vmem>>, vector<1x8x512xf32>
    %359 = vector.shape_cast %358 : vector<1x8x512xf32> to vector<8x512xf32>
    %cst_158 = arith.constant dense<0.000000e+00> : vector<8x512xf32>
    %360 = tpu.matmul %354, %352, %cst_158 {dimension_numbers = #tpu.dot_dimension_numbers<[1], [0], [0], [1], [0, 0, 1, 1], [], []>} : vector<8x128xf32>, vector<128x512xf32>, vector<8x512xf32> -> vector<8x512xf32>
    %361 = arith.addf %359, %360 : vector<8x512xf32>
    %362 = vector.extract_strided_slice %361 {offsets = [0, 0], sizes = [8, 128], strides = [1, 1]} : vector<8x512xf32> to vector<8x128xf32>
    %cst_159 = arith.constant 5.000000e-01 : f32
    %363 = vector.broadcast %cst_159 : f32 to vector<8x128xf32>
    %364 = arith.mulf %363, %362 : vector<8x128xf32>
    %365 = math.tanh %364 : vector<8x128xf32>
    %cst_160 = arith.constant 1.000000e+00 : f32
    %366 = vector.broadcast %cst_160 : f32 to vector<8x128xf32>
    %367 = arith.addf %365, %366 : vector<8x128xf32>
    %cst_161 = arith.constant 5.000000e-01 : f32
    %368 = vector.broadcast %cst_161 : f32 to vector<8x128xf32>
    %369 = arith.mulf %368, %367 : vector<8x128xf32>
    %370 = vector.extract_strided_slice %361 {offsets = [0, 128], sizes = [8, 128], strides = [1, 1]} : vector<8x512xf32> to vector<8x128xf32>
    %cst_162 = arith.constant 5.000000e-01 : f32
    %371 = vector.broadcast %cst_162 : f32 to vector<8x128xf32>
    %372 = arith.mulf %371, %370 : vector<8x128xf32>
    %373 = math.tanh %372 : vector<8x128xf32>
    %cst_163 = arith.constant 1.000000e+00 : f32
    %374 = vector.broadcast %cst_163 : f32 to vector<8x128xf32>
    %375 = arith.addf %373, %374 : vector<8x128xf32>
    %cst_164 = arith.constant 5.000000e-01 : f32
    %376 = vector.broadcast %cst_164 : f32 to vector<8x128xf32>
    %377 = arith.mulf %376, %375 : vector<8x128xf32>
    %378 = vector.extract_strided_slice %361 {offsets = [0, 256], sizes = [8, 128], strides = [1, 1]} : vector<8x512xf32> to vector<8x128xf32>
    %379 = math.tanh %378 : vector<8x128xf32>
    %380 = vector.extract_strided_slice %361 {offsets = [0, 384], sizes = [8, 128], strides = [1, 1]} : vector<8x512xf32> to vector<8x128xf32>
    %cst_165 = arith.constant 5.000000e-01 : f32
    %381 = vector.broadcast %cst_165 : f32 to vector<8x128xf32>
    %382 = arith.mulf %381, %380 : vector<8x128xf32>
    %383 = math.tanh %382 : vector<8x128xf32>
    %cst_166 = arith.constant 1.000000e+00 : f32
    %384 = vector.broadcast %cst_166 : f32 to vector<8x128xf32>
    %385 = arith.addf %383, %384 : vector<8x128xf32>
    %cst_167 = arith.constant 5.000000e-01 : f32
    %386 = vector.broadcast %cst_167 : f32 to vector<8x128xf32>
    %387 = arith.mulf %386, %385 : vector<8x128xf32>
    %388 = arith.mulf %377, %356 : vector<8x128xf32>
    %389 = arith.mulf %369, %379 : vector<8x128xf32>
    %390 = arith.addf %388, %389 : vector<8x128xf32>
    %391 = math.tanh %390 : vector<8x128xf32>
    %392 = arith.mulf %387, %391 : vector<8x128xf32>
    %393 = arith.index_cast %c0_i32_155 : i32 to index
    %c0_168 = arith.constant 0 : index
    %c0_169 = arith.constant 0 : index
    %394 = vector.load %arg13[%393, %c0_168, %c0_169] : memref<8x8x128xf32, #tpu.memory_space<vmem>>, vector<1x8x128xf32>
    %395 = vector.shape_cast %394 : vector<1x8x128xf32> to vector<8x128xf32>
    %396 = vector.shape_cast %392 : vector<8x128xf32> to vector<1x8x128xf32>
    tpu.vector_store %arg13[%393, %c0_168, %c0_169], %396 {strides = array<i32>} : memref<8x8x128xf32, #tpu.memory_space<vmem>>, vector<1x8x128xf32>,
    %c1_i32_170 = arith.constant 1 : i32
    %397 = arith.index_cast %c1_i32_170 : i32 to index
    %c0_171 = arith.constant 0 : index
    %c0_172 = arith.constant 0 : index
    %398 = vector.load %arg12[%397, %c0_171, %c0_172] : memref<8x8x512xf32, #tpu.memory_space<vmem>>, vector<1x8x512xf32>
    %399 = vector.shape_cast %398 : vector<1x8x512xf32> to vector<8x512xf32>
    %cst_173 = arith.constant dense<0.000000e+00> : vector<8x512xf32>
    %400 = tpu.matmul %392, %352, %cst_173 {dimension_numbers = #tpu.dot_dimension_numbers<[1], [0], [0], [1], [0, 0, 1, 1], [], []>} : vector<8x128xf32>, vector<128x512xf32>, vector<8x512xf32> -> vector<8x512xf32>
    %401 = arith.addf %399, %400 : vector<8x512xf32>
    %402 = vector.extract_strided_slice %401 {offsets = [0, 0], sizes = [8, 128], strides = [1, 1]} : vector<8x512xf32> to vector<8x128xf32>
    %cst_174 = arith.constant 5.000000e-01 : f32
    %403 = vector.broadcast %cst_174 : f32 to vector<8x128xf32>
    %404 = arith.mulf %403, %402 : vector<8x128xf32>
    %405 = math.tanh %404 : vector<8x128xf32>
    %cst_175 = arith.constant 1.000000e+00 : f32
    %406 = vector.broadcast %cst_175 : f32 to vector<8x128xf32>
    %407 = arith.addf %405, %406 : vector<8x128xf32>
    %cst_176 = arith.constant 5.000000e-01 : f32
    %408 = vector.broadcast %cst_176 : f32 to vector<8x128xf32>
    %409 = arith.mulf %408, %407 : vector<8x128xf32>
    %410 = vector.extract_strided_slice %401 {offsets = [0, 128], sizes = [8, 128], strides = [1, 1]} : vector<8x512xf32> to vector<8x128xf32>
    %cst_177 = arith.constant 5.000000e-01 : f32
    %411 = vector.broadcast %cst_177 : f32 to vector<8x128xf32>
    %412 = arith.mulf %411, %410 : vector<8x128xf32>
    %413 = math.tanh %412 : vector<8x128xf32>
    %cst_178 = arith.constant 1.000000e+00 : f32
    %414 = vector.broadcast %cst_178 : f32 to vector<8x128xf32>
    %415 = arith.addf %413, %414 : vector<8x128xf32>
    %cst_179 = arith.constant 5.000000e-01 : f32
    %416 = vector.broadcast %cst_179 : f32 to vector<8x128xf32>
    %417 = arith.mulf %416, %415 : vector<8x128xf32>
    %418 = vector.extract_strided_slice %401 {offsets = [0, 256], sizes = [8, 128], strides = [1, 1]} : vector<8x512xf32> to vector<8x128xf32>
    %419 = math.tanh %418 : vector<8x128xf32>
    %420 = vector.extract_strided_slice %401 {offsets = [0, 384], sizes = [8, 128], strides = [1, 1]} : vector<8x512xf32> to vector<8x128xf32>
    %cst_180 = arith.constant 5.000000e-01 : f32
    %421 = vector.broadcast %cst_180 : f32 to vector<8x128xf32>
    %422 = arith.mulf %421, %420 : vector<8x128xf32>
    %423 = math.tanh %422 : vector<8x128xf32>
    %cst_181 = arith.constant 1.000000e+00 : f32
    %424 = vector.broadcast %cst_181 : f32 to vector<8x128xf32>
    %425 = arith.addf %423, %424 : vector<8x128xf32>
    %cst_182 = arith.constant 5.000000e-01 : f32
    %426 = vector.broadcast %cst_182 : f32 to vector<8x128xf32>
    %427 = arith.mulf %426, %425 : vector<8x128xf32>
    %428 = arith.mulf %417, %390 : vector<8x128xf32>
    %429 = arith.mulf %409, %419 : vector<8x128xf32>
    %430 = arith.addf %428, %429 : vector<8x128xf32>
    %431 = math.tanh %430 : vector<8x128xf32>
    %432 = arith.mulf %427, %431 : vector<8x128xf32>
    %433 = arith.index_cast %c1_i32_170 : i32 to index
    %c0_183 = arith.constant 0 : index
    %c0_184 = arith.constant 0 : index
    %434 = vector.load %arg13[%433, %c0_183, %c0_184] : memref<8x8x128xf32, #tpu.memory_space<vmem>>, vector<1x8x128xf32>
    %435 = vector.shape_cast %434 : vector<1x8x128xf32> to vector<8x128xf32>
    %436 = vector.shape_cast %432 : vector<8x128xf32> to vector<1x8x128xf32>
    tpu.vector_store %arg13[%433, %c0_183, %c0_184], %436 {strides = array<i32>} : memref<8x8x128xf32, #tpu.memory_space<vmem>>, vector<1x8x128xf32>,
    %c2_i32_185 = arith.constant 2 : i32
    %437 = arith.index_cast %c2_i32_185 : i32 to index
    %c0_186 = arith.constant 0 : index
    %c0_187 = arith.constant 0 : index
    %438 = vector.load %arg12[%437, %c0_186, %c0_187] : memref<8x8x512xf32, #tpu.memory_space<vmem>>, vector<1x8x512xf32>
    %439 = vector.shape_cast %438 : vector<1x8x512xf32> to vector<8x512xf32>
    %cst_188 = arith.constant dense<0.000000e+00> : vector<8x512xf32>
    %440 = tpu.matmul %432, %352, %cst_188 {dimension_numbers = #tpu.dot_dimension_numbers<[1], [0], [0], [1], [0, 0, 1, 1], [], []>} : vector<8x128xf32>, vector<128x512xf32>, vector<8x512xf32> -> vector<8x512xf32>
    %441 = arith.addf %439, %440 : vector<8x512xf32>
    %442 = vector.extract_strided_slice %441 {offsets = [0, 0], sizes = [8, 128], strides = [1, 1]} : vector<8x512xf32> to vector<8x128xf32>
    %cst_189 = arith.constant 5.000000e-01 : f32
    %443 = vector.broadcast %cst_189 : f32 to vector<8x128xf32>
    %444 = arith.mulf %443, %442 : vector<8x128xf32>
    %445 = math.tanh %444 : vector<8x128xf32>
    %cst_190 = arith.constant 1.000000e+00 : f32
    %446 = vector.broadcast %cst_190 : f32 to vector<8x128xf32>
    %447 = arith.addf %445, %446 : vector<8x128xf32>
    %cst_191 = arith.constant 5.000000e-01 : f32
    %448 = vector.broadcast %cst_191 : f32 to vector<8x128xf32>
    %449 = arith.mulf %448, %447 : vector<8x128xf32>
    %450 = vector.extract_strided_slice %441 {offsets = [0, 128], sizes = [8, 128], strides = [1, 1]} : vector<8x512xf32> to vector<8x128xf32>
    %cst_192 = arith.constant 5.000000e-01 : f32
    %451 = vector.broadcast %cst_192 : f32 to vector<8x128xf32>
    %452 = arith.mulf %451, %450 : vector<8x128xf32>
    %453 = math.tanh %452 : vector<8x128xf32>
    %cst_193 = arith.constant 1.000000e+00 : f32
    %454 = vector.broadcast %cst_193 : f32 to vector<8x128xf32>
    %455 = arith.addf %453, %454 : vector<8x128xf32>
    %cst_194 = arith.constant 5.000000e-01 : f32
    %456 = vector.broadcast %cst_194 : f32 to vector<8x128xf32>
    %457 = arith.mulf %456, %455 : vector<8x128xf32>
    %458 = vector.extract_strided_slice %441 {offsets = [0, 256], sizes = [8, 128], strides = [1, 1]} : vector<8x512xf32> to vector<8x128xf32>
    %459 = math.tanh %458 : vector<8x128xf32>
    %460 = vector.extract_strided_slice %441 {offsets = [0, 384], sizes = [8, 128], strides = [1, 1]} : vector<8x512xf32> to vector<8x128xf32>
    %cst_195 = arith.constant 5.000000e-01 : f32
    %461 = vector.broadcast %cst_195 : f32 to vector<8x128xf32>
    %462 = arith.mulf %461, %460 : vector<8x128xf32>
    %463 = math.tanh %462 : vector<8x128xf32>
    %cst_196 = arith.constant 1.000000e+00 : f32
    %464 = vector.broadcast %cst_196 : f32 to vector<8x128xf32>
    %465 = arith.addf %463, %464 : vector<8x128xf32>
    %cst_197 = arith.constant 5.000000e-01 : f32
    %466 = vector.broadcast %cst_197 : f32 to vector<8x128xf32>
    %467 = arith.mulf %466, %465 : vector<8x128xf32>
    %468 = arith.mulf %457, %430 : vector<8x128xf32>
    %469 = arith.mulf %449, %459 : vector<8x128xf32>
    %470 = arith.addf %468, %469 : vector<8x128xf32>
    %471 = math.tanh %470 : vector<8x128xf32>
    %472 = arith.mulf %467, %471 : vector<8x128xf32>
    %473 = arith.index_cast %c2_i32_185 : i32 to index
    %c0_198 = arith.constant 0 : index
    %c0_199 = arith.constant 0 : index
    %474 = vector.load %arg13[%473, %c0_198, %c0_199] : memref<8x8x128xf32, #tpu.memory_space<vmem>>, vector<1x8x128xf32>
    %475 = vector.shape_cast %474 : vector<1x8x128xf32> to vector<8x128xf32>
    %476 = vector.shape_cast %472 : vector<8x128xf32> to vector<1x8x128xf32>
    tpu.vector_store %arg13[%473, %c0_198, %c0_199], %476 {strides = array<i32>} : memref<8x8x128xf32, #tpu.memory_space<vmem>>, vector<1x8x128xf32>,
    %c3_i32_200 = arith.constant 3 : i32
    %477 = arith.index_cast %c3_i32_200 : i32 to index
    %c0_201 = arith.constant 0 : index
    %c0_202 = arith.constant 0 : index
    %478 = vector.load %arg12[%477, %c0_201, %c0_202] : memref<8x8x512xf32, #tpu.memory_space<vmem>>, vector<1x8x512xf32>
    %479 = vector.shape_cast %478 : vector<1x8x512xf32> to vector<8x512xf32>
    %cst_203 = arith.constant dense<0.000000e+00> : vector<8x512xf32>
    %480 = tpu.matmul %472, %352, %cst_203 {dimension_numbers = #tpu.dot_dimension_numbers<[1], [0], [0], [1], [0, 0, 1, 1], [], []>} : vector<8x128xf32>, vector<128x512xf32>, vector<8x512xf32> -> vector<8x512xf32>
    %481 = arith.addf %479, %480 : vector<8x512xf32>
    %482 = vector.extract_strided_slice %481 {offsets = [0, 0], sizes = [8, 128], strides = [1, 1]} : vector<8x512xf32> to vector<8x128xf32>
    %cst_204 = arith.constant 5.000000e-01 : f32
    %483 = vector.broadcast %cst_204 : f32 to vector<8x128xf32>
    %484 = arith.mulf %483, %482 : vector<8x128xf32>
    %485 = math.tanh %484 : vector<8x128xf32>
    %cst_205 = arith.constant 1.000000e+00 : f32
    %486 = vector.broadcast %cst_205 : f32 to vector<8x128xf32>
    %487 = arith.addf %485, %486 : vector<8x128xf32>
    %cst_206 = arith.constant 5.000000e-01 : f32
    %488 = vector.broadcast %cst_206 : f32 to vector<8x128xf32>
    %489 = arith.mulf %488, %487 : vector<8x128xf32>
    %490 = vector.extract_strided_slice %481 {offsets = [0, 128], sizes = [8, 128], strides = [1, 1]} : vector<8x512xf32> to vector<8x128xf32>
    %cst_207 = arith.constant 5.000000e-01 : f32
    %491 = vector.broadcast %cst_207 : f32 to vector<8x128xf32>
    %492 = arith.mulf %491, %490 : vector<8x128xf32>
    %493 = math.tanh %492 : vector<8x128xf32>
    %cst_208 = arith.constant 1.000000e+00 : f32
    %494 = vector.broadcast %cst_208 : f32 to vector<8x128xf32>
    %495 = arith.addf %493, %494 : vector<8x128xf32>
    %cst_209 = arith.constant 5.000000e-01 : f32
    %496 = vector.broadcast %cst_209 : f32 to vector<8x128xf32>
    %497 = arith.mulf %496, %495 : vector<8x128xf32>
    %498 = vector.extract_strided_slice %481 {offsets = [0, 256], sizes = [8, 128], strides = [1, 1]} : vector<8x512xf32> to vector<8x128xf32>
    %499 = math.tanh %498 : vector<8x128xf32>
    %500 = vector.extract_strided_slice %481 {offsets = [0, 384], sizes = [8, 128], strides = [1, 1]} : vector<8x512xf32> to vector<8x128xf32>
    %cst_210 = arith.constant 5.000000e-01 : f32
    %501 = vector.broadcast %cst_210 : f32 to vector<8x128xf32>
    %502 = arith.mulf %501, %500 : vector<8x128xf32>
    %503 = math.tanh %502 : vector<8x128xf32>
    %cst_211 = arith.constant 1.000000e+00 : f32
    %504 = vector.broadcast %cst_211 : f32 to vector<8x128xf32>
    %505 = arith.addf %503, %504 : vector<8x128xf32>
    %cst_212 = arith.constant 5.000000e-01 : f32
    %506 = vector.broadcast %cst_212 : f32 to vector<8x128xf32>
    %507 = arith.mulf %506, %505 : vector<8x128xf32>
    %508 = arith.mulf %497, %470 : vector<8x128xf32>
    %509 = arith.mulf %489, %499 : vector<8x128xf32>
    %510 = arith.addf %508, %509 : vector<8x128xf32>
    %511 = math.tanh %510 : vector<8x128xf32>
    %512 = arith.mulf %507, %511 : vector<8x128xf32>
    %513 = arith.index_cast %c3_i32_200 : i32 to index
    %c0_213 = arith.constant 0 : index
    %c0_214 = arith.constant 0 : index
    %514 = vector.load %arg13[%513, %c0_213, %c0_214] : memref<8x8x128xf32, #tpu.memory_space<vmem>>, vector<1x8x128xf32>
    %515 = vector.shape_cast %514 : vector<1x8x128xf32> to vector<8x128xf32>
    %516 = vector.shape_cast %512 : vector<8x128xf32> to vector<1x8x128xf32>
    tpu.vector_store %arg13[%513, %c0_213, %c0_214], %516 {strides = array<i32>} : memref<8x8x128xf32, #tpu.memory_space<vmem>>, vector<1x8x128xf32>,
    %c4_i32_215 = arith.constant 4 : i32
    %517 = arith.index_cast %c4_i32_215 : i32 to index
    %c0_216 = arith.constant 0 : index
    %c0_217 = arith.constant 0 : index
    %518 = vector.load %arg12[%517, %c0_216, %c0_217] : memref<8x8x512xf32, #tpu.memory_space<vmem>>, vector<1x8x512xf32>
    %519 = vector.shape_cast %518 : vector<1x8x512xf32> to vector<8x512xf32>
    %cst_218 = arith.constant dense<0.000000e+00> : vector<8x512xf32>
    %520 = tpu.matmul %512, %352, %cst_218 {dimension_numbers = #tpu.dot_dimension_numbers<[1], [0], [0], [1], [0, 0, 1, 1], [], []>} : vector<8x128xf32>, vector<128x512xf32>, vector<8x512xf32> -> vector<8x512xf32>
    %521 = arith.addf %519, %520 : vector<8x512xf32>
    %522 = vector.extract_strided_slice %521 {offsets = [0, 0], sizes = [8, 128], strides = [1, 1]} : vector<8x512xf32> to vector<8x128xf32>
    %cst_219 = arith.constant 5.000000e-01 : f32
    %523 = vector.broadcast %cst_219 : f32 to vector<8x128xf32>
    %524 = arith.mulf %523, %522 : vector<8x128xf32>
    %525 = math.tanh %524 : vector<8x128xf32>
    %cst_220 = arith.constant 1.000000e+00 : f32
    %526 = vector.broadcast %cst_220 : f32 to vector<8x128xf32>
    %527 = arith.addf %525, %526 : vector<8x128xf32>
    %cst_221 = arith.constant 5.000000e-01 : f32
    %528 = vector.broadcast %cst_221 : f32 to vector<8x128xf32>
    %529 = arith.mulf %528, %527 : vector<8x128xf32>
    %530 = vector.extract_strided_slice %521 {offsets = [0, 128], sizes = [8, 128], strides = [1, 1]} : vector<8x512xf32> to vector<8x128xf32>
    %cst_222 = arith.constant 5.000000e-01 : f32
    %531 = vector.broadcast %cst_222 : f32 to vector<8x128xf32>
    %532 = arith.mulf %531, %530 : vector<8x128xf32>
    %533 = math.tanh %532 : vector<8x128xf32>
    %cst_223 = arith.constant 1.000000e+00 : f32
    %534 = vector.broadcast %cst_223 : f32 to vector<8x128xf32>
    %535 = arith.addf %533, %534 : vector<8x128xf32>
    %cst_224 = arith.constant 5.000000e-01 : f32
    %536 = vector.broadcast %cst_224 : f32 to vector<8x128xf32>
    %537 = arith.mulf %536, %535 : vector<8x128xf32>
    %538 = vector.extract_strided_slice %521 {offsets = [0, 256], sizes = [8, 128], strides = [1, 1]} : vector<8x512xf32> to vector<8x128xf32>
    %539 = math.tanh %538 : vector<8x128xf32>
    %540 = vector.extract_strided_slice %521 {offsets = [0, 384], sizes = [8, 128], strides = [1, 1]} : vector<8x512xf32> to vector<8x128xf32>
    %cst_225 = arith.constant 5.000000e-01 : f32
    %541 = vector.broadcast %cst_225 : f32 to vector<8x128xf32>
    %542 = arith.mulf %541, %540 : vector<8x128xf32>
    %543 = math.tanh %542 : vector<8x128xf32>
    %cst_226 = arith.constant 1.000000e+00 : f32
    %544 = vector.broadcast %cst_226 : f32 to vector<8x128xf32>
    %545 = arith.addf %543, %544 : vector<8x128xf32>
    %cst_227 = arith.constant 5.000000e-01 : f32
    %546 = vector.broadcast %cst_227 : f32 to vector<8x128xf32>
    %547 = arith.mulf %546, %545 : vector<8x128xf32>
    %548 = arith.mulf %537, %510 : vector<8x128xf32>
    %549 = arith.mulf %529, %539 : vector<8x128xf32>
    %550 = arith.addf %548, %549 : vector<8x128xf32>
    %551 = math.tanh %550 : vector<8x128xf32>
    %552 = arith.mulf %547, %551 : vector<8x128xf32>
    %553 = arith.index_cast %c4_i32_215 : i32 to index
    %c0_228 = arith.constant 0 : index
    %c0_229 = arith.constant 0 : index
    %554 = vector.load %arg13[%553, %c0_228, %c0_229] : memref<8x8x128xf32, #tpu.memory_space<vmem>>, vector<1x8x128xf32>
    %555 = vector.shape_cast %554 : vector<1x8x128xf32> to vector<8x128xf32>
    %556 = vector.shape_cast %552 : vector<8x128xf32> to vector<1x8x128xf32>
    tpu.vector_store %arg13[%553, %c0_228, %c0_229], %556 {strides = array<i32>} : memref<8x8x128xf32, #tpu.memory_space<vmem>>, vector<1x8x128xf32>,
    %c5_i32_230 = arith.constant 5 : i32
    %557 = arith.index_cast %c5_i32_230 : i32 to index
    %c0_231 = arith.constant 0 : index
    %c0_232 = arith.constant 0 : index
    %558 = vector.load %arg12[%557, %c0_231, %c0_232] : memref<8x8x512xf32, #tpu.memory_space<vmem>>, vector<1x8x512xf32>
    %559 = vector.shape_cast %558 : vector<1x8x512xf32> to vector<8x512xf32>
    %cst_233 = arith.constant dense<0.000000e+00> : vector<8x512xf32>
    %560 = tpu.matmul %552, %352, %cst_233 {dimension_numbers = #tpu.dot_dimension_numbers<[1], [0], [0], [1], [0, 0, 1, 1], [], []>} : vector<8x128xf32>, vector<128x512xf32>, vector<8x512xf32> -> vector<8x512xf32>
    %561 = arith.addf %559, %560 : vector<8x512xf32>
    %562 = vector.extract_strided_slice %561 {offsets = [0, 0], sizes = [8, 128], strides = [1, 1]} : vector<8x512xf32> to vector<8x128xf32>
    %cst_234 = arith.constant 5.000000e-01 : f32
    %563 = vector.broadcast %cst_234 : f32 to vector<8x128xf32>
    %564 = arith.mulf %563, %562 : vector<8x128xf32>
    %565 = math.tanh %564 : vector<8x128xf32>
    %cst_235 = arith.constant 1.000000e+00 : f32
    %566 = vector.broadcast %cst_235 : f32 to vector<8x128xf32>
    %567 = arith.addf %565, %566 : vector<8x128xf32>
    %cst_236 = arith.constant 5.000000e-01 : f32
    %568 = vector.broadcast %cst_236 : f32 to vector<8x128xf32>
    %569 = arith.mulf %568, %567 : vector<8x128xf32>
    %570 = vector.extract_strided_slice %561 {offsets = [0, 128], sizes = [8, 128], strides = [1, 1]} : vector<8x512xf32> to vector<8x128xf32>
    %cst_237 = arith.constant 5.000000e-01 : f32
    %571 = vector.broadcast %cst_237 : f32 to vector<8x128xf32>
    %572 = arith.mulf %571, %570 : vector<8x128xf32>
    %573 = math.tanh %572 : vector<8x128xf32>
    %cst_238 = arith.constant 1.000000e+00 : f32
    %574 = vector.broadcast %cst_238 : f32 to vector<8x128xf32>
    %575 = arith.addf %573, %574 : vector<8x128xf32>
    %cst_239 = arith.constant 5.000000e-01 : f32
    %576 = vector.broadcast %cst_239 : f32 to vector<8x128xf32>
    %577 = arith.mulf %576, %575 : vector<8x128xf32>
    %578 = vector.extract_strided_slice %561 {offsets = [0, 256], sizes = [8, 128], strides = [1, 1]} : vector<8x512xf32> to vector<8x128xf32>
    %579 = math.tanh %578 : vector<8x128xf32>
    %580 = vector.extract_strided_slice %561 {offsets = [0, 384], sizes = [8, 128], strides = [1, 1]} : vector<8x512xf32> to vector<8x128xf32>
    %cst_240 = arith.constant 5.000000e-01 : f32
    %581 = vector.broadcast %cst_240 : f32 to vector<8x128xf32>
    %582 = arith.mulf %581, %580 : vector<8x128xf32>
    %583 = math.tanh %582 : vector<8x128xf32>
    %cst_241 = arith.constant 1.000000e+00 : f32
    %584 = vector.broadcast %cst_241 : f32 to vector<8x128xf32>
    %585 = arith.addf %583, %584 : vector<8x128xf32>
    %cst_242 = arith.constant 5.000000e-01 : f32
    %586 = vector.broadcast %cst_242 : f32 to vector<8x128xf32>
    %587 = arith.mulf %586, %585 : vector<8x128xf32>
    %588 = arith.mulf %577, %550 : vector<8x128xf32>
    %589 = arith.mulf %569, %579 : vector<8x128xf32>
    %590 = arith.addf %588, %589 : vector<8x128xf32>
    %591 = math.tanh %590 : vector<8x128xf32>
    %592 = arith.mulf %587, %591 : vector<8x128xf32>
    %593 = arith.index_cast %c5_i32_230 : i32 to index
    %c0_243 = arith.constant 0 : index
    %c0_244 = arith.constant 0 : index
    %594 = vector.load %arg13[%593, %c0_243, %c0_244] : memref<8x8x128xf32, #tpu.memory_space<vmem>>, vector<1x8x128xf32>
    %595 = vector.shape_cast %594 : vector<1x8x128xf32> to vector<8x128xf32>
    %596 = vector.shape_cast %592 : vector<8x128xf32> to vector<1x8x128xf32>
    tpu.vector_store %arg13[%593, %c0_243, %c0_244], %596 {strides = array<i32>} : memref<8x8x128xf32, #tpu.memory_space<vmem>>, vector<1x8x128xf32>,
    %c6_i32_245 = arith.constant 6 : i32
    %597 = arith.index_cast %c6_i32_245 : i32 to index
    %c0_246 = arith.constant 0 : index
    %c0_247 = arith.constant 0 : index
    %598 = vector.load %arg12[%597, %c0_246, %c0_247] : memref<8x8x512xf32, #tpu.memory_space<vmem>>, vector<1x8x512xf32>
    %599 = vector.shape_cast %598 : vector<1x8x512xf32> to vector<8x512xf32>
    %cst_248 = arith.constant dense<0.000000e+00> : vector<8x512xf32>
    %600 = tpu.matmul %592, %352, %cst_248 {dimension_numbers = #tpu.dot_dimension_numbers<[1], [0], [0], [1], [0, 0, 1, 1], [], []>} : vector<8x128xf32>, vector<128x512xf32>, vector<8x512xf32> -> vector<8x512xf32>
    %601 = arith.addf %599, %600 : vector<8x512xf32>
    %602 = vector.extract_strided_slice %601 {offsets = [0, 0], sizes = [8, 128], strides = [1, 1]} : vector<8x512xf32> to vector<8x128xf32>
    %cst_249 = arith.constant 5.000000e-01 : f32
    %603 = vector.broadcast %cst_249 : f32 to vector<8x128xf32>
    %604 = arith.mulf %603, %602 : vector<8x128xf32>
    %605 = math.tanh %604 : vector<8x128xf32>
    %cst_250 = arith.constant 1.000000e+00 : f32
    %606 = vector.broadcast %cst_250 : f32 to vector<8x128xf32>
    %607 = arith.addf %605, %606 : vector<8x128xf32>
    %cst_251 = arith.constant 5.000000e-01 : f32
    %608 = vector.broadcast %cst_251 : f32 to vector<8x128xf32>
    %609 = arith.mulf %608, %607 : vector<8x128xf32>
    %610 = vector.extract_strided_slice %601 {offsets = [0, 128], sizes = [8, 128], strides = [1, 1]} : vector<8x512xf32> to vector<8x128xf32>
    %cst_252 = arith.constant 5.000000e-01 : f32
    %611 = vector.broadcast %cst_252 : f32 to vector<8x128xf32>
    %612 = arith.mulf %611, %610 : vector<8x128xf32>
    %613 = math.tanh %612 : vector<8x128xf32>
    %cst_253 = arith.constant 1.000000e+00 : f32
    %614 = vector.broadcast %cst_253 : f32 to vector<8x128xf32>
    %615 = arith.addf %613, %614 : vector<8x128xf32>
    %cst_254 = arith.constant 5.000000e-01 : f32
    %616 = vector.broadcast %cst_254 : f32 to vector<8x128xf32>
    %617 = arith.mulf %616, %615 : vector<8x128xf32>
    %618 = vector.extract_strided_slice %601 {offsets = [0, 256], sizes = [8, 128], strides = [1, 1]} : vector<8x512xf32> to vector<8x128xf32>
    %619 = math.tanh %618 : vector<8x128xf32>
    %620 = vector.extract_strided_slice %601 {offsets = [0, 384], sizes = [8, 128], strides = [1, 1]} : vector<8x512xf32> to vector<8x128xf32>
    %cst_255 = arith.constant 5.000000e-01 : f32
    %621 = vector.broadcast %cst_255 : f32 to vector<8x128xf32>
    %622 = arith.mulf %621, %620 : vector<8x128xf32>
    %623 = math.tanh %622 : vector<8x128xf32>
    %cst_256 = arith.constant 1.000000e+00 : f32
    %624 = vector.broadcast %cst_256 : f32 to vector<8x128xf32>
    %625 = arith.addf %623, %624 : vector<8x128xf32>
    %cst_257 = arith.constant 5.000000e-01 : f32
    %626 = vector.broadcast %cst_257 : f32 to vector<8x128xf32>
    %627 = arith.mulf %626, %625 : vector<8x128xf32>
    %628 = arith.mulf %617, %590 : vector<8x128xf32>
    %629 = arith.mulf %609, %619 : vector<8x128xf32>
    %630 = arith.addf %628, %629 : vector<8x128xf32>
    %631 = math.tanh %630 : vector<8x128xf32>
    %632 = arith.mulf %627, %631 : vector<8x128xf32>
    %633 = arith.index_cast %c6_i32_245 : i32 to index
    %c0_258 = arith.constant 0 : index
    %c0_259 = arith.constant 0 : index
    %634 = vector.load %arg13[%633, %c0_258, %c0_259] : memref<8x8x128xf32, #tpu.memory_space<vmem>>, vector<1x8x128xf32>
    %635 = vector.shape_cast %634 : vector<1x8x128xf32> to vector<8x128xf32>
    %636 = vector.shape_cast %632 : vector<8x128xf32> to vector<1x8x128xf32>
    tpu.vector_store %arg13[%633, %c0_258, %c0_259], %636 {strides = array<i32>} : memref<8x8x128xf32, #tpu.memory_space<vmem>>, vector<1x8x128xf32>,
    %c7_i32_260 = arith.constant 7 : i32
    %637 = arith.index_cast %c7_i32_260 : i32 to index
    %c0_261 = arith.constant 0 : index
    %c0_262 = arith.constant 0 : index
    %638 = vector.load %arg12[%637, %c0_261, %c0_262] : memref<8x8x512xf32, #tpu.memory_space<vmem>>, vector<1x8x512xf32>
    %639 = vector.shape_cast %638 : vector<1x8x512xf32> to vector<8x512xf32>
    %cst_263 = arith.constant dense<0.000000e+00> : vector<8x512xf32>
    %640 = tpu.matmul %632, %352, %cst_263 {dimension_numbers = #tpu.dot_dimension_numbers<[1], [0], [0], [1], [0, 0, 1, 1], [], []>} : vector<8x128xf32>, vector<128x512xf32>, vector<8x512xf32> -> vector<8x512xf32>
    %641 = arith.addf %639, %640 : vector<8x512xf32>
    %642 = vector.extract_strided_slice %641 {offsets = [0, 0], sizes = [8, 128], strides = [1, 1]} : vector<8x512xf32> to vector<8x128xf32>
    %cst_264 = arith.constant 5.000000e-01 : f32
    %643 = vector.broadcast %cst_264 : f32 to vector<8x128xf32>
    %644 = arith.mulf %643, %642 : vector<8x128xf32>
    %645 = math.tanh %644 : vector<8x128xf32>
    %cst_265 = arith.constant 1.000000e+00 : f32
    %646 = vector.broadcast %cst_265 : f32 to vector<8x128xf32>
    %647 = arith.addf %645, %646 : vector<8x128xf32>
    %cst_266 = arith.constant 5.000000e-01 : f32
    %648 = vector.broadcast %cst_266 : f32 to vector<8x128xf32>
    %649 = arith.mulf %648, %647 : vector<8x128xf32>
    %650 = vector.extract_strided_slice %641 {offsets = [0, 128], sizes = [8, 128], strides = [1, 1]} : vector<8x512xf32> to vector<8x128xf32>
    %cst_267 = arith.constant 5.000000e-01 : f32
    %651 = vector.broadcast %cst_267 : f32 to vector<8x128xf32>
    %652 = arith.mulf %651, %650 : vector<8x128xf32>
    %653 = math.tanh %652 : vector<8x128xf32>
    %cst_268 = arith.constant 1.000000e+00 : f32
    %654 = vector.broadcast %cst_268 : f32 to vector<8x128xf32>
    %655 = arith.addf %653, %654 : vector<8x128xf32>
    %cst_269 = arith.constant 5.000000e-01 : f32
    %656 = vector.broadcast %cst_269 : f32 to vector<8x128xf32>
    %657 = arith.mulf %656, %655 : vector<8x128xf32>
    %658 = vector.extract_strided_slice %641 {offsets = [0, 256], sizes = [8, 128], strides = [1, 1]} : vector<8x512xf32> to vector<8x128xf32>
    %659 = math.tanh %658 : vector<8x128xf32>
    %660 = vector.extract_strided_slice %641 {offsets = [0, 384], sizes = [8, 128], strides = [1, 1]} : vector<8x512xf32> to vector<8x128xf32>
    %cst_270 = arith.constant 5.000000e-01 : f32
    %661 = vector.broadcast %cst_270 : f32 to vector<8x128xf32>
    %662 = arith.mulf %661, %660 : vector<8x128xf32>
    %663 = math.tanh %662 : vector<8x128xf32>
    %cst_271 = arith.constant 1.000000e+00 : f32
    %664 = vector.broadcast %cst_271 : f32 to vector<8x128xf32>
    %665 = arith.addf %663, %664 : vector<8x128xf32>
    %cst_272 = arith.constant 5.000000e-01 : f32
    %666 = vector.broadcast %cst_272 : f32 to vector<8x128xf32>
    %667 = arith.mulf %666, %665 : vector<8x128xf32>
    %668 = arith.mulf %657, %630 : vector<8x128xf32>
    %669 = arith.mulf %649, %659 : vector<8x128xf32>
    %670 = arith.addf %668, %669 : vector<8x128xf32>
    %671 = math.tanh %670 : vector<8x128xf32>
    %672 = arith.mulf %667, %671 : vector<8x128xf32>
    %673 = arith.index_cast %c7_i32_260 : i32 to index
    %c0_273 = arith.constant 0 : index
    %c0_274 = arith.constant 0 : index
    %674 = vector.load %arg13[%673, %c0_273, %c0_274] : memref<8x8x128xf32, #tpu.memory_space<vmem>>, vector<1x8x128xf32>
    %675 = vector.shape_cast %674 : vector<1x8x128xf32> to vector<8x128xf32>
    %676 = vector.shape_cast %672 : vector<8x128xf32> to vector<1x8x128xf32>
    tpu.vector_store %arg13[%673, %c0_273, %c0_274], %676 {strides = array<i32>} : memref<8x8x128xf32, #tpu.memory_space<vmem>>, vector<1x8x128xf32>,
    %c8_i32_275 = arith.constant 8 : i32
    %c1_276 = arith.constant 1 : index
    %c0_277 = arith.constant 0 : index
    %c0_278 = arith.constant 0 : index
    %677 = vector.load %arg14[%c1_276, %c0_277, %c0_278] : memref<2x8x128xf32, #tpu.memory_space<vmem>>, vector<1x8x128xf32>
    %678 = vector.shape_cast %677 : vector<1x8x128xf32> to vector<8x128xf32>
    %679 = vector.shape_cast %672 : vector<8x128xf32> to vector<1x8x128xf32>
    tpu.vector_store %arg14[%c1_276, %c0_277, %c0_278], %679 {strides = array<i32>} : memref<2x8x128xf32, #tpu.memory_space<vmem>>, vector<1x8x128xf32>,
    %c1_279 = arith.constant 1 : index
    %c0_280 = arith.constant 0 : index
    %c0_281 = arith.constant 0 : index
    %680 = vector.load %arg15[%c1_279, %c0_280, %c0_281] : memref<2x8x128xf32, #tpu.memory_space<vmem>>, vector<1x8x128xf32>
    %681 = vector.shape_cast %680 : vector<1x8x128xf32> to vector<8x128xf32>
    %682 = vector.shape_cast %670 : vector<8x128xf32> to vector<1x8x128xf32>
    tpu.vector_store %arg15[%c1_279, %c0_280, %c0_281], %682 {strides = array<i32>} : memref<2x8x128xf32, #tpu.memory_space<vmem>>, vector<1x8x128xf32>,
    %c0_282 = arith.constant 0 : index
    %c0_283 = arith.constant 0 : index
    %c0_284 = arith.constant 0 : index
    %683 = vector.load %arg13[%c0_282, %c0_283, %c0_284] : memref<8x8x128xf32, #tpu.memory_space<vmem>>, vector<8x8x128xf32>
    %cst_285 = arith.constant 0.000000e+00 : f32
    %684 = vector.broadcast %cst_285 : f32 to vector<8x8x128xf32>
    %685 = arith.maximumf %683, %684 : vector<8x8x128xf32>
    %686 = vector.shape_cast %685 : vector<8x8x128xf32> to vector<64x128xf32>
    %c0_286 = arith.constant 0 : index
    %c0_287 = arith.constant 0 : index
    %687 = vector.load %arg9[%c0_286, %c0_287] : memref<128x128xf32, #tpu.memory_space<vmem>>, vector<128x128xf32>
    %cst_288 = arith.constant dense<0.000000e+00> : vector<64x128xf32>
    %688 = tpu.matmul %686, %687, %cst_288 {dimension_numbers = #tpu.dot_dimension_numbers<[1], [0], [0], [1], [0, 0, 1, 1], [], []>} : vector<64x128xf32>, vector<128x128xf32>, vector<64x128xf32> -> vector<64x128xf32>
    %c0_289 = arith.constant 0 : index
    %c0_290 = arith.constant 0 : index
    %689 = vector.load %arg10[%c0_289, %c0_290] : memref<1x128xf32, #tpu.memory_space<vmem>>, vector<1x128xf32>
    %690 = vector.broadcast %689 : vector<1x128xf32> to vector<64x128xf32>
    %691 = arith.addf %688, %690 : vector<64x128xf32>
    %692 = vector.shape_cast %691 : vector<64x128xf32> to vector<8x8x128xf32>
    %c0_291 = arith.constant 0 : index
    %c0_292 = arith.constant 0 : index
    %c0_293 = arith.constant 0 : index
    %693 = vector.load %arg11[%c0_291, %c0_292, %c0_293] : memref<8x8x128xf32, #tpu.memory_space<vmem>>, vector<8x8x128xf32>
    tpu.vector_store %arg11[%c0_291, %c0_292, %c0_293], %692 {strides = array<i32>} : memref<8x8x128xf32, #tpu.memory_space<vmem>>, vector<8x8x128xf32>,
    return
  }
  func.func @transform_0(%arg0: i32, %arg1: i32) -> (i32, i32, i32) {
    %c0_i32 = arith.constant 0 : i32
    %c0_i32_0 = arith.constant 0 : i32
    return %arg1, %arg0, %c0_i32 : i32, i32, i32
  }
  func.func @transform_1(%arg0: i32, %arg1: i32) -> (i32, i32) {
    %c0_i32 = arith.constant 0 : i32
    %c0_i32_0 = arith.constant 0 : i32
    %c0_i32_1 = arith.constant 0 : i32
    return %c0_i32, %c0_i32_0 : i32, i32
  }
  func.func @transform_2(%arg0: i32, %arg1: i32) -> (i32, i32) {
    %c0_i32 = arith.constant 0 : i32
    %c0_i32_0 = arith.constant 0 : i32
    %c0_i32_1 = arith.constant 0 : i32
    return %c0_i32, %c0_i32_0 : i32, i32
  }
  func.func @transform_3(%arg0: i32, %arg1: i32) -> (i32, i32) {
    %c0_i32 = arith.constant 0 : i32
    %c0_i32_0 = arith.constant 0 : i32
    %c0_i32_1 = arith.constant 0 : i32
    return %c0_i32, %c0_i32_0 : i32, i32
  }
  func.func @transform_4(%arg0: i32, %arg1: i32) -> (i32, i32) {
    %c0_i32 = arith.constant 0 : i32
    %c0_i32_0 = arith.constant 0 : i32
    %c0_i32_1 = arith.constant 0 : i32
    return %c0_i32, %c0_i32_0 : i32, i32
  }
  func.func @transform_5(%arg0: i32, %arg1: i32) -> (i32, i32) {
    %c0_i32 = arith.constant 0 : i32
    %c0_i32_0 = arith.constant 0 : i32
    %c0_i32_1 = arith.constant 0 : i32
    return %c0_i32, %c0_i32_0 : i32, i32
  }
  func.func @transform_6(%arg0: i32, %arg1: i32) -> (i32, i32) {
    %c0_i32 = arith.constant 0 : i32
    %c0_i32_0 = arith.constant 0 : i32
    %c0_i32_1 = arith.constant 0 : i32
    return %c0_i32, %c0_i32_0 : i32, i32
  }
  func.func @transform_7(%arg0: i32, %arg1: i32) -> (i32, i32) {
    %c0_i32 = arith.constant 0 : i32
    %c0_i32_0 = arith.constant 0 : i32
    %c0_i32_1 = arith.constant 0 : i32
    return %c0_i32, %c0_i32_0 : i32, i32
  }
  func.func @transform_8(%arg0: i32, %arg1: i32) -> (i32, i32) {
    %c0_i32 = arith.constant 0 : i32
    %c0_i32_0 = arith.constant 0 : i32
    %c0_i32_1 = arith.constant 0 : i32
    return %c0_i32, %c0_i32_0 : i32, i32
  }
  func.func @transform_9(%arg0: i32, %arg1: i32) -> (i32, i32, i32) {
    %c0_i32 = arith.constant 0 : i32
    %c0_i32_0 = arith.constant 0 : i32
    return %arg1, %arg0, %c0_i32 : i32, i32, i32
  }
}

</mosaic_0001>

<llo_original>
// kernel: simple_lstm_forward.1
$region0: #{simple_lstm_forward.1}
  #allocation0 [shape = 'u32[]', space=smem, size = 0x4, offset = 0x4, fixed_abs, tag = 'smem constant byte address 0x4 - core index']
  #allocation1 [shape = 'u32[72,128]{1,0:T(1,128)}', space=vmem, size = 0x9000, scoped, tag = 'internal scratch']
  #allocation2 [shape = 'f32[8,8,512]{2,1,0:T(8,128)}', space=vmem, size = 0x20000, scoped, tag = 'scratch operand']
  #allocation3 [shape = 'f32[8,8,128]{2,1,0:T(8,128)}', space=vmem, size = 0x8000, scoped, tag = 'scratch operand']
  #allocation4 [shape = 'f32[2,8,128]{2,1,0:T(8,128)}', space=vmem, size = 0x2000, scoped, tag = 'scratch operand']
  #allocation5 [shape = 'f32[2,8,128]{2,1,0:T(8,128)}', space=vmem, size = 0x2000, scoped, tag = 'scratch operand']
  %s0 = inlined_call_operand.vmem [shape: f32[8,8,128], index: 0, kind: input, shape index: {}]
  %s1 = inlined_call_operand.hbm [shape: f32[128,512], index: 1, kind: input, shape index: {}]
  %s2 = inlined_call_operand.hbm [shape: f32[128,512], index: 2, kind: input, shape index: {}]
  %s3 = inlined_call_operand.vmem [shape: f32[1,512], index: 3, kind: input, shape index: {}]
  %s4 = inlined_call_operand.hbm [shape: f32[128,512], index: 4, kind: input, shape index: {}]
  %s5 = inlined_call_operand.hbm [shape: f32[128,512], index: 5, kind: input, shape index: {}]
  %s6 = inlined_call_operand.vmem [shape: f32[1,512], index: 6, kind: input, shape index: {}]
  %s7 = inlined_call_operand.hbm [shape: f32[128,128], index: 7, kind: input, shape index: {}]
  %s8 = inlined_call_operand.vmem [shape: f32[1,128], index: 8, kind: input, shape index: {}]
  %s9 = inlined_call_operand.vmem [shape: f32[8,8,128], index: 9, kind: output, shape index: {}]
  %s10 = sld [smem:[#allocation0]]
  $region70: #{simple_lstm_forward.1} parent=0
    _
  %s12 = ssub.s32 1, %s10
  %s13 = scalar_select 0, %s12, %s10
  $region1: #{simple_lstm_forward.1} parent=0
    #allocation6 [shape = 'u8[262144]{0}', space=vmem, size = 0x40000, scoped, tag = 'input window, operand 1, single buffered']
    #allocation7 [shape = 's32[1]{0}', space=sflag, size = 0x4, scoped, tag = 'scoped memory for simple_lstm_forward.1']
    #allocation8 [shape = 'u8[262144]{0}', space=vmem, size = 0x40000, scoped, tag = 'input window, operand 2, single buffered']
    #allocation9 [shape = 's32[1]{0}', space=sflag, size = 0x4, scoped, tag = 'scoped memory for simple_lstm_forward.1']
    #allocation10 [shape = 'u8[262144]{0}', space=vmem, size = 0x40000, scoped, tag = 'input window, operand 4, single buffered']
    #allocation11 [shape = 'u8[262144]{0}', space=vmem, size = 0x40000, scoped, tag = 'input window, operand 5, single buffered']
    #allocation12 [shape = 's32[1]{0}', space=sflag, size = 0x4, scoped, tag = 'scoped memory for simple_lstm_forward.1']
    #allocation13 [shape = 'u8[65536]{0}', space=vmem, size = 0x10000, scoped, tag = 'input window, operand 7, single buffered']
    %14 = vsyncpa [#allocation7], 0
    %15 = vsyncpa [#allocation9], 0
    %16 = vsyncpa [#allocation12], 0
    // Predicated region
    $region2: #{simple_lstm_forward.1} parent=1 // pred_check
      _
    $region3: #{simple_lstm_forward.1} parent=1 // pred_check_branch
      %18 = sbr.rel (0) target = $region5
    $region4: #{simple_lstm_forward.1} parent=1 // pred_region
      _
    $region5: #{simple_lstm_forward.1} parent=1 // pred_fallthru
      _
    // Predicated region
    $region6: #{simple_lstm_forward.1} parent=1 // pred_check
      _
    $region7: #{simple_lstm_forward.1} parent=1 // pred_check_branch
      %20 = sbr.rel (0) target = $region9
    $region8: #{simple_lstm_forward.1} parent=1 // pred_region
      %22 = vsyncadd [#allocation7], 0
      %s23 = sshll.u32 %s1, 4
      %s24 = int_to_ptr.hbm [resolvable:$true] %s23
      %s25 = sshll.u32 [#allocation6], 4
      %s26 = int_to_ptr.vmem [resolvable:$true] %s25
      %31 = dma.hbm_to_vmem [thread:$0]  %s24, 8192, %s26, [#allocation7], 512, 512, 32
    $region9: #{simple_lstm_forward.1} parent=1 // pred_fallthru
      _
    // Predicated region
    $region10: #{simple_lstm_forward.1} parent=1 // pred_check
      _
    $region11: #{simple_lstm_forward.1} parent=1 // pred_check_branch
      %33 = sbr.rel (0) target = $region13
    $region12: #{simple_lstm_forward.1} parent=1 // pred_region
      %35 = vsyncadd [#allocation9], 0
      %s36 = sshll.u32 %s2, 4
      %s37 = int_to_ptr.hbm [resolvable:$true] %s36
      %s38 = sshll.u32 [#allocation8], 4
      %s39 = int_to_ptr.vmem [resolvable:$true] %s38
      %44 = dma.hbm_to_vmem [thread:$0]  %s37, 8192, %s39, [#allocation9], 512, 512, 32
    $region13: #{simple_lstm_forward.1} parent=1 // pred_fallthru
      _
    // Predicated region
    $region14: #{simple_lstm_forward.1} parent=1 // pred_check
      _
    $region15: #{simple_lstm_forward.1} parent=1 // pred_check_branch
      %46 = sbr.rel (0) target = $region17
    $region16: #{simple_lstm_forward.1} parent=1 // pred_region
      _
    $region17: #{simple_lstm_forward.1} parent=1 // pred_fallthru
      _
    // Predicated region
    $region18: #{simple_lstm_forward.1} parent=1 // pred_check
      _
    $region19: #{simple_lstm_forward.1} parent=1 // pred_check_branch
      %48 = sbr.rel (0) target = $region21
    $region20: #{simple_lstm_forward.1} parent=1 // pred_region
      %50 = vsyncadd [#allocation9], 0
      %s51 = sshll.u32 %s4, 4
      %s52 = int_to_ptr.hbm [resolvable:$true] %s51
      %s53 = sshll.u32 [#allocation10], 4
      %s54 = int_to_ptr.vmem [resolvable:$true] %s53
      %59 = dma.hbm_to_vmem [thread:$0]  %s52, 8192, %s54, [#allocation9], 512, 512, 32
    $region21: #{simple_lstm_forward.1} parent=1 // pred_fallthru
      _
    // Predicated region
    $region22: #{simple_lstm_forward.1} parent=1 // pred_check
      _
    $region23: #{simple_lstm_forward.1} parent=1 // pred_check_branch
      %61 = sbr.rel (0) target = $region25
    $region24: #{simple_lstm_forward.1} parent=1 // pred_region
      %63 = vsyncadd [#allocation12], 0
      %s64 = sshll.u32 %s5, 4
      %s65 = int_to_ptr.hbm [resolvable:$true] %s64
      %s66 = sshll.u32 [#allocation11], 4
      %s67 = int_to_ptr.vmem [resolvable:$true] %s66
      %72 = dma.hbm_to_vmem [thread:$0]  %s65, 8192, %s67, [#allocation12], 512, 512, 32
    $region25: #{simple_lstm_forward.1} parent=1 // pred_fallthru
      _
    // Predicated region
    $region26: #{simple_lstm_forward.1} parent=1 // pred_check
      _
    $region27: #{simple_lstm_forward.1} parent=1 // pred_check_branch
      %74 = sbr.rel (0) target = $region29
    $region28: #{simple_lstm_forward.1} parent=1 // pred_region
      _
    $region29: #{simple_lstm_forward.1} parent=1 // pred_fallthru
      _
    // Predicated region
    $region30: #{simple_lstm_forward.1} parent=1 // pred_check
      _
    $region31: #{simple_lstm_forward.1} parent=1 // pred_check_branch
      %76 = sbr.rel (0) target = $region33
    $region32: #{simple_lstm_forward.1} parent=1 // pred_region
      %78 = vsyncadd [#allocation12], 0
      %s79 = sshll.u32 %s7, 4
      %s80 = int_to_ptr.hbm [resolvable:$true] %s79
      %s81 = sshll.u32 [#allocation13], 4
      %s82 = int_to_ptr.vmem [resolvable:$true] %s81
      %87 = dma.hbm_to_vmem [thread:$0]  %s80, 2048, %s82, [#allocation12], 128, 128, 8
    $region33: #{simple_lstm_forward.1} parent=1 // pred_fallthru
      _
    // Predicated region
    $region34: #{simple_lstm_forward.1} parent=1 // pred_check
      _
    $region35: #{simple_lstm_forward.1} parent=1 // pred_check_branch
      %89 = sbr.rel (0) target = $region37
    $region36: #{simple_lstm_forward.1} parent=1 // pred_region
      _
    $region37: #{simple_lstm_forward.1} parent=1 // pred_fallthru
      _
    // Predicated region
    $region38: #{simple_lstm_forward.1} parent=1 // pred_check
      _
    $region39: #{simple_lstm_forward.1} parent=1 // pred_check_branch
      %91 = sbr.rel (0) target = $region41
    $region40: #{simple_lstm_forward.1} parent=1 // pred_region
      %93 = dma.done [#allocation7], 8192
    $region41: #{simple_lstm_forward.1} parent=1 // pred_fallthru
      _
    // Predicated region
    $region42: #{simple_lstm_forward.1} parent=1 // pred_check
      _
    $region43: #{simple_lstm_forward.1} parent=1 // pred_check_branch
      %95 = sbr.rel (0) target = $region45
    $region44: #{simple_lstm_forward.1} parent=1 // pred_region
      %97 = dma.done [#allocation9], 8192
    $region45: #{simple_lstm_forward.1} parent=1 // pred_fallthru
      _
    // Predicated region
    $region46: #{simple_lstm_forward.1} parent=1 // pred_check
      _
    $region47: #{simple_lstm_forward.1} parent=1 // pred_check_branch
      %99 = sbr.rel (0) target = $region49
    $region48: #{simple_lstm_forward.1} parent=1 // pred_region
      %101 = dma.done [#allocation9], 8192
    $region49: #{simple_lstm_forward.1} parent=1 // pred_fallthru
      _
    // Predicated region
    $region50: #{simple_lstm_forward.1} parent=1 // pred_check
      _
    $region51: #{simple_lstm_forward.1} parent=1 // pred_check_branch
      %103 = sbr.rel (0) target = $region53
    $region52: #{simple_lstm_forward.1} parent=1 // pred_region
      %105 = dma.done [#allocation12], 8192
    $region53: #{simple_lstm_forward.1} parent=1 // pred_fallthru
      _
    // Predicated region
    $region54: #{simple_lstm_forward.1} parent=1 // pred_check
      _
    $region55: #{simple_lstm_forward.1} parent=1 // pred_check_branch
      %107 = sbr.rel (0) target = $region57
    $region56: #{simple_lstm_forward.1} parent=1 // pred_region
      %109 = dma.done [#allocation12], 2048
    $region57: #{simple_lstm_forward.1} parent=1 // pred_fallthru
      _
    %p110 = scmp.eq.s32.totalorder 0, 0
    // Predicated region
    $region58: #{simple_lstm_forward.1} parent=1 // pred_check
      %p111 = pneg %p110
    $region59: #{simple_lstm_forward.1} parent=1 // pred_check_branch
      %113 = sbr.rel (%p111) target = $region61
    $region60: #{simple_lstm_forward.1} parent=1 // pred_region
      %114 = vst [vmem:[#allocation4] sm:$0xff] 0.0
      %115 = vst [vmem:[#allocation4 + $0x8] sm:$0xff] 0.0
      %116 = vst [vmem:[#allocation5] sm:$0xff] 0.0
      %117 = vst [vmem:[#allocation5 + $0x8] sm:$0xff] 0.0
    $region61: #{simple_lstm_forward.1} parent=1 // pred_fallthru
      _
    %v118 = vld [vmem:[%s0] sm:$0xff]
    %v119 = vld [vmem:[%s0 + $0x8] sm:$0xff]
    %v120 = vld [vmem:[%s0 + $0x10] sm:$0xff]
    %v121 = vld [vmem:[%s0 + $0x18] sm:$0xff]
    %v122 = vld [vmem:[%s0 + $0x20] sm:$0xff]
    %v123 = vld [vmem:[%s0 + $0x28] sm:$0xff]
    %v124 = vld [vmem:[%s0 + $0x30] sm:$0xff]
    %v125 = vld [vmem:[%s0 + $0x38] sm:$0xff]
    %v126 = vld [vmem:[#allocation6] sm:$0xff]
    %v127 = vld [vmem:[#allocation6 + $0x8] sm:$0xff]
    %v128 = vld [vmem:[#allocation6 + $0x10] sm:$0xff]
    %v129 = vld [vmem:[#allocation6 + $0x18] sm:$0xff]
    %v130 = vld [vmem:[#allocation6 + $0x20] sm:$0xff]
    %v131 = vld [vmem:[#allocation6 + $0x28] sm:$0xff]
    %v132 = vld [vmem:[#allocation6 + $0x30] sm:$0xff]
    %v133 = vld [vmem:[#allocation6 + $0x38] sm:$0xff]
    %v134 = vld [vmem:[#allocation6 + $0x40] sm:$0xff]
    %v135 = vld [vmem:[#allocation6 + $0x48] sm:$0xff]
    %v136 = vld [vmem:[#allocation6 + $0x50] sm:$0xff]
    %v137 = vld [vmem:[#allocation6 + $0x58] sm:$0xff]
    %v138 = vld [vmem:[#allocation6 + $0x60] sm:$0xff]
    %v139 = vld [vmem:[#allocation6 + $0x68] sm:$0xff]
    %v140 = vld [vmem:[#allocation6 + $0x70] sm:$0xff]
    %v141 = vld [vmem:[#allocation6 + $0x78] sm:$0xff]
    %v142 = vld [vmem:[#allocation6 + $0x80] sm:$0xff]
    %v143 = vld [vmem:[#allocation6 + $0x88] sm:$0xff]
    %v144 = vld [vmem:[#allocation6 + $0x90] sm:$0xff]
    %v145 = vld [vmem:[#allocation6 + $0x98] sm:$0xff]
    %v146 = vld [vmem:[#allocation6 + $0xa0] sm:$0xff]
    %v147 = vld [vmem:[#allocation6 + $0xa8] sm:$0xff]
    %v148 = vld [vmem:[#allocation6 + $0xb0] sm:$0xff]
    %v149 = vld [vmem:[#allocation6 + $0xb8] sm:$0xff]
    %v150 = vld [vmem:[#allocation6 + $0xc0] sm:$0xff]
    %v151 = vld [vmem:[#allocation6 + $0xc8] sm:$0xff]
    %v152 = vld [vmem:[#allocation6 + $0xd0] sm:$0xff]
    %v153 = vld [vmem:[#allocation6 + $0xd8] sm:$0xff]
    %v154 = vld [vmem:[#allocation6 + $0xe0] sm:$0xff]
    %v155 = vld [vmem:[#allocation6 + $0xe8] sm:$0xff]
    %v156 = vld [vmem:[#allocation6 + $0xf0] sm:$0xff]
    %v157 = vld [vmem:[#allocation6 + $0xf8] sm:$0xff]
    %v158 = vld [vmem:[#allocation6 + $0x100] sm:$0xff]
    %v159 = vld [vmem:[#allocation6 + $0x108] sm:$0xff]
    %v160 = vld [vmem:[#allocation6 + $0x110] sm:$0xff]
    %v161 = vld [vmem:[#allocation6 + $0x118] sm:$0xff]
    %v162 = vld [vmem:[#allocation6 + $0x120] sm:$0xff]
    %v163 = vld [vmem:[#allocation6 + $0x128] sm:$0xff]
    %v164 = vld [vmem:[#allocation6 + $0x130] sm:$0xff]
    %v165 = vld [vmem:[#allocation6 + $0x138] sm:$0xff]
    %v166 = vld [vmem:[#allocation6 + $0x140] sm:$0xff]
    %v167 = vld [vmem:[#allocation6 + $0x148] sm:$0xff]
    %v168 = vld [vmem:[#allocation6 + $0x150] sm:$0xff]
    %v169 = vld [vmem:[#allocation6 + $0x158] sm:$0xff]
    %v170 = vld [vmem:[#allocation6 + $0x160] sm:$0xff]
    %v171 = vld [vmem:[#allocation6 + $0x168] sm:$0xff]
    %v172 = vld [vmem:[#allocation6 + $0x170] sm:$0xff]
    %v173 = vld [vmem:[#allocation6 + $0x178] sm:$0xff]
    %v174 = vld [vmem:[#allocation6 + $0x180] sm:$0xff]
    %v175 = vld [vmem:[#allocation6 + $0x188] sm:$0xff]
    %v176 = vld [vmem:[#allocation6 + $0x190] sm:$0xff]
    %v177 = vld [vmem:[#allocation6 + $0x198] sm:$0xff]
    %v178 = vld [vmem:[#allocation6 + $0x1a0] sm:$0xff]
    %v179 = vld [vmem:[#allocation6 + $0x1a8] sm:$0xff]
    %v180 = vld [vmem:[#allocation6 + $0x1b0] sm:$0xff]
    %v181 = vld [vmem:[#allocation6 + $0x1b8] sm:$0xff]
    %v182 = vld [vmem:[#allocation6 + $0x1c0] sm:$0xff]
    %v183 = vld [vmem:[#allocation6 + $0x1c8] sm:$0xff]
    %v184 = vld [vmem:[#allocation6 + $0x1d0] sm:$0xff]
    %v185 = vld [vmem:[#allocation6 + $0x1d8] sm:$0xff]
    %v186 = vld [vmem:[#allocation6 + $0x1e0] sm:$0xff]
    %v187 = vld [vmem:[#allocation6 + $0x1e8] sm:$0xff]
    %v188 = vld [vmem:[#allocation6 + $0x1f0] sm:$0xff]
    %v189 = vld [vmem:[#allocation6 + $0x1f8] sm:$0xff]
    %v190 = vld [vmem:[%s3] sm:$0xf]
    %v192 = vperm.slane %v190, 0
    %v193 = vperm.slane %v190, 1
    %v194 = vperm.slane %v190, 2
    %v195 = vperm.slane %v190, 3
    %200 = vmatpush.msra.mxu0 %v186
    %201 = vmatpush.msra.mxu0 %v182
    %202 = vmatpush.msra.mxu0 %v178
    %203 = vmatpush.msra.mxu0 %v174
    %204 = vmatpush.msra.mxu0 %v170
    %205 = vmatpush.msra.mxu0 %v166
    %206 = vmatpush.msra.mxu0 %v162
    %207 = vmatpush.msra.mxu0 %v158
    %208 = vmatpush.msra.mxu0 %v154
    %209 = vmatpush.msra.mxu0 %v150
    %210 = vmatpush.msra.mxu0 %v146
    %211 = vmatpush.msra.mxu0 %v142
    %212 = vmatpush.msra.mxu0 %v138
    %213 = vmatpush.msra.mxu0 %v134
    %214 = vmatpush.msra.mxu0 %v130
    %215 = vmatpush.msra.mxu0 %v126
    %216 = vmatmul.f32.gmra.mxu0 %v118
    %v217 = vpop.f32.mrf.mxu0
    %v218 = vadd.f32 %v192, %v217
    %219 = vmatmul.f32.gmra.mxu0 %v119
    %v220 = vpop.f32.mrf.mxu0
    %v221 = vadd.f32 %v192, %v220
    %222 = vmatmul.f32.gmra.mxu0 %v120
    %v223 = vpop.f32.mrf.mxu0
    %v224 = vadd.f32 %v192, %v223
    %225 = vmatmul.f32.gmra.mxu0 %v121
    %v226 = vpop.f32.mrf.mxu0
    %v227 = vadd.f32 %v192, %v226
    %228 = vmatmul.f32.gmra.mxu0 %v122
    %v229 = vpop.f32.mrf.mxu0
    %v230 = vadd.f32 %v192, %v229
    %231 = vmatmul.f32.gmra.mxu0 %v123
    %v232 = vpop.f32.mrf.mxu0
    %v233 = vadd.f32 %v192, %v232
    %234 = vmatmul.f32.gmra.mxu0 %v124
    %v235 = vpop.f32.mrf.mxu0
    %v236 = vadd.f32 %v192, %v235
    %237 = vmatmul.f32.gmra.mxu0 %v125
    %v238 = vpop.f32.mrf.mxu0
    %v239 = vadd.f32 %v192, %v238
    %240 = vdwg.mxu0
    %241 = vmatpush.msra.mxu0 %v187
    %242 = vmatpush.msra.mxu0 %v183
    %243 = vmatpush.msra.mxu0 %v179
    %244 = vmatpush.msra.mxu0 %v175
    %245 = vmatpush.msra.mxu0 %v171
    %246 = vmatpush.msra.mxu0 %v167
    %247 = vmatpush.msra.mxu0 %v163
    %248 = vmatpush.msra.mxu0 %v159
    %249 = vmatpush.msra.mxu0 %v155
    %250 = vmatpush.msra.mxu0 %v151
    %251 = vmatpush.msra.mxu0 %v147
    %252 = vmatpush.msra.mxu0 %v143
    %253 = vmatpush.msra.mxu0 %v139
    %254 = vmatpush.msra.mxu0 %v135
    %255 = vmatpush.msra.mxu0 %v131
    %256 = vmatpush.msra.mxu0 %v127
    %257 = vmatmul.f32.gmra.mxu0 %v118
    %v258 = vpop.f32.mrf.mxu0
    %v259 = vadd.f32 %v193, %v258
    %260 = vmatmul.f32.gmra.mxu0 %v119
    %v261 = vpop.f32.mrf.mxu0
    %v262 = vadd.f32 %v193, %v261
    %263 = vmatmul.f32.gmra.mxu0 %v120
    %v264 = vpop.f32.mrf.mxu0
    %v265 = vadd.f32 %v193, %v264
    %266 = vmatmul.f32.gmra.mxu0 %v121
    %v267 = vpop.f32.mrf.mxu0
    %v268 = vadd.f32 %v193, %v267
    %269 = vmatmul.f32.gmra.mxu0 %v122
    %v270 = vpop.f32.mrf.mxu0
    %v271 = vadd.f32 %v193, %v270
    %272 = vmatmul.f32.gmra.mxu0 %v123
    %v273 = vpop.f32.mrf.mxu0
    %v274 = vadd.f32 %v193, %v273
    %275 = vmatmul.f32.gmra.mxu0 %v124
    %v276 = vpop.f32.mrf.mxu0
    %v277 = vadd.f32 %v193, %v276
    %278 = vmatmul.f32.gmra.mxu0 %v125
    %v279 = vpop.f32.mrf.mxu0
    %v280 = vadd.f32 %v193, %v279
    %281 = vdwg.mxu0
    %282 = vmatpush.msra.mxu0 %v188
    %283 = vmatpush.msra.mxu0 %v184
    %284 = vmatpush.msra.mxu0 %v180
    %285 = vmatpush.msra.mxu0 %v176
    %286 = vmatpush.msra.mxu0 %v172
    %287 = vmatpush.msra.mxu0 %v168
    %288 = vmatpush.msra.mxu0 %v164
    %289 = vmatpush.msra.mxu0 %v160
    %290 = vmatpush.msra.mxu0 %v156
    %291 = vmatpush.msra.mxu0 %v152
    %292 = vmatpush.msra.mxu0 %v148
    %293 = vmatpush.msra.mxu0 %v144
    %294 = vmatpush.msra.mxu0 %v140
    %295 = vmatpush.msra.mxu0 %v136
    %296 = vmatpush.msra.mxu0 %v132
    %297 = vmatpush.msra.mxu0 %v128
    %298 = vmatmul.f32.gmra.mxu0 %v118
    %v299 = vpop.f32.mrf.mxu0
    %v300 = vadd.f32 %v194, %v299
    %301 = vmatmul.f32.gmra.mxu0 %v119
    %v302 = vpop.f32.mrf.mxu0
    %v303 = vadd.f32 %v194, %v302
    %304 = vmatmul.f32.gmra.mxu0 %v120
    %v305 = vpop.f32.mrf.mxu0
    %v306 = vadd.f32 %v194, %v305
    %307 = vmatmul.f32.gmra.mxu0 %v121
    %v308 = vpop.f32.mrf.mxu0
    %v309 = vadd.f32 %v194, %v308
    %310 = vmatmul.f32.gmra.mxu0 %v122
    %v311 = vpop.f32.mrf.mxu0
    %v312 = vadd.f32 %v194, %v311
    %313 = vmatmul.f32.gmra.mxu0 %v123
    %v314 = vpop.f32.mrf.mxu0
    %v315 = vadd.f32 %v194, %v314
    %316 = vmatmul.f32.gmra.mxu0 %v124
    %v317 = vpop.f32.mrf.mxu0
    %v318 = vadd.f32 %v194, %v317
    %319 = vmatmul.f32.gmra.mxu0 %v125
    %v320 = vpop.f32.mrf.mxu0
    %v321 = vadd.f32 %v194, %v320
    %322 = vdwg.mxu0
    %323 = vmatpush.msra.mxu0 %v189
    %324 = vmatpush.msra.mxu0 %v185
    %325 = vmatpush.msra.mxu0 %v181
    %326 = vmatpush.msra.mxu0 %v177
    %327 = vmatpush.msra.mxu0 %v173
    %328 = vmatpush.msra.mxu0 %v169
    %329 = vmatpush.msra.mxu0 %v165
    %330 = vmatpush.msra.mxu0 %v161
    %331 = vmatpush.msra.mxu0 %v157
    %332 = vmatpush.msra.mxu0 %v153
    %333 = vmatpush.msra.mxu0 %v149
    %334 = vmatpush.msra.mxu0 %v145
    %335 = vmatpush.msra.mxu0 %v141
    %336 = vmatpush.msra.mxu0 %v137
    %337 = vmatpush.msra.mxu0 %v133
    %338 = vmatpush.msra.mxu0 %v129
    %339 = vmatmul.f32.gmra.mxu0 %v118
    %v340 = vpop.f32.mrf.mxu0
    %v341 = vadd.f32 %v195, %v340
    %342 = vmatmul.f32.gmra.mxu0 %v119
    %v343 = vpop.f32.mrf.mxu0
    %v344 = vadd.f32 %v195, %v343
    %345 = vmatmul.f32.gmra.mxu0 %v120
    %v346 = vpop.f32.mrf.mxu0
    %v347 = vadd.f32 %v195, %v346
    %348 = vmatmul.f32.gmra.mxu0 %v121
    %v349 = vpop.f32.mrf.mxu0
    %v350 = vadd.f32 %v195, %v349
    %351 = vmatmul.f32.gmra.mxu0 %v122
    %v352 = vpop.f32.mrf.mxu0
    %v353 = vadd.f32 %v195, %v352
    %354 = vmatmul.f32.gmra.mxu0 %v123
    %v355 = vpop.f32.mrf.mxu0
    %v356 = vadd.f32 %v195, %v355
    %357 = vmatmul.f32.gmra.mxu0 %v124
    %v358 = vpop.f32.mrf.mxu0
    %v359 = vadd.f32 %v195, %v358
    %360 = vmatmul.f32.gmra.mxu0 %v125
    %v361 = vpop.f32.mrf.mxu0
    %v362 = vadd.f32 %v195, %v361
    %363 = vdwg.mxu0
    %364 = vst [vmem:[#allocation2] sm:$0xff] %v218
    %365 = vst [vmem:[#allocation2 + $0x8] sm:$0xff] %v259
    %366 = vst [vmem:[#allocation2 + $0x10] sm:$0xff] %v300
    %367 = vst [vmem:[#allocation2 + $0x18] sm:$0xff] %v341
    %368 = vst [vmem:[#allocation2 + $0x20] sm:$0xff] %v221
    %369 = vst [vmem:[#allocation2 + $0x28] sm:$0xff] %v262
    %370 = vst [vmem:[#allocation2 + $0x30] sm:$0xff] %v303
    %371 = vst [vmem:[#allocation2 + $0x38] sm:$0xff] %v344
    %372 = vst [vmem:[#allocation2 + $0x40] sm:$0xff] %v224
    %373 = vst [vmem:[#allocation2 + $0x48] sm:$0xff] %v265
    %374 = vst [vmem:[#allocation2 + $0x50] sm:$0xff] %v306
    %375 = vst [vmem:[#allocation2 + $0x58] sm:$0xff] %v347
    %376 = vst [vmem:[#allocation2 + $0x60] sm:$0xff] %v227
    %377 = vst [vmem:[#allocation2 + $0x68] sm:$0xff] %v268
    %378 = vst [vmem:[#allocation2 + $0x70] sm:$0xff] %v309
    %379 = vst [vmem:[#allocation2 + $0x78] sm:$0xff] %v350
    %380 = vst [vmem:[#allocation2 + $0x80] sm:$0xff] %v230
    %381 = vst [vmem:[#allocation2 + $0x88] sm:$0xff] %v271
    %382 = vst [vmem:[#allocation2 + $0x90] sm:$0xff] %v312
    %383 = vst [vmem:[#allocation2 + $0x98] sm:$0xff] %v353
    %384 = vst [vmem:[#allocation2 + $0xa0] sm:$0xff] %v233
    %385 = vst [vmem:[#allocation2 + $0xa8] sm:$0xff] %v274
    %386 = vst [vmem:[#allocation2 + $0xb0] sm:$0xff] %v315
    %387 = vst [vmem:[#allocation2 + $0xb8] sm:$0xff] %v356
    %388 = vst [vmem:[#allocation2 + $0xc0] sm:$0xff] %v236
    %389 = vst [vmem:[#allocation2 + $0xc8] sm:$0xff] %v277
    %390 = vst [vmem:[#allocation2 + $0xd0] sm:$0xff] %v318
    %391 = vst [vmem:[#allocation2 + $0xd8] sm:$0xff] %v359
    %392 = vst [vmem:[#allocation2 + $0xe0] sm:$0xff] %v239
    %393 = vst [vmem:[#allocation2 + $0xe8] sm:$0xff] %v280
    %394 = vst [vmem:[#allocation2 + $0xf0] sm:$0xff] %v321
    %395 = vst [vmem:[#allocation2 + $0xf8] sm:$0xff] %v362
    %v396 = vld [vmem:[#allocation8] sm:$0xff]
    %v397 = vld [vmem:[#allocation8 + $0x8] sm:$0xff]
    %v398 = vld [vmem:[#allocation8 + $0x10] sm:$0xff]
    %v399 = vld [vmem:[#allocation8 + $0x18] sm:$0xff]
    %v400 = vld [vmem:[#allocation8 + $0x20] sm:$0xff]
    %v401 = vld [vmem:[#allocation8 + $0x28] sm:$0xff]
    %v402 = vld [vmem:[#allocation8 + $0x30] sm:$0xff]
    %v403 = vld [vmem:[#allocation8 + $0x38] sm:$0xff]
    %v404 = vld [vmem:[#allocation8 + $0x40] sm:$0xff]
    %v405 = vld [vmem:[#allocation8 + $0x48] sm:$0xff]
    %v406 = vld [vmem:[#allocation8 + $0x50] sm:$0xff]
    %v407 = vld [vmem:[#allocation8 + $0x58] sm:$0xff]
    %v408 = vld [vmem:[#allocation8 + $0x60] sm:$0xff]
    %v409 = vld [vmem:[#allocation8 + $0x68] sm:$0xff]
    %v410 = vld [vmem:[#allocation8 + $0x70] sm:$0xff]
    %v411 = vld [vmem:[#allocation8 + $0x78] sm:$0xff]
    %v412 = vld [vmem:[#allocation8 + $0x80] sm:$0xff]
    %v413 = vld [vmem:[#allocation8 + $0x88] sm:$0xff]
    %v414 = vld [vmem:[#allocation8 + $0x90] sm:$0xff]
    %v415 = vld [vmem:[#allocation8 + $0x98] sm:$0xff]
    %v416 = vld [vmem:[#allocation8 + $0xa0] sm:$0xff]
    %v417 = vld [vmem:[#allocation8 + $0xa8] sm:$0xff]
    %v418 = vld [vmem:[#allocation8 + $0xb0] sm:$0xff]
    %v419 = vld [vmem:[#allocation8 + $0xb8] sm:$0xff]
    %v420 = vld [vmem:[#allocation8 + $0xc0] sm:$0xff]
    %v421 = vld [vmem:[#allocation8 + $0xc8] sm:$0xff]
    %v422 = vld [vmem:[#allocation8 + $0xd0] sm:$0xff]
    %v423 = vld [vmem:[#allocation8 + $0xd8] sm:$0xff]
    %v424 = vld [vmem:[#allocation8 + $0xe0] sm:$0xff]
    %v425 = vld [vmem:[#allocation8 + $0xe8] sm:$0xff]
    %v426 = vld [vmem:[#allocation8 + $0xf0] sm:$0xff]
    %v427 = vld [vmem:[#allocation8 + $0xf8] sm:$0xff]
    %v428 = vld [vmem:[#allocation8 + $0x100] sm:$0xff]
    %v429 = vld [vmem:[#allocation8 + $0x108] sm:$0xff]
    %v430 = vld [vmem:[#allocation8 + $0x110] sm:$0xff]
    %v431 = vld [vmem:[#allocation8 + $0x118] sm:$0xff]
    %v432 = vld [vmem:[#allocation8 + $0x120] sm:$0xff]
    %v433 = vld [vmem:[#allocation8 + $0x128] sm:$0xff]
    %v434 = vld [vmem:[#allocation8 + $0x130] sm:$0xff]
    %v435 = vld [vmem:[#allocation8 + $0x138] sm:$0xff]
    %v436 = vld [vmem:[#allocation8 + $0x140] sm:$0xff]
    %v437 = vld [vmem:[#allocation8 + $0x148] sm:$0xff]
    %v438 = vld [vmem:[#allocation8 + $0x150] sm:$0xff]
    %v439 = vld [vmem:[#allocation8 + $0x158] sm:$0xff]
    %v440 = vld [vmem:[#allocation8 + $0x160] sm:$0xff]
    %v441 = vld [vmem:[#allocation8 + $0x168] sm:$0xff]
    %v442 = vld [vmem:[#allocation8 + $0x170] sm:$0xff]
    %v443 = vld [vmem:[#allocation8 + $0x178] sm:$0xff]
    %v444 = vld [vmem:[#allocation8 + $0x180] sm:$0xff]
    %v445 = vld [vmem:[#allocation8 + $0x188] sm:$0xff]
    %v446 = vld [vmem:[#allocation8 + $0x190] sm:$0xff]
    %v447 = vld [vmem:[#allocation8 + $0x198] sm:$0xff]
    %v448 = vld [vmem:[#allocation8 + $0x1a0] sm:$0xff]
    %v449 = vld [vmem:[#allocation8 + $0x1a8] sm:$0xff]
    %v450 = vld [vmem:[#allocation8 + $0x1b0] sm:$0xff]
    %v451 = vld [vmem:[#allocation8 + $0x1b8] sm:$0xff]
    %v452 = vld [vmem:[#allocation8 + $0x1c0] sm:$0xff]
    %v453 = vld [vmem:[#allocation8 + $0x1c8] sm:$0xff]
    %v454 = vld [vmem:[#allocation8 + $0x1d0] sm:$0xff]
    %v455 = vld [vmem:[#allocation8 + $0x1d8] sm:$0xff]
    %v456 = vld [vmem:[#allocation8 + $0x1e0] sm:$0xff]
    %v457 = vld [vmem:[#allocation8 + $0x1e8] sm:$0xff]
    %v458 = vld [vmem:[#allocation8 + $0x1f0] sm:$0xff]
    %v459 = vld [vmem:[#allocation8 + $0x1f8] sm:$0xff]
    %v460 = vld [vmem:[#allocation4] sm:$0xff]
    %v461 = vld [vmem:[#allocation5] sm:$0xff]
    %v462 = vld [vmem:[#allocation2] sm:$0xff]
    %v463 = vld [vmem:[#allocation2 + $0x8] sm:$0xff]
    %v464 = vld [vmem:[#allocation2 + $0x10] sm:$0xff]
    %v465 = vld [vmem:[#allocation2 + $0x18] sm:$0xff]
    %466 = vmatpush.msra.mxu0 %v456
    %467 = vmatpush.msra.mxu0 %v452
    %468 = vmatpush.msra.mxu0 %v448
    %469 = vmatpush.msra.mxu0 %v444
    %470 = vmatpush.msra.mxu0 %v440
    %471 = vmatpush.msra.mxu0 %v436
    %472 = vmatpush.msra.mxu0 %v432
    %473 = vmatpush.msra.mxu0 %v428
    %474 = vmatpush.msra.mxu0 %v424
    %475 = vmatpush.msra.mxu0 %v420
    %476 = vmatpush.msra.mxu0 %v416
    %477 = vmatpush.msra.mxu0 %v412
    %478 = vmatpush.msra.mxu0 %v408
    %479 = vmatpush.msra.mxu0 %v404
    %480 = vmatpush.msra.mxu0 %v400
    %481 = vmatpush.msra.mxu0 %v396
    %482 = vmatmul.f32.gmra.mxu0 %v460
    %v483 = vpop.f32.mrf.mxu0
    %v484 = vadd.f32 0.0, %v483
    %485 = vdwg.mxu0
    %486 = vmatpush.msra.mxu0 %v457
    %487 = vmatpush.msra.mxu0 %v453
    %488 = vmatpush.msra.mxu0 %v449
    %489 = vmatpush.msra.mxu0 %v445
    %490 = vmatpush.msra.mxu0 %v441
    %491 = vmatpush.msra.mxu0 %v437
    %492 = vmatpush.msra.mxu0 %v433
    %493 = vmatpush.msra.mxu0 %v429
    %494 = vmatpush.msra.mxu0 %v425
    %495 = vmatpush.msra.mxu0 %v421
    %496 = vmatpush.msra.mxu0 %v417
    %497 = vmatpush.msra.mxu0 %v413
    %498 = vmatpush.msra.mxu0 %v409
    %499 = vmatpush.msra.mxu0 %v405
    %500 = vmatpush.msra.mxu0 %v401
    %501 = vmatpush.msra.mxu0 %v397
    %502 = vmatmul.f32.gmra.mxu0 %v460
    %v503 = vpop.f32.mrf.mxu0
    %v504 = vadd.f32 0.0, %v503
    %505 = vdwg.mxu0
    %506 = vmatpush.msra.mxu0 %v458
    %507 = vmatpush.msra.mxu0 %v454
    %508 = vmatpush.msra.mxu0 %v450
    %509 = vmatpush.msra.mxu0 %v446
    %510 = vmatpush.msra.mxu0 %v442
    %511 = vmatpush.msra.mxu0 %v438
    %512 = vmatpush.msra.mxu0 %v434
    %513 = vmatpush.msra.mxu0 %v430
    %514 = vmatpush.msra.mxu0 %v426
    %515 = vmatpush.msra.mxu0 %v422
    %516 = vmatpush.msra.mxu0 %v418
    %517 = vmatpush.msra.mxu0 %v414
    %518 = vmatpush.msra.mxu0 %v410
    %519 = vmatpush.msra.mxu0 %v406
    %520 = vmatpush.msra.mxu0 %v402
    %521 = vmatpush.msra.mxu0 %v398
    %522 = vmatmul.f32.gmra.mxu0 %v460
    %v523 = vpop.f32.mrf.mxu0
    %v524 = vadd.f32 0.0, %v523
    %525 = vdwg.mxu0
    %526 = vmatpush.msra.mxu0 %v459
    %527 = vmatpush.msra.mxu0 %v455
    %528 = vmatpush.msra.mxu0 %v451
    %529 = vmatpush.msra.mxu0 %v447
    %530 = vmatpush.msra.mxu0 %v443
    %531 = vmatpush.msra.mxu0 %v439
    %532 = vmatpush.msra.mxu0 %v435
    %533 = vmatpush.msra.mxu0 %v431
    %534 = vmatpush.msra.mxu0 %v427
    %535 = vmatpush.msra.mxu0 %v423
    %536 = vmatpush.msra.mxu0 %v419
    %537 = vmatpush.msra.mxu0 %v415
    %538 = vmatpush.msra.mxu0 %v411
    %539 = vmatpush.msra.mxu0 %v407
    %540 = vmatpush.msra.mxu0 %v403
    %541 = vmatpush.msra.mxu0 %v399
    %542 = vmatmul.f32.gmra.mxu0 %v460
    %v543 = vpop.f32.mrf.mxu0
    %v544 = vadd.f32 0.0, %v543
    %545 = vdwg.mxu0
    %v546 = vadd.f32 %v462, %v484
    %v547 = vadd.f32 %v463, %v504
    %v548 = vadd.f32 %v464, %v524
    %v549 = vadd.f32 %v465, %v544
    %v550 = vmul.f32 %v546, 0.5
    %v551 = vtanh.pop %v550
    %v552 = vadd.f32 %v551, 1.0
    %v553 = vmul.f32 %v552, 0.5
    %v554 = vmul.f32 %v547, 0.5
    %v555 = vtanh.pop %v554
    %v556 = vadd.f32 %v555, 1.0
    %v557 = vmul.f32 %v556, 0.5
    %v558 = vtanh.pop %v548
    %v559 = vmul.f32 %v549, 0.5
    %v560 = vtanh.pop %v559
    %v561 = vadd.f32 %v560, 1.0
    %v562 = vmul.f32 %v561, 0.5
    %v563 = vmul.f32 %v557, %v461
    %v564 = vmul.f32 %v553, %v558
    %v565 = vadd.f32 %v563, %v564
    %v566 = vtanh.pop %v565
    %v567 = vmul.f32 %v562, %v566
    %568 = vst [vmem:[#allocation3] sm:$0xff] %v567
    %s569 = scalar_lea.vmem [#allocation2], 32
    %v570 = vld [vmem:[%s569] sm:$0xff]
    %v571 = vld [vmem:[%s569 + $0x8] sm:$0xff]
    %v572 = vld [vmem:[%s569 + $0x10] sm:$0xff]
    %v573 = vld [vmem:[%s569 + $0x18] sm:$0xff]
    %574 = vmatpush.msra.mxu0 %v456
    %575 = vmatpush.msra.mxu0 %v452
    %576 = vmatpush.msra.mxu0 %v448
    %577 = vmatpush.msra.mxu0 %v444
    %578 = vmatpush.msra.mxu0 %v440
    %579 = vmatpush.msra.mxu0 %v436
    %580 = vmatpush.msra.mxu0 %v432
    %581 = vmatpush.msra.mxu0 %v428
    %582 = vmatpush.msra.mxu0 %v424
    %583 = vmatpush.msra.mxu0 %v420
    %584 = vmatpush.msra.mxu0 %v416
    %585 = vmatpush.msra.mxu0 %v412
    %586 = vmatpush.msra.mxu0 %v408
    %587 = vmatpush.msra.mxu0 %v404
    %588 = vmatpush.msra.mxu0 %v400
    %589 = vmatpush.msra.mxu0 %v396
    %590 = vmatmul.f32.gmra.mxu0 %v567
    %v591 = vpop.f32.mrf.mxu0
    %v592 = vadd.f32 0.0, %v591
    %593 = vdwg.mxu0
    %594 = vmatpush.msra.mxu0 %v457
    %595 = vmatpush.msra.mxu0 %v453
    %596 = vmatpush.msra.mxu0 %v449
    %597 = vmatpush.msra.mxu0 %v445
    %598 = vmatpush.msra.mxu0 %v441
    %599 = vmatpush.msra.mxu0 %v437
    %600 = vmatpush.msra.mxu0 %v433
    %601 = vmatpush.msra.mxu0 %v429
    %602 = vmatpush.msra.mxu0 %v425
    %603 = vmatpush.msra.mxu0 %v421
    %604 = vmatpush.msra.mxu0 %v417
    %605 = vmatpush.msra.mxu0 %v413
    %606 = vmatpush.msra.mxu0 %v409
    %607 = vmatpush.msra.mxu0 %v405
    %608 = vmatpush.msra.mxu0 %v401
    %609 = vmatpush.msra.mxu0 %v397
    %610 = vmatmul.f32.gmra.mxu0 %v567
    %v611 = vpop.f32.mrf.mxu0
    %v612 = vadd.f32 0.0, %v611
    %613 = vdwg.mxu0
    %614 = vmatpush.msra.mxu0 %v458
    %615 = vmatpush.msra.mxu0 %v454
    %616 = vmatpush.msra.mxu0 %v450
    %617 = vmatpush.msra.mxu0 %v446
    %618 = vmatpush.msra.mxu0 %v442
    %619 = vmatpush.msra.mxu0 %v438
    %620 = vmatpush.msra.mxu0 %v434
    %621 = vmatpush.msra.mxu0 %v430
    %622 = vmatpush.msra.mxu0 %v426
    %623 = vmatpush.msra.mxu0 %v422
    %624 = vmatpush.msra.mxu0 %v418
    %625 = vmatpush.msra.mxu0 %v414
    %626 = vmatpush.msra.mxu0 %v410
    %627 = vmatpush.msra.mxu0 %v406
    %628 = vmatpush.msra.mxu0 %v402
    %629 = vmatpush.msra.mxu0 %v398
    %630 = vmatmul.f32.gmra.mxu0 %v567
    %v631 = vpop.f32.mrf.mxu0
    %v632 = vadd.f32 0.0, %v631
    %633 = vdwg.mxu0
    %634 = vmatpush.msra.mxu0 %v459
    %635 = vmatpush.msra.mxu0 %v455
    %636 = vmatpush.msra.mxu0 %v451
    %637 = vmatpush.msra.mxu0 %v447
    %638 = vmatpush.msra.mxu0 %v443
    %639 = vmatpush.msra.mxu0 %v439
    %640 = vmatpush.msra.mxu0 %v435
    %641 = vmatpush.msra.mxu0 %v431
    %642 = vmatpush.msra.mxu0 %v427
    %643 = vmatpush.msra.mxu0 %v423
    %644 = vmatpush.msra.mxu0 %v419
    %645 = vmatpush.msra.mxu0 %v415
    %646 = vmatpush.msra.mxu0 %v411
    %647 = vmatpush.msra.mxu0 %v407
    %648 = vmatpush.msra.mxu0 %v403
    %649 = vmatpush.msra.mxu0 %v399
    %650 = vmatmul.f32.gmra.mxu0 %v567
    %v651 = vpop.f32.mrf.mxu0
    %v652 = vadd.f32 0.0, %v651
    %653 = vdwg.mxu0
    %v654 = vadd.f32 %v570, %v592
    %v655 = vadd.f32 %v571, %v612
    %v656 = vadd.f32 %v572, %v632
    %v657 = vadd.f32 %v573, %v652
    %v658 = vmul.f32 %v654, 0.5
    %v659 = vtanh.pop %v658
    %v660 = vadd.f32 %v659, 1.0
    %v661 = vmul.f32 %v660, 0.5
    %v662 = vmul.f32 %v655, 0.5
    %v663 = vtanh.pop %v662
    %v664 = vadd.f32 %v663, 1.0
    %v665 = vmul.f32 %v664, 0.5
    %v666 = vtanh.pop %v656
    %v667 = vmul.f32 %v657, 0.5
    %v668 = vtanh.pop %v667
    %v669 = vadd.f32 %v668, 1.0
    %v670 = vmul.f32 %v669, 0.5
    %v671 = vmul.f32 %v665, %v565
    %v672 = vmul.f32 %v661, %v666
    %v673 = vadd.f32 %v671, %v672
    %v674 = vtanh.pop %v673
    %v675 = vmul.f32 %v670, %v674
    %s676 = scalar_lea.vmem [#allocation3], 8
    %677 = vst [vmem:[%s676] sm:$0xff] %v675
    %s678 = scalar_lea.vmem [#allocation2], 64
    %v679 = vld [vmem:[%s678] sm:$0xff]
    %v680 = vld [vmem:[%s678 + $0x8] sm:$0xff]
    %v681 = vld [vmem:[%s678 + $0x10] sm:$0xff]
    %v682 = vld [vmem:[%s678 + $0x18] sm:$0xff]
    %683 = vmatpush.msra.mxu0 %v456
    %684 = vmatpush.msra.mxu0 %v452
    %685 = vmatpush.msra.mxu0 %v448
    %686 = vmatpush.msra.mxu0 %v444
    %687 = vmatpush.msra.mxu0 %v440
    %688 = vmatpush.msra.mxu0 %v436
    %689 = vmatpush.msra.mxu0 %v432
    %690 = vmatpush.msra.mxu0 %v428
    %691 = vmatpush.msra.mxu0 %v424
    %692 = vmatpush.msra.mxu0 %v420
    %693 = vmatpush.msra.mxu0 %v416
    %694 = vmatpush.msra.mxu0 %v412
    %695 = vmatpush.msra.mxu0 %v408
    %696 = vmatpush.msra.mxu0 %v404
    %697 = vmatpush.msra.mxu0 %v400
    %698 = vmatpush.msra.mxu0 %v396
    %699 = vmatmul.f32.gmra.mxu0 %v675
    %v700 = vpop.f32.mrf.mxu0
    %v701 = vadd.f32 0.0, %v700
    %702 = vdwg.mxu0
    %703 = vmatpush.msra.mxu0 %v457
    %704 = vmatpush.msra.mxu0 %v453
    %705 = vmatpush.msra.mxu0 %v449
    %706 = vmatpush.msra.mxu0 %v445
    %707 = vmatpush.msra.mxu0 %v441
    %708 = vmatpush.msra.mxu0 %v437
    %709 = vmatpush.msra.mxu0 %v433
    %710 = vmatpush.msra.mxu0 %v429
    %711 = vmatpush.msra.mxu0 %v425
    %712 = vmatpush.msra.mxu0 %v421
    %713 = vmatpush.msra.mxu0 %v417
    %714 = vmatpush.msra.mxu0 %v413
    %715 = vmatpush.msra.mxu0 %v409
    %716 = vmatpush.msra.mxu0 %v405
    %717 = vmatpush.msra.mxu0 %v401
    %718 = vmatpush.msra.mxu0 %v397
    %719 = vmatmul.f32.gmra.mxu0 %v675
    %v720 = vpop.f32.mrf.mxu0
    %v721 = vadd.f32 0.0, %v720
    %722 = vdwg.mxu0
    %723 = vmatpush.msra.mxu0 %v458
    %724 = vmatpush.msra.mxu0 %v454
    %725 = vmatpush.msra.mxu0 %v450
    %726 = vmatpush.msra.mxu0 %v446
    %727 = vmatpush.msra.mxu0 %v442
    %728 = vmatpush.msra.mxu0 %v438
    %729 = vmatpush.msra.mxu0 %v434
    %730 = vmatpush.msra.mxu0 %v430
    %731 = vmatpush.msra.mxu0 %v426
    %732 = vmatpush.msra.mxu0 %v422
    %733 = vmatpush.msra.mxu0 %v418
    %734 = vmatpush.msra.mxu0 %v414
    %735 = vmatpush.msra.mxu0 %v410
    %736 = vmatpush.msra.mxu0 %v406
    %737 = vmatpush.msra.mxu0 %v402
    %738 = vmatpush.msra.mxu0 %v398
    %739 = vmatmul.f32.gmra.mxu0 %v675
    %v740 = vpop.f32.mrf.mxu0
    %v741 = vadd.f32 0.0, %v740
    %742 = vdwg.mxu0
    %743 = vmatpush.msra.mxu0 %v459
    %744 = vmatpush.msra.mxu0 %v455
    %745 = vmatpush.msra.mxu0 %v451
    %746 = vmatpush.msra.mxu0 %v447
    %747 = vmatpush.msra.mxu0 %v443
    %748 = vmatpush.msra.mxu0 %v439
    %749 = vmatpush.msra.mxu0 %v435
    %750 = vmatpush.msra.mxu0 %v431
    %751 = vmatpush.msra.mxu0 %v427
    %752 = vmatpush.msra.mxu0 %v423
    %753 = vmatpush.msra.mxu0 %v419
    %754 = vmatpush.msra.mxu0 %v415
    %755 = vmatpush.msra.mxu0 %v411
    %756 = vmatpush.msra.mxu0 %v407
    %757 = vmatpush.msra.mxu0 %v403
    %758 = vmatpush.msra.mxu0 %v399
    %759 = vmatmul.f32.gmra.mxu0 %v675
    %v760 = vpop.f32.mrf.mxu0
    %v761 = vadd.f32 0.0, %v760
    %762 = vdwg.mxu0
    %v763 = vadd.f32 %v679, %v701
    %v764 = vadd.f32 %v680, %v721
    %v765 = vadd.f32 %v681, %v741
    %v766 = vadd.f32 %v682, %v761
    %v767 = vmul.f32 %v763, 0.5
    %v768 = vtanh.pop %v767
    %v769 = vadd.f32 %v768, 1.0
    %v770 = vmul.f32 %v769, 0.5
    %v771 = vmul.f32 %v764, 0.5
    %v772 = vtanh.pop %v771
    %v773 = vadd.f32 %v772, 1.0
    %v774 = vmul.f32 %v773, 0.5
    %v775 = vtanh.pop %v765
    %v776 = vmul.f32 %v766, 0.5
    %v777 = vtanh.pop %v776
    %v778 = vadd.f32 %v777, 1.0
    %v779 = vmul.f32 %v778, 0.5
    %v780 = vmul.f32 %v774, %v673
    %v781 = vmul.f32 %v770, %v775
    %v782 = vadd.f32 %v780, %v781
    %v783 = vtanh.pop %v782
    %v784 = vmul.f32 %v779, %v783
    %s785 = scalar_lea.vmem [#allocation3], 16
    %786 = vst [vmem:[%s785] sm:$0xff] %v784
    %s787 = scalar_lea.vmem [#allocation2], 96
    %v788 = vld [vmem:[%s787] sm:$0xff]
    %v789 = vld [vmem:[%s787 + $0x8] sm:$0xff]
    %v790 = vld [vmem:[%s787 + $0x10] sm:$0xff]
    %v791 = vld [vmem:[%s787 + $0x18] sm:$0xff]
    %792 = vmatpush.msra.mxu0 %v456
    %793 = vmatpush.msra.mxu0 %v452
    %794 = vmatpush.msra.mxu0 %v448
    %795 = vmatpush.msra.mxu0 %v444
    %796 = vmatpush.msra.mxu0 %v440
    %797 = vmatpush.msra.mxu0 %v436
    %798 = vmatpush.msra.mxu0 %v432
    %799 = vmatpush.msra.mxu0 %v428
    %800 = vmatpush.msra.mxu0 %v424
    %801 = vmatpush.msra.mxu0 %v420
    %802 = vmatpush.msra.mxu0 %v416
    %803 = vmatpush.msra.mxu0 %v412
    %804 = vmatpush.msra.mxu0 %v408
    %805 = vmatpush.msra.mxu0 %v404
    %806 = vmatpush.msra.mxu0 %v400
    %807 = vmatpush.msra.mxu0 %v396
    %808 = vmatmul.f32.gmra.mxu0 %v784
    %v809 = vpop.f32.mrf.mxu0
    %v810 = vadd.f32 0.0, %v809
    %811 = vdwg.mxu0
    %812 = vmatpush.msra.mxu0 %v457
    %813 = vmatpush.msra.mxu0 %v453
    %814 = vmatpush.msra.mxu0 %v449
    %815 = vmatpush.msra.mxu0 %v445
    %816 = vmatpush.msra.mxu0 %v441
    %817 = vmatpush.msra.mxu0 %v437
    %818 = vmatpush.msra.mxu0 %v433
    %819 = vmatpush.msra.mxu0 %v429
    %820 = vmatpush.msra.mxu0 %v425
    %821 = vmatpush.msra.mxu0 %v421
    %822 = vmatpush.msra.mxu0 %v417
    %823 = vmatpush.msra.mxu0 %v413
    %824 = vmatpush.msra.mxu0 %v409
    %825 = vmatpush.msra.mxu0 %v405
    %826 = vmatpush.msra.mxu0 %v401
    %827 = vmatpush.msra.mxu0 %v397
    %828 = vmatmul.f32.gmra.mxu0 %v784
    %v829 = vpop.f32.mrf.mxu0
    %v830 = vadd.f32 0.0, %v829
    %831 = vdwg.mxu0
    %832 = vmatpush.msra.mxu0 %v458
    %833 = vmatpush.msra.mxu0 %v454
    %834 = vmatpush.msra.mxu0 %v450
    %835 = vmatpush.msra.mxu0 %v446
    %836 = vmatpush.msra.mxu0 %v442
    %837 = vmatpush.msra.mxu0 %v438
    %838 = vmatpush.msra.mxu0 %v434
    %839 = vmatpush.msra.mxu0 %v430
    %840 = vmatpush.msra.mxu0 %v426
    %841 = vmatpush.msra.mxu0 %v422
    %842 = vmatpush.msra.mxu0 %v418
    %843 = vmatpush.msra.mxu0 %v414
    %844 = vmatpush.msra.mxu0 %v410
    %845 = vmatpush.msra.mxu0 %v406
    %846 = vmatpush.msra.mxu0 %v402
    %847 = vmatpush.msra.mxu0 %v398
    %848 = vmatmul.f32.gmra.mxu0 %v784
    %v849 = vpop.f32.mrf.mxu0
    %v850 = vadd.f32 0.0, %v849
    %851 = vdwg.mxu0
    %852 = vmatpush.msra.mxu0 %v459
    %853 = vmatpush.msra.mxu0 %v455
    %854 = vmatpush.msra.mxu0 %v451
    %855 = vmatpush.msra.mxu0 %v447
    %856 = vmatpush.msra.mxu0 %v443
    %857 = vmatpush.msra.mxu0 %v439
    %858 = vmatpush.msra.mxu0 %v435
    %859 = vmatpush.msra.mxu0 %v431
    %860 = vmatpush.msra.mxu0 %v427
    %861 = vmatpush.msra.mxu0 %v423
    %862 = vmatpush.msra.mxu0 %v419
    %863 = vmatpush.msra.mxu0 %v415
    %864 = vmatpush.msra.mxu0 %v411
    %865 = vmatpush.msra.mxu0 %v407
    %866 = vmatpush.msra.mxu0 %v403
    %867 = vmatpush.msra.mxu0 %v399
    %868 = vmatmul.f32.gmra.mxu0 %v784
    %v869 = vpop.f32.mrf.mxu0
    %v870 = vadd.f32 0.0, %v869
    %871 = vdwg.mxu0
    %v872 = vadd.f32 %v788, %v810
    %v873 = vadd.f32 %v789, %v830
    %v874 = vadd.f32 %v790, %v850
    %v875 = vadd.f32 %v791, %v870
    %v876 = vmul.f32 %v872, 0.5
    %v877 = vtanh.pop %v876
    %v878 = vadd.f32 %v877, 1.0
    %v879 = vmul.f32 %v878, 0.5
    %v880 = vmul.f32 %v873, 0.5
    %v881 = vtanh.pop %v880
    %v882 = vadd.f32 %v881, 1.0
    %v883 = vmul.f32 %v882, 0.5
    %v884 = vtanh.pop %v874
    %v885 = vmul.f32 %v875, 0.5
    %v886 = vtanh.pop %v885
    %v887 = vadd.f32 %v886, 1.0
    %v888 = vmul.f32 %v887, 0.5
    %v889 = vmul.f32 %v883, %v782
    %v890 = vmul.f32 %v879, %v884
    %v891 = vadd.f32 %v889, %v890
    %v892 = vtanh.pop %v891
    %v893 = vmul.f32 %v888, %v892
    %s894 = scalar_lea.vmem [#allocation3], 24
    %895 = vst [vmem:[%s894] sm:$0xff] %v893
    %s896 = scalar_lea.vmem [#allocation2], 128
    %v897 = vld [vmem:[%s896] sm:$0xff]
    %v898 = vld [vmem:[%s896 + $0x8] sm:$0xff]
    %v899 = vld [vmem:[%s896 + $0x10] sm:$0xff]
    %v900 = vld [vmem:[%s896 + $0x18] sm:$0xff]
    %901 = vmatpush.msra.mxu0 %v456
    %902 = vmatpush.msra.mxu0 %v452
    %903 = vmatpush.msra.mxu0 %v448
    %904 = vmatpush.msra.mxu0 %v444
    %905 = vmatpush.msra.mxu0 %v440
    %906 = vmatpush.msra.mxu0 %v436
    %907 = vmatpush.msra.mxu0 %v432
    %908 = vmatpush.msra.mxu0 %v428
    %909 = vmatpush.msra.mxu0 %v424
    %910 = vmatpush.msra.mxu0 %v420
    %911 = vmatpush.msra.mxu0 %v416
    %912 = vmatpush.msra.mxu0 %v412
    %913 = vmatpush.msra.mxu0 %v408
    %914 = vmatpush.msra.mxu0 %v404
    %915 = vmatpush.msra.mxu0 %v400
    %916 = vmatpush.msra.mxu0 %v396
    %917 = vmatmul.f32.gmra.mxu0 %v893
    %v918 = vpop.f32.mrf.mxu0
    %v919 = vadd.f32 0.0, %v918
    %920 = vdwg.mxu0
    %921 = vmatpush.msra.mxu0 %v457
    %922 = vmatpush.msra.mxu0 %v453
    %923 = vmatpush.msra.mxu0 %v449
    %924 = vmatpush.msra.mxu0 %v445
    %925 = vmatpush.msra.mxu0 %v441
    %926 = vmatpush.msra.mxu0 %v437
    %927 = vmatpush.msra.mxu0 %v433
    %928 = vmatpush.msra.mxu0 %v429
    %929 = vmatpush.msra.mxu0 %v425
    %930 = vmatpush.msra.mxu0 %v421
    %931 = vmatpush.msra.mxu0 %v417
    %932 = vmatpush.msra.mxu0 %v413
    %933 = vmatpush.msra.mxu0 %v409
    %934 = vmatpush.msra.mxu0 %v405
    %935 = vmatpush.msra.mxu0 %v401
    %936 = vmatpush.msra.mxu0 %v397
    %937 = vmatmul.f32.gmra.mxu0 %v893
    %v938 = vpop.f32.mrf.mxu0
    %v939 = vadd.f32 0.0, %v938
    %940 = vdwg.mxu0
    %941 = vmatpush.msra.mxu0 %v458
    %942 = vmatpush.msra.mxu0 %v454
    %943 = vmatpush.msra.mxu0 %v450
    %944 = vmatpush.msra.mxu0 %v446
    %945 = vmatpush.msra.mxu0 %v442
    %946 = vmatpush.msra.mxu0 %v438
    %947 = vmatpush.msra.mxu0 %v434
    %948 = vmatpush.msra.mxu0 %v430
    %949 = vmatpush.msra.mxu0 %v426
    %950 = vmatpush.msra.mxu0 %v422
    %951 = vmatpush.msra.mxu0 %v418
    %952 = vmatpush.msra.mxu0 %v414
    %953 = vmatpush.msra.mxu0 %v410
    %954 = vmatpush.msra.mxu0 %v406
    %955 = vmatpush.msra.mxu0 %v402
    %956 = vmatpush.msra.mxu0 %v398
    %957 = vmatmul.f32.gmra.mxu0 %v893
    %v958 = vpop.f32.mrf.mxu0
    %v959 = vadd.f32 0.0, %v958
    %960 = vdwg.mxu0
    %961 = vmatpush.msra.mxu0 %v459
    %962 = vmatpush.msra.mxu0 %v455
    %963 = vmatpush.msra.mxu0 %v451
    %964 = vmatpush.msra.mxu0 %v447
    %965 = vmatpush.msra.mxu0 %v443
    %966 = vmatpush.msra.mxu0 %v439
    %967 = vmatpush.msra.mxu0 %v435
    %968 = vmatpush.msra.mxu0 %v431
    %969 = vmatpush.msra.mxu0 %v427
    %970 = vmatpush.msra.mxu0 %v423
    %971 = vmatpush.msra.mxu0 %v419
    %972 = vmatpush.msra.mxu0 %v415
    %973 = vmatpush.msra.mxu0 %v411
    %974 = vmatpush.msra.mxu0 %v407
    %975 = vmatpush.msra.mxu0 %v403
    %976 = vmatpush.msra.mxu0 %v399
    %977 = vmatmul.f32.gmra.mxu0 %v893
    %v978 = vpop.f32.mrf.mxu0
    %v979 = vadd.f32 0.0, %v978
    %980 = vdwg.mxu0
    %v981 = vadd.f32 %v897, %v919
    %v982 = vadd.f32 %v898, %v939
    %v983 = vadd.f32 %v899, %v959
    %v984 = vadd.f32 %v900, %v979
    %v985 = vmul.f32 %v981, 0.5
    %v986 = vtanh.pop %v985
    %v987 = vadd.f32 %v986, 1.0
    %v988 = vmul.f32 %v987, 0.5
    %v989 = vmul.f32 %v982, 0.5
    %v990 = vtanh.pop %v989
    %v991 = vadd.f32 %v990, 1.0
    %v992 = vmul.f32 %v991, 0.5
    %v993 = vtanh.pop %v983
    %v994 = vmul.f32 %v984, 0.5
    %v995 = vtanh.pop %v994
    %v996 = vadd.f32 %v995, 1.0
    %v997 = vmul.f32 %v996, 0.5
    %v998 = vmul.f32 %v992, %v891
    %v999 = vmul.f32 %v988, %v993
    %v1000 = vadd.f32 %v998, %v999
    %v1001 = vtanh.pop %v1000
    %v1002 = vmul.f32 %v997, %v1001
    %s1003 = scalar_lea.vmem [#allocation3], 32
    %1004 = vst [vmem:[%s1003] sm:$0xff] %v1002
    %s1005 = scalar_lea.vmem [#allocation2], 160
    %v1006 = vld [vmem:[%s1005] sm:$0xff]
    %v1007 = vld [vmem:[%s1005 + $0x8] sm:$0xff]
    %v1008 = vld [vmem:[%s1005 + $0x10] sm:$0xff]
    %v1009 = vld [vmem:[%s1005 + $0x18] sm:$0xff]
    %1010 = vmatpush.msra.mxu0 %v456
    %1011 = vmatpush.msra.mxu0 %v452
    %1012 = vmatpush.msra.mxu0 %v448
    %1013 = vmatpush.msra.mxu0 %v444
    %1014 = vmatpush.msra.mxu0 %v440
    %1015 = vmatpush.msra.mxu0 %v436
    %1016 = vmatpush.msra.mxu0 %v432
    %1017 = vmatpush.msra.mxu0 %v428
    %1018 = vmatpush.msra.mxu0 %v424
    %1019 = vmatpush.msra.mxu0 %v420
    %1020 = vmatpush.msra.mxu0 %v416
    %1021 = vmatpush.msra.mxu0 %v412
    %1022 = vmatpush.msra.mxu0 %v408
    %1023 = vmatpush.msra.mxu0 %v404
    %1024 = vmatpush.msra.mxu0 %v400
    %1025 = vmatpush.msra.mxu0 %v396
    %1026 = vmatmul.f32.gmra.mxu0 %v1002
    %v1027 = vpop.f32.mrf.mxu0
    %v1028 = vadd.f32 0.0, %v1027
    %1029 = vdwg.mxu0
    %1030 = vmatpush.msra.mxu0 %v457
    %1031 = vmatpush.msra.mxu0 %v453
    %1032 = vmatpush.msra.mxu0 %v449
    %1033 = vmatpush.msra.mxu0 %v445
    %1034 = vmatpush.msra.mxu0 %v441
    %1035 = vmatpush.msra.mxu0 %v437
    %1036 = vmatpush.msra.mxu0 %v433
    %1037 = vmatpush.msra.mxu0 %v429
    %1038 = vmatpush.msra.mxu0 %v425
    %1039 = vmatpush.msra.mxu0 %v421
    %1040 = vmatpush.msra.mxu0 %v417
    %1041 = vmatpush.msra.mxu0 %v413
    %1042 = vmatpush.msra.mxu0 %v409
    %1043 = vmatpush.msra.mxu0 %v405
    %1044 = vmatpush.msra.mxu0 %v401
    %1045 = vmatpush.msra.mxu0 %v397
    %1046 = vmatmul.f32.gmra.mxu0 %v1002
    %v1047 = vpop.f32.mrf.mxu0
    %v1048 = vadd.f32 0.0, %v1047
    %1049 = vdwg.mxu0
    %1050 = vmatpush.msra.mxu0 %v458
    %1051 = vmatpush.msra.mxu0 %v454
    %1052 = vmatpush.msra.mxu0 %v450
    %1053 = vmatpush.msra.mxu0 %v446
    %1054 = vmatpush.msra.mxu0 %v442
    %1055 = vmatpush.msra.mxu0 %v438
    %1056 = vmatpush.msra.mxu0 %v434
    %1057 = vmatpush.msra.mxu0 %v430
    %1058 = vmatpush.msra.mxu0 %v426
    %1059 = vmatpush.msra.mxu0 %v422
    %1060 = vmatpush.msra.mxu0 %v418
    %1061 = vmatpush.msra.mxu0 %v414
    %1062 = vmatpush.msra.mxu0 %v410
    %1063 = vmatpush.msra.mxu0 %v406
    %1064 = vmatpush.msra.mxu0 %v402
    %1065 = vmatpush.msra.mxu0 %v398
    %1066 = vmatmul.f32.gmra.mxu0 %v1002
    %v1067 = vpop.f32.mrf.mxu0
    %v1068 = vadd.f32 0.0, %v1067
    %1069 = vdwg.mxu0
    %1070 = vmatpush.msra.mxu0 %v459
    %1071 = vmatpush.msra.mxu0 %v455
    %1072 = vmatpush.msra.mxu0 %v451
    %1073 = vmatpush.msra.mxu0 %v447
    %1074 = vmatpush.msra.mxu0 %v443
    %1075 = vmatpush.msra.mxu0 %v439
    %1076 = vmatpush.msra.mxu0 %v435
    %1077 = vmatpush.msra.mxu0 %v431
    %1078 = vmatpush.msra.mxu0 %v427
    %1079 = vmatpush.msra.mxu0 %v423
    %1080 = vmatpush.msra.mxu0 %v419
    %1081 = vmatpush.msra.mxu0 %v415
    %1082 = vmatpush.msra.mxu0 %v411
    %1083 = vmatpush.msra.mxu0 %v407
    %1084 = vmatpush.msra.mxu0 %v403
    %1085 = vmatpush.msra.mxu0 %v399
    %1086 = vmatmul.f32.gmra.mxu0 %v1002
    %v1087 = vpop.f32.mrf.mxu0
    %v1088 = vadd.f32 0.0, %v1087
    %1089 = vdwg.mxu0
    %v1090 = vadd.f32 %v1006, %v1028
    %v1091 = vadd.f32 %v1007, %v1048
    %v1092 = vadd.f32 %v1008, %v1068
    %v1093 = vadd.f32 %v1009, %v1088
    %v1094 = vmul.f32 %v1090, 0.5
    %v1095 = vtanh.pop %v1094
    %v1096 = vadd.f32 %v1095, 1.0
    %v1097 = vmul.f32 %v1096, 0.5
    %v1098 = vmul.f32 %v1091, 0.5
    %v1099 = vtanh.pop %v1098
    %v1100 = vadd.f32 %v1099, 1.0
    %v1101 = vmul.f32 %v1100, 0.5
    %v1102 = vtanh.pop %v1092
    %v1103 = vmul.f32 %v1093, 0.5
    %v1104 = vtanh.pop %v1103
    %v1105 = vadd.f32 %v1104, 1.0
    %v1106 = vmul.f32 %v1105, 0.5
    %v1107 = vmul.f32 %v1101, %v1000
    %v1108 = vmul.f32 %v1097, %v1102
    %v1109 = vadd.f32 %v1107, %v1108
    %v1110 = vtanh.pop %v1109
    %v1111 = vmul.f32 %v1106, %v1110
    %s1112 = scalar_lea.vmem [#allocation3], 40
    %1113 = vst [vmem:[%s1112] sm:$0xff] %v1111
    %s1114 = scalar_lea.vmem [#allocation2], 192
    %v1115 = vld [vmem:[%s1114] sm:$0xff]
    %v1116 = vld [vmem:[%s1114 + $0x8] sm:$0xff]
    %v1117 = vld [vmem:[%s1114 + $0x10] sm:$0xff]
    %v1118 = vld [vmem:[%s1114 + $0x18] sm:$0xff]
    %1119 = vmatpush.msra.mxu0 %v456
    %1120 = vmatpush.msra.mxu0 %v452
    %1121 = vmatpush.msra.mxu0 %v448
    %1122 = vmatpush.msra.mxu0 %v444
    %1123 = vmatpush.msra.mxu0 %v440
    %1124 = vmatpush.msra.mxu0 %v436
    %1125 = vmatpush.msra.mxu0 %v432
    %1126 = vmatpush.msra.mxu0 %v428
    %1127 = vmatpush.msra.mxu0 %v424
    %1128 = vmatpush.msra.mxu0 %v420
    %1129 = vmatpush.msra.mxu0 %v416
    %1130 = vmatpush.msra.mxu0 %v412
    %1131 = vmatpush.msra.mxu0 %v408
    %1132 = vmatpush.msra.mxu0 %v404
    %1133 = vmatpush.msra.mxu0 %v400
    %1134 = vmatpush.msra.mxu0 %v396
    %1135 = vmatmul.f32.gmra.mxu0 %v1111
    %v1136 = vpop.f32.mrf.mxu0
    %v1137 = vadd.f32 0.0, %v1136
    %1138 = vdwg.mxu0
    %1139 = vmatpush.msra.mxu0 %v457
    %1140 = vmatpush.msra.mxu0 %v453
    %1141 = vmatpush.msra.mxu0 %v449
    %1142 = vmatpush.msra.mxu0 %v445
    %1143 = vmatpush.msra.mxu0 %v441
    %1144 = vmatpush.msra.mxu0 %v437
    %1145 = vmatpush.msra.mxu0 %v433
    %1146 = vmatpush.msra.mxu0 %v429
    %1147 = vmatpush.msra.mxu0 %v425
    %1148 = vmatpush.msra.mxu0 %v421
    %1149 = vmatpush.msra.mxu0 %v417
    %1150 = vmatpush.msra.mxu0 %v413
    %1151 = vmatpush.msra.mxu0 %v409
    %1152 = vmatpush.msra.mxu0 %v405
    %1153 = vmatpush.msra.mxu0 %v401
    %1154 = vmatpush.msra.mxu0 %v397
    %1155 = vmatmul.f32.gmra.mxu0 %v1111
    %v1156 = vpop.f32.mrf.mxu0
    %v1157 = vadd.f32 0.0, %v1156
    %1158 = vdwg.mxu0
    %1159 = vmatpush.msra.mxu0 %v458
    %1160 = vmatpush.msra.mxu0 %v454
    %1161 = vmatpush.msra.mxu0 %v450
    %1162 = vmatpush.msra.mxu0 %v446
    %1163 = vmatpush.msra.mxu0 %v442
    %1164 = vmatpush.msra.mxu0 %v438
    %1165 = vmatpush.msra.mxu0 %v434
    %1166 = vmatpush.msra.mxu0 %v430
    %1167 = vmatpush.msra.mxu0 %v426
    %1168 = vmatpush.msra.mxu0 %v422
    %1169 = vmatpush.msra.mxu0 %v418
    %1170 = vmatpush.msra.mxu0 %v414
    %1171 = vmatpush.msra.mxu0 %v410
    %1172 = vmatpush.msra.mxu0 %v406
    %1173 = vmatpush.msra.mxu0 %v402
    %1174 = vmatpush.msra.mxu0 %v398
    %1175 = vmatmul.f32.gmra.mxu0 %v1111
    %v1176 = vpop.f32.mrf.mxu0
    %v1177 = vadd.f32 0.0, %v1176
    %1178 = vdwg.mxu0
    %1179 = vmatpush.msra.mxu0 %v459
    %1180 = vmatpush.msra.mxu0 %v455
    %1181 = vmatpush.msra.mxu0 %v451
    %1182 = vmatpush.msra.mxu0 %v447
    %1183 = vmatpush.msra.mxu0 %v443
    %1184 = vmatpush.msra.mxu0 %v439
    %1185 = vmatpush.msra.mxu0 %v435
    %1186 = vmatpush.msra.mxu0 %v431
    %1187 = vmatpush.msra.mxu0 %v427
    %1188 = vmatpush.msra.mxu0 %v423
    %1189 = vmatpush.msra.mxu0 %v419
    %1190 = vmatpush.msra.mxu0 %v415
    %1191 = vmatpush.msra.mxu0 %v411
    %1192 = vmatpush.msra.mxu0 %v407
    %1193 = vmatpush.msra.mxu0 %v403
    %1194 = vmatpush.msra.mxu0 %v399
    %1195 = vmatmul.f32.gmra.mxu0 %v1111
    %v1196 = vpop.f32.mrf.mxu0
    %v1197 = vadd.f32 0.0, %v1196
    %1198 = vdwg.mxu0
    %v1199 = vadd.f32 %v1115, %v1137
    %v1200 = vadd.f32 %v1116, %v1157
    %v1201 = vadd.f32 %v1117, %v1177
    %v1202 = vadd.f32 %v1118, %v1197
    %v1203 = vmul.f32 %v1199, 0.5
    %v1204 = vtanh.pop %v1203
    %v1205 = vadd.f32 %v1204, 1.0
    %v1206 = vmul.f32 %v1205, 0.5
    %v1207 = vmul.f32 %v1200, 0.5
    %v1208 = vtanh.pop %v1207
    %v1209 = vadd.f32 %v1208, 1.0
    %v1210 = vmul.f32 %v1209, 0.5
    %v1211 = vtanh.pop %v1201
    %v1212 = vmul.f32 %v1202, 0.5
    %v1213 = vtanh.pop %v1212
    %v1214 = vadd.f32 %v1213, 1.0
    %v1215 = vmul.f32 %v1214, 0.5
    %v1216 = vmul.f32 %v1210, %v1109
    %v1217 = vmul.f32 %v1206, %v1211
    %v1218 = vadd.f32 %v1216, %v1217
    %v1219 = vtanh.pop %v1218
    %v1220 = vmul.f32 %v1215, %v1219
    %s1221 = scalar_lea.vmem [#allocation3], 48
    %1222 = vst [vmem:[%s1221] sm:$0xff] %v1220
    %s1223 = scalar_lea.vmem [#allocation2], 224
    %v1224 = vld [vmem:[%s1223] sm:$0xff]
    %v1225 = vld [vmem:[%s1223 + $0x8] sm:$0xff]
    %v1226 = vld [vmem:[%s1223 + $0x10] sm:$0xff]
    %v1227 = vld [vmem:[%s1223 + $0x18] sm:$0xff]
    %1228 = vmatpush.msra.mxu0 %v456
    %1229 = vmatpush.msra.mxu0 %v452
    %1230 = vmatpush.msra.mxu0 %v448
    %1231 = vmatpush.msra.mxu0 %v444
    %1232 = vmatpush.msra.mxu0 %v440
    %1233 = vmatpush.msra.mxu0 %v436
    %1234 = vmatpush.msra.mxu0 %v432
    %1235 = vmatpush.msra.mxu0 %v428
    %1236 = vmatpush.msra.mxu0 %v424
    %1237 = vmatpush.msra.mxu0 %v420
    %1238 = vmatpush.msra.mxu0 %v416
    %1239 = vmatpush.msra.mxu0 %v412
    %1240 = vmatpush.msra.mxu0 %v408
    %1241 = vmatpush.msra.mxu0 %v404
    %1242 = vmatpush.msra.mxu0 %v400
    %1243 = vmatpush.msra.mxu0 %v396
    %1244 = vmatmul.f32.gmra.mxu0 %v1220
    %v1245 = vpop.f32.mrf.mxu0
    %v1246 = vadd.f32 0.0, %v1245
    %1247 = vdwg.mxu0
    %1248 = vmatpush.msra.mxu0 %v457
    %1249 = vmatpush.msra.mxu0 %v453
    %1250 = vmatpush.msra.mxu0 %v449
    %1251 = vmatpush.msra.mxu0 %v445
    %1252 = vmatpush.msra.mxu0 %v441
    %1253 = vmatpush.msra.mxu0 %v437
    %1254 = vmatpush.msra.mxu0 %v433
    %1255 = vmatpush.msra.mxu0 %v429
    %1256 = vmatpush.msra.mxu0 %v425
    %1257 = vmatpush.msra.mxu0 %v421
    %1258 = vmatpush.msra.mxu0 %v417
    %1259 = vmatpush.msra.mxu0 %v413
    %1260 = vmatpush.msra.mxu0 %v409
    %1261 = vmatpush.msra.mxu0 %v405
    %1262 = vmatpush.msra.mxu0 %v401
    %1263 = vmatpush.msra.mxu0 %v397
    %1264 = vmatmul.f32.gmra.mxu0 %v1220
    %v1265 = vpop.f32.mrf.mxu0
    %v1266 = vadd.f32 0.0, %v1265
    %1267 = vdwg.mxu0
    %1268 = vmatpush.msra.mxu0 %v458
    %1269 = vmatpush.msra.mxu0 %v454
    %1270 = vmatpush.msra.mxu0 %v450
    %1271 = vmatpush.msra.mxu0 %v446
    %1272 = vmatpush.msra.mxu0 %v442
    %1273 = vmatpush.msra.mxu0 %v438
    %1274 = vmatpush.msra.mxu0 %v434
    %1275 = vmatpush.msra.mxu0 %v430
    %1276 = vmatpush.msra.mxu0 %v426
    %1277 = vmatpush.msra.mxu0 %v422
    %1278 = vmatpush.msra.mxu0 %v418
    %1279 = vmatpush.msra.mxu0 %v414
    %1280 = vmatpush.msra.mxu0 %v410
    %1281 = vmatpush.msra.mxu0 %v406
    %1282 = vmatpush.msra.mxu0 %v402
    %1283 = vmatpush.msra.mxu0 %v398
    %1284 = vmatmul.f32.gmra.mxu0 %v1220
    %v1285 = vpop.f32.mrf.mxu0
    %v1286 = vadd.f32 0.0, %v1285
    %1287 = vdwg.mxu0
    %1288 = vmatpush.msra.mxu0 %v459
    %1289 = vmatpush.msra.mxu0 %v455
    %1290 = vmatpush.msra.mxu0 %v451
    %1291 = vmatpush.msra.mxu0 %v447
    %1292 = vmatpush.msra.mxu0 %v443
    %1293 = vmatpush.msra.mxu0 %v439
    %1294 = vmatpush.msra.mxu0 %v435
    %1295 = vmatpush.msra.mxu0 %v431
    %1296 = vmatpush.msra.mxu0 %v427
    %1297 = vmatpush.msra.mxu0 %v423
    %1298 = vmatpush.msra.mxu0 %v419
    %1299 = vmatpush.msra.mxu0 %v415
    %1300 = vmatpush.msra.mxu0 %v411
    %1301 = vmatpush.msra.mxu0 %v407
    %1302 = vmatpush.msra.mxu0 %v403
    %1303 = vmatpush.msra.mxu0 %v399
    %1304 = vmatmul.f32.gmra.mxu0 %v1220
    %v1305 = vpop.f32.mrf.mxu0
    %v1306 = vadd.f32 0.0, %v1305
    %1307 = vdwg.mxu0
    %v1308 = vadd.f32 %v1224, %v1246
    %v1309 = vadd.f32 %v1225, %v1266
    %v1310 = vadd.f32 %v1226, %v1286
    %v1311 = vadd.f32 %v1227, %v1306
    %v1312 = vmul.f32 %v1308, 0.5
    %v1313 = vtanh.pop %v1312
    %v1314 = vadd.f32 %v1313, 1.0
    %v1315 = vmul.f32 %v1314, 0.5
    %v1316 = vmul.f32 %v1309, 0.5
    %v1317 = vtanh.pop %v1316
    %v1318 = vadd.f32 %v1317, 1.0
    %v1319 = vmul.f32 %v1318, 0.5
    %v1320 = vtanh.pop %v1310
    %v1321 = vmul.f32 %v1311, 0.5
    %v1322 = vtanh.pop %v1321
    %v1323 = vadd.f32 %v1322, 1.0
    %v1324 = vmul.f32 %v1323, 0.5
    %v1325 = vmul.f32 %v1319, %v1218
    %v1326 = vmul.f32 %v1315, %v1320
    %v1327 = vadd.f32 %v1325, %v1326
    %v1328 = vtanh.pop %v1327
    %v1329 = vmul.f32 %v1324, %v1328
    %s1330 = scalar_lea.vmem [#allocation3], 56
    %1331 = vst [vmem:[%s1330] sm:$0xff] %v1329
    %1332 = vst [vmem:[#allocation4] sm:$0xff] %v1329
    %1333 = vst [vmem:[#allocation5] sm:$0xff] %v1327
    %v1334 = vld [vmem:[#allocation3] sm:$0xff]
    %v1335 = vld [vmem:[#allocation3 + $0x8] sm:$0xff]
    %v1336 = vld [vmem:[#allocation3 + $0x10] sm:$0xff]
    %v1337 = vld [vmem:[#allocation3 + $0x18] sm:$0xff]
    %v1338 = vld [vmem:[#allocation3 + $0x20] sm:$0xff]
    %v1339 = vld [vmem:[#allocation3 + $0x28] sm:$0xff]
    %v1340 = vld [vmem:[#allocation3 + $0x30] sm:$0xff]
    %v1341 = vld [vmem:[#allocation3 + $0x38] sm:$0xff]
    %v1342 = vld [vmem:[#allocation10] sm:$0xff]
    %v1343 = vld [vmem:[#allocation10 + $0x8] sm:$0xff]
    %v1344 = vld [vmem:[#allocation10 + $0x10] sm:$0xff]
    %v1345 = vld [vmem:[#allocation10 + $0x18] sm:$0xff]
    %v1346 = vld [vmem:[#allocation10 + $0x20] sm:$0xff]
    %v1347 = vld [vmem:[#allocation10 + $0x28] sm:$0xff]
    %v1348 = vld [vmem:[#allocation10 + $0x30] sm:$0xff]
    %v1349 = vld [vmem:[#allocation10 + $0x38] sm:$0xff]
    %v1350 = vld [vmem:[#allocation10 + $0x40] sm:$0xff]
    %v1351 = vld [vmem:[#allocation10 + $0x48] sm:$0xff]
    %v1352 = vld [vmem:[#allocation10 + $0x50] sm:$0xff]
    %v1353 = vld [vmem:[#allocation10 + $0x58] sm:$0xff]
    %v1354 = vld [vmem:[#allocation10 + $0x60] sm:$0xff]
    %v1355 = vld [vmem:[#allocation10 + $0x68] sm:$0xff]
    %v1356 = vld [vmem:[#allocation10 + $0x70] sm:$0xff]
    %v1357 = vld [vmem:[#allocation10 + $0x78] sm:$0xff]
    %v1358 = vld [vmem:[#allocation10 + $0x80] sm:$0xff]
    %v1359 = vld [vmem:[#allocation10 + $0x88] sm:$0xff]
    %v1360 = vld [vmem:[#allocation10 + $0x90] sm:$0xff]
    %v1361 = vld [vmem:[#allocation10 + $0x98] sm:$0xff]
    %v1362 = vld [vmem:[#allocation10 + $0xa0] sm:$0xff]
    %v1363 = vld [vmem:[#allocation10 + $0xa8] sm:$0xff]
    %v1364 = vld [vmem:[#allocation10 + $0xb0] sm:$0xff]
    %v1365 = vld [vmem:[#allocation10 + $0xb8] sm:$0xff]
    %v1366 = vld [vmem:[#allocation10 + $0xc0] sm:$0xff]
    %v1367 = vld [vmem:[#allocation10 + $0xc8] sm:$0xff]
    %v1368 = vld [vmem:[#allocation10 + $0xd0] sm:$0xff]
    %v1369 = vld [vmem:[#allocation10 + $0xd8] sm:$0xff]
    %v1370 = vld [vmem:[#allocation10 + $0xe0] sm:$0xff]
    %v1371 = vld [vmem:[#allocation10 + $0xe8] sm:$0xff]
    %v1372 = vld [vmem:[#allocation10 + $0xf0] sm:$0xff]
    %v1373 = vld [vmem:[#allocation10 + $0xf8] sm:$0xff]
    %v1374 = vld [vmem:[#allocation10 + $0x100] sm:$0xff]
    %v1375 = vld [vmem:[#allocation10 + $0x108] sm:$0xff]
    %v1376 = vld [vmem:[#allocation10 + $0x110] sm:$0xff]
    %v1377 = vld [vmem:[#allocation10 + $0x118] sm:$0xff]
    %v1378 = vld [vmem:[#allocation10 + $0x120] sm:$0xff]
    %v1379 = vld [vmem:[#allocation10 + $0x128] sm:$0xff]
    %v1380 = vld [vmem:[#allocation10 + $0x130] sm:$0xff]
    %v1381 = vld [vmem:[#allocation10 + $0x138] sm:$0xff]
    %v1382 = vld [vmem:[#allocation10 + $0x140] sm:$0xff]
    %v1383 = vld [vmem:[#allocation10 + $0x148] sm:$0xff]
    %v1384 = vld [vmem:[#allocation10 + $0x150] sm:$0xff]
    %v1385 = vld [vmem:[#allocation10 + $0x158] sm:$0xff]
    %v1386 = vld [vmem:[#allocation10 + $0x160] sm:$0xff]
    %v1387 = vld [vmem:[#allocation10 + $0x168] sm:$0xff]
    %v1388 = vld [vmem:[#allocation10 + $0x170] sm:$0xff]
    %v1389 = vld [vmem:[#allocation10 + $0x178] sm:$0xff]
    %v1390 = vld [vmem:[#allocation10 + $0x180] sm:$0xff]
    %v1391 = vld [vmem:[#allocation10 + $0x188] sm:$0xff]
    %v1392 = vld [vmem:[#allocation10 + $0x190] sm:$0xff]
    %v1393 = vld [vmem:[#allocation10 + $0x198] sm:$0xff]
    %v1394 = vld [vmem:[#allocation10 + $0x1a0] sm:$0xff]
    %v1395 = vld [vmem:[#allocation10 + $0x1a8] sm:$0xff]
    %v1396 = vld [vmem:[#allocation10 + $0x1b0] sm:$0xff]
    %v1397 = vld [vmem:[#allocation10 + $0x1b8] sm:$0xff]
    %v1398 = vld [vmem:[#allocation10 + $0x1c0] sm:$0xff]
    %v1399 = vld [vmem:[#allocation10 + $0x1c8] sm:$0xff]
    %v1400 = vld [vmem:[#allocation10 + $0x1d0] sm:$0xff]
    %v1401 = vld [vmem:[#allocation10 + $0x1d8] sm:$0xff]
    %v1402 = vld [vmem:[#allocation10 + $0x1e0] sm:$0xff]
    %v1403 = vld [vmem:[#allocation10 + $0x1e8] sm:$0xff]
    %v1404 = vld [vmem:[#allocation10 + $0x1f0] sm:$0xff]
    %v1405 = vld [vmem:[#allocation10 + $0x1f8] sm:$0xff]
    %v1406 = vld [vmem:[%s6] sm:$0xf]
    %v1408 = vperm.slane %v1406, 0
    %v1409 = vperm.slane %v1406, 1
    %v1410 = vperm.slane %v1406, 2
    %v1411 = vperm.slane %v1406, 3
    %1416 = vmatpush.msra.mxu0 %v1402
    %1417 = vmatpush.msra.mxu0 %v1398
    %1418 = vmatpush.msra.mxu0 %v1394
    %1419 = vmatpush.msra.mxu0 %v1390
    %1420 = vmatpush.msra.mxu0 %v1386
    %1421 = vmatpush.msra.mxu0 %v1382
    %1422 = vmatpush.msra.mxu0 %v1378
    %1423 = vmatpush.msra.mxu0 %v1374
    %1424 = vmatpush.msra.mxu0 %v1370
    %1425 = vmatpush.msra.mxu0 %v1366
    %1426 = vmatpush.msra.mxu0 %v1362
    %1427 = vmatpush.msra.mxu0 %v1358
    %1428 = vmatpush.msra.mxu0 %v1354
    %1429 = vmatpush.msra.mxu0 %v1350
    %1430 = vmatpush.msra.mxu0 %v1346
    %1431 = vmatpush.msra.mxu0 %v1342
    %1432 = vmatmul.f32.gmra.mxu0 %v1334
    %v1433 = vpop.f32.mrf.mxu0
    %v1434 = vadd.f32 %v1408, %v1433
    %1435 = vmatmul.f32.gmra.mxu0 %v1335
    %v1436 = vpop.f32.mrf.mxu0
    %v1437 = vadd.f32 %v1408, %v1436
    %1438 = vmatmul.f32.gmra.mxu0 %v1336
    %v1439 = vpop.f32.mrf.mxu0
    %v1440 = vadd.f32 %v1408, %v1439
    %1441 = vmatmul.f32.gmra.mxu0 %v1337
    %v1442 = vpop.f32.mrf.mxu0
    %v1443 = vadd.f32 %v1408, %v1442
    %1444 = vmatmul.f32.gmra.mxu0 %v1338
    %v1445 = vpop.f32.mrf.mxu0
    %v1446 = vadd.f32 %v1408, %v1445
    %1447 = vmatmul.f32.gmra.mxu0 %v1339
    %v1448 = vpop.f32.mrf.mxu0
    %v1449 = vadd.f32 %v1408, %v1448
    %1450 = vmatmul.f32.gmra.mxu0 %v1340
    %v1451 = vpop.f32.mrf.mxu0
    %v1452 = vadd.f32 %v1408, %v1451
    %1453 = vmatmul.f32.gmra.mxu0 %v1341
    %v1454 = vpop.f32.mrf.mxu0
    %v1455 = vadd.f32 %v1408, %v1454
    %1456 = vdwg.mxu0
    %1457 = vmatpush.msra.mxu0 %v1403
    %1458 = vmatpush.msra.mxu0 %v1399
    %1459 = vmatpush.msra.mxu0 %v1395
    %1460 = vmatpush.msra.mxu0 %v1391
    %1461 = vmatpush.msra.mxu0 %v1387
    %1462 = vmatpush.msra.mxu0 %v1383
    %1463 = vmatpush.msra.mxu0 %v1379
    %1464 = vmatpush.msra.mxu0 %v1375
    %1465 = vmatpush.msra.mxu0 %v1371
    %1466 = vmatpush.msra.mxu0 %v1367
    %1467 = vmatpush.msra.mxu0 %v1363
    %1468 = vmatpush.msra.mxu0 %v1359
    %1469 = vmatpush.msra.mxu0 %v1355
    %1470 = vmatpush.msra.mxu0 %v1351
    %1471 = vmatpush.msra.mxu0 %v1347
    %1472 = vmatpush.msra.mxu0 %v1343
    %1473 = vmatmul.f32.gmra.mxu0 %v1334
    %v1474 = vpop.f32.mrf.mxu0
    %v1475 = vadd.f32 %v1409, %v1474
    %1476 = vmatmul.f32.gmra.mxu0 %v1335
    %v1477 = vpop.f32.mrf.mxu0
    %v1478 = vadd.f32 %v1409, %v1477
    %1479 = vmatmul.f32.gmra.mxu0 %v1336
    %v1480 = vpop.f32.mrf.mxu0
    %v1481 = vadd.f32 %v1409, %v1480
    %1482 = vmatmul.f32.gmra.mxu0 %v1337
    %v1483 = vpop.f32.mrf.mxu0
    %v1484 = vadd.f32 %v1409, %v1483
    %1485 = vmatmul.f32.gmra.mxu0 %v1338
    %v1486 = vpop.f32.mrf.mxu0
    %v1487 = vadd.f32 %v1409, %v1486
    %1488 = vmatmul.f32.gmra.mxu0 %v1339
    %v1489 = vpop.f32.mrf.mxu0
    %v1490 = vadd.f32 %v1409, %v1489
    %1491 = vmatmul.f32.gmra.mxu0 %v1340
    %v1492 = vpop.f32.mrf.mxu0
    %v1493 = vadd.f32 %v1409, %v1492
    %1494 = vmatmul.f32.gmra.mxu0 %v1341
    %v1495 = vpop.f32.mrf.mxu0
    %v1496 = vadd.f32 %v1409, %v1495
    %1497 = vdwg.mxu0
    %1498 = vmatpush.msra.mxu0 %v1404
    %1499 = vmatpush.msra.mxu0 %v1400
    %1500 = vmatpush.msra.mxu0 %v1396
    %1501 = vmatpush.msra.mxu0 %v1392
    %1502 = vmatpush.msra.mxu0 %v1388
    %1503 = vmatpush.msra.mxu0 %v1384
    %1504 = vmatpush.msra.mxu0 %v1380
    %1505 = vmatpush.msra.mxu0 %v1376
    %1506 = vmatpush.msra.mxu0 %v1372
    %1507 = vmatpush.msra.mxu0 %v1368
    %1508 = vmatpush.msra.mxu0 %v1364
    %1509 = vmatpush.msra.mxu0 %v1360
    %1510 = vmatpush.msra.mxu0 %v1356
    %1511 = vmatpush.msra.mxu0 %v1352
    %1512 = vmatpush.msra.mxu0 %v1348
    %1513 = vmatpush.msra.mxu0 %v1344
    %1514 = vmatmul.f32.gmra.mxu0 %v1334
    %v1515 = vpop.f32.mrf.mxu0
    %v1516 = vadd.f32 %v1410, %v1515
    %1517 = vmatmul.f32.gmra.mxu0 %v1335
    %v1518 = vpop.f32.mrf.mxu0
    %v1519 = vadd.f32 %v1410, %v1518
    %1520 = vmatmul.f32.gmra.mxu0 %v1336
    %v1521 = vpop.f32.mrf.mxu0
    %v1522 = vadd.f32 %v1410, %v1521
    %1523 = vmatmul.f32.gmra.mxu0 %v1337
    %v1524 = vpop.f32.mrf.mxu0
    %v1525 = vadd.f32 %v1410, %v1524
    %1526 = vmatmul.f32.gmra.mxu0 %v1338
    %v1527 = vpop.f32.mrf.mxu0
    %v1528 = vadd.f32 %v1410, %v1527
    %1529 = vmatmul.f32.gmra.mxu0 %v1339
    %v1530 = vpop.f32.mrf.mxu0
    %v1531 = vadd.f32 %v1410, %v1530
    %1532 = vmatmul.f32.gmra.mxu0 %v1340
    %v1533 = vpop.f32.mrf.mxu0
    %v1534 = vadd.f32 %v1410, %v1533
    %1535 = vmatmul.f32.gmra.mxu0 %v1341
    %v1536 = vpop.f32.mrf.mxu0
    %v1537 = vadd.f32 %v1410, %v1536
    %1538 = vdwg.mxu0
    %1539 = vmatpush.msra.mxu0 %v1405
    %1540 = vmatpush.msra.mxu0 %v1401
    %1541 = vmatpush.msra.mxu0 %v1397
    %1542 = vmatpush.msra.mxu0 %v1393
    %1543 = vmatpush.msra.mxu0 %v1389
    %1544 = vmatpush.msra.mxu0 %v1385
    %1545 = vmatpush.msra.mxu0 %v1381
    %1546 = vmatpush.msra.mxu0 %v1377
    %1547 = vmatpush.msra.mxu0 %v1373
    %1548 = vmatpush.msra.mxu0 %v1369
    %1549 = vmatpush.msra.mxu0 %v1365
    %1550 = vmatpush.msra.mxu0 %v1361
    %1551 = vmatpush.msra.mxu0 %v1357
    %1552 = vmatpush.msra.mxu0 %v1353
    %1553 = vmatpush.msra.mxu0 %v1349
    %1554 = vmatpush.msra.mxu0 %v1345
    %1555 = vmatmul.f32.gmra.mxu0 %v1334
    %v1556 = vpop.f32.mrf.mxu0
    %v1557 = vadd.f32 %v1411, %v1556
    %1558 = vmatmul.f32.gmra.mxu0 %v1335
    %v1559 = vpop.f32.mrf.mxu0
    %v1560 = vadd.f32 %v1411, %v1559
    %1561 = vmatmul.f32.gmra.mxu0 %v1336
    %v1562 = vpop.f32.mrf.mxu0
    %v1563 = vadd.f32 %v1411, %v1562
    %1564 = vmatmul.f32.gmra.mxu0 %v1337
    %v1565 = vpop.f32.mrf.mxu0
    %v1566 = vadd.f32 %v1411, %v1565
    %1567 = vmatmul.f32.gmra.mxu0 %v1338
    %v1568 = vpop.f32.mrf.mxu0
    %v1569 = vadd.f32 %v1411, %v1568
    %1570 = vmatmul.f32.gmra.mxu0 %v1339
    %v1571 = vpop.f32.mrf.mxu0
    %v1572 = vadd.f32 %v1411, %v1571
    %1573 = vmatmul.f32.gmra.mxu0 %v1340
    %v1574 = vpop.f32.mrf.mxu0
    %v1575 = vadd.f32 %v1411, %v1574
    %1576 = vmatmul.f32.gmra.mxu0 %v1341
    %v1577 = vpop.f32.mrf.mxu0
    %v1578 = vadd.f32 %v1411, %v1577
    %1579 = vdwg.mxu0
    %1580 = vst [vmem:[#allocation2] sm:$0xff] %v1434
    %1581 = vst [vmem:[#allocation2 + $0x8] sm:$0xff] %v1475
    %1582 = vst [vmem:[#allocation2 + $0x10] sm:$0xff] %v1516
    %1583 = vst [vmem:[#allocation2 + $0x18] sm:$0xff] %v1557
    %1584 = vst [vmem:[#allocation2 + $0x20] sm:$0xff] %v1437
    %1585 = vst [vmem:[#allocation2 + $0x28] sm:$0xff] %v1478
    %1586 = vst [vmem:[#allocation2 + $0x30] sm:$0xff] %v1519
    %1587 = vst [vmem:[#allocation2 + $0x38] sm:$0xff] %v1560
    %1588 = vst [vmem:[#allocation2 + $0x40] sm:$0xff] %v1440
    %1589 = vst [vmem:[#allocation2 + $0x48] sm:$0xff] %v1481
    %1590 = vst [vmem:[#allocation2 + $0x50] sm:$0xff] %v1522
    %1591 = vst [vmem:[#allocation2 + $0x58] sm:$0xff] %v1563
    %1592 = vst [vmem:[#allocation2 + $0x60] sm:$0xff] %v1443
    %1593 = vst [vmem:[#allocation2 + $0x68] sm:$0xff] %v1484
    %1594 = vst [vmem:[#allocation2 + $0x70] sm:$0xff] %v1525
    %1595 = vst [vmem:[#allocation2 + $0x78] sm:$0xff] %v1566
    %1596 = vst [vmem:[#allocation2 + $0x80] sm:$0xff] %v1446
    %1597 = vst [vmem:[#allocation2 + $0x88] sm:$0xff] %v1487
    %1598 = vst [vmem:[#allocation2 + $0x90] sm:$0xff] %v1528
    %1599 = vst [vmem:[#allocation2 + $0x98] sm:$0xff] %v1569
    %1600 = vst [vmem:[#allocation2 + $0xa0] sm:$0xff] %v1449
    %1601 = vst [vmem:[#allocation2 + $0xa8] sm:$0xff] %v1490
    %1602 = vst [vmem:[#allocation2 + $0xb0] sm:$0xff] %v1531
    %1603 = vst [vmem:[#allocation2 + $0xb8] sm:$0xff] %v1572
    %1604 = vst [vmem:[#allocation2 + $0xc0] sm:$0xff] %v1452
    %1605 = vst [vmem:[#allocation2 + $0xc8] sm:$0xff] %v1493
    %1606 = vst [vmem:[#allocation2 + $0xd0] sm:$0xff] %v1534
    %1607 = vst [vmem:[#allocation2 + $0xd8] sm:$0xff] %v1575
    %1608 = vst [vmem:[#allocation2 + $0xe0] sm:$0xff] %v1455
    %1609 = vst [vmem:[#allocation2 + $0xe8] sm:$0xff] %v1496
    %1610 = vst [vmem:[#allocation2 + $0xf0] sm:$0xff] %v1537
    %1611 = vst [vmem:[#allocation2 + $0xf8] sm:$0xff] %v1578
    %v1612 = vld [vmem:[#allocation11] sm:$0xff]
    %v1613 = vld [vmem:[#allocation11 + $0x8] sm:$0xff]
    %v1614 = vld [vmem:[#allocation11 + $0x10] sm:$0xff]
    %v1615 = vld [vmem:[#allocation11 + $0x18] sm:$0xff]
    %v1616 = vld [vmem:[#allocation11 + $0x20] sm:$0xff]
    %v1617 = vld [vmem:[#allocation11 + $0x28] sm:$0xff]
    %v1618 = vld [vmem:[#allocation11 + $0x30] sm:$0xff]
    %v1619 = vld [vmem:[#allocation11 + $0x38] sm:$0xff]
    %v1620 = vld [vmem:[#allocation11 + $0x40] sm:$0xff]
    %v1621 = vld [vmem:[#allocation11 + $0x48] sm:$0xff]
    %v1622 = vld [vmem:[#allocation11 + $0x50] sm:$0xff]
    %v1623 = vld [vmem:[#allocation11 + $0x58] sm:$0xff]
    %v1624 = vld [vmem:[#allocation11 + $0x60] sm:$0xff]
    %v1625 = vld [vmem:[#allocation11 + $0x68] sm:$0xff]
    %v1626 = vld [vmem:[#allocation11 + $0x70] sm:$0xff]
    %v1627 = vld [vmem:[#allocation11 + $0x78] sm:$0xff]
    %v1628 = vld [vmem:[#allocation11 + $0x80] sm:$0xff]
    %v1629 = vld [vmem:[#allocation11 + $0x88] sm:$0xff]
    %v1630 = vld [vmem:[#allocation11 + $0x90] sm:$0xff]
    %v1631 = vld [vmem:[#allocation11 + $0x98] sm:$0xff]
    %v1632 = vld [vmem:[#allocation11 + $0xa0] sm:$0xff]
    %v1633 = vld [vmem:[#allocation11 + $0xa8] sm:$0xff]
    %v1634 = vld [vmem:[#allocation11 + $0xb0] sm:$0xff]
    %v1635 = vld [vmem:[#allocation11 + $0xb8] sm:$0xff]
    %v1636 = vld [vmem:[#allocation11 + $0xc0] sm:$0xff]
    %v1637 = vld [vmem:[#allocation11 + $0xc8] sm:$0xff]
    %v1638 = vld [vmem:[#allocation11 + $0xd0] sm:$0xff]
    %v1639 = vld [vmem:[#allocation11 + $0xd8] sm:$0xff]
    %v1640 = vld [vmem:[#allocation11 + $0xe0] sm:$0xff]
    %v1641 = vld [vmem:[#allocation11 + $0xe8] sm:$0xff]
    %v1642 = vld [vmem:[#allocation11 + $0xf0] sm:$0xff]
    %v1643 = vld [vmem:[#allocation11 + $0xf8] sm:$0xff]
    %v1644 = vld [vmem:[#allocation11 + $0x100] sm:$0xff]
    %v1645 = vld [vmem:[#allocation11 + $0x108] sm:$0xff]
    %v1646 = vld [vmem:[#allocation11 + $0x110] sm:$0xff]
    %v1647 = vld [vmem:[#allocation11 + $0x118] sm:$0xff]
    %v1648 = vld [vmem:[#allocation11 + $0x120] sm:$0xff]
    %v1649 = vld [vmem:[#allocation11 + $0x128] sm:$0xff]
    %v1650 = vld [vmem:[#allocation11 + $0x130] sm:$0xff]
    %v1651 = vld [vmem:[#allocation11 + $0x138] sm:$0xff]
    %v1652 = vld [vmem:[#allocation11 + $0x140] sm:$0xff]
    %v1653 = vld [vmem:[#allocation11 + $0x148] sm:$0xff]
    %v1654 = vld [vmem:[#allocation11 + $0x150] sm:$0xff]
    %v1655 = vld [vmem:[#allocation11 + $0x158] sm:$0xff]
    %v1656 = vld [vmem:[#allocation11 + $0x160] sm:$0xff]
    %v1657 = vld [vmem:[#allocation11 + $0x168] sm:$0xff]
    %v1658 = vld [vmem:[#allocation11 + $0x170] sm:$0xff]
    %v1659 = vld [vmem:[#allocation11 + $0x178] sm:$0xff]
    %v1660 = vld [vmem:[#allocation11 + $0x180] sm:$0xff]
    %v1661 = vld [vmem:[#allocation11 + $0x188] sm:$0xff]
    %v1662 = vld [vmem:[#allocation11 + $0x190] sm:$0xff]
    %v1663 = vld [vmem:[#allocation11 + $0x198] sm:$0xff]
    %v1664 = vld [vmem:[#allocation11 + $0x1a0] sm:$0xff]
    %v1665 = vld [vmem:[#allocation11 + $0x1a8] sm:$0xff]
    %v1666 = vld [vmem:[#allocation11 + $0x1b0] sm:$0xff]
    %v1667 = vld [vmem:[#allocation11 + $0x1b8] sm:$0xff]
    %v1668 = vld [vmem:[#allocation11 + $0x1c0] sm:$0xff]
    %v1669 = vld [vmem:[#allocation11 + $0x1c8] sm:$0xff]
    %v1670 = vld [vmem:[#allocation11 + $0x1d0] sm:$0xff]
    %v1671 = vld [vmem:[#allocation11 + $0x1d8] sm:$0xff]
    %v1672 = vld [vmem:[#allocation11 + $0x1e0] sm:$0xff]
    %v1673 = vld [vmem:[#allocation11 + $0x1e8] sm:$0xff]
    %v1674 = vld [vmem:[#allocation11 + $0x1f0] sm:$0xff]
    %v1675 = vld [vmem:[#allocation11 + $0x1f8] sm:$0xff]
    %s1676 = scalar_lea.vmem [#allocation4], 8
    %v1677 = vld [vmem:[%s1676] sm:$0xff]
    %s1678 = scalar_lea.vmem [#allocation5], 8
    %v1679 = vld [vmem:[%s1678] sm:$0xff]
    %v1680 = vld [vmem:[#allocation2] sm:$0xff]
    %v1681 = vld [vmem:[#allocation2 + $0x8] sm:$0xff]
    %v1682 = vld [vmem:[#allocation2 + $0x10] sm:$0xff]
    %v1683 = vld [vmem:[#allocation2 + $0x18] sm:$0xff]
    %1684 = vmatpush.msra.mxu0 %v1672
    %1685 = vmatpush.msra.mxu0 %v1668
    %1686 = vmatpush.msra.mxu0 %v1664
    %1687 = vmatpush.msra.mxu0 %v1660
    %1688 = vmatpush.msra.mxu0 %v1656
    %1689 = vmatpush.msra.mxu0 %v1652
    %1690 = vmatpush.msra.mxu0 %v1648
    %1691 = vmatpush.msra.mxu0 %v1644
    %1692 = vmatpush.msra.mxu0 %v1640
    %1693 = vmatpush.msra.mxu0 %v1636
    %1694 = vmatpush.msra.mxu0 %v1632
    %1695 = vmatpush.msra.mxu0 %v1628
    %1696 = vmatpush.msra.mxu0 %v1624
    %1697 = vmatpush.msra.mxu0 %v1620
    %1698 = vmatpush.msra.mxu0 %v1616
    %1699 = vmatpush.msra.mxu0 %v1612
    %1700 = vmatmul.f32.gmra.mxu0 %v1677
    %v1701 = vpop.f32.mrf.mxu0
    %v1702 = vadd.f32 0.0, %v1701
    %1703 = vdwg.mxu0
    %1704 = vmatpush.msra.mxu0 %v1673
    %1705 = vmatpush.msra.mxu0 %v1669
    %1706 = vmatpush.msra.mxu0 %v1665
    %1707 = vmatpush.msra.mxu0 %v1661
    %1708 = vmatpush.msra.mxu0 %v1657
    %1709 = vmatpush.msra.mxu0 %v1653
    %1710 = vmatpush.msra.mxu0 %v1649
    %1711 = vmatpush.msra.mxu0 %v1645
    %1712 = vmatpush.msra.mxu0 %v1641
    %1713 = vmatpush.msra.mxu0 %v1637
    %1714 = vmatpush.msra.mxu0 %v1633
    %1715 = vmatpush.msra.mxu0 %v1629
    %1716 = vmatpush.msra.mxu0 %v1625
    %1717 = vmatpush.msra.mxu0 %v1621
    %1718 = vmatpush.msra.mxu0 %v1617
    %1719 = vmatpush.msra.mxu0 %v1613
    %1720 = vmatmul.f32.gmra.mxu0 %v1677
    %v1721 = vpop.f32.mrf.mxu0
    %v1722 = vadd.f32 0.0, %v1721
    %1723 = vdwg.mxu0
    %1724 = vmatpush.msra.mxu0 %v1674
    %1725 = vmatpush.msra.mxu0 %v1670
    %1726 = vmatpush.msra.mxu0 %v1666
    %1727 = vmatpush.msra.mxu0 %v1662
    %1728 = vmatpush.msra.mxu0 %v1658
    %1729 = vmatpush.msra.mxu0 %v1654
    %1730 = vmatpush.msra.mxu0 %v1650
    %1731 = vmatpush.msra.mxu0 %v1646
    %1732 = vmatpush.msra.mxu0 %v1642
    %1733 = vmatpush.msra.mxu0 %v1638
    %1734 = vmatpush.msra.mxu0 %v1634
    %1735 = vmatpush.msra.mxu0 %v1630
    %1736 = vmatpush.msra.mxu0 %v1626
    %1737 = vmatpush.msra.mxu0 %v1622
    %1738 = vmatpush.msra.mxu0 %v1618
    %1739 = vmatpush.msra.mxu0 %v1614
    %1740 = vmatmul.f32.gmra.mxu0 %v1677
    %v1741 = vpop.f32.mrf.mxu0
    %v1742 = vadd.f32 0.0, %v1741
    %1743 = vdwg.mxu0
    %1744 = vmatpush.msra.mxu0 %v1675
    %1745 = vmatpush.msra.mxu0 %v1671
    %1746 = vmatpush.msra.mxu0 %v1667
    %1747 = vmatpush.msra.mxu0 %v1663
    %1748 = vmatpush.msra.mxu0 %v1659
    %1749 = vmatpush.msra.mxu0 %v1655
    %1750 = vmatpush.msra.mxu0 %v1651
    %1751 = vmatpush.msra.mxu0 %v1647
    %1752 = vmatpush.msra.mxu0 %v1643
    %1753 = vmatpush.msra.mxu0 %v1639
    %1754 = vmatpush.msra.mxu0 %v1635
    %1755 = vmatpush.msra.mxu0 %v1631
    %1756 = vmatpush.msra.mxu0 %v1627
    %1757 = vmatpush.msra.mxu0 %v1623
    %1758 = vmatpush.msra.mxu0 %v1619
    %1759 = vmatpush.msra.mxu0 %v1615
    %1760 = vmatmul.f32.gmra.mxu0 %v1677
    %v1761 = vpop.f32.mrf.mxu0
    %v1762 = vadd.f32 0.0, %v1761
    %1763 = vdwg.mxu0
    %v1764 = vadd.f32 %v1680, %v1702
    %v1765 = vadd.f32 %v1681, %v1722
    %v1766 = vadd.f32 %v1682, %v1742
    %v1767 = vadd.f32 %v1683, %v1762
    %v1768 = vmul.f32 %v1764, 0.5
    %v1769 = vtanh.pop %v1768
    %v1770 = vadd.f32 %v1769, 1.0
    %v1771 = vmul.f32 %v1770, 0.5
    %v1772 = vmul.f32 %v1765, 0.5
    %v1773 = vtanh.pop %v1772
    %v1774 = vadd.f32 %v1773, 1.0
    %v1775 = vmul.f32 %v1774, 0.5
    %v1776 = vtanh.pop %v1766
    %v1777 = vmul.f32 %v1767, 0.5
    %v1778 = vtanh.pop %v1777
    %v1779 = vadd.f32 %v1778, 1.0
    %v1780 = vmul.f32 %v1779, 0.5
    %v1781 = vmul.f32 %v1775, %v1679
    %v1782 = vmul.f32 %v1771, %v1776
    %v1783 = vadd.f32 %v1781, %v1782
    %v1784 = vtanh.pop %v1783
    %v1785 = vmul.f32 %v1780, %v1784
    %1786 = vst [vmem:[#allocation3] sm:$0xff] %v1785
    %v1787 = vld [vmem:[%s569] sm:$0xff]
    %v1788 = vld [vmem:[%s569 + $0x8] sm:$0xff]
    %v1789 = vld [vmem:[%s569 + $0x10] sm:$0xff]
    %v1790 = vld [vmem:[%s569 + $0x18] sm:$0xff]
    %1791 = vmatpush.msra.mxu0 %v1672
    %1792 = vmatpush.msra.mxu0 %v1668
    %1793 = vmatpush.msra.mxu0 %v1664
    %1794 = vmatpush.msra.mxu0 %v1660
    %1795 = vmatpush.msra.mxu0 %v1656
    %1796 = vmatpush.msra.mxu0 %v1652
    %1797 = vmatpush.msra.mxu0 %v1648
    %1798 = vmatpush.msra.mxu0 %v1644
    %1799 = vmatpush.msra.mxu0 %v1640
    %1800 = vmatpush.msra.mxu0 %v1636
    %1801 = vmatpush.msra.mxu0 %v1632
    %1802 = vmatpush.msra.mxu0 %v1628
    %1803 = vmatpush.msra.mxu0 %v1624
    %1804 = vmatpush.msra.mxu0 %v1620
    %1805 = vmatpush.msra.mxu0 %v1616
    %1806 = vmatpush.msra.mxu0 %v1612
    %1807 = vmatmul.f32.gmra.mxu0 %v1785
    %v1808 = vpop.f32.mrf.mxu0
    %v1809 = vadd.f32 0.0, %v1808
    %1810 = vdwg.mxu0
    %1811 = vmatpush.msra.mxu0 %v1673
    %1812 = vmatpush.msra.mxu0 %v1669
    %1813 = vmatpush.msra.mxu0 %v1665
    %1814 = vmatpush.msra.mxu0 %v1661
    %1815 = vmatpush.msra.mxu0 %v1657
    %1816 = vmatpush.msra.mxu0 %v1653
    %1817 = vmatpush.msra.mxu0 %v1649
    %1818 = vmatpush.msra.mxu0 %v1645
    %1819 = vmatpush.msra.mxu0 %v1641
    %1820 = vmatpush.msra.mxu0 %v1637
    %1821 = vmatpush.msra.mxu0 %v1633
    %1822 = vmatpush.msra.mxu0 %v1629
    %1823 = vmatpush.msra.mxu0 %v1625
    %1824 = vmatpush.msra.mxu0 %v1621
    %1825 = vmatpush.msra.mxu0 %v1617
    %1826 = vmatpush.msra.mxu0 %v1613
    %1827 = vmatmul.f32.gmra.mxu0 %v1785
    %v1828 = vpop.f32.mrf.mxu0
    %v1829 = vadd.f32 0.0, %v1828
    %1830 = vdwg.mxu0
    %1831 = vmatpush.msra.mxu0 %v1674
    %1832 = vmatpush.msra.mxu0 %v1670
    %1833 = vmatpush.msra.mxu0 %v1666
    %1834 = vmatpush.msra.mxu0 %v1662
    %1835 = vmatpush.msra.mxu0 %v1658
    %1836 = vmatpush.msra.mxu0 %v1654
    %1837 = vmatpush.msra.mxu0 %v1650
    %1838 = vmatpush.msra.mxu0 %v1646
    %1839 = vmatpush.msra.mxu0 %v1642
    %1840 = vmatpush.msra.mxu0 %v1638
    %1841 = vmatpush.msra.mxu0 %v1634
    %1842 = vmatpush.msra.mxu0 %v1630
    %1843 = vmatpush.msra.mxu0 %v1626
    %1844 = vmatpush.msra.mxu0 %v1622
    %1845 = vmatpush.msra.mxu0 %v1618
    %1846 = vmatpush.msra.mxu0 %v1614
    %1847 = vmatmul.f32.gmra.mxu0 %v1785
    %v1848 = vpop.f32.mrf.mxu0
    %v1849 = vadd.f32 0.0, %v1848
    %1850 = vdwg.mxu0
    %1851 = vmatpush.msra.mxu0 %v1675
    %1852 = vmatpush.msra.mxu0 %v1671
    %1853 = vmatpush.msra.mxu0 %v1667
    %1854 = vmatpush.msra.mxu0 %v1663
    %1855 = vmatpush.msra.mxu0 %v1659
    %1856 = vmatpush.msra.mxu0 %v1655
    %1857 = vmatpush.msra.mxu0 %v1651
    %1858 = vmatpush.msra.mxu0 %v1647
    %1859 = vmatpush.msra.mxu0 %v1643
    %1860 = vmatpush.msra.mxu0 %v1639
    %1861 = vmatpush.msra.mxu0 %v1635
    %1862 = vmatpush.msra.mxu0 %v1631
    %1863 = vmatpush.msra.mxu0 %v1627
    %1864 = vmatpush.msra.mxu0 %v1623
    %1865 = vmatpush.msra.mxu0 %v1619
    %1866 = vmatpush.msra.mxu0 %v1615
    %1867 = vmatmul.f32.gmra.mxu0 %v1785
    %v1868 = vpop.f32.mrf.mxu0
    %v1869 = vadd.f32 0.0, %v1868
    %1870 = vdwg.mxu0
    %v1871 = vadd.f32 %v1787, %v1809
    %v1872 = vadd.f32 %v1788, %v1829
    %v1873 = vadd.f32 %v1789, %v1849
    %v1874 = vadd.f32 %v1790, %v1869
    %v1875 = vmul.f32 %v1871, 0.5
    %v1876 = vtanh.pop %v1875
    %v1877 = vadd.f32 %v1876, 1.0
    %v1878 = vmul.f32 %v1877, 0.5
    %v1879 = vmul.f32 %v1872, 0.5
    %v1880 = vtanh.pop %v1879
    %v1881 = vadd.f32 %v1880, 1.0
    %v1882 = vmul.f32 %v1881, 0.5
    %v1883 = vtanh.pop %v1873
    %v1884 = vmul.f32 %v1874, 0.5
    %v1885 = vtanh.pop %v1884
    %v1886 = vadd.f32 %v1885, 1.0
    %v1887 = vmul.f32 %v1886, 0.5
    %v1888 = vmul.f32 %v1882, %v1783
    %v1889 = vmul.f32 %v1878, %v1883
    %v1890 = vadd.f32 %v1888, %v1889
    %v1891 = vtanh.pop %v1890
    %v1892 = vmul.f32 %v1887, %v1891
    %1893 = vst [vmem:[%s676] sm:$0xff] %v1892
    %v1894 = vld [vmem:[%s678] sm:$0xff]
    %v1895 = vld [vmem:[%s678 + $0x8] sm:$0xff]
    %v1896 = vld [vmem:[%s678 + $0x10] sm:$0xff]
    %v1897 = vld [vmem:[%s678 + $0x18] sm:$0xff]
    %1898 = vmatpush.msra.mxu0 %v1672
    %1899 = vmatpush.msra.mxu0 %v1668
    %1900 = vmatpush.msra.mxu0 %v1664
    %1901 = vmatpush.msra.mxu0 %v1660
    %1902 = vmatpush.msra.mxu0 %v1656
    %1903 = vmatpush.msra.mxu0 %v1652
    %1904 = vmatpush.msra.mxu0 %v1648
    %1905 = vmatpush.msra.mxu0 %v1644
    %1906 = vmatpush.msra.mxu0 %v1640
    %1907 = vmatpush.msra.mxu0 %v1636
    %1908 = vmatpush.msra.mxu0 %v1632
    %1909 = vmatpush.msra.mxu0 %v1628
    %1910 = vmatpush.msra.mxu0 %v1624
    %1911 = vmatpush.msra.mxu0 %v1620
    %1912 = vmatpush.msra.mxu0 %v1616
    %1913 = vmatpush.msra.mxu0 %v1612
    %1914 = vmatmul.f32.gmra.mxu0 %v1892
    %v1915 = vpop.f32.mrf.mxu0
    %v1916 = vadd.f32 0.0, %v1915
    %1917 = vdwg.mxu0
    %1918 = vmatpush.msra.mxu0 %v1673
    %1919 = vmatpush.msra.mxu0 %v1669
    %1920 = vmatpush.msra.mxu0 %v1665
    %1921 = vmatpush.msra.mxu0 %v1661
    %1922 = vmatpush.msra.mxu0 %v1657
    %1923 = vmatpush.msra.mxu0 %v1653
    %1924 = vmatpush.msra.mxu0 %v1649
    %1925 = vmatpush.msra.mxu0 %v1645
    %1926 = vmatpush.msra.mxu0 %v1641
    %1927 = vmatpush.msra.mxu0 %v1637
    %1928 = vmatpush.msra.mxu0 %v1633
    %1929 = vmatpush.msra.mxu0 %v1629
    %1930 = vmatpush.msra.mxu0 %v1625
    %1931 = vmatpush.msra.mxu0 %v1621
    %1932 = vmatpush.msra.mxu0 %v1617
    %1933 = vmatpush.msra.mxu0 %v1613
    %1934 = vmatmul.f32.gmra.mxu0 %v1892
    %v1935 = vpop.f32.mrf.mxu0
    %v1936 = vadd.f32 0.0, %v1935
    %1937 = vdwg.mxu0
    %1938 = vmatpush.msra.mxu0 %v1674
    %1939 = vmatpush.msra.mxu0 %v1670
    %1940 = vmatpush.msra.mxu0 %v1666
    %1941 = vmatpush.msra.mxu0 %v1662
    %1942 = vmatpush.msra.mxu0 %v1658
    %1943 = vmatpush.msra.mxu0 %v1654
    %1944 = vmatpush.msra.mxu0 %v1650
    %1945 = vmatpush.msra.mxu0 %v1646
    %1946 = vmatpush.msra.mxu0 %v1642
    %1947 = vmatpush.msra.mxu0 %v1638
    %1948 = vmatpush.msra.mxu0 %v1634
    %1949 = vmatpush.msra.mxu0 %v1630
    %1950 = vmatpush.msra.mxu0 %v1626
    %1951 = vmatpush.msra.mxu0 %v1622
    %1952 = vmatpush.msra.mxu0 %v1618
    %1953 = vmatpush.msra.mxu0 %v1614
    %1954 = vmatmul.f32.gmra.mxu0 %v1892
    %v1955 = vpop.f32.mrf.mxu0
    %v1956 = vadd.f32 0.0, %v1955
    %1957 = vdwg.mxu0
    %1958 = vmatpush.msra.mxu0 %v1675
    %1959 = vmatpush.msra.mxu0 %v1671
    %1960 = vmatpush.msra.mxu0 %v1667
    %1961 = vmatpush.msra.mxu0 %v1663
    %1962 = vmatpush.msra.mxu0 %v1659
    %1963 = vmatpush.msra.mxu0 %v1655
    %1964 = vmatpush.msra.mxu0 %v1651
    %1965 = vmatpush.msra.mxu0 %v1647
    %1966 = vmatpush.msra.mxu0 %v1643
    %1967 = vmatpush.msra.mxu0 %v1639
    %1968 = vmatpush.msra.mxu0 %v1635
    %1969 = vmatpush.msra.mxu0 %v1631
    %1970 = vmatpush.msra.mxu0 %v1627
    %1971 = vmatpush.msra.mxu0 %v1623
    %1972 = vmatpush.msra.mxu0 %v1619
    %1973 = vmatpush.msra.mxu0 %v1615
    %1974 = vmatmul.f32.gmra.mxu0 %v1892
    %v1975 = vpop.f32.mrf.mxu0
    %v1976 = vadd.f32 0.0, %v1975
    %1977 = vdwg.mxu0
    %v1978 = vadd.f32 %v1894, %v1916
    %v1979 = vadd.f32 %v1895, %v1936
    %v1980 = vadd.f32 %v1896, %v1956
    %v1981 = vadd.f32 %v1897, %v1976
    %v1982 = vmul.f32 %v1978, 0.5
    %v1983 = vtanh.pop %v1982
    %v1984 = vadd.f32 %v1983, 1.0
    %v1985 = vmul.f32 %v1984, 0.5
    %v1986 = vmul.f32 %v1979, 0.5
    %v1987 = vtanh.pop %v1986
    %v1988 = vadd.f32 %v1987, 1.0
    %v1989 = vmul.f32 %v1988, 0.5
    %v1990 = vtanh.pop %v1980
    %v1991 = vmul.f32 %v1981, 0.5
    %v1992 = vtanh.pop %v1991
    %v1993 = vadd.f32 %v1992, 1.0
    %v1994 = vmul.f32 %v1993, 0.5
    %v1995 = vmul.f32 %v1989, %v1890
    %v1996 = vmul.f32 %v1985, %v1990
    %v1997 = vadd.f32 %v1995, %v1996
    %v1998 = vtanh.pop %v1997
    %v1999 = vmul.f32 %v1994, %v1998
    %2000 = vst [vmem:[%s785] sm:$0xff] %v1999
    %v2001 = vld [vmem:[%s787] sm:$0xff]
    %v2002 = vld [vmem:[%s787 + $0x8] sm:$0xff]
    %v2003 = vld [vmem:[%s787 + $0x10] sm:$0xff]
    %v2004 = vld [vmem:[%s787 + $0x18] sm:$0xff]
    %2005 = vmatpush.msra.mxu0 %v1672
    %2006 = vmatpush.msra.mxu0 %v1668
    %2007 = vmatpush.msra.mxu0 %v1664
    %2008 = vmatpush.msra.mxu0 %v1660
    %2009 = vmatpush.msra.mxu0 %v1656
    %2010 = vmatpush.msra.mxu0 %v1652
    %2011 = vmatpush.msra.mxu0 %v1648
    %2012 = vmatpush.msra.mxu0 %v1644
    %2013 = vmatpush.msra.mxu0 %v1640
    %2014 = vmatpush.msra.mxu0 %v1636
    %2015 = vmatpush.msra.mxu0 %v1632
    %2016 = vmatpush.msra.mxu0 %v1628
    %2017 = vmatpush.msra.mxu0 %v1624
    %2018 = vmatpush.msra.mxu0 %v1620
    %2019 = vmatpush.msra.mxu0 %v1616
    %2020 = vmatpush.msra.mxu0 %v1612
    %2021 = vmatmul.f32.gmra.mxu0 %v1999
    %v2022 = vpop.f32.mrf.mxu0
    %v2023 = vadd.f32 0.0, %v2022
    %2024 = vdwg.mxu0
    %2025 = vmatpush.msra.mxu0 %v1673
    %2026 = vmatpush.msra.mxu0 %v1669
    %2027 = vmatpush.msra.mxu0 %v1665
    %2028 = vmatpush.msra.mxu0 %v1661
    %2029 = vmatpush.msra.mxu0 %v1657
    %2030 = vmatpush.msra.mxu0 %v1653
    %2031 = vmatpush.msra.mxu0 %v1649
    %2032 = vmatpush.msra.mxu0 %v1645
    %2033 = vmatpush.msra.mxu0 %v1641
    %2034 = vmatpush.msra.mxu0 %v1637
    %2035 = vmatpush.msra.mxu0 %v1633
    %2036 = vmatpush.msra.mxu0 %v1629
    %2037 = vmatpush.msra.mxu0 %v1625
    %2038 = vmatpush.msra.mxu0 %v1621
    %2039 = vmatpush.msra.mxu0 %v1617
    %2040 = vmatpush.msra.mxu0 %v1613
    %2041 = vmatmul.f32.gmra.mxu0 %v1999
    %v2042 = vpop.f32.mrf.mxu0
    %v2043 = vadd.f32 0.0, %v2042
    %2044 = vdwg.mxu0
    %2045 = vmatpush.msra.mxu0 %v1674
    %2046 = vmatpush.msra.mxu0 %v1670
    %2047 = vmatpush.msra.mxu0 %v1666
    %2048 = vmatpush.msra.mxu0 %v1662
    %2049 = vmatpush.msra.mxu0 %v1658
    %2050 = vmatpush.msra.mxu0 %v1654
    %2051 = vmatpush.msra.mxu0 %v1650
    %2052 = vmatpush.msra.mxu0 %v1646
    %2053 = vmatpush.msra.mxu0 %v1642
    %2054 = vmatpush.msra.mxu0 %v1638
    %2055 = vmatpush.msra.mxu0 %v1634
    %2056 = vmatpush.msra.mxu0 %v1630
    %2057 = vmatpush.msra.mxu0 %v1626
    %2058 = vmatpush.msra.mxu0 %v1622
    %2059 = vmatpush.msra.mxu0 %v1618
    %2060 = vmatpush.msra.mxu0 %v1614
    %2061 = vmatmul.f32.gmra.mxu0 %v1999
    %v2062 = vpop.f32.mrf.mxu0
    %v2063 = vadd.f32 0.0, %v2062
    %2064 = vdwg.mxu0
    %2065 = vmatpush.msra.mxu0 %v1675
    %2066 = vmatpush.msra.mxu0 %v1671
    %2067 = vmatpush.msra.mxu0 %v1667
    %2068 = vmatpush.msra.mxu0 %v1663
    %2069 = vmatpush.msra.mxu0 %v1659
    %2070 = vmatpush.msra.mxu0 %v1655
    %2071 = vmatpush.msra.mxu0 %v1651
    %2072 = vmatpush.msra.mxu0 %v1647
    %2073 = vmatpush.msra.mxu0 %v1643
    %2074 = vmatpush.msra.mxu0 %v1639
    %2075 = vmatpush.msra.mxu0 %v1635
    %2076 = vmatpush.msra.mxu0 %v1631
    %2077 = vmatpush.msra.mxu0 %v1627
    %2078 = vmatpush.msra.mxu0 %v1623
    %2079 = vmatpush.msra.mxu0 %v1619
    %2080 = vmatpush.msra.mxu0 %v1615
    %2081 = vmatmul.f32.gmra.mxu0 %v1999
    %v2082 = vpop.f32.mrf.mxu0
    %v2083 = vadd.f32 0.0, %v2082
    %2084 = vdwg.mxu0
    %v2085 = vadd.f32 %v2001, %v2023
    %v2086 = vadd.f32 %v2002, %v2043
    %v2087 = vadd.f32 %v2003, %v2063
    %v2088 = vadd.f32 %v2004, %v2083
    %v2089 = vmul.f32 %v2085, 0.5
    %v2090 = vtanh.pop %v2089
    %v2091 = vadd.f32 %v2090, 1.0
    %v2092 = vmul.f32 %v2091, 0.5
    %v2093 = vmul.f32 %v2086, 0.5
    %v2094 = vtanh.pop %v2093
    %v2095 = vadd.f32 %v2094, 1.0
    %v2096 = vmul.f32 %v2095, 0.5
    %v2097 = vtanh.pop %v2087
    %v2098 = vmul.f32 %v2088, 0.5
    %v2099 = vtanh.pop %v2098
    %v2100 = vadd.f32 %v2099, 1.0
    %v2101 = vmul.f32 %v2100, 0.5
    %v2102 = vmul.f32 %v2096, %v1997
    %v2103 = vmul.f32 %v2092, %v2097
    %v2104 = vadd.f32 %v2102, %v2103
    %v2105 = vtanh.pop %v2104
    %v2106 = vmul.f32 %v2101, %v2105
    %2107 = vst [vmem:[%s894] sm:$0xff] %v2106
    %v2108 = vld [vmem:[%s896] sm:$0xff]
    %v2109 = vld [vmem:[%s896 + $0x8] sm:$0xff]
    %v2110 = vld [vmem:[%s896 + $0x10] sm:$0xff]
    %v2111 = vld [vmem:[%s896 + $0x18] sm:$0xff]
    %2112 = vmatpush.msra.mxu0 %v1672
    %2113 = vmatpush.msra.mxu0 %v1668
    %2114 = vmatpush.msra.mxu0 %v1664
    %2115 = vmatpush.msra.mxu0 %v1660
    %2116 = vmatpush.msra.mxu0 %v1656
    %2117 = vmatpush.msra.mxu0 %v1652
    %2118 = vmatpush.msra.mxu0 %v1648
    %2119 = vmatpush.msra.mxu0 %v1644
    %2120 = vmatpush.msra.mxu0 %v1640
    %2121 = vmatpush.msra.mxu0 %v1636
    %2122 = vmatpush.msra.mxu0 %v1632
    %2123 = vmatpush.msra.mxu0 %v1628
    %2124 = vmatpush.msra.mxu0 %v1624
    %2125 = vmatpush.msra.mxu0 %v1620
    %2126 = vmatpush.msra.mxu0 %v1616
    %2127 = vmatpush.msra.mxu0 %v1612
    %2128 = vmatmul.f32.gmra.mxu0 %v2106
    %v2129 = vpop.f32.mrf.mxu0
    %v2130 = vadd.f32 0.0, %v2129
    %2131 = vdwg.mxu0
    %2132 = vmatpush.msra.mxu0 %v1673
    %2133 = vmatpush.msra.mxu0 %v1669
    %2134 = vmatpush.msra.mxu0 %v1665
    %2135 = vmatpush.msra.mxu0 %v1661
    %2136 = vmatpush.msra.mxu0 %v1657
    %2137 = vmatpush.msra.mxu0 %v1653
    %2138 = vmatpush.msra.mxu0 %v1649
    %2139 = vmatpush.msra.mxu0 %v1645
    %2140 = vmatpush.msra.mxu0 %v1641
    %2141 = vmatpush.msra.mxu0 %v1637
    %2142 = vmatpush.msra.mxu0 %v1633
    %2143 = vmatpush.msra.mxu0 %v1629
    %2144 = vmatpush.msra.mxu0 %v1625
    %2145 = vmatpush.msra.mxu0 %v1621
    %2146 = vmatpush.msra.mxu0 %v1617
    %2147 = vmatpush.msra.mxu0 %v1613
    %2148 = vmatmul.f32.gmra.mxu0 %v2106
    %v2149 = vpop.f32.mrf.mxu0
    %v2150 = vadd.f32 0.0, %v2149
    %2151 = vdwg.mxu0
    %2152 = vmatpush.msra.mxu0 %v1674
    %2153 = vmatpush.msra.mxu0 %v1670
    %2154 = vmatpush.msra.mxu0 %v1666
    %2155 = vmatpush.msra.mxu0 %v1662
    %2156 = vmatpush.msra.mxu0 %v1658
    %2157 = vmatpush.msra.mxu0 %v1654
    %2158 = vmatpush.msra.mxu0 %v1650
    %2159 = vmatpush.msra.mxu0 %v1646
    %2160 = vmatpush.msra.mxu0 %v1642
    %2161 = vmatpush.msra.mxu0 %v1638
    %2162 = vmatpush.msra.mxu0 %v1634
    %2163 = vmatpush.msra.mxu0 %v1630
    %2164 = vmatpush.msra.mxu0 %v1626
    %2165 = vmatpush.msra.mxu0 %v1622
    %2166 = vmatpush.msra.mxu0 %v1618
    %2167 = vmatpush.msra.mxu0 %v1614
    %2168 = vmatmul.f32.gmra.mxu0 %v2106
    %v2169 = vpop.f32.mrf.mxu0
    %v2170 = vadd.f32 0.0, %v2169
    %2171 = vdwg.mxu0
    %2172 = vmatpush.msra.mxu0 %v1675
    %2173 = vmatpush.msra.mxu0 %v1671
    %2174 = vmatpush.msra.mxu0 %v1667
    %2175 = vmatpush.msra.mxu0 %v1663
    %2176 = vmatpush.msra.mxu0 %v1659
    %2177 = vmatpush.msra.mxu0 %v1655
    %2178 = vmatpush.msra.mxu0 %v1651
    %2179 = vmatpush.msra.mxu0 %v1647
    %2180 = vmatpush.msra.mxu0 %v1643
    %2181 = vmatpush.msra.mxu0 %v1639
    %2182 = vmatpush.msra.mxu0 %v1635
    %2183 = vmatpush.msra.mxu0 %v1631
    %2184 = vmatpush.msra.mxu0 %v1627
    %2185 = vmatpush.msra.mxu0 %v1623
    %2186 = vmatpush.msra.mxu0 %v1619
    %2187 = vmatpush.msra.mxu0 %v1615
    %2188 = vmatmul.f32.gmra.mxu0 %v2106
    %v2189 = vpop.f32.mrf.mxu0
    %v2190 = vadd.f32 0.0, %v2189
    %2191 = vdwg.mxu0
    %v2192 = vadd.f32 %v2108, %v2130
    %v2193 = vadd.f32 %v2109, %v2150
    %v2194 = vadd.f32 %v2110, %v2170
    %v2195 = vadd.f32 %v2111, %v2190
    %v2196 = vmul.f32 %v2192, 0.5
    %v2197 = vtanh.pop %v2196
    %v2198 = vadd.f32 %v2197, 1.0
    %v2199 = vmul.f32 %v2198, 0.5
    %v2200 = vmul.f32 %v2193, 0.5
    %v2201 = vtanh.pop %v2200
    %v2202 = vadd.f32 %v2201, 1.0
    %v2203 = vmul.f32 %v2202, 0.5
    %v2204 = vtanh.pop %v2194
    %v2205 = vmul.f32 %v2195, 0.5
    %v2206 = vtanh.pop %v2205
    %v2207 = vadd.f32 %v2206, 1.0
    %v2208 = vmul.f32 %v2207, 0.5
    %v2209 = vmul.f32 %v2203, %v2104
    %v2210 = vmul.f32 %v2199, %v2204
    %v2211 = vadd.f32 %v2209, %v2210
    %v2212 = vtanh.pop %v2211
    %v2213 = vmul.f32 %v2208, %v2212
    %2214 = vst [vmem:[%s1003] sm:$0xff] %v2213
    %v2215 = vld [vmem:[%s1005] sm:$0xff]
    %v2216 = vld [vmem:[%s1005 + $0x8] sm:$0xff]
    %v2217 = vld [vmem:[%s1005 + $0x10] sm:$0xff]
    %v2218 = vld [vmem:[%s1005 + $0x18] sm:$0xff]
    %2219 = vmatpush.msra.mxu0 %v1672
    %2220 = vmatpush.msra.mxu0 %v1668
    %2221 = vmatpush.msra.mxu0 %v1664
    %2222 = vmatpush.msra.mxu0 %v1660
    %2223 = vmatpush.msra.mxu0 %v1656
    %2224 = vmatpush.msra.mxu0 %v1652
    %2225 = vmatpush.msra.mxu0 %v1648
    %2226 = vmatpush.msra.mxu0 %v1644
    %2227 = vmatpush.msra.mxu0 %v1640
    %2228 = vmatpush.msra.mxu0 %v1636
    %2229 = vmatpush.msra.mxu0 %v1632
    %2230 = vmatpush.msra.mxu0 %v1628
    %2231 = vmatpush.msra.mxu0 %v1624
    %2232 = vmatpush.msra.mxu0 %v1620
    %2233 = vmatpush.msra.mxu0 %v1616
    %2234 = vmatpush.msra.mxu0 %v1612
    %2235 = vmatmul.f32.gmra.mxu0 %v2213
    %v2236 = vpop.f32.mrf.mxu0
    %v2237 = vadd.f32 0.0, %v2236
    %2238 = vdwg.mxu0
    %2239 = vmatpush.msra.mxu0 %v1673
    %2240 = vmatpush.msra.mxu0 %v1669
    %2241 = vmatpush.msra.mxu0 %v1665
    %2242 = vmatpush.msra.mxu0 %v1661
    %2243 = vmatpush.msra.mxu0 %v1657
    %2244 = vmatpush.msra.mxu0 %v1653
    %2245 = vmatpush.msra.mxu0 %v1649
    %2246 = vmatpush.msra.mxu0 %v1645
    %2247 = vmatpush.msra.mxu0 %v1641
    %2248 = vmatpush.msra.mxu0 %v1637
    %2249 = vmatpush.msra.mxu0 %v1633
    %2250 = vmatpush.msra.mxu0 %v1629
    %2251 = vmatpush.msra.mxu0 %v1625
    %2252 = vmatpush.msra.mxu0 %v1621
    %2253 = vmatpush.msra.mxu0 %v1617
    %2254 = vmatpush.msra.mxu0 %v1613
    %2255 = vmatmul.f32.gmra.mxu0 %v2213
    %v2256 = vpop.f32.mrf.mxu0
    %v2257 = vadd.f32 0.0, %v2256
    %2258 = vdwg.mxu0
    %2259 = vmatpush.msra.mxu0 %v1674
    %2260 = vmatpush.msra.mxu0 %v1670
    %2261 = vmatpush.msra.mxu0 %v1666
    %2262 = vmatpush.msra.mxu0 %v1662
    %2263 = vmatpush.msra.mxu0 %v1658
    %2264 = vmatpush.msra.mxu0 %v1654
    %2265 = vmatpush.msra.mxu0 %v1650
    %2266 = vmatpush.msra.mxu0 %v1646
    %2267 = vmatpush.msra.mxu0 %v1642
    %2268 = vmatpush.msra.mxu0 %v1638
    %2269 = vmatpush.msra.mxu0 %v1634
    %2270 = vmatpush.msra.mxu0 %v1630
    %2271 = vmatpush.msra.mxu0 %v1626
    %2272 = vmatpush.msra.mxu0 %v1622
    %2273 = vmatpush.msra.mxu0 %v1618
    %2274 = vmatpush.msra.mxu0 %v1614
    %2275 = vmatmul.f32.gmra.mxu0 %v2213
    %v2276 = vpop.f32.mrf.mxu0
    %v2277 = vadd.f32 0.0, %v2276
    %2278 = vdwg.mxu0
    %2279 = vmatpush.msra.mxu0 %v1675
    %2280 = vmatpush.msra.mxu0 %v1671
    %2281 = vmatpush.msra.mxu0 %v1667
    %2282 = vmatpush.msra.mxu0 %v1663
    %2283 = vmatpush.msra.mxu0 %v1659
    %2284 = vmatpush.msra.mxu0 %v1655
    %2285 = vmatpush.msra.mxu0 %v1651
    %2286 = vmatpush.msra.mxu0 %v1647
    %2287 = vmatpush.msra.mxu0 %v1643
    %2288 = vmatpush.msra.mxu0 %v1639
    %2289 = vmatpush.msra.mxu0 %v1635
    %2290 = vmatpush.msra.mxu0 %v1631
    %2291 = vmatpush.msra.mxu0 %v1627
    %2292 = vmatpush.msra.mxu0 %v1623
    %2293 = vmatpush.msra.mxu0 %v1619
    %2294 = vmatpush.msra.mxu0 %v1615
    %2295 = vmatmul.f32.gmra.mxu0 %v2213
    %v2296 = vpop.f32.mrf.mxu0
    %v2297 = vadd.f32 0.0, %v2296
    %2298 = vdwg.mxu0
    %v2299 = vadd.f32 %v2215, %v2237
    %v2300 = vadd.f32 %v2216, %v2257
    %v2301 = vadd.f32 %v2217, %v2277
    %v2302 = vadd.f32 %v2218, %v2297
    %v2303 = vmul.f32 %v2299, 0.5
    %v2304 = vtanh.pop %v2303
    %v2305 = vadd.f32 %v2304, 1.0
    %v2306 = vmul.f32 %v2305, 0.5
    %v2307 = vmul.f32 %v2300, 0.5
    %v2308 = vtanh.pop %v2307
    %v2309 = vadd.f32 %v2308, 1.0
    %v2310 = vmul.f32 %v2309, 0.5
    %v2311 = vtanh.pop %v2301
    %v2312 = vmul.f32 %v2302, 0.5
    %v2313 = vtanh.pop %v2312
    %v2314 = vadd.f32 %v2313, 1.0
    %v2315 = vmul.f32 %v2314, 0.5
    %v2316 = vmul.f32 %v2310, %v2211
    %v2317 = vmul.f32 %v2306, %v2311
    %v2318 = vadd.f32 %v2316, %v2317
    %v2319 = vtanh.pop %v2318
    %v2320 = vmul.f32 %v2315, %v2319
    %2321 = vst [vmem:[%s1112] sm:$0xff] %v2320
    %v2322 = vld [vmem:[%s1114] sm:$0xff]
    %v2323 = vld [vmem:[%s1114 + $0x8] sm:$0xff]
    %v2324 = vld [vmem:[%s1114 + $0x10] sm:$0xff]
    %v2325 = vld [vmem:[%s1114 + $0x18] sm:$0xff]
    %2326 = vmatpush.msra.mxu0 %v1672
    %2327 = vmatpush.msra.mxu0 %v1668
    %2328 = vmatpush.msra.mxu0 %v1664
    %2329 = vmatpush.msra.mxu0 %v1660
    %2330 = vmatpush.msra.mxu0 %v1656
    %2331 = vmatpush.msra.mxu0 %v1652
    %2332 = vmatpush.msra.mxu0 %v1648
    %2333 = vmatpush.msra.mxu0 %v1644
    %2334 = vmatpush.msra.mxu0 %v1640
    %2335 = vmatpush.msra.mxu0 %v1636
    %2336 = vmatpush.msra.mxu0 %v1632
    %2337 = vmatpush.msra.mxu0 %v1628
    %2338 = vmatpush.msra.mxu0 %v1624
    %2339 = vmatpush.msra.mxu0 %v1620
    %2340 = vmatpush.msra.mxu0 %v1616
    %2341 = vmatpush.msra.mxu0 %v1612
    %2342 = vmatmul.f32.gmra.mxu0 %v2320
    %v2343 = vpop.f32.mrf.mxu0
    %v2344 = vadd.f32 0.0, %v2343
    %2345 = vdwg.mxu0
    %2346 = vmatpush.msra.mxu0 %v1673
    %2347 = vmatpush.msra.mxu0 %v1669
    %2348 = vmatpush.msra.mxu0 %v1665
    %2349 = vmatpush.msra.mxu0 %v1661
    %2350 = vmatpush.msra.mxu0 %v1657
    %2351 = vmatpush.msra.mxu0 %v1653
    %2352 = vmatpush.msra.mxu0 %v1649
    %2353 = vmatpush.msra.mxu0 %v1645
    %2354 = vmatpush.msra.mxu0 %v1641
    %2355 = vmatpush.msra.mxu0 %v1637
    %2356 = vmatpush.msra.mxu0 %v1633
    %2357 = vmatpush.msra.mxu0 %v1629
    %2358 = vmatpush.msra.mxu0 %v1625
    %2359 = vmatpush.msra.mxu0 %v1621
    %2360 = vmatpush.msra.mxu0 %v1617
    %2361 = vmatpush.msra.mxu0 %v1613
    %2362 = vmatmul.f32.gmra.mxu0 %v2320
    %v2363 = vpop.f32.mrf.mxu0
    %v2364 = vadd.f32 0.0, %v2363
    %2365 = vdwg.mxu0
    %2366 = vmatpush.msra.mxu0 %v1674
    %2367 = vmatpush.msra.mxu0 %v1670
    %2368 = vmatpush.msra.mxu0 %v1666
    %2369 = vmatpush.msra.mxu0 %v1662
    %2370 = vmatpush.msra.mxu0 %v1658
    %2371 = vmatpush.msra.mxu0 %v1654
    %2372 = vmatpush.msra.mxu0 %v1650
    %2373 = vmatpush.msra.mxu0 %v1646
    %2374 = vmatpush.msra.mxu0 %v1642
    %2375 = vmatpush.msra.mxu0 %v1638
    %2376 = vmatpush.msra.mxu0 %v1634
    %2377 = vmatpush.msra.mxu0 %v1630
    %2378 = vmatpush.msra.mxu0 %v1626
    %2379 = vmatpush.msra.mxu0 %v1622
    %2380 = vmatpush.msra.mxu0 %v1618
    %2381 = vmatpush.msra.mxu0 %v1614
    %2382 = vmatmul.f32.gmra.mxu0 %v2320
    %v2383 = vpop.f32.mrf.mxu0
    %v2384 = vadd.f32 0.0, %v2383
    %2385 = vdwg.mxu0
    %2386 = vmatpush.msra.mxu0 %v1675
    %2387 = vmatpush.msra.mxu0 %v1671
    %2388 = vmatpush.msra.mxu0 %v1667
    %2389 = vmatpush.msra.mxu0 %v1663
    %2390 = vmatpush.msra.mxu0 %v1659
    %2391 = vmatpush.msra.mxu0 %v1655
    %2392 = vmatpush.msra.mxu0 %v1651
    %2393 = vmatpush.msra.mxu0 %v1647
    %2394 = vmatpush.msra.mxu0 %v1643
    %2395 = vmatpush.msra.mxu0 %v1639
    %2396 = vmatpush.msra.mxu0 %v1635
    %2397 = vmatpush.msra.mxu0 %v1631
    %2398 = vmatpush.msra.mxu0 %v1627
    %2399 = vmatpush.msra.mxu0 %v1623
    %2400 = vmatpush.msra.mxu0 %v1619
    %2401 = vmatpush.msra.mxu0 %v1615
    %2402 = vmatmul.f32.gmra.mxu0 %v2320
    %v2403 = vpop.f32.mrf.mxu0
    %v2404 = vadd.f32 0.0, %v2403
    %2405 = vdwg.mxu0
    %v2406 = vadd.f32 %v2322, %v2344
    %v2407 = vadd.f32 %v2323, %v2364
    %v2408 = vadd.f32 %v2324, %v2384
    %v2409 = vadd.f32 %v2325, %v2404
    %v2410 = vmul.f32 %v2406, 0.5
    %v2411 = vtanh.pop %v2410
    %v2412 = vadd.f32 %v2411, 1.0
    %v2413 = vmul.f32 %v2412, 0.5
    %v2414 = vmul.f32 %v2407, 0.5
    %v2415 = vtanh.pop %v2414
    %v2416 = vadd.f32 %v2415, 1.0
    %v2417 = vmul.f32 %v2416, 0.5
    %v2418 = vtanh.pop %v2408
    %v2419 = vmul.f32 %v2409, 0.5
    %v2420 = vtanh.pop %v2419
    %v2421 = vadd.f32 %v2420, 1.0
    %v2422 = vmul.f32 %v2421, 0.5
    %v2423 = vmul.f32 %v2417, %v2318
    %v2424 = vmul.f32 %v2413, %v2418
    %v2425 = vadd.f32 %v2423, %v2424
    %v2426 = vtanh.pop %v2425
    %v2427 = vmul.f32 %v2422, %v2426
    %2428 = vst [vmem:[%s1221] sm:$0xff] %v2427
    %v2429 = vld [vmem:[%s1223] sm:$0xff]
    %v2430 = vld [vmem:[%s1223 + $0x8] sm:$0xff]
    %v2431 = vld [vmem:[%s1223 + $0x10] sm:$0xff]
    %v2432 = vld [vmem:[%s1223 + $0x18] sm:$0xff]
    %2433 = vmatpush.msra.mxu0 %v1672
    %2434 = vmatpush.msra.mxu0 %v1668
    %2435 = vmatpush.msra.mxu0 %v1664
    %2436 = vmatpush.msra.mxu0 %v1660
    %2437 = vmatpush.msra.mxu0 %v1656
    %2438 = vmatpush.msra.mxu0 %v1652
    %2439 = vmatpush.msra.mxu0 %v1648
    %2440 = vmatpush.msra.mxu0 %v1644
    %2441 = vmatpush.msra.mxu0 %v1640
    %2442 = vmatpush.msra.mxu0 %v1636
    %2443 = vmatpush.msra.mxu0 %v1632
    %2444 = vmatpush.msra.mxu0 %v1628
    %2445 = vmatpush.msra.mxu0 %v1624
    %2446 = vmatpush.msra.mxu0 %v1620
    %2447 = vmatpush.msra.mxu0 %v1616
    %2448 = vmatpush.msra.mxu0 %v1612
    %2449 = vmatmul.f32.gmra.mxu0 %v2427
    %v2450 = vpop.f32.mrf.mxu0
    %v2451 = vadd.f32 0.0, %v2450
    %2452 = vdwg.mxu0
    %2453 = vmatpush.msra.mxu0 %v1673
    %2454 = vmatpush.msra.mxu0 %v1669
    %2455 = vmatpush.msra.mxu0 %v1665
    %2456 = vmatpush.msra.mxu0 %v1661
    %2457 = vmatpush.msra.mxu0 %v1657
    %2458 = vmatpush.msra.mxu0 %v1653
    %2459 = vmatpush.msra.mxu0 %v1649
    %2460 = vmatpush.msra.mxu0 %v1645
    %2461 = vmatpush.msra.mxu0 %v1641
    %2462 = vmatpush.msra.mxu0 %v1637
    %2463 = vmatpush.msra.mxu0 %v1633
    %2464 = vmatpush.msra.mxu0 %v1629
    %2465 = vmatpush.msra.mxu0 %v1625
    %2466 = vmatpush.msra.mxu0 %v1621
    %2467 = vmatpush.msra.mxu0 %v1617
    %2468 = vmatpush.msra.mxu0 %v1613
    %2469 = vmatmul.f32.gmra.mxu0 %v2427
    %v2470 = vpop.f32.mrf.mxu0
    %v2471 = vadd.f32 0.0, %v2470
    %2472 = vdwg.mxu0
    %2473 = vmatpush.msra.mxu0 %v1674
    %2474 = vmatpush.msra.mxu0 %v1670
    %2475 = vmatpush.msra.mxu0 %v1666
    %2476 = vmatpush.msra.mxu0 %v1662
    %2477 = vmatpush.msra.mxu0 %v1658
    %2478 = vmatpush.msra.mxu0 %v1654
    %2479 = vmatpush.msra.mxu0 %v1650
    %2480 = vmatpush.msra.mxu0 %v1646
    %2481 = vmatpush.msra.mxu0 %v1642
    %2482 = vmatpush.msra.mxu0 %v1638
    %2483 = vmatpush.msra.mxu0 %v1634
    %2484 = vmatpush.msra.mxu0 %v1630
    %2485 = vmatpush.msra.mxu0 %v1626
    %2486 = vmatpush.msra.mxu0 %v1622
    %2487 = vmatpush.msra.mxu0 %v1618
    %2488 = vmatpush.msra.mxu0 %v1614
    %2489 = vmatmul.f32.gmra.mxu0 %v2427
    %v2490 = vpop.f32.mrf.mxu0
    %v2491 = vadd.f32 0.0, %v2490
    %2492 = vdwg.mxu0
    %2493 = vmatpush.msra.mxu0 %v1675
    %2494 = vmatpush.msra.mxu0 %v1671
    %2495 = vmatpush.msra.mxu0 %v1667
    %2496 = vmatpush.msra.mxu0 %v1663
    %2497 = vmatpush.msra.mxu0 %v1659
    %2498 = vmatpush.msra.mxu0 %v1655
    %2499 = vmatpush.msra.mxu0 %v1651
    %2500 = vmatpush.msra.mxu0 %v1647
    %2501 = vmatpush.msra.mxu0 %v1643
    %2502 = vmatpush.msra.mxu0 %v1639
    %2503 = vmatpush.msra.mxu0 %v1635
    %2504 = vmatpush.msra.mxu0 %v1631
    %2505 = vmatpush.msra.mxu0 %v1627
    %2506 = vmatpush.msra.mxu0 %v1623
    %2507 = vmatpush.msra.mxu0 %v1619
    %2508 = vmatpush.msra.mxu0 %v1615
    %2509 = vmatmul.f32.gmra.mxu0 %v2427
    %v2510 = vpop.f32.mrf.mxu0
    %v2511 = vadd.f32 0.0, %v2510
    %2512 = vdwg.mxu0
    %v2513 = vadd.f32 %v2429, %v2451
    %v2514 = vadd.f32 %v2430, %v2471
    %v2515 = vadd.f32 %v2431, %v2491
    %v2516 = vadd.f32 %v2432, %v2511
    %v2517 = vmul.f32 %v2513, 0.5
    %v2518 = vtanh.pop %v2517
    %v2519 = vadd.f32 %v2518, 1.0
    %v2520 = vmul.f32 %v2519, 0.5
    %v2521 = vmul.f32 %v2514, 0.5
    %v2522 = vtanh.pop %v2521
    %v2523 = vadd.f32 %v2522, 1.0
    %v2524 = vmul.f32 %v2523, 0.5
    %v2525 = vtanh.pop %v2515
    %v2526 = vmul.f32 %v2516, 0.5
    %v2527 = vtanh.pop %v2526
    %v2528 = vadd.f32 %v2527, 1.0
    %v2529 = vmul.f32 %v2528, 0.5
    %v2530 = vmul.f32 %v2524, %v2425
    %v2531 = vmul.f32 %v2520, %v2525
    %v2532 = vadd.f32 %v2530, %v2531
    %v2533 = vtanh.pop %v2532
    %v2534 = vmul.f32 %v2529, %v2533
    %2535 = vst [vmem:[%s1330] sm:$0xff] %v2534
    %2536 = vst [vmem:[%s1676] sm:$0xff] %v2534
    %2537 = vst [vmem:[%s1678] sm:$0xff] %v2532
    %v2538 = vld [vmem:[#allocation3] sm:$0xff]
    %v2539 = vld [vmem:[#allocation3 + $0x8] sm:$0xff]
    %v2540 = vld [vmem:[#allocation3 + $0x10] sm:$0xff]
    %v2541 = vld [vmem:[#allocation3 + $0x18] sm:$0xff]
    %v2542 = vld [vmem:[#allocation3 + $0x20] sm:$0xff]
    %v2543 = vld [vmem:[#allocation3 + $0x28] sm:$0xff]
    %v2544 = vld [vmem:[#allocation3 + $0x30] sm:$0xff]
    %v2545 = vld [vmem:[#allocation3 + $0x38] sm:$0xff]
    %v2546 = vmax.f32 %v2538, 0.0
    %v2547 = vmax.f32 %v2539, 0.0
    %v2548 = vmax.f32 %v2540, 0.0
    %v2549 = vmax.f32 %v2541, 0.0
    %v2550 = vmax.f32 %v2542, 0.0
    %v2551 = vmax.f32 %v2543, 0.0
    %v2552 = vmax.f32 %v2544, 0.0
    %v2553 = vmax.f32 %v2545, 0.0
    %v2554 = vld [vmem:[#allocation13] sm:$0xff]
    %v2555 = vld [vmem:[#allocation13 + $0x8] sm:$0xff]
    %v2556 = vld [vmem:[#allocation13 + $0x10] sm:$0xff]
    %v2557 = vld [vmem:[#allocation13 + $0x18] sm:$0xff]
    %v2558 = vld [vmem:[#allocation13 + $0x20] sm:$0xff]
    %v2559 = vld [vmem:[#allocation13 + $0x28] sm:$0xff]
    %v2560 = vld [vmem:[#allocation13 + $0x30] sm:$0xff]
    %v2561 = vld [vmem:[#allocation13 + $0x38] sm:$0xff]
    %v2562 = vld [vmem:[#allocation13 + $0x40] sm:$0xff]
    %v2563 = vld [vmem:[#allocation13 + $0x48] sm:$0xff]
    %v2564 = vld [vmem:[#allocation13 + $0x50] sm:$0xff]
    %v2565 = vld [vmem:[#allocation13 + $0x58] sm:$0xff]
    %v2566 = vld [vmem:[#allocation13 + $0x60] sm:$0xff]
    %v2567 = vld [vmem:[#allocation13 + $0x68] sm:$0xff]
    %v2568 = vld [vmem:[#allocation13 + $0x70] sm:$0xff]
    %v2569 = vld [vmem:[#allocation13 + $0x78] sm:$0xff]
    %v2570 = vld [vmem:[%s8] sm:$0x1]
    %v2572 = vperm.slane %v2570, 0
    %2574 = vmatpush.msra.mxu0 %v2569
    %2575 = vmatpush.msra.mxu0 %v2568
    %2576 = vmatpush.msra.mxu0 %v2567
    %2577 = vmatpush.msra.mxu0 %v2566
    %2578 = vmatpush.msra.mxu0 %v2565
    %2579 = vmatpush.msra.mxu0 %v2564
    %2580 = vmatpush.msra.mxu0 %v2563
    %2581 = vmatpush.msra.mxu0 %v2562
    %2582 = vmatpush.msra.mxu0 %v2561
    %2583 = vmatpush.msra.mxu0 %v2560
    %2584 = vmatpush.msra.mxu0 %v2559
    %2585 = vmatpush.msra.mxu0 %v2558
    %2586 = vmatpush.msra.mxu0 %v2557
    %2587 = vmatpush.msra.mxu0 %v2556
    %2588 = vmatpush.msra.mxu0 %v2555
    %2589 = vmatpush.msra.mxu0 %v2554
    %2590 = vmatmul.f32.gmra.mxu0 %v2546
    %v2591 = vpop.f32.mrf.mxu0
    %v2592 = vadd.f32 %v2572, %v2591
    %2593 = vmatmul.f32.gmra.mxu0 %v2547
    %v2594 = vpop.f32.mrf.mxu0
    %v2595 = vadd.f32 %v2572, %v2594
    %2596 = vmatmul.f32.gmra.mxu0 %v2548
    %v2597 = vpop.f32.mrf.mxu0
    %v2598 = vadd.f32 %v2572, %v2597
    %2599 = vmatmul.f32.gmra.mxu0 %v2549
    %v2600 = vpop.f32.mrf.mxu0
    %v2601 = vadd.f32 %v2572, %v2600
    %2602 = vmatmul.f32.gmra.mxu0 %v2550
    %v2603 = vpop.f32.mrf.mxu0
    %v2604 = vadd.f32 %v2572, %v2603
    %2605 = vmatmul.f32.gmra.mxu0 %v2551
    %v2606 = vpop.f32.mrf.mxu0
    %v2607 = vadd.f32 %v2572, %v2606
    %2608 = vmatmul.f32.gmra.mxu0 %v2552
    %v2609 = vpop.f32.mrf.mxu0
    %v2610 = vadd.f32 %v2572, %v2609
    %2611 = vmatmul.f32.gmra.mxu0 %v2553
    %v2612 = vpop.f32.mrf.mxu0
    %v2613 = vadd.f32 %v2572, %v2612
    %2614 = vdwg.mxu0
    %2615 = vst [vmem:[%s9] sm:$0xff] %v2592
    %2616 = vst [vmem:[%s9 + $0x8] sm:$0xff] %v2595
    %2617 = vst [vmem:[%s9 + $0x10] sm:$0xff] %v2598
    %2618 = vst [vmem:[%s9 + $0x18] sm:$0xff] %v2601
    %2619 = vst [vmem:[%s9 + $0x20] sm:$0xff] %v2604
    %2620 = vst [vmem:[%s9 + $0x28] sm:$0xff] %v2607
    %2621 = vst [vmem:[%s9 + $0x30] sm:$0xff] %v2610
    %2622 = vst [vmem:[%s9 + $0x38] sm:$0xff] %v2613
    // Predicated region
    $region62: #{simple_lstm_forward.1} parent=1 // pred_check
      _
    $region63: #{simple_lstm_forward.1} parent=1 // pred_check_branch
      %2624 = sbr.rel (0) target = $region65
    $region64: #{simple_lstm_forward.1} parent=1 // pred_region
      _
    $region65: #{simple_lstm_forward.1} parent=1 // pred_fallthru
      _
    // Predicated region
    $region66: #{simple_lstm_forward.1} parent=1 // pred_check
      _
    $region67: #{simple_lstm_forward.1} parent=1 // pred_check_branch
      %2626 = sbr.rel (0) target = $region69
    $region68: #{simple_lstm_forward.1} parent=1 // pred_region
      _
    $region69: #{simple_lstm_forward.1} parent=1 // pred_fallthru
      _
    %2627 = vsyncpa [#allocation7], 1
    %2628 = vsyncpa [#allocation9], 1
    %2629 = vsyncpa [#allocation12], 1

// kernel: simple_lstm_forward.1
$region0: #{simple_lstm_forward.1}
  #allocation0 [shape = 'u32[]', space=smem, size = 0x4, offset = 0x4, fixed_abs, tag = 'smem constant byte address 0x4 - core index']
  #allocation1 [shape = 'u32[72,128]{1,0:T(1,128)}', space=vmem, size = 0x9000, scoped, tag = 'internal scratch']
  #allocation2 [shape = 'f32[8,8,512]{2,1,0:T(8,128)}', space=vmem, size = 0x20000, scoped, tag = 'scratch operand']
  #allocation3 [shape = 'f32[8,8,128]{2,1,0:T(8,128)}', space=vmem, size = 0x8000, scoped, tag = 'scratch operand']
  #allocation4 [shape = 'f32[2,8,128]{2,1,0:T(8,128)}', space=vmem, size = 0x2000, scoped, tag = 'scratch operand']
  #allocation5 [shape = 'f32[2,8,128]{2,1,0:T(8,128)}', space=vmem, size = 0x2000, scoped, tag = 'scratch operand']
  %s0 = inlined_call_operand.vmem [shape: f32[8,8,128], index: 0, kind: input, shape index: {}]
  %s1 = inlined_call_operand.hbm [shape: f32[128,512], index: 1, kind: input, shape index: {}]
  %s2 = inlined_call_operand.hbm [shape: f32[128,512], index: 2, kind: input, shape index: {}]
  %s3 = inlined_call_operand.vmem [shape: f32[1,512], index: 3, kind: input, shape index: {}]
  %s4 = inlined_call_operand.hbm [shape: f32[128,512], index: 4, kind: input, shape index: {}]
  %s5 = inlined_call_operand.hbm [shape: f32[128,512], index: 5, kind: input, shape index: {}]
  %s6 = inlined_call_operand.vmem [shape: f32[1,512], index: 6, kind: input, shape index: {}]
  %s7 = inlined_call_operand.hbm [shape: f32[128,128], index: 7, kind: input, shape index: {}]
  %s8 = inlined_call_operand.vmem [shape: f32[1,128], index: 8, kind: input, shape index: {}]
  %s9 = inlined_call_operand.vmem [shape: f32[8,8,128], index: 9, kind: output, shape index: {}]
  %s10 = sld [smem:[#allocation0]]
  $region70: #{simple_lstm_forward.1} parent=0
    _
  %s12 = ssub.s32 1, %s10
  %s13 = scalar_select 0, %s12, %s10
  $region1: #{simple_lstm_forward.1} parent=0
    #allocation6 [shape = 'u8[262144]{0}', space=vmem, size = 0x40000, scoped, tag = 'input window, operand 1, single buffered']
    #allocation7 [shape = 's32[1]{0}', space=sflag, size = 0x4, scoped, tag = 'scoped memory for simple_lstm_forward.1']
    #allocation8 [shape = 'u8[262144]{0}', space=vmem, size = 0x40000, scoped, tag = 'input window, operand 2, single buffered']
    #allocation9 [shape = 's32[1]{0}', space=sflag, size = 0x4, scoped, tag = 'scoped memory for simple_lstm_forward.1']
    #allocation10 [shape = 'u8[262144]{0}', space=vmem, size = 0x40000, scoped, tag = 'input window, operand 4, single buffered']
    #allocation11 [shape = 'u8[262144]{0}', space=vmem, size = 0x40000, scoped, tag = 'input window, operand 5, single buffered']
    #allocation12 [shape = 's32[1]{0}', space=sflag, size = 0x4, scoped, tag = 'scoped memory for simple_lstm_forward.1']
    #allocation13 [shape = 'u8[65536]{0}', space=vmem, size = 0x10000, scoped, tag = 'input window, operand 7, single buffered']
    %14 = vsyncpa [#allocation7], 0
    %15 = vsyncpa [#allocation9], 0
    %16 = vsyncpa [#allocation12], 0
    // Predicated region
    $region2: #{simple_lstm_forward.1} parent=1 // pred_check
      _
    $region3: #{simple_lstm_forward.1} parent=1 // pred_check_branch
      %18 = sbr.rel (0) target = $region5
    $region4: #{simple_lstm_forward.1} parent=1 // pred_region
      _
    $region5: #{simple_lstm_forward.1} parent=1 // pred_fallthru
      _
    // Predicated region
    $region6: #{simple_lstm_forward.1} parent=1 // pred_check
      _
    $region7: #{simple_lstm_forward.1} parent=1 // pred_check_branch
      %20 = sbr.rel (0) target = $region9
    $region8: #{simple_lstm_forward.1} parent=1 // pred_region
      %22 = vsyncadd [#allocation7], 0
      %s23 = sshll.u32 %s1, 4
      %s24 = int_to_ptr.hbm [resolvable:$true] %s23
      %s25 = sshll.u32 [#allocation6], 4
      %s26 = int_to_ptr.vmem [resolvable:$true] %s25
      %31 = dma.hbm_to_vmem [thread:$0]  %s24, 8192, %s26, [#allocation7], 512, 512, 32
    $region9: #{simple_lstm_forward.1} parent=1 // pred_fallthru
      _
    // Predicated region
    $region10: #{simple_lstm_forward.1} parent=1 // pred_check
      _
    $region11: #{simple_lstm_forward.1} parent=1 // pred_check_branch
      %33 = sbr.rel (0) target = $region13
    $region12: #{simple_lstm_forward.1} parent=1 // pred_region
      %35 = vsyncadd [#allocation9], 0
      %s36 = sshll.u32 %s2, 4
      %s37 = int_to_ptr.hbm [resolvable:$true] %s36
      %s38 = sshll.u32 [#allocation8], 4
      %s39 = int_to_ptr.vmem [resolvable:$true] %s38
      %44 = dma.hbm_to_vmem [thread:$0]  %s37, 8192, %s39, [#allocation9], 512, 512, 32
    $region13: #{simple_lstm_forward.1} parent=1 // pred_fallthru
      _
    // Predicated region
    $region14: #{simple_lstm_forward.1} parent=1 // pred_check
      _
    $region15: #{simple_lstm_forward.1} parent=1 // pred_check_branch
      %46 = sbr.rel (0) target = $region17
    $region16: #{simple_lstm_forward.1} parent=1 // pred_region
      _
    $region17: #{simple_lstm_forward.1} parent=1 // pred_fallthru
      _
    // Predicated region
    $region18: #{simple_lstm_forward.1} parent=1 // pred_check
      _
    $region19: #{simple_lstm_forward.1} parent=1 // pred_check_branch
      %48 = sbr.rel (0) target = $region21
    $region20: #{simple_lstm_forward.1} parent=1 // pred_region
      %50 = vsyncadd [#allocation9], 0
      %s51 = sshll.u32 %s4, 4
      %s52 = int_to_ptr.hbm [resolvable:$true] %s51
      %s53 = sshll.u32 [#allocation10], 4
      %s54 = int_to_ptr.vmem [resolvable:$true] %s53
      %59 = dma.hbm_to_vmem [thread:$0]  %s52, 8192, %s54, [#allocation9], 512, 512, 32
    $region21: #{simple_lstm_forward.1} parent=1 // pred_fallthru
      _
    // Predicated region
    $region22: #{simple_lstm_forward.1} parent=1 // pred_check
      _
    $region23: #{simple_lstm_forward.1} parent=1 // pred_check_branch
      %61 = sbr.rel (0) target = $region25
    $region24: #{simple_lstm_forward.1} parent=1 // pred_region
      %63 = vsyncadd [#allocation12], 0
      %s64 = sshll.u32 %s5, 4
      %s65 = int_to_ptr.hbm [resolvable:$true] %s64
      %s66 = sshll.u32 [#allocation11], 4
      %s67 = int_to_ptr.vmem [resolvable:$true] %s66
      %72 = dma.hbm_to_vmem [thread:$0]  %s65, 8192, %s67, [#allocation12], 512, 512, 32
    $region25: #{simple_lstm_forward.1} parent=1 // pred_fallthru
      _
    // Predicated region
    $region26: #{simple_lstm_forward.1} parent=1 // pred_check
      _
    $region27: #{simple_lstm_forward.1} parent=1 // pred_check_branch
      %74 = sbr.rel (0) target = $region29
    $region28: #{simple_lstm_forward.1} parent=1 // pred_region
      _
    $region29: #{simple_lstm_forward.1} parent=1 // pred_fallthru
      _
    // Predicated region
    $region30: #{simple_lstm_forward.1} parent=1 // pred_check
      _
    $region31: #{simple_lstm_forward.1} parent=1 // pred_check_branch
      %76 = sbr.rel (0) target = $region33
    $region32: #{simple_lstm_forward.1} parent=1 // pred_region
      %78 = vsyncadd [#allocation12], 0
      %s79 = sshll.u32 %s7, 4
      %s80 = int_to_ptr.hbm [resolvable:$true] %s79
      %s81 = sshll.u32 [#allocation13], 4
      %s82 = int_to_ptr.vmem [resolvable:$true] %s81
      %87 = dma.hbm_to_vmem [thread:$0]  %s80, 2048, %s82, [#allocation12], 128, 128, 8
    $region33: #{simple_lstm_forward.1} parent=1 // pred_fallthru
      _
    // Predicated region
    $region34: #{simple_lstm_forward.1} parent=1 // pred_check
      _
    $region35: #{simple_lstm_forward.1} parent=1 // pred_check_branch
      %89 = sbr.rel (0) target = $region37
    $region36: #{simple_lstm_forward.1} parent=1 // pred_region
      _
    $region37: #{simple_lstm_forward.1} parent=1 // pred_fallthru
      _
    // Predicated region
    $region38: #{simple_lstm_forward.1} parent=1 // pred_check
      _
    $region39: #{simple_lstm_forward.1} parent=1 // pred_check_branch
      %91 = sbr.rel (0) target = $region41
    $region40: #{simple_lstm_forward.1} parent=1 // pred_region
      %93 = dma.done [#allocation7], 8192
    $region41: #{simple_lstm_forward.1} parent=1 // pred_fallthru
      _
    // Predicated region
    $region42: #{simple_lstm_forward.1} parent=1 // pred_check
      _
    $region43: #{simple_lstm_forward.1} parent=1 // pred_check_branch
      %95 = sbr.rel (0) target = $region45
    $region44: #{simple_lstm_forward.1} parent=1 // pred_region
      %97 = dma.done [#allocation9], 8192
    $region45: #{simple_lstm_forward.1} parent=1 // pred_fallthru
      _
    // Predicated region
    $region46: #{simple_lstm_forward.1} parent=1 // pred_check
      _
    $region47: #{simple_lstm_forward.1} parent=1 // pred_check_branch
      %99 = sbr.rel (0) target = $region49
    $region48: #{simple_lstm_forward.1} parent=1 // pred_region
      %101 = dma.done [#allocation9], 8192
    $region49: #{simple_lstm_forward.1} parent=1 // pred_fallthru
      _
    // Predicated region
    $region50: #{simple_lstm_forward.1} parent=1 // pred_check
      _
    $region51: #{simple_lstm_forward.1} parent=1 // pred_check_branch
      %103 = sbr.rel (0) target = $region53
    $region52: #{simple_lstm_forward.1} parent=1 // pred_region
      %105 = dma.done [#allocation12], 8192
    $region53: #{simple_lstm_forward.1} parent=1 // pred_fallthru
      _
    // Predicated region
    $region54: #{simple_lstm_forward.1} parent=1 // pred_check
      _
    $region55: #{simple_lstm_forward.1} parent=1 // pred_check_branch
      %107 = sbr.rel (0) target = $region57
    $region56: #{simple_lstm_forward.1} parent=1 // pred_region
      %109 = dma.done [#allocation12], 2048
    $region57: #{simple_lstm_forward.1} parent=1 // pred_fallthru
      _
    %p110 = scmp.eq.s32.totalorder 0, 0
    // Predicated region
    $region58: #{simple_lstm_forward.1} parent=1 // pred_check
      %p111 = pneg %p110
    $region59: #{simple_lstm_forward.1} parent=1 // pred_check_branch
      %113 = sbr.rel (%p111) target = $region61
    $region60: #{simple_lstm_forward.1} parent=1 // pred_region
      %114 = vst [vmem:[#allocation4] sm:$0xff] 0.0
      %115 = vst [vmem:[#allocation4 + $0x8] sm:$0xff] 0.0
      %116 = vst [vmem:[#allocation5] sm:$0xff] 0.0
      %117 = vst [vmem:[#allocation5 + $0x8] sm:$0xff] 0.0
    $region61: #{simple_lstm_forward.1} parent=1 // pred_fallthru
      _
    %v118 = vld [vmem:[%s0] sm:$0xff]
    %v119 = vld [vmem:[%s0 + $0x8] sm:$0xff]
    %v120 = vld [vmem:[%s0 + $0x10] sm:$0xff]
    %v121 = vld [vmem:[%s0 + $0x18] sm:$0xff]
    %v122 = vld [vmem:[%s0 + $0x20] sm:$0xff]
    %v123 = vld [vmem:[%s0 + $0x28] sm:$0xff]
    %v124 = vld [vmem:[%s0 + $0x30] sm:$0xff]
    %v125 = vld [vmem:[%s0 + $0x38] sm:$0xff]
    %v126 = vld [vmem:[#allocation6] sm:$0xff]
    %v127 = vld [vmem:[#allocation6 + $0x8] sm:$0xff]
    %v128 = vld [vmem:[#allocation6 + $0x10] sm:$0xff]
    %v129 = vld [vmem:[#allocation6 + $0x18] sm:$0xff]
    %v130 = vld [vmem:[#allocation6 + $0x20] sm:$0xff]
    %v131 = vld [vmem:[#allocation6 + $0x28] sm:$0xff]
    %v132 = vld [vmem:[#allocation6 + $0x30] sm:$0xff]
    %v133 = vld [vmem:[#allocation6 + $0x38] sm:$0xff]
    %v134 = vld [vmem:[#allocation6 + $0x40] sm:$0xff]
    %v135 = vld [vmem:[#allocation6 + $0x48] sm:$0xff]
    %v136 = vld [vmem:[#allocation6 + $0x50] sm:$0xff]
    %v137 = vld [vmem:[#allocation6 + $0x58] sm:$0xff]
    %v138 = vld [vmem:[#allocation6 + $0x60] sm:$0xff]
    %v139 = vld [vmem:[#allocation6 + $0x68] sm:$0xff]
    %v140 = vld [vmem:[#allocation6 + $0x70] sm:$0xff]
    %v141 = vld [vmem:[#allocation6 + $0x78] sm:$0xff]
    %v142 = vld [vmem:[#allocation6 + $0x80] sm:$0xff]
    %v143 = vld [vmem:[#allocation6 + $0x88] sm:$0xff]
    %v144 = vld [vmem:[#allocation6 + $0x90] sm:$0xff]
    %v145 = vld [vmem:[#allocation6 + $0x98] sm:$0xff]
    %v146 = vld [vmem:[#allocation6 + $0xa0] sm:$0xff]
    %v147 = vld [vmem:[#allocation6 + $0xa8] sm:$0xff]
    %v148 = vld [vmem:[#allocation6 + $0xb0] sm:$0xff]
    %v149 = vld [vmem:[#allocation6 + $0xb8] sm:$0xff]
    %v150 = vld [vmem:[#allocation6 + $0xc0] sm:$0xff]
    %v151 = vld [vmem:[#allocation6 + $0xc8] sm:$0xff]
    %v152 = vld [vmem:[#allocation6 + $0xd0] sm:$0xff]
    %v153 = vld [vmem:[#allocation6 + $0xd8] sm:$0xff]
    %v154 = vld [vmem:[#allocation6 + $0xe0] sm:$0xff]
    %v155 = vld [vmem:[#allocation6 + $0xe8] sm:$0xff]
    %v156 = vld [vmem:[#allocation6 + $0xf0] sm:$0xff]
    %v157 = vld [vmem:[#allocation6 + $0xf8] sm:$0xff]
    %v158 = vld [vmem:[#allocation6 + $0x100] sm:$0xff]
    %v159 = vld [vmem:[#allocation6 + $0x108] sm:$0xff]
    %v160 = vld [vmem:[#allocation6 + $0x110] sm:$0xff]
    %v161 = vld [vmem:[#allocation6 + $0x118] sm:$0xff]
    %v162 = vld [vmem:[#allocation6 + $0x120] sm:$0xff]
    %v163 = vld [vmem:[#allocation6 + $0x128] sm:$0xff]
    %v164 = vld [vmem:[#allocation6 + $0x130] sm:$0xff]
    %v165 = vld [vmem:[#allocation6 + $0x138] sm:$0xff]
    %v166 = vld [vmem:[#allocation6 + $0x140] sm:$0xff]
    %v167 = vld [vmem:[#allocation6 + $0x148] sm:$0xff]
    %v168 = vld [vmem:[#allocation6 + $0x150] sm:$0xff]
    %v169 = vld [vmem:[#allocation6 + $0x158] sm:$0xff]
    %v170 = vld [vmem:[#allocation6 + $0x160] sm:$0xff]
    %v171 = vld [vmem:[#allocation6 + $0x168] sm:$0xff]
    %v172 = vld [vmem:[#allocation6 + $0x170] sm:$0xff]
    %v173 = vld [vmem:[#allocation6 + $0x178] sm:$0xff]
    %v174 = vld [vmem:[#allocation6 + $0x180] sm:$0xff]
    %v175 = vld [vmem:[#allocation6 + $0x188] sm:$0xff]
    %v176 = vld [vmem:[#allocation6 + $0x190] sm:$0xff]
    %v177 = vld [vmem:[#allocation6 + $0x198] sm:$0xff]
    %v178 = vld [vmem:[#allocation6 + $0x1a0] sm:$0xff]
    %v179 = vld [vmem:[#allocation6 + $0x1a8] sm:$0xff]
    %v180 = vld [vmem:[#allocation6 + $0x1b0] sm:$0xff]
    %v181 = vld [vmem:[#allocation6 + $0x1b8] sm:$0xff]
    %v182 = vld [vmem:[#allocation6 + $0x1c0] sm:$0xff]
    %v183 = vld [vmem:[#allocation6 + $0x1c8] sm:$0xff]
    %v184 = vld [vmem:[#allocation6 + $0x1d0] sm:$0xff]
    %v185 = vld [vmem:[#allocation6 + $0x1d8] sm:$0xff]
    %v186 = vld [vmem:[#allocation6 + $0x1e0] sm:$0xff]
    %v187 = vld [vmem:[#allocation6 + $0x1e8] sm:$0xff]
    %v188 = vld [vmem:[#allocation6 + $0x1f0] sm:$0xff]
    %v189 = vld [vmem:[#allocation6 + $0x1f8] sm:$0xff]
    %v190 = vld [vmem:[%s3] sm:$0xf]
    %v192 = vperm.slane %v190, 0
    %v193 = vperm.slane %v190, 1
    %v194 = vperm.slane %v190, 2
    %v195 = vperm.slane %v190, 3
    %200 = vmatpush.msra.mxu0 %v186
    %201 = vmatpush.msra.mxu0 %v182
    %202 = vmatpush.msra.mxu0 %v178
    %203 = vmatpush.msra.mxu0 %v174
    %204 = vmatpush.msra.mxu0 %v170
    %205 = vmatpush.msra.mxu0 %v166
    %206 = vmatpush.msra.mxu0 %v162
    %207 = vmatpush.msra.mxu0 %v158
    %208 = vmatpush.msra.mxu0 %v154
    %209 = vmatpush.msra.mxu0 %v150
    %210 = vmatpush.msra.mxu0 %v146
    %211 = vmatpush.msra.mxu0 %v142
    %212 = vmatpush.msra.mxu0 %v138
    %213 = vmatpush.msra.mxu0 %v134
    %214 = vmatpush.msra.mxu0 %v130
    %215 = vmatpush.msra.mxu0 %v126
    %216 = vmatmul.f32.gmra.mxu0 %v118
    %v217 = vpop.f32.mrf.mxu0
    %v218 = vadd.f32 %v192, %v217
    %219 = vmatmul.f32.gmra.mxu0 %v119
    %v220 = vpop.f32.mrf.mxu0
    %v221 = vadd.f32 %v192, %v220
    %222 = vmatmul.f32.gmra.mxu0 %v120
    %v223 = vpop.f32.mrf.mxu0
    %v224 = vadd.f32 %v192, %v223
    %225 = vmatmul.f32.gmra.mxu0 %v121
    %v226 = vpop.f32.mrf.mxu0
    %v227 = vadd.f32 %v192, %v226
    %228 = vmatmul.f32.gmra.mxu0 %v122
    %v229 = vpop.f32.mrf.mxu0
    %v230 = vadd.f32 %v192, %v229
    %231 = vmatmul.f32.gmra.mxu0 %v123
    %v232 = vpop.f32.mrf.mxu0
    %v233 = vadd.f32 %v192, %v232
    %234 = vmatmul.f32.gmra.mxu0 %v124
    %v235 = vpop.f32.mrf.mxu0
    %v236 = vadd.f32 %v192, %v235
    %237 = vmatmul.f32.gmra.mxu0 %v125
    %v238 = vpop.f32.mrf.mxu0
    %v239 = vadd.f32 %v192, %v238
    %240 = vdwg.mxu0
    %241 = vmatpush.msra.mxu0 %v187
    %242 = vmatpush.msra.mxu0 %v183
    %243 = vmatpush.msra.mxu0 %v179
    %244 = vmatpush.msra.mxu0 %v175
    %245 = vmatpush.msra.mxu0 %v171
    %246 = vmatpush.msra.mxu0 %v167
    %247 = vmatpush.msra.mxu0 %v163
    %248 = vmatpush.msra.mxu0 %v159
    %249 = vmatpush.msra.mxu0 %v155
    %250 = vmatpush.msra.mxu0 %v151
    %251 = vmatpush.msra.mxu0 %v147
    %252 = vmatpush.msra.mxu0 %v143
    %253 = vmatpush.msra.mxu0 %v139
    %254 = vmatpush.msra.mxu0 %v135
    %255 = vmatpush.msra.mxu0 %v131
    %256 = vmatpush.msra.mxu0 %v127
    %257 = vmatmul.f32.gmra.mxu0 %v118
    %v258 = vpop.f32.mrf.mxu0
    %v259 = vadd.f32 %v193, %v258
    %260 = vmatmul.f32.gmra.mxu0 %v119
    %v261 = vpop.f32.mrf.mxu0
    %v262 = vadd.f32 %v193, %v261
    %263 = vmatmul.f32.gmra.mxu0 %v120
    %v264 = vpop.f32.mrf.mxu0
    %v265 = vadd.f32 %v193, %v264
    %266 = vmatmul.f32.gmra.mxu0 %v121
    %v267 = vpop.f32.mrf.mxu0
    %v268 = vadd.f32 %v193, %v267
    %269 = vmatmul.f32.gmra.mxu0 %v122
    %v270 = vpop.f32.mrf.mxu0
    %v271 = vadd.f32 %v193, %v270
    %272 = vmatmul.f32.gmra.mxu0 %v123
    %v273 = vpop.f32.mrf.mxu0
    %v274 = vadd.f32 %v193, %v273
    %275 = vmatmul.f32.gmra.mxu0 %v124
    %v276 = vpop.f32.mrf.mxu0
    %v277 = vadd.f32 %v193, %v276
    %278 = vmatmul.f32.gmra.mxu0 %v125
    %v279 = vpop.f32.mrf.mxu0
    %v280 = vadd.f32 %v193, %v279
    %281 = vdwg.mxu0
    %282 = vmatpush.msra.mxu0 %v188
    %283 = vmatpush.msra.mxu0 %v184
    %284 = vmatpush.msra.mxu0 %v180
    %285 = vmatpush.msra.mxu0 %v176
    %286 = vmatpush.msra.mxu0 %v172
    %287 = vmatpush.msra.mxu0 %v168
    %288 = vmatpush.msra.mxu0 %v164
    %289 = vmatpush.msra.mxu0 %v160
    %290 = vmatpush.msra.mxu0 %v156
    %291 = vmatpush.msra.mxu0 %v152
    %292 = vmatpush.msra.mxu0 %v148
    %293 = vmatpush.msra.mxu0 %v144
    %294 = vmatpush.msra.mxu0 %v140
    %295 = vmatpush.msra.mxu0 %v136
    %296 = vmatpush.msra.mxu0 %v132
    %297 = vmatpush.msra.mxu0 %v128
    %298 = vmatmul.f32.gmra.mxu0 %v118
    %v299 = vpop.f32.mrf.mxu0
    %v300 = vadd.f32 %v194, %v299
    %301 = vmatmul.f32.gmra.mxu0 %v119
    %v302 = vpop.f32.mrf.mxu0
    %v303 = vadd.f32 %v194, %v302
    %304 = vmatmul.f32.gmra.mxu0 %v120
    %v305 = vpop.f32.mrf.mxu0
    %v306 = vadd.f32 %v194, %v305
    %307 = vmatmul.f32.gmra.mxu0 %v121
    %v308 = vpop.f32.mrf.mxu0
    %v309 = vadd.f32 %v194, %v308
    %310 = vmatmul.f32.gmra.mxu0 %v122
    %v311 = vpop.f32.mrf.mxu0
    %v312 = vadd.f32 %v194, %v311
    %313 = vmatmul.f32.gmra.mxu0 %v123
    %v314 = vpop.f32.mrf.mxu0
    %v315 = vadd.f32 %v194, %v314
    %316 = vmatmul.f32.gmra.mxu0 %v124
    %v317 = vpop.f32.mrf.mxu0
    %v318 = vadd.f32 %v194, %v317
    %319 = vmatmul.f32.gmra.mxu0 %v125
    %v320 = vpop.f32.mrf.mxu0
    %v321 = vadd.f32 %v194, %v320
    %322 = vdwg.mxu0
    %323 = vmatpush.msra.mxu0 %v189
    %324 = vmatpush.msra.mxu0 %v185
    %325 = vmatpush.msra.mxu0 %v181
    %326 = vmatpush.msra.mxu0 %v177
    %327 = vmatpush.msra.mxu0 %v173
    %328 = vmatpush.msra.mxu0 %v169
    %329 = vmatpush.msra.mxu0 %v165
    %330 = vmatpush.msra.mxu0 %v161
    %331 = vmatpush.msra.mxu0 %v157
    %332 = vmatpush.msra.mxu0 %v153
    %333 = vmatpush.msra.mxu0 %v149
    %334 = vmatpush.msra.mxu0 %v145
    %335 = vmatpush.msra.mxu0 %v141
    %336 = vmatpush.msra.mxu0 %v137
    %337 = vmatpush.msra.mxu0 %v133
    %338 = vmatpush.msra.mxu0 %v129
    %339 = vmatmul.f32.gmra.mxu0 %v118
    %v340 = vpop.f32.mrf.mxu0
    %v341 = vadd.f32 %v195, %v340
    %342 = vmatmul.f32.gmra.mxu0 %v119
    %v343 = vpop.f32.mrf.mxu0
    %v344 = vadd.f32 %v195, %v343
    %345 = vmatmul.f32.gmra.mxu0 %v120
    %v346 = vpop.f32.mrf.mxu0
    %v347 = vadd.f32 %v195, %v346
    %348 = vmatmul.f32.gmra.mxu0 %v121
    %v349 = vpop.f32.mrf.mxu0
    %v350 = vadd.f32 %v195, %v349
    %351 = vmatmul.f32.gmra.mxu0 %v122
    %v352 = vpop.f32.mrf.mxu0
    %v353 = vadd.f32 %v195, %v352
    %354 = vmatmul.f32.gmra.mxu0 %v123
    %v355 = vpop.f32.mrf.mxu0
    %v356 = vadd.f32 %v195, %v355
    %357 = vmatmul.f32.gmra.mxu0 %v124
    %v358 = vpop.f32.mrf.mxu0
    %v359 = vadd.f32 %v195, %v358
    %360 = vmatmul.f32.gmra.mxu0 %v125
    %v361 = vpop.f32.mrf.mxu0
    %v362 = vadd.f32 %v195, %v361
    %363 = vdwg.mxu0
    %364 = vst [vmem:[#allocation2] sm:$0xff] %v218
    %365 = vst [vmem:[#allocation2 + $0x8] sm:$0xff] %v259
    %366 = vst [vmem:[#allocation2 + $0x10] sm:$0xff] %v300
    %367 = vst [vmem:[#allocation2 + $0x18] sm:$0xff] %v341
    %368 = vst [vmem:[#allocation2 + $0x20] sm:$0xff] %v221
    %369 = vst [vmem:[#allocation2 + $0x28] sm:$0xff] %v262
    %370 = vst [vmem:[#allocation2 + $0x30] sm:$0xff] %v303
    %371 = vst [vmem:[#allocation2 + $0x38] sm:$0xff] %v344
    %372 = vst [vmem:[#allocation2 + $0x40] sm:$0xff] %v224
    %373 = vst [vmem:[#allocation2 + $0x48] sm:$0xff] %v265
    %374 = vst [vmem:[#allocation2 + $0x50] sm:$0xff] %v306
    %375 = vst [vmem:[#allocation2 + $0x58] sm:$0xff] %v347
    %376 = vst [vmem:[#allocation2 + $0x60] sm:$0xff] %v227
    %377 = vst [vmem:[#allocation2 + $0x68] sm:$0xff] %v268
    %378 = vst [vmem:[#allocation2 + $0x70] sm:$0xff] %v309
    %379 = vst [vmem:[#allocation2 + $0x78] sm:$0xff] %v350
    %380 = vst [vmem:[#allocation2 + $0x80] sm:$0xff] %v230
    %381 = vst [vmem:[#allocation2 + $0x88] sm:$0xff] %v271
    %382 = vst [vmem:[#allocation2 + $0x90] sm:$0xff] %v312
    %383 = vst [vmem:[#allocation2 + $0x98] sm:$0xff] %v353
    %384 = vst [vmem:[#allocation2 + $0xa0] sm:$0xff] %v233
    %385 = vst [vmem:[#allocation2 + $0xa8] sm:$0xff] %v274
    %386 = vst [vmem:[#allocation2 + $0xb0] sm:$0xff] %v315
    %387 = vst [vmem:[#allocation2 + $0xb8] sm:$0xff] %v356
    %388 = vst [vmem:[#allocation2 + $0xc0] sm:$0xff] %v236
    %389 = vst [vmem:[#allocation2 + $0xc8] sm:$0xff] %v277
    %390 = vst [vmem:[#allocation2 + $0xd0] sm:$0xff] %v318
    %391 = vst [vmem:[#allocation2 + $0xd8] sm:$0xff] %v359
    %392 = vst [vmem:[#allocation2 + $0xe0] sm:$0xff] %v239
    %393 = vst [vmem:[#allocation2 + $0xe8] sm:$0xff] %v280
    %394 = vst [vmem:[#allocation2 + $0xf0] sm:$0xff] %v321
    %395 = vst [vmem:[#allocation2 + $0xf8] sm:$0xff] %v362
    %v396 = vld [vmem:[#allocation8] sm:$0xff]
    %v397 = vld [vmem:[#allocation8 + $0x8] sm:$0xff]
    %v398 = vld [vmem:[#allocation8 + $0x10] sm:$0xff]
    %v399 = vld [vmem:[#allocation8 + $0x18] sm:$0xff]
    %v400 = vld [vmem:[#allocation8 + $0x20] sm:$0xff]
    %v401 = vld [vmem:[#allocation8 + $0x28] sm:$0xff]
    %v402 = vld [vmem:[#allocation8 + $0x30] sm:$0xff]
    %v403 = vld [vmem:[#allocation8 + $0x38] sm:$0xff]
    %v404 = vld [vmem:[#allocation8 + $0x40] sm:$0xff]
    %v405 = vld [vmem:[#allocation8 + $0x48] sm:$0xff]
    %v406 = vld [vmem:[#allocation8 + $0x50] sm:$0xff]
    %v407 = vld [vmem:[#allocation8 + $0x58] sm:$0xff]
    %v408 = vld [vmem:[#allocation8 + $0x60] sm:$0xff]
    %v409 = vld [vmem:[#allocation8 + $0x68] sm:$0xff]
    %v410 = vld [vmem:[#allocation8 + $0x70] sm:$0xff]
    %v411 = vld [vmem:[#allocation8 + $0x78] sm:$0xff]
    %v412 = vld [vmem:[#allocation8 + $0x80] sm:$0xff]
    %v413 = vld [vmem:[#allocation8 + $0x88] sm:$0xff]
    %v414 = vld [vmem:[#allocation8 + $0x90] sm:$0xff]
    %v415 = vld [vmem:[#allocation8 + $0x98] sm:$0xff]
    %v416 = vld [vmem:[#allocation8 + $0xa0] sm:$0xff]
    %v417 = vld [vmem:[#allocation8 + $0xa8] sm:$0xff]
    %v418 = vld [vmem:[#allocation8 + $0xb0] sm:$0xff]
    %v419 = vld [vmem:[#allocation8 + $0xb8] sm:$0xff]
    %v420 = vld [vmem:[#allocation8 + $0xc0] sm:$0xff]
    %v421 = vld [vmem:[#allocation8 + $0xc8] sm:$0xff]
    %v422 = vld [vmem:[#allocation8 + $0xd0] sm:$0xff]
    %v423 = vld [vmem:[#allocation8 + $0xd8] sm:$0xff]
    %v424 = vld [vmem:[#allocation8 + $0xe0] sm:$0xff]
    %v425 = vld [vmem:[#allocation8 + $0xe8] sm:$0xff]
    %v426 = vld [vmem:[#allocation8 + $0xf0] sm:$0xff]
    %v427 = vld [vmem:[#allocation8 + $0xf8] sm:$0xff]
    %v428 = vld [vmem:[#allocation8 + $0x100] sm:$0xff]
    %v429 = vld [vmem:[#allocation8 + $0x108] sm:$0xff]
    %v430 = vld [vmem:[#allocation8 + $0x110] sm:$0xff]
    %v431 = vld [vmem:[#allocation8 + $0x118] sm:$0xff]
    %v432 = vld [vmem:[#allocation8 + $0x120] sm:$0xff]
    %v433 = vld [vmem:[#allocation8 + $0x128] sm:$0xff]
    %v434 = vld [vmem:[#allocation8 + $0x130] sm:$0xff]
    %v435 = vld [vmem:[#allocation8 + $0x138] sm:$0xff]
    %v436 = vld [vmem:[#allocation8 + $0x140] sm:$0xff]
    %v437 = vld [vmem:[#allocation8 + $0x148] sm:$0xff]
    %v438 = vld [vmem:[#allocation8 + $0x150] sm:$0xff]
    %v439 = vld [vmem:[#allocation8 + $0x158] sm:$0xff]
    %v440 = vld [vmem:[#allocation8 + $0x160] sm:$0xff]
    %v441 = vld [vmem:[#allocation8 + $0x168] sm:$0xff]
    %v442 = vld [vmem:[#allocation8 + $0x170] sm:$0xff]
    %v443 = vld [vmem:[#allocation8 + $0x178] sm:$0xff]
    %v444 = vld [vmem:[#allocation8 + $0x180] sm:$0xff]
    %v445 = vld [vmem:[#allocation8 + $0x188] sm:$0xff]
    %v446 = vld [vmem:[#allocation8 + $0x190] sm:$0xff]
    %v447 = vld [vmem:[#allocation8 + $0x198] sm:$0xff]
    %v448 = vld [vmem:[#allocation8 + $0x1a0] sm:$0xff]
    %v449 = vld [vmem:[#allocation8 + $0x1a8] sm:$0xff]
    %v450 = vld [vmem:[#allocation8 + $0x1b0] sm:$0xff]
    %v451 = vld [vmem:[#allocation8 + $0x1b8] sm:$0xff]
    %v452 = vld [vmem:[#allocation8 + $0x1c0] sm:$0xff]
    %v453 = vld [vmem:[#allocation8 + $0x1c8] sm:$0xff]
    %v454 = vld [vmem:[#allocation8 + $0x1d0] sm:$0xff]
    %v455 = vld [vmem:[#allocation8 + $0x1d8] sm:$0xff]
    %v456 = vld [vmem:[#allocation8 + $0x1e0] sm:$0xff]
    %v457 = vld [vmem:[#allocation8 + $0x1e8] sm:$0xff]
    %v458 = vld [vmem:[#allocation8 + $0x1f0] sm:$0xff]
    %v459 = vld [vmem:[#allocation8 + $0x1f8] sm:$0xff]
    %v460 = vld [vmem:[#allocation4] sm:$0xff]
    %v461 = vld [vmem:[#allocation5] sm:$0xff]
    %v462 = vld [vmem:[#allocation2] sm:$0xff]
    %v463 = vld [vmem:[#allocation2 + $0x8] sm:$0xff]
    %v464 = vld [vmem:[#allocation2 + $0x10] sm:$0xff]
    %v465 = vld [vmem:[#allocation2 + $0x18] sm:$0xff]
    %466 = vmatpush.msra.mxu0 %v456
    %467 = vmatpush.msra.mxu0 %v452
    %468 = vmatpush.msra.mxu0 %v448
    %469 = vmatpush.msra.mxu0 %v444
    %470 = vmatpush.msra.mxu0 %v440
    %471 = vmatpush.msra.mxu0 %v436
    %472 = vmatpush.msra.mxu0 %v432
    %473 = vmatpush.msra.mxu0 %v428
    %474 = vmatpush.msra.mxu0 %v424
    %475 = vmatpush.msra.mxu0 %v420
    %476 = vmatpush.msra.mxu0 %v416
    %477 = vmatpush.msra.mxu0 %v412
    %478 = vmatpush.msra.mxu0 %v408
    %479 = vmatpush.msra.mxu0 %v404
    %480 = vmatpush.msra.mxu0 %v400
    %481 = vmatpush.msra.mxu0 %v396
    %482 = vmatmul.f32.gmra.mxu0 %v460
    %v483 = vpop.f32.mrf.mxu0
    %v484 = vadd.f32 0.0, %v483
    %485 = vdwg.mxu0
    %486 = vmatpush.msra.mxu0 %v457
    %487 = vmatpush.msra.mxu0 %v453
    %488 = vmatpush.msra.mxu0 %v449
    %489 = vmatpush.msra.mxu0 %v445
    %490 = vmatpush.msra.mxu0 %v441
    %491 = vmatpush.msra.mxu0 %v437
    %492 = vmatpush.msra.mxu0 %v433
    %493 = vmatpush.msra.mxu0 %v429
    %494 = vmatpush.msra.mxu0 %v425
    %495 = vmatpush.msra.mxu0 %v421
    %496 = vmatpush.msra.mxu0 %v417
    %497 = vmatpush.msra.mxu0 %v413
    %498 = vmatpush.msra.mxu0 %v409
    %499 = vmatpush.msra.mxu0 %v405
    %500 = vmatpush.msra.mxu0 %v401
    %501 = vmatpush.msra.mxu0 %v397
    %502 = vmatmul.f32.gmra.mxu0 %v460
    %v503 = vpop.f32.mrf.mxu0
    %v504 = vadd.f32 0.0, %v503
    %505 = vdwg.mxu0
    %506 = vmatpush.msra.mxu0 %v458
    %507 = vmatpush.msra.mxu0 %v454
    %508 = vmatpush.msra.mxu0 %v450
    %509 = vmatpush.msra.mxu0 %v446
    %510 = vmatpush.msra.mxu0 %v442
    %511 = vmatpush.msra.mxu0 %v438
    %512 = vmatpush.msra.mxu0 %v434
    %513 = vmatpush.msra.mxu0 %v430
    %514 = vmatpush.msra.mxu0 %v426
    %515 = vmatpush.msra.mxu0 %v422
    %516 = vmatpush.msra.mxu0 %v418
    %517 = vmatpush.msra.mxu0 %v414
    %518 = vmatpush.msra.mxu0 %v410
    %519 = vmatpush.msra.mxu0 %v406
    %520 = vmatpush.msra.mxu0 %v402
    %521 = vmatpush.msra.mxu0 %v398
    %522 = vmatmul.f32.gmra.mxu0 %v460
    %v523 = vpop.f32.mrf.mxu0
    %v524 = vadd.f32 0.0, %v523
    %525 = vdwg.mxu0
    %526 = vmatpush.msra.mxu0 %v459
    %527 = vmatpush.msra.mxu0 %v455
    %528 = vmatpush.msra.mxu0 %v451
    %529 = vmatpush.msra.mxu0 %v447
    %530 = vmatpush.msra.mxu0 %v443
    %531 = vmatpush.msra.mxu0 %v439
    %532 = vmatpush.msra.mxu0 %v435
    %533 = vmatpush.msra.mxu0 %v431
    %534 = vmatpush.msra.mxu0 %v427
    %535 = vmatpush.msra.mxu0 %v423
    %536 = vmatpush.msra.mxu0 %v419
    %537 = vmatpush.msra.mxu0 %v415
    %538 = vmatpush.msra.mxu0 %v411
    %539 = vmatpush.msra.mxu0 %v407
    %540 = vmatpush.msra.mxu0 %v403
    %541 = vmatpush.msra.mxu0 %v399
    %542 = vmatmul.f32.gmra.mxu0 %v460
    %v543 = vpop.f32.mrf.mxu0
    %v544 = vadd.f32 0.0, %v543
    %545 = vdwg.mxu0
    %v546 = vadd.f32 %v462, %v484
    %v547 = vadd.f32 %v463, %v504
    %v548 = vadd.f32 %v464, %v524
    %v549 = vadd.f32 %v465, %v544
    %v550 = vmul.f32 %v546, 0.5
    %v551 = vtanh.pop %v550
    %v552 = vadd.f32 %v551, 1.0
    %v553 = vmul.f32 %v552, 0.5
    %v554 = vmul.f32 %v547, 0.5
    %v555 = vtanh.pop %v554
    %v556 = vadd.f32 %v555, 1.0
    %v557 = vmul.f32 %v556, 0.5
    %v558 = vtanh.pop %v548
    %v559 = vmul.f32 %v549, 0.5
    %v560 = vtanh.pop %v559
    %v561 = vadd.f32 %v560, 1.0
    %v562 = vmul.f32 %v561, 0.5
    %v563 = vmul.f32 %v557, %v461
    %v564 = vmul.f32 %v553, %v558
    %v565 = vadd.f32 %v563, %v564
    %v566 = vtanh.pop %v565
    %v567 = vmul.f32 %v562, %v566
    %568 = vst [vmem:[#allocation3] sm:$0xff] %v567
    %s569 = scalar_lea.vmem [#allocation2], 32
    %v570 = vld [vmem:[%s569] sm:$0xff]
    %v571 = vld [vmem:[%s569 + $0x8] sm:$0xff]
    %v572 = vld [vmem:[%s569 + $0x10] sm:$0xff]
    %v573 = vld [vmem:[%s569 + $0x18] sm:$0xff]
    %574 = vmatpush.msra.mxu0 %v456
    %575 = vmatpush.msra.mxu0 %v452
    %576 = vmatpush.msra.mxu0 %v448
    %577 = vmatpush.msra.mxu0 %v444
    %578 = vmatpush.msra.mxu0 %v440
    %579 = vmatpush.msra.mxu0 %v436
    %580 = vmatpush.msra.mxu0 %v432
    %581 = vmatpush.msra.mxu0 %v428
    %582 = vmatpush.msra.mxu0 %v424
    %583 = vmatpush.msra.mxu0 %v420
    %584 = vmatpush.msra.mxu0 %v416
    %585 = vmatpush.msra.mxu0 %v412
    %586 = vmatpush.msra.mxu0 %v408
    %587 = vmatpush.msra.mxu0 %v404
    %588 = vmatpush.msra.mxu0 %v400
    %589 = vmatpush.msra.mxu0 %v396
    %590 = vmatmul.f32.gmra.mxu0 %v567
    %v591 = vpop.f32.mrf.mxu0
    %v592 = vadd.f32 0.0, %v591
    %593 = vdwg.mxu0
    %594 = vmatpush.msra.mxu0 %v457
    %595 = vmatpush.msra.mxu0 %v453
    %596 = vmatpush.msra.mxu0 %v449
    %597 = vmatpush.msra.mxu0 %v445
    %598 = vmatpush.msra.mxu0 %v441
    %599 = vmatpush.msra.mxu0 %v437
    %600 = vmatpush.msra.mxu0 %v433
    %601 = vmatpush.msra.mxu0 %v429
    %602 = vmatpush.msra.mxu0 %v425
    %603 = vmatpush.msra.mxu0 %v421
    %604 = vmatpush.msra.mxu0 %v417
    %605 = vmatpush.msra.mxu0 %v413
    %606 = vmatpush.msra.mxu0 %v409
    %607 = vmatpush.msra.mxu0 %v405
    %608 = vmatpush.msra.mxu0 %v401
    %609 = vmatpush.msra.mxu0 %v397
    %610 = vmatmul.f32.gmra.mxu0 %v567
    %v611 = vpop.f32.mrf.mxu0
    %v612 = vadd.f32 0.0, %v611
    %613 = vdwg.mxu0
    %614 = vmatpush.msra.mxu0 %v458
    %615 = vmatpush.msra.mxu0 %v454
    %616 = vmatpush.msra.mxu0 %v450
    %617 = vmatpush.msra.mxu0 %v446
    %618 = vmatpush.msra.mxu0 %v442
    %619 = vmatpush.msra.mxu0 %v438
    %620 = vmatpush.msra.mxu0 %v434
    %621 = vmatpush.msra.mxu0 %v430
    %622 = vmatpush.msra.mxu0 %v426
    %623 = vmatpush.msra.mxu0 %v422
    %624 = vmatpush.msra.mxu0 %v418
    %625 = vmatpush.msra.mxu0 %v414
    %626 = vmatpush.msra.mxu0 %v410
    %627 = vmatpush.msra.mxu0 %v406
    %628 = vmatpush.msra.mxu0 %v402
    %629 = vmatpush.msra.mxu0 %v398
    %630 = vmatmul.f32.gmra.mxu0 %v567
    %v631 = vpop.f32.mrf.mxu0
    %v632 = vadd.f32 0.0, %v631
    %633 = vdwg.mxu0
    %634 = vmatpush.msra.mxu0 %v459
    %635 = vmatpush.msra.mxu0 %v455
    %636 = vmatpush.msra.mxu0 %v451
    %637 = vmatpush.msra.mxu0 %v447
    %638 = vmatpush.msra.mxu0 %v443
    %639 = vmatpush.msra.mxu0 %v439
    %640 = vmatpush.msra.mxu0 %v435
    %641 = vmatpush.msra.mxu0 %v431
    %642 = vmatpush.msra.mxu0 %v427
    %643 = vmatpush.msra.mxu0 %v423
    %644 = vmatpush.msra.mxu0 %v419
    %645 = vmatpush.msra.mxu0 %v415
    %646 = vmatpush.msra.mxu0 %v411
    %647 = vmatpush.msra.mxu0 %v407
    %648 = vmatpush.msra.mxu0 %v403
    %649 = vmatpush.msra.mxu0 %v399
    %650 = vmatmul.f32.gmra.mxu0 %v567
    %v651 = vpop.f32.mrf.mxu0
    %v652 = vadd.f32 0.0, %v651
    %653 = vdwg.mxu0
    %v654 = vadd.f32 %v570, %v592
    %v655 = vadd.f32 %v571, %v612
    %v656 = vadd.f32 %v572, %v632
    %v657 = vadd.f32 %v573, %v652
    %v658 = vmul.f32 %v654, 0.5
    %v659 = vtanh.pop %v658
    %v660 = vadd.f32 %v659, 1.0
    %v661 = vmul.f32 %v660, 0.5
    %v662 = vmul.f32 %v655, 0.5
    %v663 = vtanh.pop %v662
    %v664 = vadd.f32 %v663, 1.0
    %v665 = vmul.f32 %v664, 0.5
    %v666 = vtanh.pop %v656
    %v667 = vmul.f32 %v657, 0.5
    %v668 = vtanh.pop %v667
    %v669 = vadd.f32 %v668, 1.0
    %v670 = vmul.f32 %v669, 0.5
    %v671 = vmul.f32 %v665, %v565
    %v672 = vmul.f32 %v661, %v666
    %v673 = vadd.f32 %v671, %v672
    %v674 = vtanh.pop %v673
    %v675 = vmul.f32 %v670, %v674
    %s676 = scalar_lea.vmem [#allocation3], 8
    %677 = vst [vmem:[%s676] sm:$0xff] %v675
    %s678 = scalar_lea.vmem [#allocation2], 64
    %v679 = vld [vmem:[%s678] sm:$0xff]
    %v680 = vld [vmem:[%s678 + $0x8] sm:$0xff]
    %v681 = vld [vmem:[%s678 + $0x10] sm:$0xff]
    %v682 = vld [vmem:[%s678 + $0x18] sm:$0xff]
    %683 = vmatpush.msra.mxu0 %v456
    %684 = vmatpush.msra.mxu0 %v452
    %685 = vmatpush.msra.mxu0 %v448
    %686 = vmatpush.msra.mxu0 %v444
    %687 = vmatpush.msra.mxu0 %v440
    %688 = vmatpush.msra.mxu0 %v436
    %689 = vmatpush.msra.mxu0 %v432
    %690 = vmatpush.msra.mxu0 %v428
    %691 = vmatpush.msra.mxu0 %v424
    %692 = vmatpush.msra.mxu0 %v420
    %693 = vmatpush.msra.mxu0 %v416
    %694 = vmatpush.msra.mxu0 %v412
    %695 = vmatpush.msra.mxu0 %v408
    %696 = vmatpush.msra.mxu0 %v404
    %697 = vmatpush.msra.mxu0 %v400
    %698 = vmatpush.msra.mxu0 %v396
    %699 = vmatmul.f32.gmra.mxu0 %v675
    %v700 = vpop.f32.mrf.mxu0
    %v701 = vadd.f32 0.0, %v700
    %702 = vdwg.mxu0
    %703 = vmatpush.msra.mxu0 %v457
    %704 = vmatpush.msra.mxu0 %v453
    %705 = vmatpush.msra.mxu0 %v449
    %706 = vmatpush.msra.mxu0 %v445
    %707 = vmatpush.msra.mxu0 %v441
    %708 = vmatpush.msra.mxu0 %v437
    %709 = vmatpush.msra.mxu0 %v433
    %710 = vmatpush.msra.mxu0 %v429
    %711 = vmatpush.msra.mxu0 %v425
    %712 = vmatpush.msra.mxu0 %v421
    %713 = vmatpush.msra.mxu0 %v417
    %714 = vmatpush.msra.mxu0 %v413
    %715 = vmatpush.msra.mxu0 %v409
    %716 = vmatpush.msra.mxu0 %v405
    %717 = vmatpush.msra.mxu0 %v401
    %718 = vmatpush.msra.mxu0 %v397
    %719 = vmatmul.f32.gmra.mxu0 %v675
    %v720 = vpop.f32.mrf.mxu0
    %v721 = vadd.f32 0.0, %v720
    %722 = vdwg.mxu0
    %723 = vmatpush.msra.mxu0 %v458
    %724 = vmatpush.msra.mxu0 %v454
    %725 = vmatpush.msra.mxu0 %v450
    %726 = vmatpush.msra.mxu0 %v446
    %727 = vmatpush.msra.mxu0 %v442
    %728 = vmatpush.msra.mxu0 %v438
    %729 = vmatpush.msra.mxu0 %v434
    %730 = vmatpush.msra.mxu0 %v430
    %731 = vmatpush.msra.mxu0 %v426
    %732 = vmatpush.msra.mxu0 %v422
    %733 = vmatpush.msra.mxu0 %v418
    %734 = vmatpush.msra.mxu0 %v414
    %735 = vmatpush.msra.mxu0 %v410
    %736 = vmatpush.msra.mxu0 %v406
    %737 = vmatpush.msra.mxu0 %v402
    %738 = vmatpush.msra.mxu0 %v398
    %739 = vmatmul.f32.gmra.mxu0 %v675
    %v740 = vpop.f32.mrf.mxu0
    %v741 = vadd.f32 0.0, %v740
    %742 = vdwg.mxu0
    %743 = vmatpush.msra.mxu0 %v459
    %744 = vmatpush.msra.mxu0 %v455
    %745 = vmatpush.msra.mxu0 %v451
    %746 = vmatpush.msra.mxu0 %v447
    %747 = vmatpush.msra.mxu0 %v443
    %748 = vmatpush.msra.mxu0 %v439
    %749 = vmatpush.msra.mxu0 %v435
    %750 = vmatpush.msra.mxu0 %v431
    %751 = vmatpush.msra.mxu0 %v427
    %752 = vmatpush.msra.mxu0 %v423
    %753 = vmatpush.msra.mxu0 %v419
    %754 = vmatpush.msra.mxu0 %v415
    %755 = vmatpush.msra.mxu0 %v411
    %756 = vmatpush.msra.mxu0 %v407
    %757 = vmatpush.msra.mxu0 %v403
    %758 = vmatpush.msra.mxu0 %v399
    %759 = vmatmul.f32.gmra.mxu0 %v675
    %v760 = vpop.f32.mrf.mxu0
    %v761 = vadd.f32 0.0, %v760
    %762 = vdwg.mxu0
    %v763 = vadd.f32 %v679, %v701
    %v764 = vadd.f32 %v680, %v721
    %v765 = vadd.f32 %v681, %v741
    %v766 = vadd.f32 %v682, %v761
    %v767 = vmul.f32 %v763, 0.5
    %v768 = vtanh.pop %v767
    %v769 = vadd.f32 %v768, 1.0
    %v770 = vmul.f32 %v769, 0.5
    %v771 = vmul.f32 %v764, 0.5
    %v772 = vtanh.pop %v771
    %v773 = vadd.f32 %v772, 1.0
    %v774 = vmul.f32 %v773, 0.5
    %v775 = vtanh.pop %v765
    %v776 = vmul.f32 %v766, 0.5
    %v777 = vtanh.pop %v776
    %v778 = vadd.f32 %v777, 1.0
    %v779 = vmul.f32 %v778, 0.5
    %v780 = vmul.f32 %v774, %v673
    %v781 = vmul.f32 %v770, %v775
    %v782 = vadd.f32 %v780, %v781
    %v783 = vtanh.pop %v782
    %v784 = vmul.f32 %v779, %v783
    %s785 = scalar_lea.vmem [#allocation3], 16
    %786 = vst [vmem:[%s785] sm:$0xff] %v784
    %s787 = scalar_lea.vmem [#allocation2], 96
    %v788 = vld [vmem:[%s787] sm:$0xff]
    %v789 = vld [vmem:[%s787 + $0x8] sm:$0xff]
    %v790 = vld [vmem:[%s787 + $0x10] sm:$0xff]
    %v791 = vld [vmem:[%s787 + $0x18] sm:$0xff]
    %792 = vmatpush.msra.mxu0 %v456
    %793 = vmatpush.msra.mxu0 %v452
    %794 = vmatpush.msra.mxu0 %v448
    %795 = vmatpush.msra.mxu0 %v444
    %796 = vmatpush.msra.mxu0 %v440
    %797 = vmatpush.msra.mxu0 %v436
    %798 = vmatpush.msra.mxu0 %v432
    %799 = vmatpush.msra.mxu0 %v428
    %800 = vmatpush.msra.mxu0 %v424
    %801 = vmatpush.msra.mxu0 %v420
    %802 = vmatpush.msra.mxu0 %v416
    %803 = vmatpush.msra.mxu0 %v412
    %804 = vmatpush.msra.mxu0 %v408
    %805 = vmatpush.msra.mxu0 %v404
    %806 = vmatpush.msra.mxu0 %v400
    %807 = vmatpush.msra.mxu0 %v396
    %808 = vmatmul.f32.gmra.mxu0 %v784
    %v809 = vpop.f32.mrf.mxu0
    %v810 = vadd.f32 0.0, %v809
    %811 = vdwg.mxu0
    %812 = vmatpush.msra.mxu0 %v457
    %813 = vmatpush.msra.mxu0 %v453
    %814 = vmatpush.msra.mxu0 %v449
    %815 = vmatpush.msra.mxu0 %v445
    %816 = vmatpush.msra.mxu0 %v441
    %817 = vmatpush.msra.mxu0 %v437
    %818 = vmatpush.msra.mxu0 %v433
    %819 = vmatpush.msra.mxu0 %v429
    %820 = vmatpush.msra.mxu0 %v425
    %821 = vmatpush.msra.mxu0 %v421
    %822 = vmatpush.msra.mxu0 %v417
    %823 = vmatpush.msra.mxu0 %v413
    %824 = vmatpush.msra.mxu0 %v409
    %825 = vmatpush.msra.mxu0 %v405
    %826 = vmatpush.msra.mxu0 %v401
    %827 = vmatpush.msra.mxu0 %v397
    %828 = vmatmul.f32.gmra.mxu0 %v784
    %v829 = vpop.f32.mrf.mxu0
    %v830 = vadd.f32 0.0, %v829
    %831 = vdwg.mxu0
    %832 = vmatpush.msra.mxu0 %v458
    %833 = vmatpush.msra.mxu0 %v454
    %834 = vmatpush.msra.mxu0 %v450
    %835 = vmatpush.msra.mxu0 %v446
    %836 = vmatpush.msra.mxu0 %v442
    %837 = vmatpush.msra.mxu0 %v438
    %838 = vmatpush.msra.mxu0 %v434
    %839 = vmatpush.msra.mxu0 %v430
    %840 = vmatpush.msra.mxu0 %v426
    %841 = vmatpush.msra.mxu0 %v422
    %842 = vmatpush.msra.mxu0 %v418
    %843 = vmatpush.msra.mxu0 %v414
    %844 = vmatpush.msra.mxu0 %v410
    %845 = vmatpush.msra.mxu0 %v406
    %846 = vmatpush.msra.mxu0 %v402
    %847 = vmatpush.msra.mxu0 %v398
    %848 = vmatmul.f32.gmra.mxu0 %v784
    %v849 = vpop.f32.mrf.mxu0
    %v850 = vadd.f32 0.0, %v849
    %851 = vdwg.mxu0
    %852 = vmatpush.msra.mxu0 %v459
    %853 = vmatpush.msra.mxu0 %v455
    %854 = vmatpush.msra.mxu0 %v451
    %855 = vmatpush.msra.mxu0 %v447
    %856 = vmatpush.msra.mxu0 %v443
    %857 = vmatpush.msra.mxu0 %v439
    %858 = vmatpush.msra.mxu0 %v435
    %859 = vmatpush.msra.mxu0 %v431
    %860 = vmatpush.msra.mxu0 %v427
    %861 = vmatpush.msra.mxu0 %v423
    %862 = vmatpush.msra.mxu0 %v419
    %863 = vmatpush.msra.mxu0 %v415
    %864 = vmatpush.msra.mxu0 %v411
    %865 = vmatpush.msra.mxu0 %v407
    %866 = vmatpush.msra.mxu0 %v403
    %867 = vmatpush.msra.mxu0 %v399
    %868 = vmatmul.f32.gmra.mxu0 %v784
    %v869 = vpop.f32.mrf.mxu0
    %v870 = vadd.f32 0.0, %v869
    %871 = vdwg.mxu0
    %v872 = vadd.f32 %v788, %v810
    %v873 = vadd.f32 %v789, %v830
    %v874 = vadd.f32 %v790, %v850
    %v875 = vadd.f32 %v791, %v870
    %v876 = vmul.f32 %v872, 0.5
    %v877 = vtanh.pop %v876
    %v878 = vadd.f32 %v877, 1.0
    %v879 = vmul.f32 %v878, 0.5
    %v880 = vmul.f32 %v873, 0.5
    %v881 = vtanh.pop %v880
    %v882 = vadd.f32 %v881, 1.0
    %v883 = vmul.f32 %v882, 0.5
    %v884 = vtanh.pop %v874
    %v885 = vmul.f32 %v875, 0.5
    %v886 = vtanh.pop %v885
    %v887 = vadd.f32 %v886, 1.0
    %v888 = vmul.f32 %v887, 0.5
    %v889 = vmul.f32 %v883, %v782
    %v890 = vmul.f32 %v879, %v884
    %v891 = vadd.f32 %v889, %v890
    %v892 = vtanh.pop %v891
    %v893 = vmul.f32 %v888, %v892
    %s894 = scalar_lea.vmem [#allocation3], 24
    %895 = vst [vmem:[%s894] sm:$0xff] %v893
    %s896 = scalar_lea.vmem [#allocation2], 128
    %v897 = vld [vmem:[%s896] sm:$0xff]
    %v898 = vld [vmem:[%s896 + $0x8] sm:$0xff]
    %v899 = vld [vmem:[%s896 + $0x10] sm:$0xff]
    %v900 = vld [vmem:[%s896 + $0x18] sm:$0xff]
    %901 = vmatpush.msra.mxu0 %v456
    %902 = vmatpush.msra.mxu0 %v452
    %903 = vmatpush.msra.mxu0 %v448
    %904 = vmatpush.msra.mxu0 %v444
    %905 = vmatpush.msra.mxu0 %v440
    %906 = vmatpush.msra.mxu0 %v436
    %907 = vmatpush.msra.mxu0 %v432
    %908 = vmatpush.msra.mxu0 %v428
    %909 = vmatpush.msra.mxu0 %v424
    %910 = vmatpush.msra.mxu0 %v420
    %911 = vmatpush.msra.mxu0 %v416
    %912 = vmatpush.msra.mxu0 %v412
    %913 = vmatpush.msra.mxu0 %v408
    %914 = vmatpush.msra.mxu0 %v404
    %915 = vmatpush.msra.mxu0 %v400
    %916 = vmatpush.msra.mxu0 %v396
    %917 = vmatmul.f32.gmra.mxu0 %v893
    %v918 = vpop.f32.mrf.mxu0
    %v919 = vadd.f32 0.0, %v918
    %920 = vdwg.mxu0
    %921 = vmatpush.msra.mxu0 %v457
    %922 = vmatpush.msra.mxu0 %v453
    %923 = vmatpush.msra.mxu0 %v449
    %924 = vmatpush.msra.mxu0 %v445
    %925 = vmatpush.msra.mxu0 %v441
    %926 = vmatpush.msra.mxu0 %v437
    %927 = vmatpush.msra.mxu0 %v433
    %928 = vmatpush.msra.mxu0 %v429
    %929 = vmatpush.msra.mxu0 %v425
    %930 = vmatpush.msra.mxu0 %v421
    %931 = vmatpush.msra.mxu0 %v417
    %932 = vmatpush.msra.mxu0 %v413
    %933 = vmatpush.msra.mxu0 %v409
    %934 = vmatpush.msra.mxu0 %v405
    %935 = vmatpush.msra.mxu0 %v401
    %936 = vmatpush.msra.mxu0 %v397
    %937 = vmatmul.f32.gmra.mxu0 %v893
    %v938 = vpop.f32.mrf.mxu0
    %v939 = vadd.f32 0.0, %v938
    %940 = vdwg.mxu0
    %941 = vmatpush.msra.mxu0 %v458
    %942 = vmatpush.msra.mxu0 %v454
    %943 = vmatpush.msra.mxu0 %v450
    %944 = vmatpush.msra.mxu0 %v446
    %945 = vmatpush.msra.mxu0 %v442
    %946 = vmatpush.msra.mxu0 %v438
    %947 = vmatpush.msra.mxu0 %v434
    %948 = vmatpush.msra.mxu0 %v430
    %949 = vmatpush.msra.mxu0 %v426
    %950 = vmatpush.msra.mxu0 %v422
    %951 = vmatpush.msra.mxu0 %v418
    %952 = vmatpush.msra.mxu0 %v414
    %953 = vmatpush.msra.mxu0 %v410
    %954 = vmatpush.msra.mxu0 %v406
    %955 = vmatpush.msra.mxu0 %v402
    %956 = vmatpush.msra.mxu0 %v398
    %957 = vmatmul.f32.gmra.mxu0 %v893
    %v958 = vpop.f32.mrf.mxu0
    %v959 = vadd.f32 0.0, %v958
    %960 = vdwg.mxu0
    %961 = vmatpush.msra.mxu0 %v459
    %962 = vmatpush.msra.mxu0 %v455
    %963 = vmatpush.msra.mxu0 %v451
    %964 = vmatpush.msra.mxu0 %v447
    %965 = vmatpush.msra.mxu0 %v443
    %966 = vmatpush.msra.mxu0 %v439
    %967 = vmatpush.msra.mxu0 %v435
    %968 = vmatpush.msra.mxu0 %v431
    %969 = vmatpush.msra.mxu0 %v427
    %970 = vmatpush.msra.mxu0 %v423
    %971 = vmatpush.msra.mxu0 %v419
    %972 = vmatpush.msra.mxu0 %v415
    %973 = vmatpush.msra.mxu0 %v411
    %974 = vmatpush.msra.mxu0 %v407
    %975 = vmatpush.msra.mxu0 %v403
    %976 = vmatpush.msra.mxu0 %v399
    %977 = vmatmul.f32.gmra.mxu0 %v893
    %v978 = vpop.f32.mrf.mxu0
    %v979 = vadd.f32 0.0, %v978
    %980 = vdwg.mxu0
    %v981 = vadd.f32 %v897, %v919
    %v982 = vadd.f32 %v898, %v939
    %v983 = vadd.f32 %v899, %v959
    %v984 = vadd.f32 %v900, %v979
    %v985 = vmul.f32 %v981, 0.5
    %v986 = vtanh.pop %v985
    %v987 = vadd.f32 %v986, 1.0
    %v988 = vmul.f32 %v987, 0.5
    %v989 = vmul.f32 %v982, 0.5
    %v990 = vtanh.pop %v989
    %v991 = vadd.f32 %v990, 1.0
    %v992 = vmul.f32 %v991, 0.5
    %v993 = vtanh.pop %v983
    %v994 = vmul.f32 %v984, 0.5
    %v995 = vtanh.pop %v994
    %v996 = vadd.f32 %v995, 1.0
    %v997 = vmul.f32 %v996, 0.5
    %v998 = vmul.f32 %v992, %v891
    %v999 = vmul.f32 %v988, %v993
    %v1000 = vadd.f32 %v998, %v999
    %v1001 = vtanh.pop %v1000
    %v1002 = vmul.f32 %v997, %v1001
    %s1003 = scalar_lea.vmem [#allocation3], 32
    %1004 = vst [vmem:[%s1003] sm:$0xff] %v1002
    %s1005 = scalar_lea.vmem [#allocation2], 160
    %v1006 = vld [vmem:[%s1005] sm:$0xff]
    %v1007 = vld [vmem:[%s1005 + $0x8] sm:$0xff]
    %v1008 = vld [vmem:[%s1005 + $0x10] sm:$0xff]
    %v1009 = vld [vmem:[%s1005 + $0x18] sm:$0xff]
    %1010 = vmatpush.msra.mxu0 %v456
    %1011 = vmatpush.msra.mxu0 %v452
    %1012 = vmatpush.msra.mxu0 %v448
    %1013 = vmatpush.msra.mxu0 %v444
    %1014 = vmatpush.msra.mxu0 %v440
    %1015 = vmatpush.msra.mxu0 %v436
    %1016 = vmatpush.msra.mxu0 %v432
    %1017 = vmatpush.msra.mxu0 %v428
    %1018 = vmatpush.msra.mxu0 %v424
    %1019 = vmatpush.msra.mxu0 %v420
    %1020 = vmatpush.msra.mxu0 %v416
    %1021 = vmatpush.msra.mxu0 %v412
    %1022 = vmatpush.msra.mxu0 %v408
    %1023 = vmatpush.msra.mxu0 %v404
    %1024 = vmatpush.msra.mxu0 %v400
    %1025 = vmatpush.msra.mxu0 %v396
    %1026 = vmatmul.f32.gmra.mxu0 %v1002
    %v1027 = vpop.f32.mrf.mxu0
    %v1028 = vadd.f32 0.0, %v1027
    %1029 = vdwg.mxu0
    %1030 = vmatpush.msra.mxu0 %v457
    %1031 = vmatpush.msra.mxu0 %v453
    %1032 = vmatpush.msra.mxu0 %v449
    %1033 = vmatpush.msra.mxu0 %v445
    %1034 = vmatpush.msra.mxu0 %v441
    %1035 = vmatpush.msra.mxu0 %v437
    %1036 = vmatpush.msra.mxu0 %v433
    %1037 = vmatpush.msra.mxu0 %v429
    %1038 = vmatpush.msra.mxu0 %v425
    %1039 = vmatpush.msra.mxu0 %v421
    %1040 = vmatpush.msra.mxu0 %v417
    %1041 = vmatpush.msra.mxu0 %v413
    %1042 = vmatpush.msra.mxu0 %v409
    %1043 = vmatpush.msra.mxu0 %v405
    %1044 = vmatpush.msra.mxu0 %v401
    %1045 = vmatpush.msra.mxu0 %v397
    %1046 = vmatmul.f32.gmra.mxu0 %v1002
    %v1047 = vpop.f32.mrf.mxu0
    %v1048 = vadd.f32 0.0, %v1047
    %1049 = vdwg.mxu0
    %1050 = vmatpush.msra.mxu0 %v458
    %1051 = vmatpush.msra.mxu0 %v454
    %1052 = vmatpush.msra.mxu0 %v450
    %1053 = vmatpush.msra.mxu0 %v446
    %1054 = vmatpush.msra.mxu0 %v442
    %1055 = vmatpush.msra.mxu0 %v438
    %1056 = vmatpush.msra.mxu0 %v434
    %1057 = vmatpush.msra.mxu0 %v430
    %1058 = vmatpush.msra.mxu0 %v426
    %1059 = vmatpush.msra.mxu0 %v422
    %1060 = vmatpush.msra.mxu0 %v418
    %1061 = vmatpush.msra.mxu0 %v414
    %1062 = vmatpush.msra.mxu0 %v410
    %1063 = vmatpush.msra.mxu0 %v406
    %1064 = vmatpush.msra.mxu0 %v402
    %1065 = vmatpush.msra.mxu0 %v398
    %1066 = vmatmul.f32.gmra.mxu0 %v1002
    %v1067 = vpop.f32.mrf.mxu0
    %v1068 = vadd.f32 0.0, %v1067
    %1069 = vdwg.mxu0
    %1070 = vmatpush.msra.mxu0 %v459
    %1071 = vmatpush.msra.mxu0 %v455
    %1072 = vmatpush.msra.mxu0 %v451
    %1073 = vmatpush.msra.mxu0 %v447
    %1074 = vmatpush.msra.mxu0 %v443
    %1075 = vmatpush.msra.mxu0 %v439
    %1076 = vmatpush.msra.mxu0 %v435
    %1077 = vmatpush.msra.mxu0 %v431
    %1078 = vmatpush.msra.mxu0 %v427
    %1079 = vmatpush.msra.mxu0 %v423
    %1080 = vmatpush.msra.mxu0 %v419
    %1081 = vmatpush.msra.mxu0 %v415
    %1082 = vmatpush.msra.mxu0 %v411
    %1083 = vmatpush.msra.mxu0 %v407
    %1084 = vmatpush.msra.mxu0 %v403
    %1085 = vmatpush.msra.mxu0 %v399
    %1086 = vmatmul.f32.gmra.mxu0 %v1002
    %v1087 = vpop.f32.mrf.mxu0
    %v1088 = vadd.f32 0.0, %v1087
    %1089 = vdwg.mxu0
    %v1090 = vadd.f32 %v1006, %v1028
    %v1091 = vadd.f32 %v1007, %v1048
    %v1092 = vadd.f32 %v1008, %v1068
    %v1093 = vadd.f32 %v1009, %v1088
    %v1094 = vmul.f32 %v1090, 0.5
    %v1095 = vtanh.pop %v1094
    %v1096 = vadd.f32 %v1095, 1.0
    %v1097 = vmul.f32 %v1096, 0.5
    %v1098 = vmul.f32 %v1091, 0.5
    %v1099 = vtanh.pop %v1098
    %v1100 = vadd.f32 %v1099, 1.0
    %v1101 = vmul.f32 %v1100, 0.5
    %v1102 = vtanh.pop %v1092
    %v1103 = vmul.f32 %v1093, 0.5
    %v1104 = vtanh.pop %v1103
    %v1105 = vadd.f32 %v1104, 1.0
    %v1106 = vmul.f32 %v1105, 0.5
    %v1107 = vmul.f32 %v1101, %v1000
    %v1108 = vmul.f32 %v1097, %v1102
    %v1109 = vadd.f32 %v1107, %v1108
    %v1110 = vtanh.pop %v1109
    %v1111 = vmul.f32 %v1106, %v1110
    %s1112 = scalar_lea.vmem [#allocation3], 40
    %1113 = vst [vmem:[%s1112] sm:$0xff] %v1111
    %s1114 = scalar_lea.vmem [#allocation2], 192
    %v1115 = vld [vmem:[%s1114] sm:$0xff]
    %v1116 = vld [vmem:[%s1114 + $0x8] sm:$0xff]
    %v1117 = vld [vmem:[%s1114 + $0x10] sm:$0xff]
    %v1118 = vld [vmem:[%s1114 + $0x18] sm:$0xff]
    %1119 = vmatpush.msra.mxu0 %v456
    %1120 = vmatpush.msra.mxu0 %v452
    %1121 = vmatpush.msra.mxu0 %v448
    %1122 = vmatpush.msra.mxu0 %v444
    %1123 = vmatpush.msra.mxu0 %v440
    %1124 = vmatpush.msra.mxu0 %v436
    %1125 = vmatpush.msra.mxu0 %v432
    %1126 = vmatpush.msra.mxu0 %v428
    %1127 = vmatpush.msra.mxu0 %v424
    %1128 = vmatpush.msra.mxu0 %v420
    %1129 = vmatpush.msra.mxu0 %v416
    %1130 = vmatpush.msra.mxu0 %v412
    %1131 = vmatpush.msra.mxu0 %v408
    %1132 = vmatpush.msra.mxu0 %v404
    %1133 = vmatpush.msra.mxu0 %v400
    %1134 = vmatpush.msra.mxu0 %v396
    %1135 = vmatmul.f32.gmra.mxu0 %v1111
    %v1136 = vpop.f32.mrf.mxu0
    %v1137 = vadd.f32 0.0, %v1136
    %1138 = vdwg.mxu0
    %1139 = vmatpush.msra.mxu0 %v457
    %1140 = vmatpush.msra.mxu0 %v453
    %1141 = vmatpush.msra.mxu0 %v449
    %1142 = vmatpush.msra.mxu0 %v445
    %1143 = vmatpush.msra.mxu0 %v441
    %1144 = vmatpush.msra.mxu0 %v437
    %1145 = vmatpush.msra.mxu0 %v433
    %1146 = vmatpush.msra.mxu0 %v429
    %1147 = vmatpush.msra.mxu0 %v425
    %1148 = vmatpush.msra.mxu0 %v421
    %1149 = vmatpush.msra.mxu0 %v417
    %1150 = vmatpush.msra.mxu0 %v413
    %1151 = vmatpush.msra.mxu0 %v409
    %1152 = vmatpush.msra.mxu0 %v405
    %1153 = vmatpush.msra.mxu0 %v401
    %1154 = vmatpush.msra.mxu0 %v397
    %1155 = vmatmul.f32.gmra.mxu0 %v1111
    %v1156 = vpop.f32.mrf.mxu0
    %v1157 = vadd.f32 0.0, %v1156
    %1158 = vdwg.mxu0
    %1159 = vmatpush.msra.mxu0 %v458
    %1160 = vmatpush.msra.mxu0 %v454
    %1161 = vmatpush.msra.mxu0 %v450
    %1162 = vmatpush.msra.mxu0 %v446
    %1163 = vmatpush.msra.mxu0 %v442
    %1164 = vmatpush.msra.mxu0 %v438
    %1165 = vmatpush.msra.mxu0 %v434
    %1166 = vmatpush.msra.mxu0 %v430
    %1167 = vmatpush.msra.mxu0 %v426
    %1168 = vmatpush.msra.mxu0 %v422
    %1169 = vmatpush.msra.mxu0 %v418
    %1170 = vmatpush.msra.mxu0 %v414
    %1171 = vmatpush.msra.mxu0 %v410
    %1172 = vmatpush.msra.mxu0 %v406
    %1173 = vmatpush.msra.mxu0 %v402
    %1174 = vmatpush.msra.mxu0 %v398
    %1175 = vmatmul.f32.gmra.mxu0 %v1111
    %v1176 = vpop.f32.mrf.mxu0
    %v1177 = vadd.f32 0.0, %v1176
    %1178 = vdwg.mxu0
    %1179 = vmatpush.msra.mxu0 %v459
    %1180 = vmatpush.msra.mxu0 %v455
    %1181 = vmatpush.msra.mxu0 %v451
    %1182 = vmatpush.msra.mxu0 %v447
    %1183 = vmatpush.msra.mxu0 %v443
    %1184 = vmatpush.msra.mxu0 %v439
    %1185 = vmatpush.msra.mxu0 %v435
    %1186 = vmatpush.msra.mxu0 %v431
    %1187 = vmatpush.msra.mxu0 %v427
    %1188 = vmatpush.msra.mxu0 %v423
    %1189 = vmatpush.msra.mxu0 %v419
    %1190 = vmatpush.msra.mxu0 %v415
    %1191 = vmatpush.msra.mxu0 %v411
    %1192 = vmatpush.msra.mxu0 %v407
    %1193 = vmatpush.msra.mxu0 %v403
    %1194 = vmatpush.msra.mxu0 %v399
    %1195 = vmatmul.f32.gmra.mxu0 %v1111
    %v1196 = vpop.f32.mrf.mxu0
    %v1197 = vadd.f32 0.0, %v1196
    %1198 = vdwg.mxu0
    %v1199 = vadd.f32 %v1115, %v1137
    %v1200 = vadd.f32 %v1116, %v1157
    %v1201 = vadd.f32 %v1117, %v1177
    %v1202 = vadd.f32 %v1118, %v1197
    %v1203 = vmul.f32 %v1199, 0.5
    %v1204 = vtanh.pop %v1203
    %v1205 = vadd.f32 %v1204, 1.0
    %v1206 = vmul.f32 %v1205, 0.5
    %v1207 = vmul.f32 %v1200, 0.5
    %v1208 = vtanh.pop %v1207
    %v1209 = vadd.f32 %v1208, 1.0
    %v1210 = vmul.f32 %v1209, 0.5
    %v1211 = vtanh.pop %v1201
    %v1212 = vmul.f32 %v1202, 0.5
    %v1213 = vtanh.pop %v1212
    %v1214 = vadd.f32 %v1213, 1.0
    %v1215 = vmul.f32 %v1214, 0.5
    %v1216 = vmul.f32 %v1210, %v1109
    %v1217 = vmul.f32 %v1206, %v1211
    %v1218 = vadd.f32 %v1216, %v1217
    %v1219 = vtanh.pop %v1218
    %v1220 = vmul.f32 %v1215, %v1219
    %s1221 = scalar_lea.vmem [#allocation3], 48
    %1222 = vst [vmem:[%s1221] sm:$0xff] %v1220
    %s1223 = scalar_lea.vmem [#allocation2], 224
    %v1224 = vld [vmem:[%s1223] sm:$0xff]
    %v1225 = vld [vmem:[%s1223 + $0x8] sm:$0xff]
    %v1226 = vld [vmem:[%s1223 + $0x10] sm:$0xff]
    %v1227 = vld [vmem:[%s1223 + $0x18] sm:$0xff]
    %1228 = vmatpush.msra.mxu0 %v456
    %1229 = vmatpush.msra.mxu0 %v452
    %1230 = vmatpush.msra.mxu0 %v448
    %1231 = vmatpush.msra.mxu0 %v444
    %1232 = vmatpush.msra.mxu0 %v440
    %1233 = vmatpush.msra.mxu0 %v436
    %1234 = vmatpush.msra.mxu0 %v432
    %1235 = vmatpush.msra.mxu0 %v428
    %1236 = vmatpush.msra.mxu0 %v424
    %1237 = vmatpush.msra.mxu0 %v420
    %1238 = vmatpush.msra.mxu0 %v416
    %1239 = vmatpush.msra.mxu0 %v412
    %1240 = vmatpush.msra.mxu0 %v408
    %1241 = vmatpush.msra.mxu0 %v404
    %1242 = vmatpush.msra.mxu0 %v400
    %1243 = vmatpush.msra.mxu0 %v396
    %1244 = vmatmul.f32.gmra.mxu0 %v1220
    %v1245 = vpop.f32.mrf.mxu0
    %v1246 = vadd.f32 0.0, %v1245
    %1247 = vdwg.mxu0
    %1248 = vmatpush.msra.mxu0 %v457
    %1249 = vmatpush.msra.mxu0 %v453
    %1250 = vmatpush.msra.mxu0 %v449
    %1251 = vmatpush.msra.mxu0 %v445
    %1252 = vmatpush.msra.mxu0 %v441
    %1253 = vmatpush.msra.mxu0 %v437
    %1254 = vmatpush.msra.mxu0 %v433
    %1255 = vmatpush.msra.mxu0 %v429
    %1256 = vmatpush.msra.mxu0 %v425
    %1257 = vmatpush.msra.mxu0 %v421
    %1258 = vmatpush.msra.mxu0 %v417
    %1259 = vmatpush.msra.mxu0 %v413
    %1260 = vmatpush.msra.mxu0 %v409
    %1261 = vmatpush.msra.mxu0 %v405
    %1262 = vmatpush.msra.mxu0 %v401
    %1263 = vmatpush.msra.mxu0 %v397
    %1264 = vmatmul.f32.gmra.mxu0 %v1220
    %v1265 = vpop.f32.mrf.mxu0
    %v1266 = vadd.f32 0.0, %v1265
    %1267 = vdwg.mxu0
    %1268 = vmatpush.msra.mxu0 %v458
    %1269 = vmatpush.msra.mxu0 %v454
    %1270 = vmatpush.msra.mxu0 %v450
    %1271 = vmatpush.msra.mxu0 %v446
    %1272 = vmatpush.msra.mxu0 %v442
    %1273 = vmatpush.msra.mxu0 %v438
    %1274 = vmatpush.msra.mxu0 %v434
    %1275 = vmatpush.msra.mxu0 %v430
    %1276 = vmatpush.msra.mxu0 %v426
    %1277 = vmatpush.msra.mxu0 %v422
    %1278 = vmatpush.msra.mxu0 %v418
    %1279 = vmatpush.msra.mxu0 %v414
    %1280 = vmatpush.msra.mxu0 %v410
    %1281 = vmatpush.msra.mxu0 %v406
    %1282 = vmatpush.msra.mxu0 %v402
    %1283 = vmatpush.msra.mxu0 %v398
    %1284 = vmatmul.f32.gmra.mxu0 %v1220
    %v1285 = vpop.f32.mrf.mxu0
    %v1286 = vadd.f32 0.0, %v1285
    %1287 = vdwg.mxu0
    %1288 = vmatpush.msra.mxu0 %v459
    %1289 = vmatpush.msra.mxu0 %v455
    %1290 = vmatpush.msra.mxu0 %v451
    %1291 = vmatpush.msra.mxu0 %v447
    %1292 = vmatpush.msra.mxu0 %v443
    %1293 = vmatpush.msra.mxu0 %v439
    %1294 = vmatpush.msra.mxu0 %v435
    %1295 = vmatpush.msra.mxu0 %v431
    %1296 = vmatpush.msra.mxu0 %v427
    %1297 = vmatpush.msra.mxu0 %v423
    %1298 = vmatpush.msra.mxu0 %v419
    %1299 = vmatpush.msra.mxu0 %v415
    %1300 = vmatpush.msra.mxu0 %v411
    %1301 = vmatpush.msra.mxu0 %v407
    %1302 = vmatpush.msra.mxu0 %v403
    %1303 = vmatpush.msra.mxu0 %v399
    %1304 = vmatmul.f32.gmra.mxu0 %v1220
    %v1305 = vpop.f32.mrf.mxu0
    %v1306 = vadd.f32 0.0, %v1305
    %1307 = vdwg.mxu0
    %v1308 = vadd.f32 %v1224, %v1246
    %v1309 = vadd.f32 %v1225, %v1266
    %v1310 = vadd.f32 %v1226, %v1286
    %v1311 = vadd.f32 %v1227, %v1306
    %v1312 = vmul.f32 %v1308, 0.5
    %v1313 = vtanh.pop %v1312
    %v1314 = vadd.f32 %v1313, 1.0
    %v1315 = vmul.f32 %v1314, 0.5
    %v1316 = vmul.f32 %v1309, 0.5
    %v1317 = vtanh.pop %v1316
    %v1318 = vadd.f32 %v1317, 1.0
    %v1319 = vmul.f32 %v1318, 0.5
    %v1320 = vtanh.pop %v1310
    %v1321 = vmul.f32 %v1311, 0.5
    %v1322 = vtanh.pop %v1321
    %v1323 = vadd.f32 %v1322, 1.0
    %v1324 = vmul.f32 %v1323, 0.5
    %v1325 = vmul.f32 %v1319, %v1218
    %v1326 = vmul.f32 %v1315, %v1320
    %v1327 = vadd.f32 %v1325, %v1326
    %v1328 = vtanh.pop %v1327
    %v1329 = vmul.f32 %v1324, %v1328
    %s1330 = scalar_lea.vmem [#allocation3], 56
    %1331 = vst [vmem:[%s1330] sm:$0xff] %v1329
    %1332 = vst [vmem:[#allocation4] sm:$0xff] %v1329
    %1333 = vst [vmem:[#allocation5] sm:$0xff] %v1327
    %v1334 = vld [vmem:[#allocation3] sm:$0xff]
    %v1335 = vld [vmem:[#allocation3 + $0x8] sm:$0xff]
    %v1336 = vld [vmem:[#allocation3 + $0x10] sm:$0xff]
    %v1337 = vld [vmem:[#allocation3 + $0x18] sm:$0xff]
    %v1338 = vld [vmem:[#allocation3 + $0x20] sm:$0xff]
    %v1339 = vld [vmem:[#allocation3 + $0x28] sm:$0xff]
    %v1340 = vld [vmem:[#allocation3 + $0x30] sm:$0xff]
    %v1341 = vld [vmem:[#allocation3 + $0x38] sm:$0xff]
    %v1342 = vld [vmem:[#allocation10] sm:$0xff]
    %v1343 = vld [vmem:[#allocation10 + $0x8] sm:$0xff]
    %v1344 = vld [vmem:[#allocation10 + $0x10] sm:$0xff]
    %v1345 = vld [vmem:[#allocation10 + $0x18] sm:$0xff]
    %v1346 = vld [vmem:[#allocation10 + $0x20] sm:$0xff]
    %v1347 = vld [vmem:[#allocation10 + $0x28] sm:$0xff]
    %v1348 = vld [vmem:[#allocation10 + $0x30] sm:$0xff]
    %v1349 = vld [vmem:[#allocation10 + $0x38] sm:$0xff]
    %v1350 = vld [vmem:[#allocation10 + $0x40] sm:$0xff]
    %v1351 = vld [vmem:[#allocation10 + $0x48] sm:$0xff]
    %v1352 = vld [vmem:[#allocation10 + $0x50] sm:$0xff]
    %v1353 = vld [vmem:[#allocation10 + $0x58] sm:$0xff]
    %v1354 = vld [vmem:[#allocation10 + $0x60] sm:$0xff]
    %v1355 = vld [vmem:[#allocation10 + $0x68] sm:$0xff]
    %v1356 = vld [vmem:[#allocation10 + $0x70] sm:$0xff]
    %v1357 = vld [vmem:[#allocation10 + $0x78] sm:$0xff]
    %v1358 = vld [vmem:[#allocation10 + $0x80] sm:$0xff]
    %v1359 = vld [vmem:[#allocation10 + $0x88] sm:$0xff]
    %v1360 = vld [vmem:[#allocation10 + $0x90] sm:$0xff]
    %v1361 = vld [vmem:[#allocation10 + $0x98] sm:$0xff]
    %v1362 = vld [vmem:[#allocation10 + $0xa0] sm:$0xff]
    %v1363 = vld [vmem:[#allocation10 + $0xa8] sm:$0xff]
    %v1364 = vld [vmem:[#allocation10 + $0xb0] sm:$0xff]
    %v1365 = vld [vmem:[#allocation10 + $0xb8] sm:$0xff]
    %v1366 = vld [vmem:[#allocation10 + $0xc0] sm:$0xff]
    %v1367 = vld [vmem:[#allocation10 + $0xc8] sm:$0xff]
    %v1368 = vld [vmem:[#allocation10 + $0xd0] sm:$0xff]
    %v1369 = vld [vmem:[#allocation10 + $0xd8] sm:$0xff]
    %v1370 = vld [vmem:[#allocation10 + $0xe0] sm:$0xff]
    %v1371 = vld [vmem:[#allocation10 + $0xe8] sm:$0xff]
    %v1372 = vld [vmem:[#allocation10 + $0xf0] sm:$0xff]
    %v1373 = vld [vmem:[#allocation10 + $0xf8] sm:$0xff]
    %v1374 = vld [vmem:[#allocation10 + $0x100] sm:$0xff]
    %v1375 = vld [vmem:[#allocation10 + $0x108] sm:$0xff]
    %v1376 = vld [vmem:[#allocation10 + $0x110] sm:$0xff]
    %v1377 = vld [vmem:[#allocation10 + $0x118] sm:$0xff]
    %v1378 = vld [vmem:[#allocation10 + $0x120] sm:$0xff]
    %v1379 = vld [vmem:[#allocation10 + $0x128] sm:$0xff]
    %v1380 = vld [vmem:[#allocation10 + $0x130] sm:$0xff]
    %v1381 = vld [vmem:[#allocation10 + $0x138] sm:$0xff]
    %v1382 = vld [vmem:[#allocation10 + $0x140] sm:$0xff]
    %v1383 = vld [vmem:[#allocation10 + $0x148] sm:$0xff]
    %v1384 = vld [vmem:[#allocation10 + $0x150] sm:$0xff]
    %v1385 = vld [vmem:[#allocation10 + $0x158] sm:$0xff]
    %v1386 = vld [vmem:[#allocation10 + $0x160] sm:$0xff]
    %v1387 = vld [vmem:[#allocation10 + $0x168] sm:$0xff]
    %v1388 = vld [vmem:[#allocation10 + $0x170] sm:$0xff]
    %v1389 = vld [vmem:[#allocation10 + $0x178] sm:$0xff]
    %v1390 = vld [vmem:[#allocation10 + $0x180] sm:$0xff]
    %v1391 = vld [vmem:[#allocation10 + $0x188] sm:$0xff]
    %v1392 = vld [vmem:[#allocation10 + $0x190] sm:$0xff]
    %v1393 = vld [vmem:[#allocation10 + $0x198] sm:$0xff]
    %v1394 = vld [vmem:[#allocation10 + $0x1a0] sm:$0xff]
    %v1395 = vld [vmem:[#allocation10 + $0x1a8] sm:$0xff]
    %v1396 = vld [vmem:[#allocation10 + $0x1b0] sm:$0xff]
    %v1397 = vld [vmem:[#allocation10 + $0x1b8] sm:$0xff]
    %v1398 = vld [vmem:[#allocation10 + $0x1c0] sm:$0xff]
    %v1399 = vld [vmem:[#allocation10 + $0x1c8] sm:$0xff]
    %v1400 = vld [vmem:[#allocation10 + $0x1d0] sm:$0xff]
    %v1401 = vld [vmem:[#allocation10 + $0x1d8] sm:$0xff]
    %v1402 = vld [vmem:[#allocation10 + $0x1e0] sm:$0xff]
    %v1403 = vld [vmem:[#allocation10 + $0x1e8] sm:$0xff]
    %v1404 = vld [vmem:[#allocation10 + $0x1f0] sm:$0xff]
    %v1405 = vld [vmem:[#allocation10 + $0x1f8] sm:$0xff]
    %v1406 = vld [vmem:[%s6] sm:$0xf]
    %v1408 = vperm.slane %v1406, 0
    %v1409 = vperm.slane %v1406, 1
    %v1410 = vperm.slane %v1406, 2
    %v1411 = vperm.slane %v1406, 3
    %1416 = vmatpush.msra.mxu0 %v1402
    %1417 = vmatpush.msra.mxu0 %v1398
    %1418 = vmatpush.msra.mxu0 %v1394
    %1419 = vmatpush.msra.mxu0 %v1390
    %1420 = vmatpush.msra.mxu0 %v1386
    %1421 = vmatpush.msra.mxu0 %v1382
    %1422 = vmatpush.msra.mxu0 %v1378
    %1423 = vmatpush.msra.mxu0 %v1374
    %1424 = vmatpush.msra.mxu0 %v1370
    %1425 = vmatpush.msra.mxu0 %v1366
    %1426 = vmatpush.msra.mxu0 %v1362
    %1427 = vmatpush.msra.mxu0 %v1358
    %1428 = vmatpush.msra.mxu0 %v1354
    %1429 = vmatpush.msra.mxu0 %v1350
    %1430 = vmatpush.msra.mxu0 %v1346
    %1431 = vmatpush.msra.mxu0 %v1342
    %1432 = vmatmul.f32.gmra.mxu0 %v1334
    %v1433 = vpop.f32.mrf.mxu0
    %v1434 = vadd.f32 %v1408, %v1433
    %1435 = vmatmul.f32.gmra.mxu0 %v1335
    %v1436 = vpop.f32.mrf.mxu0
    %v1437 = vadd.f32 %v1408, %v1436
    %1438 = vmatmul.f32.gmra.mxu0 %v1336
    %v1439 = vpop.f32.mrf.mxu0
    %v1440 = vadd.f32 %v1408, %v1439
    %1441 = vmatmul.f32.gmra.mxu0 %v1337
    %v1442 = vpop.f32.mrf.mxu0
    %v1443 = vadd.f32 %v1408, %v1442
    %1444 = vmatmul.f32.gmra.mxu0 %v1338
    %v1445 = vpop.f32.mrf.mxu0
    %v1446 = vadd.f32 %v1408, %v1445
    %1447 = vmatmul.f32.gmra.mxu0 %v1339
    %v1448 = vpop.f32.mrf.mxu0
    %v1449 = vadd.f32 %v1408, %v1448
    %1450 = vmatmul.f32.gmra.mxu0 %v1340
    %v1451 = vpop.f32.mrf.mxu0
    %v1452 = vadd.f32 %v1408, %v1451
    %1453 = vmatmul.f32.gmra.mxu0 %v1341
    %v1454 = vpop.f32.mrf.mxu0
    %v1455 = vadd.f32 %v1408, %v1454
    %1456 = vdwg.mxu0
    %1457 = vmatpush.msra.mxu0 %v1403
    %1458 = vmatpush.msra.mxu0 %v1399
    %1459 = vmatpush.msra.mxu0 %v1395
    %1460 = vmatpush.msra.mxu0 %v1391
    %1461 = vmatpush.msra.mxu0 %v1387
    %1462 = vmatpush.msra.mxu0 %v1383
    %1463 = vmatpush.msra.mxu0 %v1379
    %1464 = vmatpush.msra.mxu0 %v1375
    %1465 = vmatpush.msra.mxu0 %v1371
    %1466 = vmatpush.msra.mxu0 %v1367
    %1467 = vmatpush.msra.mxu0 %v1363
    %1468 = vmatpush.msra.mxu0 %v1359
    %1469 = vmatpush.msra.mxu0 %v1355
    %1470 = vmatpush.msra.mxu0 %v1351
    %1471 = vmatpush.msra.mxu0 %v1347
    %1472 = vmatpush.msra.mxu0 %v1343
    %1473 = vmatmul.f32.gmra.mxu0 %v1334
    %v1474 = vpop.f32.mrf.mxu0
    %v1475 = vadd.f32 %v1409, %v1474
    %1476 = vmatmul.f32.gmra.mxu0 %v1335
    %v1477 = vpop.f32.mrf.mxu0
    %v1478 = vadd.f32 %v1409, %v1477
    %1479 = vmatmul.f32.gmra.mxu0 %v1336
    %v1480 = vpop.f32.mrf.mxu0
    %v1481 = vadd.f32 %v1409, %v1480
    %1482 = vmatmul.f32.gmra.mxu0 %v1337
    %v1483 = vpop.f32.mrf.mxu0
    %v1484 = vadd.f32 %v1409, %v1483
    %1485 = vmatmul.f32.gmra.mxu0 %v1338
    %v1486 = vpop.f32.mrf.mxu0
    %v1487 = vadd.f32 %v1409, %v1486
    %1488 = vmatmul.f32.gmra.mxu0 %v1339
    %v1489 = vpop.f32.mrf.mxu0
    %v1490 = vadd.f32 %v1409, %v1489
    %1491 = vmatmul.f32.gmra.mxu0 %v1340
    %v1492 = vpop.f32.mrf.mxu0
    %v1493 = vadd.f32 %v1409, %v1492
    %1494 = vmatmul.f32.gmra.mxu0 %v1341
    %v1495 = vpop.f32.mrf.mxu0
    %v1496 = vadd.f32 %v1409, %v1495
    %1497 = vdwg.mxu0
    %1498 = vmatpush.msra.mxu0 %v1404
    %1499 = vmatpush.msra.mxu0 %v1400
    %1500 = vmatpush.msra.mxu0 %v1396
    %1501 = vmatpush.msra.mxu0 %v1392
    %1502 = vmatpush.msra.mxu0 %v1388
    %1503 = vmatpush.msra.mxu0 %v1384
    %1504 = vmatpush.msra.mxu0 %v1380
    %1505 = vmatpush.msra.mxu0 %v1376
    %1506 = vmatpush.msra.mxu0 %v1372
    %1507 = vmatpush.msra.mxu0 %v1368
    %1508 = vmatpush.msra.mxu0 %v1364
    %1509 = vmatpush.msra.mxu0 %v1360
    %1510 = vmatpush.msra.mxu0 %v1356
    %1511 = vmatpush.msra.mxu0 %v1352
    %1512 = vmatpush.msra.mxu0 %v1348
    %1513 = vmatpush.msra.mxu0 %v1344
    %1514 = vmatmul.f32.gmra.mxu0 %v1334
    %v1515 = vpop.f32.mrf.mxu0
    %v1516 = vadd.f32 %v1410, %v1515
    %1517 = vmatmul.f32.gmra.mxu0 %v1335
    %v1518 = vpop.f32.mrf.mxu0
    %v1519 = vadd.f32 %v1410, %v1518
    %1520 = vmatmul.f32.gmra.mxu0 %v1336
    %v1521 = vpop.f32.mrf.mxu0
    %v1522 = vadd.f32 %v1410, %v1521
    %1523 = vmatmul.f32.gmra.mxu0 %v1337
    %v1524 = vpop.f32.mrf.mxu0
    %v1525 = vadd.f32 %v1410, %v1524
    %1526 = vmatmul.f32.gmra.mxu0 %v1338
    %v1527 = vpop.f32.mrf.mxu0
    %v1528 = vadd.f32 %v1410, %v1527
    %1529 = vmatmul.f32.gmra.mxu0 %v1339
    %v1530 = vpop.f32.mrf.mxu0
    %v1531 = vadd.f32 %v1410, %v1530
    %1532 = vmatmul.f32.gmra.mxu0 %v1340
    %v1533 = vpop.f32.mrf.mxu0
    %v1534 = vadd.f32 %v1410, %v1533
    %1535 = vmatmul.f32.gmra.mxu0 %v1341
    %v1536 = vpop.f32.mrf.mxu0
    %v1537 = vadd.f32 %v1410, %v1536
    %1538 = vdwg.mxu0
    %1539 = vmatpush.msra.mxu0 %v1405
    %1540 = vmatpush.msra.mxu0 %v1401
    %1541 = vmatpush.msra.mxu0 %v1397
    %1542 = vmatpush.msra.mxu0 %v1393
    %1543 = vmatpush.msra.mxu0 %v1389
    %1544 = vmatpush.msra.mxu0 %v1385
    %1545 = vmatpush.msra.mxu0 %v1381
    %1546 = vmatpush.msra.mxu0 %v1377
    %1547 = vmatpush.msra.mxu0 %v1373
    %1548 = vmatpush.msra.mxu0 %v1369
    %1549 = vmatpush.msra.mxu0 %v1365
    %1550 = vmatpush.msra.mxu0 %v1361
    %1551 = vmatpush.msra.mxu0 %v1357
    %1552 = vmatpush.msra.mxu0 %v1353
    %1553 = vmatpush.msra.mxu0 %v1349
    %1554 = vmatpush.msra.mxu0 %v1345
    %1555 = vmatmul.f32.gmra.mxu0 %v1334
    %v1556 = vpop.f32.mrf.mxu0
    %v1557 = vadd.f32 %v1411, %v1556
    %1558 = vmatmul.f32.gmra.mxu0 %v1335
    %v1559 = vpop.f32.mrf.mxu0
    %v1560 = vadd.f32 %v1411, %v1559
    %1561 = vmatmul.f32.gmra.mxu0 %v1336
    %v1562 = vpop.f32.mrf.mxu0
    %v1563 = vadd.f32 %v1411, %v1562
    %1564 = vmatmul.f32.gmra.mxu0 %v1337
    %v1565 = vpop.f32.mrf.mxu0
    %v1566 = vadd.f32 %v1411, %v1565
    %1567 = vmatmul.f32.gmra.mxu0 %v1338
    %v1568 = vpop.f32.mrf.mxu0
    %v1569 = vadd.f32 %v1411, %v1568
    %1570 = vmatmul.f32.gmra.mxu0 %v1339
    %v1571 = vpop.f32.mrf.mxu0
    %v1572 = vadd.f32 %v1411, %v1571
    %1573 = vmatmul.f32.gmra.mxu0 %v1340
    %v1574 = vpop.f32.mrf.mxu0
    %v1575 = vadd.f32 %v1411, %v1574
    %1576 = vmatmul.f32.gmra.mxu0 %v1341
    %v1577 = vpop.f32.mrf.mxu0
    %v1578 = vadd.f32 %v1411, %v1577
    %1579 = vdwg.mxu0
    %1580 = vst [vmem:[#allocation2] sm:$0xff] %v1434
    %1581 = vst [vmem:[#allocation2 + $0x8] sm:$0xff] %v1475
    %1582 = vst [vmem:[#allocation2 + $0x10] sm:$0xff] %v1516
    %1583 = vst [vmem:[#allocation2 + $0x18] sm:$0xff] %v1557
    %1584 = vst [vmem:[#allocation2 + $0x20] sm:$0xff] %v1437
    %1585 = vst [vmem:[#allocation2 + $0x28] sm:$0xff] %v1478
    %1586 = vst [vmem:[#allocation2 + $0x30] sm:$0xff] %v1519
    %1587 = vst [vmem:[#allocation2 + $0x38] sm:$0xff] %v1560
    %1588 = vst [vmem:[#allocation2 + $0x40] sm:$0xff] %v1440
    %1589 = vst [vmem:[#allocation2 + $0x48] sm:$0xff] %v1481
    %1590 = vst [vmem:[#allocation2 + $0x50] sm:$0xff] %v1522
    %1591 = vst [vmem:[#allocation2 + $0x58] sm:$0xff] %v1563
    %1592 = vst [vmem:[#allocation2 + $0x60] sm:$0xff] %v1443
    %1593 = vst [vmem:[#allocation2 + $0x68] sm:$0xff] %v1484
    %1594 = vst [vmem:[#allocation2 + $0x70] sm:$0xff] %v1525
    %1595 = vst [vmem:[#allocation2 + $0x78] sm:$0xff] %v1566
    %1596 = vst [vmem:[#allocation2 + $0x80] sm:$0xff] %v1446
    %1597 = vst [vmem:[#allocation2 + $0x88] sm:$0xff] %v1487
    %1598 = vst [vmem:[#allocation2 + $0x90] sm:$0xff] %v1528
    %1599 = vst [vmem:[#allocation2 + $0x98] sm:$0xff] %v1569
    %1600 = vst [vmem:[#allocation2 + $0xa0] sm:$0xff] %v1449
    %1601 = vst [vmem:[#allocation2 + $0xa8] sm:$0xff] %v1490
    %1602 = vst [vmem:[#allocation2 + $0xb0] sm:$0xff] %v1531
    %1603 = vst [vmem:[#allocation2 + $0xb8] sm:$0xff] %v1572
    %1604 = vst [vmem:[#allocation2 + $0xc0] sm:$0xff] %v1452
    %1605 = vst [vmem:[#allocation2 + $0xc8] sm:$0xff] %v1493
    %1606 = vst [vmem:[#allocation2 + $0xd0] sm:$0xff] %v1534
    %1607 = vst [vmem:[#allocation2 + $0xd8] sm:$0xff] %v1575
    %1608 = vst [vmem:[#allocation2 + $0xe0] sm:$0xff] %v1455
    %1609 = vst [vmem:[#allocation2 + $0xe8] sm:$0xff] %v1496
    %1610 = vst [vmem:[#allocation2 + $0xf0] sm:$0xff] %v1537
    %1611 = vst [vmem:[#allocation2 + $0xf8] sm:$0xff] %v1578
    %v1612 = vld [vmem:[#allocation11] sm:$0xff]
    %v1613 = vld [vmem:[#allocation11 + $0x8] sm:$0xff]
    %v1614 = vld [vmem:[#allocation11 + $0x10] sm:$0xff]
    %v1615 = vld [vmem:[#allocation11 + $0x18] sm:$0xff]
    %v1616 = vld [vmem:[#allocation11 + $0x20] sm:$0xff]
    %v1617 = vld [vmem:[#allocation11 + $0x28] sm:$0xff]
    %v1618 = vld [vmem:[#allocation11 + $0x30] sm:$0xff]
    %v1619 = vld [vmem:[#allocation11 + $0x38] sm:$0xff]
    %v1620 = vld [vmem:[#allocation11 + $0x40] sm:$0xff]
    %v1621 = vld [vmem:[#allocation11 + $0x48] sm:$0xff]
    %v1622 = vld [vmem:[#allocation11 + $0x50] sm:$0xff]
    %v1623 = vld [vmem:[#allocation11 + $0x58] sm:$0xff]
    %v1624 = vld [vmem:[#allocation11 + $0x60] sm:$0xff]
    %v1625 = vld [vmem:[#allocation11 + $0x68] sm:$0xff]
    %v1626 = vld [vmem:[#allocation11 + $0x70] sm:$0xff]
    %v1627 = vld [vmem:[#allocation11 + $0x78] sm:$0xff]
    %v1628 = vld [vmem:[#allocation11 + $0x80] sm:$0xff]
    %v1629 = vld [vmem:[#allocation11 + $0x88] sm:$0xff]
    %v1630 = vld [vmem:[#allocation11 + $0x90] sm:$0xff]
    %v1631 = vld [vmem:[#allocation11 + $0x98] sm:$0xff]
    %v1632 = vld [vmem:[#allocation11 + $0xa0] sm:$0xff]
    %v1633 = vld [vmem:[#allocation11 + $0xa8] sm:$0xff]
    %v1634 = vld [vmem:[#allocation11 + $0xb0] sm:$0xff]
    %v1635 = vld [vmem:[#allocation11 + $0xb8] sm:$0xff]
    %v1636 = vld [vmem:[#allocation11 + $0xc0] sm:$0xff]
    %v1637 = vld [vmem:[#allocation11 + $0xc8] sm:$0xff]
    %v1638 = vld [vmem:[#allocation11 + $0xd0] sm:$0xff]
    %v1639 = vld [vmem:[#allocation11 + $0xd8] sm:$0xff]
    %v1640 = vld [vmem:[#allocation11 + $0xe0] sm:$0xff]
    %v1641 = vld [vmem:[#allocation11 + $0xe8] sm:$0xff]
    %v1642 = vld [vmem:[#allocation11 + $0xf0] sm:$0xff]
    %v1643 = vld [vmem:[#allocation11 + $0xf8] sm:$0xff]
    %v1644 = vld [vmem:[#allocation11 + $0x100] sm:$0xff]
    %v1645 = vld [vmem:[#allocation11 + $0x108] sm:$0xff]
    %v1646 = vld [vmem:[#allocation11 + $0x110] sm:$0xff]
    %v1647 = vld [vmem:[#allocation11 + $0x118] sm:$0xff]
    %v1648 = vld [vmem:[#allocation11 + $0x120] sm:$0xff]
    %v1649 = vld [vmem:[#allocation11 + $0x128] sm:$0xff]
    %v1650 = vld [vmem:[#allocation11 + $0x130] sm:$0xff]
    %v1651 = vld [vmem:[#allocation11 + $0x138] sm:$0xff]
    %v1652 = vld [vmem:[#allocation11 + $0x140] sm:$0xff]
    %v1653 = vld [vmem:[#allocation11 + $0x148] sm:$0xff]
    %v1654 = vld [vmem:[#allocation11 + $0x150] sm:$0xff]
    %v1655 = vld [vmem:[#allocation11 + $0x158] sm:$0xff]
    %v1656 = vld [vmem:[#allocation11 + $0x160] sm:$0xff]
    %v1657 = vld [vmem:[#allocation11 + $0x168] sm:$0xff]
    %v1658 = vld [vmem:[#allocation11 + $0x170] sm:$0xff]
    %v1659 = vld [vmem:[#allocation11 + $0x178] sm:$0xff]
    %v1660 = vld [vmem:[#allocation11 + $0x180] sm:$0xff]
    %v1661 = vld [vmem:[#allocation11 + $0x188] sm:$0xff]
    %v1662 = vld [vmem:[#allocation11 + $0x190] sm:$0xff]
    %v1663 = vld [vmem:[#allocation11 + $0x198] sm:$0xff]
    %v1664 = vld [vmem:[#allocation11 + $0x1a0] sm:$0xff]
    %v1665 = vld [vmem:[#allocation11 + $0x1a8] sm:$0xff]
    %v1666 = vld [vmem:[#allocation11 + $0x1b0] sm:$0xff]
    %v1667 = vld [vmem:[#allocation11 + $0x1b8] sm:$0xff]
    %v1668 = vld [vmem:[#allocation11 + $0x1c0] sm:$0xff]
    %v1669 = vld [vmem:[#allocation11 + $0x1c8] sm:$0xff]
    %v1670 = vld [vmem:[#allocation11 + $0x1d0] sm:$0xff]
    %v1671 = vld [vmem:[#allocation11 + $0x1d8] sm:$0xff]
    %v1672 = vld [vmem:[#allocation11 + $0x1e0] sm:$0xff]
    %v1673 = vld [vmem:[#allocation11 + $0x1e8] sm:$0xff]
    %v1674 = vld [vmem:[#allocation11 + $0x1f0] sm:$0xff]
    %v1675 = vld [vmem:[#allocation11 + $0x1f8] sm:$0xff]
    %s1676 = scalar_lea.vmem [#allocation4], 8
    %v1677 = vld [vmem:[%s1676] sm:$0xff]
    %s1678 = scalar_lea.vmem [#allocation5], 8
    %v1679 = vld [vmem:[%s1678] sm:$0xff]
    %v1680 = vld [vmem:[#allocation2] sm:$0xff]
    %v1681 = vld [vmem:[#allocation2 + $0x8] sm:$0xff]
    %v1682 = vld [vmem:[#allocation2 + $0x10] sm:$0xff]
    %v1683 = vld [vmem:[#allocation2 + $0x18] sm:$0xff]
    %1684 = vmatpush.msra.mxu0 %v1672
    %1685 = vmatpush.msra.mxu0 %v1668
    %1686 = vmatpush.msra.mxu0 %v1664
    %1687 = vmatpush.msra.mxu0 %v1660
    %1688 = vmatpush.msra.mxu0 %v1656
    %1689 = vmatpush.msra.mxu0 %v1652
    %1690 = vmatpush.msra.mxu0 %v1648
    %1691 = vmatpush.msra.mxu0 %v1644
    %1692 = vmatpush.msra.mxu0 %v1640
    %1693 = vmatpush.msra.mxu0 %v1636
    %1694 = vmatpush.msra.mxu0 %v1632
    %1695 = vmatpush.msra.mxu0 %v1628
    %1696 = vmatpush.msra.mxu0 %v1624
    %1697 = vmatpush.msra.mxu0 %v1620
    %1698 = vmatpush.msra.mxu0 %v1616
    %1699 = vmatpush.msra.mxu0 %v1612
    %1700 = vmatmul.f32.gmra.mxu0 %v1677
    %v1701 = vpop.f32.mrf.mxu0
    %v1702 = vadd.f32 0.0, %v1701
    %1703 = vdwg.mxu0
    %1704 = vmatpush.msra.mxu0 %v1673
    %1705 = vmatpush.msra.mxu0 %v1669
    %1706 = vmatpush.msra.mxu0 %v1665
    %1707 = vmatpush.msra.mxu0 %v1661
    %1708 = vmatpush.msra.mxu0 %v1657
    %1709 = vmatpush.msra.mxu0 %v1653
    %1710 = vmatpush.msra.mxu0 %v1649
    %1711 = vmatpush.msra.mxu0 %v1645
    %1712 = vmatpush.msra.mxu0 %v1641
    %1713 = vmatpush.msra.mxu0 %v1637
    %1714 = vmatpush.msra.mxu0 %v1633
    %1715 = vmatpush.msra.mxu0 %v1629
    %1716 = vmatpush.msra.mxu0 %v1625
    %1717 = vmatpush.msra.mxu0 %v1621
    %1718 = vmatpush.msra.mxu0 %v1617
    %1719 = vmatpush.msra.mxu0 %v1613
    %1720 = vmatmul.f32.gmra.mxu0 %v1677
    %v1721 = vpop.f32.mrf.mxu0
    %v1722 = vadd.f32 0.0, %v1721
    %1723 = vdwg.mxu0
    %1724 = vmatpush.msra.mxu0 %v1674
    %1725 = vmatpush.msra.mxu0 %v1670
    %1726 = vmatpush.msra.mxu0 %v1666
    %1727 = vmatpush.msra.mxu0 %v1662
    %1728 = vmatpush.msra.mxu0 %v1658
    %1729 = vmatpush.msra.mxu0 %v1654
    %1730 = vmatpush.msra.mxu0 %v1650
    %1731 = vmatpush.msra.mxu0 %v1646
    %1732 = vmatpush.msra.mxu0 %v1642
    %1733 = vmatpush.msra.mxu0 %v1638
    %1734 = vmatpush.msra.mxu0 %v1634
    %1735 = vmatpush.msra.mxu0 %v1630
    %1736 = vmatpush.msra.mxu0 %v1626
    %1737 = vmatpush.msra.mxu0 %v1622
    %1738 = vmatpush.msra.mxu0 %v1618
    %1739 = vmatpush.msra.mxu0 %v1614
    %1740 = vmatmul.f32.gmra.mxu0 %v1677
    %v1741 = vpop.f32.mrf.mxu0
    %v1742 = vadd.f32 0.0, %v1741
    %1743 = vdwg.mxu0
    %1744 = vmatpush.msra.mxu0 %v1675
    %1745 = vmatpush.msra.mxu0 %v1671
    %1746 = vmatpush.msra.mxu0 %v1667
    %1747 = vmatpush.msra.mxu0 %v1663
    %1748 = vmatpush.msra.mxu0 %v1659
    %1749 = vmatpush.msra.mxu0 %v1655
    %1750 = vmatpush.msra.mxu0 %v1651
    %1751 = vmatpush.msra.mxu0 %v1647
    %1752 = vmatpush.msra.mxu0 %v1643
    %1753 = vmatpush.msra.mxu0 %v1639
    %1754 = vmatpush.msra.mxu0 %v1635
    %1755 = vmatpush.msra.mxu0 %v1631
    %1756 = vmatpush.msra.mxu0 %v1627
    %1757 = vmatpush.msra.mxu0 %v1623
    %1758 = vmatpush.msra.mxu0 %v1619
    %1759 = vmatpush.msra.mxu0 %v1615
    %1760 = vmatmul.f32.gmra.mxu0 %v1677
    %v1761 = vpop.f32.mrf.mxu0
    %v1762 = vadd.f32 0.0, %v1761
    %1763 = vdwg.mxu0
    %v1764 = vadd.f32 %v1680, %v1702
    %v1765 = vadd.f32 %v1681, %v1722
    %v1766 = vadd.f32 %v1682, %v1742
    %v1767 = vadd.f32 %v1683, %v1762
    %v1768 = vmul.f32 %v1764, 0.5
    %v1769 = vtanh.pop %v1768
    %v1770 = vadd.f32 %v1769, 1.0
    %v1771 = vmul.f32 %v1770, 0.5
    %v1772 = vmul.f32 %v1765, 0.5
    %v1773 = vtanh.pop %v1772
    %v1774 = vadd.f32 %v1773, 1.0
    %v1775 = vmul.f32 %v1774, 0.5
    %v1776 = vtanh.pop %v1766
    %v1777 = vmul.f32 %v1767, 0.5
    %v1778 = vtanh.pop %v1777
    %v1779 = vadd.f32 %v1778, 1.0
    %v1780 = vmul.f32 %v1779, 0.5
    %v1781 = vmul.f32 %v1775, %v1679
    %v1782 = vmul.f32 %v1771, %v1776
    %v1783 = vadd.f32 %v1781, %v1782
    %v1784 = vtanh.pop %v1783
    %v1785 = vmul.f32 %v1780, %v1784
    %1786 = vst [vmem:[#allocation3] sm:$0xff] %v1785
    %v1787 = vld [vmem:[%s569] sm:$0xff]
    %v1788 = vld [vmem:[%s569 + $0x8] sm:$0xff]
    %v1789 = vld [vmem:[%s569 + $0x10] sm:$0xff]
    %v1790 = vld [vmem:[%s569 + $0x18] sm:$0xff]
    %1791 = vmatpush.msra.mxu0 %v1672
    %1792 = vmatpush.msra.mxu0 %v1668
    %1793 = vmatpush.msra.mxu0 %v1664
    %1794 = vmatpush.msra.mxu0 %v1660
    %1795 = vmatpush.msra.mxu0 %v1656
    %1796 = vmatpush.msra.mxu0 %v1652
    %1797 = vmatpush.msra.mxu0 %v1648
    %1798 = vmatpush.msra.mxu0 %v1644
    %1799 = vmatpush.msra.mxu0 %v1640
    %1800 = vmatpush.msra.mxu0 %v1636
    %1801 = vmatpush.msra.mxu0 %v1632
    %1802 = vmatpush.msra.mxu0 %v1628
    %1803 = vmatpush.msra.mxu0 %v1624
    %1804 = vmatpush.msra.mxu0 %v1620
    %1805 = vmatpush.msra.mxu0 %v1616
    %1806 = vmatpush.msra.mxu0 %v1612
    %1807 = vmatmul.f32.gmra.mxu0 %v1785
    %v1808 = vpop.f32.mrf.mxu0
    %v1809 = vadd.f32 0.0, %v1808
    %1810 = vdwg.mxu0
    %1811 = vmatpush.msra.mxu0 %v1673
    %1812 = vmatpush.msra.mxu0 %v1669
    %1813 = vmatpush.msra.mxu0 %v1665
    %1814 = vmatpush.msra.mxu0 %v1661
    %1815 = vmatpush.msra.mxu0 %v1657
    %1816 = vmatpush.msra.mxu0 %v1653
    %1817 = vmatpush.msra.mxu0 %v1649
    %1818 = vmatpush.msra.mxu0 %v1645
    %1819 = vmatpush.msra.mxu0 %v1641
    %1820 = vmatpush.msra.mxu0 %v1637
    %1821 = vmatpush.msra.mxu0 %v1633
    %1822 = vmatpush.msra.mxu0 %v1629
    %1823 = vmatpush.msra.mxu0 %v1625
    %1824 = vmatpush.msra.mxu0 %v1621
    %1825 = vmatpush.msra.mxu0 %v1617
    %1826 = vmatpush.msra.mxu0 %v1613
    %1827 = vmatmul.f32.gmra.mxu0 %v1785
    %v1828 = vpop.f32.mrf.mxu0
    %v1829 = vadd.f32 0.0, %v1828
    %1830 = vdwg.mxu0
    %1831 = vmatpush.msra.mxu0 %v1674
    %1832 = vmatpush.msra.mxu0 %v1670
    %1833 = vmatpush.msra.mxu0 %v1666
    %1834 = vmatpush.msra.mxu0 %v1662
    %1835 = vmatpush.msra.mxu0 %v1658
    %1836 = vmatpush.msra.mxu0 %v1654
    %1837 = vmatpush.msra.mxu0 %v1650
    %1838 = vmatpush.msra.mxu0 %v1646
    %1839 = vmatpush.msra.mxu0 %v1642
    %1840 = vmatpush.msra.mxu0 %v1638
    %1841 = vmatpush.msra.mxu0 %v1634
    %1842 = vmatpush.msra.mxu0 %v1630
    %1843 = vmatpush.msra.mxu0 %v1626
    %1844 = vmatpush.msra.mxu0 %v1622
    %1845 = vmatpush.msra.mxu0 %v1618
    %1846 = vmatpush.msra.mxu0 %v1614
    %1847 = vmatmul.f32.gmra.mxu0 %v1785
    %v1848 = vpop.f32.mrf.mxu0
    %v1849 = vadd.f32 0.0, %v1848
    %1850 = vdwg.mxu0
    %1851 = vmatpush.msra.mxu0 %v1675
    %1852 = vmatpush.msra.mxu0 %v1671
    %1853 = vmatpush.msra.mxu0 %v1667
    %1854 = vmatpush.msra.mxu0 %v1663
    %1855 = vmatpush.msra.mxu0 %v1659
    %1856 = vmatpush.msra.mxu0 %v1655
    %1857 = vmatpush.msra.mxu0 %v1651
    %1858 = vmatpush.msra.mxu0 %v1647
    %1859 = vmatpush.msra.mxu0 %v1643
    %1860 = vmatpush.msra.mxu0 %v1639
    %1861 = vmatpush.msra.mxu0 %v1635
    %1862 = vmatpush.msra.mxu0 %v1631
    %1863 = vmatpush.msra.mxu0 %v1627
    %1864 = vmatpush.msra.mxu0 %v1623
    %1865 = vmatpush.msra.mxu0 %v1619
    %1866 = vmatpush.msra.mxu0 %v1615
    %1867 = vmatmul.f32.gmra.mxu0 %v1785
    %v1868 = vpop.f32.mrf.mxu0
    %v1869 = vadd.f32 0.0, %v1868
    %1870 = vdwg.mxu0
    %v1871 = vadd.f32 %v1787, %v1809
    %v1872 = vadd.f32 %v1788, %v1829
    %v1873 = vadd.f32 %v1789, %v1849
    %v1874 = vadd.f32 %v1790, %v1869
    %v1875 = vmul.f32 %v1871, 0.5
    %v1876 = vtanh.pop %v1875
    %v1877 = vadd.f32 %v1876, 1.0
    %v1878 = vmul.f32 %v1877, 0.5
    %v1879 = vmul.f32 %v1872, 0.5
    %v1880 = vtanh.pop %v1879
    %v1881 = vadd.f32 %v1880, 1.0
    %v1882 = vmul.f32 %v1881, 0.5
    %v1883 = vtanh.pop %v1873
    %v1884 = vmul.f32 %v1874, 0.5
    %v1885 = vtanh.pop %v1884
    %v1886 = vadd.f32 %v1885, 1.0
    %v1887 = vmul.f32 %v1886, 0.5
    %v1888 = vmul.f32 %v1882, %v1783
    %v1889 = vmul.f32 %v1878, %v1883
    %v1890 = vadd.f32 %v1888, %v1889
    %v1891 = vtanh.pop %v1890
    %v1892 = vmul.f32 %v1887, %v1891
    %1893 = vst [vmem:[%s676] sm:$0xff] %v1892
    %v1894 = vld [vmem:[%s678] sm:$0xff]
    %v1895 = vld [vmem:[%s678 + $0x8] sm:$0xff]
    %v1896 = vld [vmem:[%s678 + $0x10] sm:$0xff]
    %v1897 = vld [vmem:[%s678 + $0x18] sm:$0xff]
    %1898 = vmatpush.msra.mxu0 %v1672
    %1899 = vmatpush.msra.mxu0 %v1668
    %1900 = vmatpush.msra.mxu0 %v1664
    %1901 = vmatpush.msra.mxu0 %v1660
    %1902 = vmatpush.msra.mxu0 %v1656
    %1903 = vmatpush.msra.mxu0 %v1652
    %1904 = vmatpush.msra.mxu0 %v1648
    %1905 = vmatpush.msra.mxu0 %v1644
    %1906 = vmatpush.msra.mxu0 %v1640
    %1907 = vmatpush.msra.mxu0 %v1636
    %1908 = vmatpush.msra.mxu0 %v1632
    %1909 = vmatpush.msra.mxu0 %v1628
    %1910 = vmatpush.msra.mxu0 %v1624
    %1911 = vmatpush.msra.mxu0 %v1620
    %1912 = vmatpush.msra.mxu0 %v1616
    %1913 = vmatpush.msra.mxu0 %v1612
    %1914 = vmatmul.f32.gmra.mxu0 %v1892
    %v1915 = vpop.f32.mrf.mxu0
    %v1916 = vadd.f32 0.0, %v1915
    %1917 = vdwg.mxu0
    %1918 = vmatpush.msra.mxu0 %v1673
    %1919 = vmatpush.msra.mxu0 %v1669
    %1920 = vmatpush.msra.mxu0 %v1665
    %1921 = vmatpush.msra.mxu0 %v1661
    %1922 = vmatpush.msra.mxu0 %v1657
    %1923 = vmatpush.msra.mxu0 %v1653
    %1924 = vmatpush.msra.mxu0 %v1649
    %1925 = vmatpush.msra.mxu0 %v1645
    %1926 = vmatpush.msra.mxu0 %v1641
    %1927 = vmatpush.msra.mxu0 %v1637
    %1928 = vmatpush.msra.mxu0 %v1633
    %1929 = vmatpush.msra.mxu0 %v1629
    %1930 = vmatpush.msra.mxu0 %v1625
    %1931 = vmatpush.msra.mxu0 %v1621
    %1932 = vmatpush.msra.mxu0 %v1617
    %1933 = vmatpush.msra.mxu0 %v1613
    %1934 = vmatmul.f32.gmra.mxu0 %v1892
    %v1935 = vpop.f32.mrf.mxu0
    %v1936 = vadd.f32 0.0, %v1935
    %1937 = vdwg.mxu0
    %1938 = vmatpush.msra.mxu0 %v1674
    %1939 = vmatpush.msra.mxu0 %v1670
    %1940 = vmatpush.msra.mxu0 %v1666
    %1941 = vmatpush.msra.mxu0 %v1662
    %1942 = vmatpush.msra.mxu0 %v1658
    %1943 = vmatpush.msra.mxu0 %v1654
    %1944 = vmatpush.msra.mxu0 %v1650
    %1945 = vmatpush.msra.mxu0 %v1646
    %1946 = vmatpush.msra.mxu0 %v1642
    %1947 = vmatpush.msra.mxu0 %v1638
    %1948 = vmatpush.msra.mxu0 %v1634
    %1949 = vmatpush.msra.mxu0 %v1630
    %1950 = vmatpush.msra.mxu0 %v1626
    %1951 = vmatpush.msra.mxu0 %v1622
    %1952 = vmatpush.msra.mxu0 %v1618
    %1953 = vmatpush.msra.mxu0 %v1614
    %1954 = vmatmul.f32.gmra.mxu0 %v1892
    %v1955 = vpop.f32.mrf.mxu0
    %v1956 = vadd.f32 0.0, %v1955
    %1957 = vdwg.mxu0
    %1958 = vmatpush.msra.mxu0 %v1675
    %1959 = vmatpush.msra.mxu0 %v1671
    %1960 = vmatpush.msra.mxu0 %v1667
    %1961 = vmatpush.msra.mxu0 %v1663
    %1962 = vmatpush.msra.mxu0 %v1659
    %1963 = vmatpush.msra.mxu0 %v1655
    %1964 = vmatpush.msra.mxu0 %v1651
    %1965 = vmatpush.msra.mxu0 %v1647
    %1966 = vmatpush.msra.mxu0 %v1643
    %1967 = vmatpush.msra.mxu0 %v1639
    %1968 = vmatpush.msra.mxu0 %v1635
    %1969 = vmatpush.msra.mxu0 %v1631
    %1970 = vmatpush.msra.mxu0 %v1627
    %1971 = vmatpush.msra.mxu0 %v1623
    %1972 = vmatpush.msra.mxu0 %v1619
    %1973 = vmatpush.msra.mxu0 %v1615
    %1974 = vmatmul.f32.gmra.mxu0 %v1892
    %v1975 = vpop.f32.mrf.mxu0
    %v1976 = vadd.f32 0.0, %v1975
    %1977 = vdwg.mxu0
    %v1978 = vadd.f32 %v1894, %v1916
    %v1979 = vadd.f32 %v1895, %v1936
    %v1980 = vadd.f32 %v1896, %v1956
    %v1981 = vadd.f32 %v1897, %v1976
    %v1982 = vmul.f32 %v1978, 0.5
    %v1983 = vtanh.pop %v1982
    %v1984 = vadd.f32 %v1983, 1.0
    %v1985 = vmul.f32 %v1984, 0.5
    %v1986 = vmul.f32 %v1979, 0.5
    %v1987 = vtanh.pop %v1986
    %v1988 = vadd.f32 %v1987, 1.0
    %v1989 = vmul.f32 %v1988, 0.5
    %v1990 = vtanh.pop %v1980
    %v1991 = vmul.f32 %v1981, 0.5
    %v1992 = vtanh.pop %v1991
    %v1993 = vadd.f32 %v1992, 1.0
    %v1994 = vmul.f32 %v1993, 0.5
    %v1995 = vmul.f32 %v1989, %v1890
    %v1996 = vmul.f32 %v1985, %v1990
    %v1997 = vadd.f32 %v1995, %v1996
    %v1998 = vtanh.pop %v1997
    %v1999 = vmul.f32 %v1994, %v1998
    %2000 = vst [vmem:[%s785] sm:$0xff] %v1999
    %v2001 = vld [vmem:[%s787] sm:$0xff]
    %v2002 = vld [vmem:[%s787 + $0x8] sm:$0xff]
    %v2003 = vld [vmem:[%s787 + $0x10] sm:$0xff]
    %v2004 = vld [vmem:[%s787 + $0x18] sm:$0xff]
    %2005 = vmatpush.msra.mxu0 %v1672
    %2006 = vmatpush.msra.mxu0 %v1668
    %2007 = vmatpush.msra.mxu0 %v1664
    %2008 = vmatpush.msra.mxu0 %v1660
    %2009 = vmatpush.msra.mxu0 %v1656
    %2010 = vmatpush.msra.mxu0 %v1652
    %2011 = vmatpush.msra.mxu0 %v1648
    %2012 = vmatpush.msra.mxu0 %v1644
    %2013 = vmatpush.msra.mxu0 %v1640
    %2014 = vmatpush.msra.mxu0 %v1636
    %2015 = vmatpush.msra.mxu0 %v1632
    %2016 = vmatpush.msra.mxu0 %v1628
    %2017 = vmatpush.msra.mxu0 %v1624
    %2018 = vmatpush.msra.mxu0 %v1620
    %2019 = vmatpush.msra.mxu0 %v1616
    %2020 = vmatpush.msra.mxu0 %v1612
    %2021 = vmatmul.f32.gmra.mxu0 %v1999
    %v2022 = vpop.f32.mrf.mxu0
    %v2023 = vadd.f32 0.0, %v2022
    %2024 = vdwg.mxu0
    %2025 = vmatpush.msra.mxu0 %v1673
    %2026 = vmatpush.msra.mxu0 %v1669
    %2027 = vmatpush.msra.mxu0 %v1665
    %2028 = vmatpush.msra.mxu0 %v1661
    %2029 = vmatpush.msra.mxu0 %v1657
    %2030 = vmatpush.msra.mxu0 %v1653
    %2031 = vmatpush.msra.mxu0 %v1649
    %2032 = vmatpush.msra.mxu0 %v1645
    %2033 = vmatpush.msra.mxu0 %v1641
    %2034 = vmatpush.msra.mxu0 %v1637
    %2035 = vmatpush.msra.mxu0 %v1633
    %2036 = vmatpush.msra.mxu0 %v1629
    %2037 = vmatpush.msra.mxu0 %v1625
    %2038 = vmatpush.msra.mxu0 %v1621
    %2039 = vmatpush.msra.mxu0 %v1617
    %2040 = vmatpush.msra.mxu0 %v1613
    %2041 = vmatmul.f32.gmra.mxu0 %v1999
    %v2042 = vpop.f32.mrf.mxu0
    %v2043 = vadd.f32 0.0, %v2042
    %2044 = vdwg.mxu0
    %2045 = vmatpush.msra.mxu0 %v1674
    %2046 = vmatpush.msra.mxu0 %v1670
    %2047 = vmatpush.msra.mxu0 %v1666
    %2048 = vmatpush.msra.mxu0 %v1662
    %2049 = vmatpush.msra.mxu0 %v1658
    %2050 = vmatpush.msra.mxu0 %v1654
    %2051 = vmatpush.msra.mxu0 %v1650
    %2052 = vmatpush.msra.mxu0 %v1646
    %2053 = vmatpush.msra.mxu0 %v1642
    %2054 = vmatpush.msra.mxu0 %v1638
    %2055 = vmatpush.msra.mxu0 %v1634
    %2056 = vmatpush.msra.mxu0 %v1630
    %2057 = vmatpush.msra.mxu0 %v1626
    %2058 = vmatpush.msra.mxu0 %v1622
    %2059 = vmatpush.msra.mxu0 %v1618
    %2060 = vmatpush.msra.mxu0 %v1614
    %2061 = vmatmul.f32.gmra.mxu0 %v1999
    %v2062 = vpop.f32.mrf.mxu0
    %v2063 = vadd.f32 0.0, %v2062
    %2064 = vdwg.mxu0
    %2065 = vmatpush.msra.mxu0 %v1675
    %2066 = vmatpush.msra.mxu0 %v1671
    %2067 = vmatpush.msra.mxu0 %v1667
    %2068 = vmatpush.msra.mxu0 %v1663
    %2069 = vmatpush.msra.mxu0 %v1659
    %2070 = vmatpush.msra.mxu0 %v1655
    %2071 = vmatpush.msra.mxu0 %v1651
    %2072 = vmatpush.msra.mxu0 %v1647
    %2073 = vmatpush.msra.mxu0 %v1643
    %2074 = vmatpush.msra.mxu0 %v1639
    %2075 = vmatpush.msra.mxu0 %v1635
    %2076 = vmatpush.msra.mxu0 %v1631
    %2077 = vmatpush.msra.mxu0 %v1627
    %2078 = vmatpush.msra.mxu0 %v1623
    %2079 = vmatpush.msra.mxu0 %v1619
    %2080 = vmatpush.msra.mxu0 %v1615
    %2081 = vmatmul.f32.gmra.mxu0 %v1999
    %v2082 = vpop.f32.mrf.mxu0
    %v2083 = vadd.f32 0.0, %v2082
    %2084 = vdwg.mxu0
    %v2085 = vadd.f32 %v2001, %v2023
    %v2086 = vadd.f32 %v2002, %v2043
    %v2087 = vadd.f32 %v2003, %v2063
    %v2088 = vadd.f32 %v2004, %v2083
    %v2089 = vmul.f32 %v2085, 0.5
    %v2090 = vtanh.pop %v2089
    %v2091 = vadd.f32 %v2090, 1.0
    %v2092 = vmul.f32 %v2091, 0.5
    %v2093 = vmul.f32 %v2086, 0.5
    %v2094 = vtanh.pop %v2093
    %v2095 = vadd.f32 %v2094, 1.0
    %v2096 = vmul.f32 %v2095, 0.5
    %v2097 = vtanh.pop %v2087
    %v2098 = vmul.f32 %v2088, 0.5
    %v2099 = vtanh.pop %v2098
    %v2100 = vadd.f32 %v2099, 1.0
    %v2101 = vmul.f32 %v2100, 0.5
    %v2102 = vmul.f32 %v2096, %v1997
    %v2103 = vmul.f32 %v2092, %v2097
    %v2104 = vadd.f32 %v2102, %v2103
    %v2105 = vtanh.pop %v2104
    %v2106 = vmul.f32 %v2101, %v2105
    %2107 = vst [vmem:[%s894] sm:$0xff] %v2106
    %v2108 = vld [vmem:[%s896] sm:$0xff]
    %v2109 = vld [vmem:[%s896 + $0x8] sm:$0xff]
    %v2110 = vld [vmem:[%s896 + $0x10] sm:$0xff]
    %v2111 = vld [vmem:[%s896 + $0x18] sm:$0xff]
    %2112 = vmatpush.msra.mxu0 %v1672
    %2113 = vmatpush.msra.mxu0 %v1668
    %2114 = vmatpush.msra.mxu0 %v1664
    %2115 = vmatpush.msra.mxu0 %v1660
    %2116 = vmatpush.msra.mxu0 %v1656
    %2117 = vmatpush.msra.mxu0 %v1652
    %2118 = vmatpush.msra.mxu0 %v1648
    %2119 = vmatpush.msra.mxu0 %v1644
    %2120 = vmatpush.msra.mxu0 %v1640
    %2121 = vmatpush.msra.mxu0 %v1636
    %2122 = vmatpush.msra.mxu0 %v1632
    %2123 = vmatpush.msra.mxu0 %v1628
    %2124 = vmatpush.msra.mxu0 %v1624
    %2125 = vmatpush.msra.mxu0 %v1620
    %2126 = vmatpush.msra.mxu0 %v1616
    %2127 = vmatpush.msra.mxu0 %v1612
    %2128 = vmatmul.f32.gmra.mxu0 %v2106
    %v2129 = vpop.f32.mrf.mxu0
    %v2130 = vadd.f32 0.0, %v2129
    %2131 = vdwg.mxu0
    %2132 = vmatpush.msra.mxu0 %v1673
    %2133 = vmatpush.msra.mxu0 %v1669
    %2134 = vmatpush.msra.mxu0 %v1665
    %2135 = vmatpush.msra.mxu0 %v1661
    %2136 = vmatpush.msra.mxu0 %v1657
    %2137 = vmatpush.msra.mxu0 %v1653
    %2138 = vmatpush.msra.mxu0 %v1649
    %2139 = vmatpush.msra.mxu0 %v1645
    %2140 = vmatpush.msra.mxu0 %v1641
    %2141 = vmatpush.msra.mxu0 %v1637
    %2142 = vmatpush.msra.mxu0 %v1633
    %2143 = vmatpush.msra.mxu0 %v1629
    %2144 = vmatpush.msra.mxu0 %v1625
    %2145 = vmatpush.msra.mxu0 %v1621
    %2146 = vmatpush.msra.mxu0 %v1617
    %2147 = vmatpush.msra.mxu0 %v1613
    %2148 = vmatmul.f32.gmra.mxu0 %v2106
    %v2149 = vpop.f32.mrf.mxu0
    %v2150 = vadd.f32 0.0, %v2149
    %2151 = vdwg.mxu0
    %2152 = vmatpush.msra.mxu0 %v1674
    %2153 = vmatpush.msra.mxu0 %v1670
    %2154 = vmatpush.msra.mxu0 %v1666
    %2155 = vmatpush.msra.mxu0 %v1662
    %2156 = vmatpush.msra.mxu0 %v1658
    %2157 = vmatpush.msra.mxu0 %v1654
    %2158 = vmatpush.msra.mxu0 %v1650
    %2159 = vmatpush.msra.mxu0 %v1646
    %2160 = vmatpush.msra.mxu0 %v1642
    %2161 = vmatpush.msra.mxu0 %v1638
    %2162 = vmatpush.msra.mxu0 %v1634
    %2163 = vmatpush.msra.mxu0 %v1630
    %2164 = vmatpush.msra.mxu0 %v1626
    %2165 = vmatpush.msra.mxu0 %v1622
    %2166 = vmatpush.msra.mxu0 %v1618
    %2167 = vmatpush.msra.mxu0 %v1614
    %2168 = vmatmul.f32.gmra.mxu0 %v2106
    %v2169 = vpop.f32.mrf.mxu0
    %v2170 = vadd.f32 0.0, %v2169
    %2171 = vdwg.mxu0
    %2172 = vmatpush.msra.mxu0 %v1675
    %2173 = vmatpush.msra.mxu0 %v1671
    %2174 = vmatpush.msra.mxu0 %v1667
    %2175 = vmatpush.msra.mxu0 %v1663
    %2176 = vmatpush.msra.mxu0 %v1659
    %2177 = vmatpush.msra.mxu0 %v1655
    %2178 = vmatpush.msra.mxu0 %v1651
    %2179 = vmatpush.msra.mxu0 %v1647
    %2180 = vmatpush.msra.mxu0 %v1643
    %2181 = vmatpush.msra.mxu0 %v1639
    %2182 = vmatpush.msra.mxu0 %v1635
    %2183 = vmatpush.msra.mxu0 %v1631
    %2184 = vmatpush.msra.mxu0 %v1627
    %2185 = vmatpush.msra.mxu0 %v1623
    %2186 = vmatpush.msra.mxu0 %v1619
    %2187 = vmatpush.msra.mxu0 %v1615
    %2188 = vmatmul.f32.gmra.mxu0 %v2106
    %v2189 = vpop.f32.mrf.mxu0
    %v2190 = vadd.f32 0.0, %v2189
    %2191 = vdwg.mxu0
    %v2192 = vadd.f32 %v2108, %v2130
    %v2193 = vadd.f32 %v2109, %v2150
    %v2194 = vadd.f32 %v2110, %v2170
    %v2195 = vadd.f32 %v2111, %v2190
    %v2196 = vmul.f32 %v2192, 0.5
    %v2197 = vtanh.pop %v2196
    %v2198 = vadd.f32 %v2197, 1.0
    %v2199 = vmul.f32 %v2198, 0.5
    %v2200 = vmul.f32 %v2193, 0.5
    %v2201 = vtanh.pop %v2200
    %v2202 = vadd.f32 %v2201, 1.0
    %v2203 = vmul.f32 %v2202, 0.5
    %v2204 = vtanh.pop %v2194
    %v2205 = vmul.f32 %v2195, 0.5
    %v2206 = vtanh.pop %v2205
    %v2207 = vadd.f32 %v2206, 1.0
    %v2208 = vmul.f32 %v2207, 0.5
    %v2209 = vmul.f32 %v2203, %v2104
    %v2210 = vmul.f32 %v2199, %v2204
    %v2211 = vadd.f32 %v2209, %v2210
    %v2212 = vtanh.pop %v2211
    %v2213 = vmul.f32 %v2208, %v2212
    %2214 = vst [vmem:[%s1003] sm:$0xff] %v2213
    %v2215 = vld [vmem:[%s1005] sm:$0xff]
    %v2216 = vld [vmem:[%s1005 + $0x8] sm:$0xff]
    %v2217 = vld [vmem:[%s1005 + $0x10] sm:$0xff]
    %v2218 = vld [vmem:[%s1005 + $0x18] sm:$0xff]
    %2219 = vmatpush.msra.mxu0 %v1672
    %2220 = vmatpush.msra.mxu0 %v1668
    %2221 = vmatpush.msra.mxu0 %v1664
    %2222 = vmatpush.msra.mxu0 %v1660
    %2223 = vmatpush.msra.mxu0 %v1656
    %2224 = vmatpush.msra.mxu0 %v1652
    %2225 = vmatpush.msra.mxu0 %v1648
    %2226 = vmatpush.msra.mxu0 %v1644
    %2227 = vmatpush.msra.mxu0 %v1640
    %2228 = vmatpush.msra.mxu0 %v1636
    %2229 = vmatpush.msra.mxu0 %v1632
    %2230 = vmatpush.msra.mxu0 %v1628
    %2231 = vmatpush.msra.mxu0 %v1624
    %2232 = vmatpush.msra.mxu0 %v1620
    %2233 = vmatpush.msra.mxu0 %v1616
    %2234 = vmatpush.msra.mxu0 %v1612
    %2235 = vmatmul.f32.gmra.mxu0 %v2213
    %v2236 = vpop.f32.mrf.mxu0
    %v2237 = vadd.f32 0.0, %v2236
    %2238 = vdwg.mxu0
    %2239 = vmatpush.msra.mxu0 %v1673
    %2240 = vmatpush.msra.mxu0 %v1669
    %2241 = vmatpush.msra.mxu0 %v1665
    %2242 = vmatpush.msra.mxu0 %v1661
    %2243 = vmatpush.msra.mxu0 %v1657
    %2244 = vmatpush.msra.mxu0 %v1653
    %2245 = vmatpush.msra.mxu0 %v1649
    %2246 = vmatpush.msra.mxu0 %v1645
    %2247 = vmatpush.msra.mxu0 %v1641
    %2248 = vmatpush.msra.mxu0 %v1637
    %2249 = vmatpush.msra.mxu0 %v1633
    %2250 = vmatpush.msra.mxu0 %v1629
    %2251 = vmatpush.msra.mxu0 %v1625
    %2252 = vmatpush.msra.mxu0 %v1621
    %2253 = vmatpush.msra.mxu0 %v1617
    %2254 = vmatpush.msra.mxu0 %v1613
    %2255 = vmatmul.f32.gmra.mxu0 %v2213
    %v2256 = vpop.f32.mrf.mxu0
    %v2257 = vadd.f32 0.0, %v2256
    %2258 = vdwg.mxu0
    %2259 = vmatpush.msra.mxu0 %v1674
    %2260 = vmatpush.msra.mxu0 %v1670
    %2261 = vmatpush.msra.mxu0 %v1666
    %2262 = vmatpush.msra.mxu0 %v1662
    %2263 = vmatpush.msra.mxu0 %v1658
    %2264 = vmatpush.msra.mxu0 %v1654
    %2265 = vmatpush.msra.mxu0 %v1650
    %2266 = vmatpush.msra.mxu0 %v1646
    %2267 = vmatpush.msra.mxu0 %v1642
    %2268 = vmatpush.msra.mxu0 %v1638
    %2269 = vmatpush.msra.mxu0 %v1634
    %2270 = vmatpush.msra.mxu0 %v1630
    %2271 = vmatpush.msra.mxu0 %v1626
    %2272 = vmatpush.msra.mxu0 %v1622
    %2273 = vmatpush.msra.mxu0 %v1618
    %2274 = vmatpush.msra.mxu0 %v1614
    %2275 = vmatmul.f32.gmra.mxu0 %v2213
    %v2276 = vpop.f32.mrf.mxu0
    %v2277 = vadd.f32 0.0, %v2276
    %2278 = vdwg.mxu0
    %2279 = vmatpush.msra.mxu0 %v1675
    %2280 = vmatpush.msra.mxu0 %v1671
    %2281 = vmatpush.msra.mxu0 %v1667
    %2282 = vmatpush.msra.mxu0 %v1663
    %2283 = vmatpush.msra.mxu0 %v1659
    %2284 = vmatpush.msra.mxu0 %v1655
    %2285 = vmatpush.msra.mxu0 %v1651
    %2286 = vmatpush.msra.mxu0 %v1647
    %2287 = vmatpush.msra.mxu0 %v1643
    %2288 = vmatpush.msra.mxu0 %v1639
    %2289 = vmatpush.msra.mxu0 %v1635
    %2290 = vmatpush.msra.mxu0 %v1631
    %2291 = vmatpush.msra.mxu0 %v1627
    %2292 = vmatpush.msra.mxu0 %v1623
    %2293 = vmatpush.msra.mxu0 %v1619
    %2294 = vmatpush.msra.mxu0 %v1615
    %2295 = vmatmul.f32.gmra.mxu0 %v2213
    %v2296 = vpop.f32.mrf.mxu0
    %v2297 = vadd.f32 0.0, %v2296
    %2298 = vdwg.mxu0
    %v2299 = vadd.f32 %v2215, %v2237
    %v2300 = vadd.f32 %v2216, %v2257
    %v2301 = vadd.f32 %v2217, %v2277
    %v2302 = vadd.f32 %v2218, %v2297
    %v2303 = vmul.f32 %v2299, 0.5
    %v2304 = vtanh.pop %v2303
    %v2305 = vadd.f32 %v2304, 1.0
    %v2306 = vmul.f32 %v2305, 0.5
    %v2307 = vmul.f32 %v2300, 0.5
    %v2308 = vtanh.pop %v2307
    %v2309 = vadd.f32 %v2308, 1.0
    %v2310 = vmul.f32 %v2309, 0.5
    %v2311 = vtanh.pop %v2301
    %v2312 = vmul.f32 %v2302, 0.5
    %v2313 = vtanh.pop %v2312
    %v2314 = vadd.f32 %v2313, 1.0
    %v2315 = vmul.f32 %v2314, 0.5
    %v2316 = vmul.f32 %v2310, %v2211
    %v2317 = vmul.f32 %v2306, %v2311
    %v2318 = vadd.f32 %v2316, %v2317
    %v2319 = vtanh.pop %v2318
    %v2320 = vmul.f32 %v2315, %v2319
    %2321 = vst [vmem:[%s1112] sm:$0xff] %v2320
    %v2322 = vld [vmem:[%s1114] sm:$0xff]
    %v2323 = vld [vmem:[%s1114 + $0x8] sm:$0xff]
    %v2324 = vld [vmem:[%s1114 + $0x10] sm:$0xff]
    %v2325 = vld [vmem:[%s1114 + $0x18] sm:$0xff]
    %2326 = vmatpush.msra.mxu0 %v1672
    %2327 = vmatpush.msra.mxu0 %v1668
    %2328 = vmatpush.msra.mxu0 %v1664
    %2329 = vmatpush.msra.mxu0 %v1660
    %2330 = vmatpush.msra.mxu0 %v1656
    %2331 = vmatpush.msra.mxu0 %v1652
    %2332 = vmatpush.msra.mxu0 %v1648
    %2333 = vmatpush.msra.mxu0 %v1644
    %2334 = vmatpush.msra.mxu0 %v1640
    %2335 = vmatpush.msra.mxu0 %v1636
    %2336 = vmatpush.msra.mxu0 %v1632
    %2337 = vmatpush.msra.mxu0 %v1628
    %2338 = vmatpush.msra.mxu0 %v1624
    %2339 = vmatpush.msra.mxu0 %v1620
    %2340 = vmatpush.msra.mxu0 %v1616
    %2341 = vmatpush.msra.mxu0 %v1612
    %2342 = vmatmul.f32.gmra.mxu0 %v2320
    %v2343 = vpop.f32.mrf.mxu0
    %v2344 = vadd.f32 0.0, %v2343
    %2345 = vdwg.mxu0
    %2346 = vmatpush.msra.mxu0 %v1673
    %2347 = vmatpush.msra.mxu0 %v1669
    %2348 = vmatpush.msra.mxu0 %v1665
    %2349 = vmatpush.msra.mxu0 %v1661
    %2350 = vmatpush.msra.mxu0 %v1657
    %2351 = vmatpush.msra.mxu0 %v1653
    %2352 = vmatpush.msra.mxu0 %v1649
    %2353 = vmatpush.msra.mxu0 %v1645
    %2354 = vmatpush.msra.mxu0 %v1641
    %2355 = vmatpush.msra.mxu0 %v1637
    %2356 = vmatpush.msra.mxu0 %v1633
    %2357 = vmatpush.msra.mxu0 %v1629
    %2358 = vmatpush.msra.mxu0 %v1625
    %2359 = vmatpush.msra.mxu0 %v1621
    %2360 = vmatpush.msra.mxu0 %v1617
    %2361 = vmatpush.msra.mxu0 %v1613
    %2362 = vmatmul.f32.gmra.mxu0 %v2320
    %v2363 = vpop.f32.mrf.mxu0
    %v2364 = vadd.f32 0.0, %v2363
    %2365 = vdwg.mxu0
    %2366 = vmatpush.msra.mxu0 %v1674
    %2367 = vmatpush.msra.mxu0 %v1670
    %2368 = vmatpush.msra.mxu0 %v1666
    %2369 = vmatpush.msra.mxu0 %v1662
    %2370 = vmatpush.msra.mxu0 %v1658
    %2371 = vmatpush.msra.mxu0 %v1654
    %2372 = vmatpush.msra.mxu0 %v1650
    %2373 = vmatpush.msra.mxu0 %v1646
    %2374 = vmatpush.msra.mxu0 %v1642
    %2375 = vmatpush.msra.mxu0 %v1638
    %2376 = vmatpush.msra.mxu0 %v1634
    %2377 = vmatpush.msra.mxu0 %v1630
    %2378 = vmatpush.msra.mxu0 %v1626
    %2379 = vmatpush.msra.mxu0 %v1622
    %2380 = vmatpush.msra.mxu0 %v1618
    %2381 = vmatpush.msra.mxu0 %v1614
    %2382 = vmatmul.f32.gmra.mxu0 %v2320
    %v2383 = vpop.f32.mrf.mxu0
    %v2384 = vadd.f32 0.0, %v2383
    %2385 = vdwg.mxu0
    %2386 = vmatpush.msra.mxu0 %v1675
    %2387 = vmatpush.msra.mxu0 %v1671
    %2388 = vmatpush.msra.mxu0 %v1667
    %2389 = vmatpush.msra.mxu0 %v1663
    %2390 = vmatpush.msra.mxu0 %v1659
    %2391 = vmatpush.msra.mxu0 %v1655
    %2392 = vmatpush.msra.mxu0 %v1651
    %2393 = vmatpush.msra.mxu0 %v1647
    %2394 = vmatpush.msra.mxu0 %v1643
    %2395 = vmatpush.msra.mxu0 %v1639
    %2396 = vmatpush.msra.mxu0 %v1635
    %2397 = vmatpush.msra.mxu0 %v1631
    %2398 = vmatpush.msra.mxu0 %v1627
    %2399 = vmatpush.msra.mxu0 %v1623
    %2400 = vmatpush.msra.mxu0 %v1619
    %2401 = vmatpush.msra.mxu0 %v1615
    %2402 = vmatmul.f32.gmra.mxu0 %v2320
    %v2403 = vpop.f32.mrf.mxu0
    %v2404 = vadd.f32 0.0, %v2403
    %2405 = vdwg.mxu0
    %v2406 = vadd.f32 %v2322, %v2344
    %v2407 = vadd.f32 %v2323, %v2364
    %v2408 = vadd.f32 %v2324, %v2384
    %v2409 = vadd.f32 %v2325, %v2404
    %v2410 = vmul.f32 %v2406, 0.5
    %v2411 = vtanh.pop %v2410
    %v2412 = vadd.f32 %v2411, 1.0
    %v2413 = vmul.f32 %v2412, 0.5
    %v2414 = vmul.f32 %v2407, 0.5
    %v2415 = vtanh.pop %v2414
    %v2416 = vadd.f32 %v2415, 1.0
    %v2417 = vmul.f32 %v2416, 0.5
    %v2418 = vtanh.pop %v2408
    %v2419 = vmul.f32 %v2409, 0.5
    %v2420 = vtanh.pop %v2419
    %v2421 = vadd.f32 %v2420, 1.0
    %v2422 = vmul.f32 %v2421, 0.5
    %v2423 = vmul.f32 %v2417, %v2318
    %v2424 = vmul.f32 %v2413, %v2418
    %v2425 = vadd.f32 %v2423, %v2424
    %v2426 = vtanh.pop %v2425
    %v2427 = vmul.f32 %v2422, %v2426
    %2428 = vst [vmem:[%s1221] sm:$0xff] %v2427
    %v2429 = vld [vmem:[%s1223] sm:$0xff]
    %v2430 = vld [vmem:[%s1223 + $0x8] sm:$0xff]
    %v2431 = vld [vmem:[%s1223 + $0x10] sm:$0xff]
    %v2432 = vld [vmem:[%s1223 + $0x18] sm:$0xff]
    %2433 = vmatpush.msra.mxu0 %v1672
    %2434 = vmatpush.msra.mxu0 %v1668
    %2435 = vmatpush.msra.mxu0 %v1664
    %2436 = vmatpush.msra.mxu0 %v1660
    %2437 = vmatpush.msra.mxu0 %v1656
    %2438 = vmatpush.msra.mxu0 %v1652
    %2439 = vmatpush.msra.mxu0 %v1648
    %2440 = vmatpush.msra.mxu0 %v1644
    %2441 = vmatpush.msra.mxu0 %v1640
    %2442 = vmatpush.msra.mxu0 %v1636
    %2443 = vmatpush.msra.mxu0 %v1632
    %2444 = vmatpush.msra.mxu0 %v1628
    %2445 = vmatpush.msra.mxu0 %v1624
    %2446 = vmatpush.msra.mxu0 %v1620
    %2447 = vmatpush.msra.mxu0 %v1616
    %2448 = vmatpush.msra.mxu0 %v1612
    %2449 = vmatmul.f32.gmra.mxu0 %v2427
    %v2450 = vpop.f32.mrf.mxu0
    %v2451 = vadd.f32 0.0, %v2450
    %2452 = vdwg.mxu0
    %2453 = vmatpush.msra.mxu0 %v1673
    %2454 = vmatpush.msra.mxu0 %v1669
    %2455 = vmatpush.msra.mxu0 %v1665
    %2456 = vmatpush.msra.mxu0 %v1661
    %2457 = vmatpush.msra.mxu0 %v1657
    %2458 = vmatpush.msra.mxu0 %v1653
    %2459 = vmatpush.msra.mxu0 %v1649
    %2460 = vmatpush.msra.mxu0 %v1645
    %2461 = vmatpush.msra.mxu0 %v1641
    %2462 = vmatpush.msra.mxu0 %v1637
    %2463 = vmatpush.msra.mxu0 %v1633
    %2464 = vmatpush.msra.mxu0 %v1629
    %2465 = vmatpush.msra.mxu0 %v1625
    %2466 = vmatpush.msra.mxu0 %v1621
    %2467 = vmatpush.msra.mxu0 %v1617
    %2468 = vmatpush.msra.mxu0 %v1613
    %2469 = vmatmul.f32.gmra.mxu0 %v2427
    %v2470 = vpop.f32.mrf.mxu0
    %v2471 = vadd.f32 0.0, %v2470
    %2472 = vdwg.mxu0
    %2473 = vmatpush.msra.mxu0 %v1674
    %2474 = vmatpush.msra.mxu0 %v1670
    %2475 = vmatpush.msra.mxu0 %v1666
    %2476 = vmatpush.msra.mxu0 %v1662
    %2477 = vmatpush.msra.mxu0 %v1658
    %2478 = vmatpush.msra.mxu0 %v1654
    %2479 = vmatpush.msra.mxu0 %v1650
    %2480 = vmatpush.msra.mxu0 %v1646
    %2481 = vmatpush.msra.mxu0 %v1642
    %2482 = vmatpush.msra.mxu0 %v1638
    %2483 = vmatpush.msra.mxu0 %v1634
    %2484 = vmatpush.msra.mxu0 %v1630
    %2485 = vmatpush.msra.mxu0 %v1626
    %2486 = vmatpush.msra.mxu0 %v1622
    %2487 = vmatpush.msra.mxu0 %v1618
    %2488 = vmatpush.msra.mxu0 %v1614
    %2489 = vmatmul.f32.gmra.mxu0 %v2427
    %v2490 = vpop.f32.mrf.mxu0
    %v2491 = vadd.f32 0.0, %v2490
    %2492 = vdwg.mxu0
    %2493 = vmatpush.msra.mxu0 %v1675
    %2494 = vmatpush.msra.mxu0 %v1671
    %2495 = vmatpush.msra.mxu0 %v1667
    %2496 = vmatpush.msra.mxu0 %v1663
    %2497 = vmatpush.msra.mxu0 %v1659
    %2498 = vmatpush.msra.mxu0 %v1655
    %2499 = vmatpush.msra.mxu0 %v1651
    %2500 = vmatpush.msra.mxu0 %v1647
    %2501 = vmatpush.msra.mxu0 %v1643
    %2502 = vmatpush.msra.mxu0 %v1639
    %2503 = vmatpush.msra.mxu0 %v1635
    %2504 = vmatpush.msra.mxu0 %v1631
    %2505 = vmatpush.msra.mxu0 %v1627
    %2506 = vmatpush.msra.mxu0 %v1623
    %2507 = vmatpush.msra.mxu0 %v1619
    %2508 = vmatpush.msra.mxu0 %v1615
    %2509 = vmatmul.f32.gmra.mxu0 %v2427
    %v2510 = vpop.f32.mrf.mxu0
    %v2511 = vadd.f32 0.0, %v2510
    %2512 = vdwg.mxu0
    %v2513 = vadd.f32 %v2429, %v2451
    %v2514 = vadd.f32 %v2430, %v2471
    %v2515 = vadd.f32 %v2431, %v2491
    %v2516 = vadd.f32 %v2432, %v2511
    %v2517 = vmul.f32 %v2513, 0.5
    %v2518 = vtanh.pop %v2517
    %v2519 = vadd.f32 %v2518, 1.0
    %v2520 = vmul.f32 %v2519, 0.5
    %v2521 = vmul.f32 %v2514, 0.5
    %v2522 = vtanh.pop %v2521
    %v2523 = vadd.f32 %v2522, 1.0
    %v2524 = vmul.f32 %v2523, 0.5
    %v2525 = vtanh.pop %v2515
    %v2526 = vmul.f32 %v2516, 0.5
    %v2527 = vtanh.pop %v2526
    %v2528 = vadd.f32 %v2527, 1.0
    %v2529 = vmul.f32 %v2528, 0.5
    %v2530 = vmul.f32 %v2524, %v2425
    %v2531 = vmul.f32 %v2520, %v2525
    %v2532 = vadd.f32 %v2530, %v2531
    %v2533 = vtanh.pop %v2532
    %v2534 = vmul.f32 %v2529, %v2533
    %2535 = vst [vmem:[%s1330] sm:$0xff] %v2534
    %2536 = vst [vmem:[%s1676] sm:$0xff] %v2534
    %2537 = vst [vmem:[%s1678] sm:$0xff] %v2532
    %v2538 = vld [vmem:[#allocation3] sm:$0xff]
    %v2539 = vld [vmem:[#allocation3 + $0x8] sm:$0xff]
    %v2540 = vld [vmem:[#allocation3 + $0x10] sm:$0xff]
    %v2541 = vld [vmem:[#allocation3 + $0x18] sm:$0xff]
    %v2542 = vld [vmem:[#allocation3 + $0x20] sm:$0xff]
    %v2543 = vld [vmem:[#allocation3 + $0x28] sm:$0xff]
    %v2544 = vld [vmem:[#allocation3 + $0x30] sm:$0xff]
    %v2545 = vld [vmem:[#allocation3 + $0x38] sm:$0xff]
    %v2546 = vmax.f32 %v2538, 0.0
    %v2547 = vmax.f32 %v2539, 0.0
    %v2548 = vmax.f32 %v2540, 0.0
    %v2549 = vmax.f32 %v2541, 0.0
    %v2550 = vmax.f32 %v2542, 0.0
    %v2551 = vmax.f32 %v2543, 0.0
    %v2552 = vmax.f32 %v2544, 0.0
    %v2553 = vmax.f32 %v2545, 0.0
    %v2554 = vld [vmem:[#allocation13] sm:$0xff]
    %v2555 = vld [vmem:[#allocation13 + $0x8] sm:$0xff]
    %v2556 = vld [vmem:[#allocation13 + $0x10] sm:$0xff]
    %v2557 = vld [vmem:[#allocation13 + $0x18] sm:$0xff]
    %v2558 = vld [vmem:[#allocation13 + $0x20] sm:$0xff]
    %v2559 = vld [vmem:[#allocation13 + $0x28] sm:$0xff]
    %v2560 = vld [vmem:[#allocation13 + $0x30] sm:$0xff]
    %v2561 = vld [vmem:[#allocation13 + $0x38] sm:$0xff]
    %v2562 = vld [vmem:[#allocation13 + $0x40] sm:$0xff]
    %v2563 = vld [vmem:[#allocation13 + $0x48] sm:$0xff]
    %v2564 = vld [vmem:[#allocation13 + $0x50] sm:$0xff]
    %v2565 = vld [vmem:[#allocation13 + $0x58] sm:$0xff]
    %v2566 = vld [vmem:[#allocation13 + $0x60] sm:$0xff]
    %v2567 = vld [vmem:[#allocation13 + $0x68] sm:$0xff]
    %v2568 = vld [vmem:[#allocation13 + $0x70] sm:$0xff]
    %v2569 = vld [vmem:[#allocation13 + $0x78] sm:$0xff]
    %v2570 = vld [vmem:[%s8] sm:$0x1]
    %v2572 = vperm.slane %v2570, 0
    %2574 = vmatpush.msra.mxu0 %v2569
    %2575 = vmatpush.msra.mxu0 %v2568
    %2576 = vmatpush.msra.mxu0 %v2567
    %2577 = vmatpush.msra.mxu0 %v2566
    %2578 = vmatpush.msra.mxu0 %v2565
    %2579 = vmatpush.msra.mxu0 %v2564
    %2580 = vmatpush.msra.mxu0 %v2563
    %2581 = vmatpush.msra.mxu0 %v2562
    %2582 = vmatpush.msra.mxu0 %v2561
    %2583 = vmatpush.msra.mxu0 %v2560
    %2584 = vmatpush.msra.mxu0 %v2559
    %2585 = vmatpush.msra.mxu0 %v2558
    %2586 = vmatpush.msra.mxu0 %v2557
    %2587 = vmatpush.msra.mxu0 %v2556
    %2588 = vmatpush.msra.mxu0 %v2555
    %2589 = vmatpush.msra.mxu0 %v2554
    %2590 = vmatmul.f32.gmra.mxu0 %v2546
    %v2591 = vpop.f32.mrf.mxu0
    %v2592 = vadd.f32 %v2572, %v2591
    %2593 = vmatmul.f32.gmra.mxu0 %v2547
    %v2594 = vpop.f32.mrf.mxu0
    %v2595 = vadd.f32 %v2572, %v2594
    %2596 = vmatmul.f32.gmra.mxu0 %v2548
    %v2597 = vpop.f32.mrf.mxu0
    %v2598 = vadd.f32 %v2572, %v2597
    %2599 = vmatmul.f32.gmra.mxu0 %v2549
    %v2600 = vpop.f32.mrf.mxu0
    %v2601 = vadd.f32 %v2572, %v2600
    %2602 = vmatmul.f32.gmra.mxu0 %v2550
    %v2603 = vpop.f32.mrf.mxu0
    %v2604 = vadd.f32 %v2572, %v2603
    %2605 = vmatmul.f32.gmra.mxu0 %v2551
    %v2606 = vpop.f32.mrf.mxu0
    %v2607 = vadd.f32 %v2572, %v2606
    %2608 = vmatmul.f32.gmra.mxu0 %v2552
    %v2609 = vpop.f32.mrf.mxu0
    %v2610 = vadd.f32 %v2572, %v2609
    %2611 = vmatmul.f32.gmra.mxu0 %v2553
    %v2612 = vpop.f32.mrf.mxu0
    %v2613 = vadd.f32 %v2572, %v2612
    %2614 = vdwg.mxu0
    %2615 = vst [vmem:[%s9] sm:$0xff] %v2592
    %2616 = vst [vmem:[%s9 + $0x8] sm:$0xff] %v2595
    %2617 = vst [vmem:[%s9 + $0x10] sm:$0xff] %v2598
    %2618 = vst [vmem:[%s9 + $0x18] sm:$0xff] %v2601
    %2619 = vst [vmem:[%s9 + $0x20] sm:$0xff] %v2604
    %2620 = vst [vmem:[%s9 + $0x28] sm:$0xff] %v2607
    %2621 = vst [vmem:[%s9 + $0x30] sm:$0xff] %v2610
    %2622 = vst [vmem:[%s9 + $0x38] sm:$0xff] %v2613
    // Predicated region
    $region62: #{simple_lstm_forward.1} parent=1 // pred_check
      _
    $region63: #{simple_lstm_forward.1} parent=1 // pred_check_branch
      %2624 = sbr.rel (0) target = $region65
    $region64: #{simple_lstm_forward.1} parent=1 // pred_region
      _
    $region65: #{simple_lstm_forward.1} parent=1 // pred_fallthru
      _
    // Predicated region
    $region66: #{simple_lstm_forward.1} parent=1 // pred_check
      _
    $region67: #{simple_lstm_forward.1} parent=1 // pred_check_branch
      %2626 = sbr.rel (0) target = $region69
    $region68: #{simple_lstm_forward.1} parent=1 // pred_region
      _
    $region69: #{simple_lstm_forward.1} parent=1 // pred_fallthru
      _
    %2627 = vsyncpa [#allocation7], 1
    %2628 = vsyncpa [#allocation9], 1
    %2629 = vsyncpa [#allocation12], 1

</llo_original>
